<compile_context>
chip_gen: v5e
topology: v5e:2x2
jax: 0.10.0
libtpu: 0.0.40
codegen_flags: <defaults>
</compile_context>

<pallas_src>
import math
import functools

import jax
import jax.numpy as jnp
from jax.experimental import pallas as pl
from jax.experimental.pallas import tpu as pltpu

D_FF = 2048          # nn.TransformerDecoderLayer default dim_feedforward
LN_EPS = 1e-5        # nn.LayerNorm default eps
NUM_LAYERS = 3


# ----------------------------------------------------------------------------
# helpers
# ----------------------------------------------------------------------------
def _layernorm(x, gamma, beta, eps=LN_EPS):
    mu = jnp.mean(x, axis=-1, keepdims=True)
    var = jnp.mean((x - mu) ** 2, axis=-1, keepdims=True)
    return (x - mu) * jax.lax.rsqrt(var + eps) * gamma + beta


# ----------------------------------------------------------------------------
# fused kernel: PE add + 3 decoder layers + final LN + tied output projection
# ----------------------------------------------------------------------------
def decoder_kernel(x_ref, mem_ref, pe_ref,
                   wqkv_s_ref, bqkv_s_ref, wo_s_ref, bo_s_ref,
                   wqkv_c_ref, bqkv_c_ref, wo_c_ref, bo_c_ref,
                   w1_ref, b1_ref, w2_ref, b2_ref,
                   g1_ref, be1_ref, g2_ref, be2_ref, g3_ref, be3_ref,
                   gf_ref, bef_ref, wout_ref, bout_ref,
                   o_ref, *, num_heads, num_layers):
    x = x_ref[0] + pe_ref[...]            # (S, E) f32, PE add fused in
    mem = mem_ref[0]                      # (Sm, E) f32
    S, E = x.shape
    hd = E // num_heads
    scale = 1.0 / math.sqrt(hd)

    def mha(q_in, kv_in, wqkv_ref, bqkv_ref, wo_ref, bo_ref, l):
        # q/k/v projections: bf16 operands, f32 accumulate
        q = jnp.dot(q_in.astype(jnp.bfloat16), wqkv_ref[l, :, :E],
                    preferred_element_type=jnp.float32) + bqkv_ref[l, :, :E]
        kv = jnp.dot(kv_in.astype(jnp.bfloat16), wqkv_ref[l, :, E:],
                     preferred_element_type=jnp.float32) + bqkv_ref[l, :, E:]
        k = kv[:, :E]
        v = kv[:, E:]
        q = q * scale                                          # hoisted scale
        out = jnp.zeros((q_in.shape[0], E), jnp.float32)
        for h in range(num_heads):                             # static unroll over heads
            lo = h * hd
            hi = lo + hd
            scores = jax.lax.dot_general(q[:, lo:hi], k[:, lo:hi],
                                         (((1,), (1,)), ((), ())),
                                         preferred_element_type=jnp.float32)  # (Sq, Skv)
            m = jnp.max(scores, axis=-1, keepdims=True)
            p = jnp.exp(scores - m)
            attn = p * pl.reciprocal(jnp.sum(p, axis=-1, keepdims=True), approx=True)
            ctx = jnp.dot(attn, v[:, lo:hi], preferred_element_type=jnp.float32)  # (Sq, hd)
            # fold the per-head output projection -> no lane-concatenate needed
            out = out + jnp.dot(ctx.astype(jnp.bfloat16), wo_ref[l, lo:hi, :],
                                preferred_element_type=jnp.float32)
        return out + bo_ref[l]

    for l in range(num_layers):                                # static unroll over layers
        # --- self-attention + post-LN ------------------------------------------------
        sa = mha(x, x, wqkv_s_ref, bqkv_s_ref, wo_s_ref, bo_s_ref, l)
        x = _layernorm(x + sa, g1_ref[l], be1_ref[l])
        # --- cross-attention over encoded memory + post-LN ---------------------------
        ca = mha(x, mem, wqkv_c_ref, bqkv_c_ref, wo_c_ref, bo_c_ref, l)
        x = _layernorm(x + ca, g2_ref[l], be2_ref[l])
        # --- feed forward + post-LN ---------------------------------------------------
        h1 = jnp.maximum(
            jnp.dot(x.astype(jnp.bfloat16), w1_ref[l],
                    preferred_element_type=jnp.float32) + b1_ref[l], 0.0)
        ff = jnp.dot(h1.astype(jnp.bfloat16), w2_ref[l],
                     preferred_element_type=jnp.float32) + b2_ref[l]
        x = _layernorm(x + ff, g3_ref[l], be3_ref[l])

    # final LayerNorm + tied output projection (logits = x @ emb.T + b)
    x = _layernorm(x, gf_ref[...], bef_ref[...])
    logits = jnp.dot(x.astype(jnp.bfloat16), wout_ref[...],
                     preferred_element_type=jnp.float32) + bout_ref[...]
    o_ref[...] = logits[jnp.newaxis]                           # single lane-contiguous store


def decoder_transformer_forward(encoded_memory, target_tokens, params, num_heads):
    emb = params["embedding"]                                  # (V, E) f32
    x = jnp.take(emb, target_tokens, axis=0)                   # (B, S, E) embedding gather (JAX glue)
    B, S, E = x.shape
    Sm = encoded_memory.shape[1]
    V = emb.shape[0]
    st = params["stack"]
    L = st["wqkv_s"].shape[0]
    d_ff = st["w1"].shape[2]
    assert S == params["pe"].shape[0], "PositionalEncoding requires seq_len == context_length"

    kern = functools.partial(decoder_kernel, num_heads=num_heads, num_layers=L)
    full3 = lambda b: (0, 0, 0)
    full2 = lambda b: (0, 0)

    in_specs = [
        pl.BlockSpec((1, S, E), lambda b: (b, 0, 0)),          # x (target embeddings)
        pl.BlockSpec((1, Sm, E), lambda b: (b, 0, 0)),         # encoded memory
        pl.BlockSpec((S, E), full2),                           # pe
        pl.BlockSpec((L, E, 3 * E), full3),                    # self-attn wqkv
        pl.BlockSpec((L, 1, 3 * E), full3),                    # self-attn bqkv
        pl.BlockSpec((L, E, E), full3),                        # self-attn wo
        pl.BlockSpec((L, 1, E), full3),                        # self-attn bo
        pl.BlockSpec((L, E, 3 * E), full3),                    # cross-attn wqkv
        pl.BlockSpec((L, 1, 3 * E), full3),                    # cross-attn bqkv
        pl.BlockSpec((L, E, E), full3),                        # cross-attn wo
        pl.BlockSpec((L, 1, E), full3),                        # cross-attn bo
        pl.BlockSpec((L, E, d_ff), full3),                     # ffn w1
        pl.BlockSpec((L, 1, d_ff), full3),                     # ffn b1
        pl.BlockSpec((L, d_ff, E), full3),                     # ffn w2
        pl.BlockSpec((L, 1, E), full3),                        # ffn b2
        pl.BlockSpec((L, 1, E), full3),                        # ln1 gamma
        pl.BlockSpec((L, 1, E), full3),                        # ln1 beta
        pl.BlockSpec((L, 1, E), full3),                        # ln2 gamma
        pl.BlockSpec((L, 1, E), full3),                        # ln2 beta
        pl.BlockSpec((L, 1, E), full3),                        # ln3 gamma
        pl.BlockSpec((L, 1, E), full3),                        # ln3 beta
        pl.BlockSpec((1, E), full2),                           # final ln gamma
        pl.BlockSpec((1, E), full2),                           # final ln beta
        pl.BlockSpec((E, V), full2),                           # tied output weight (emb.T, bf16)
        pl.BlockSpec((1, V), full2),                           # output bias
    ]

    return pl.pallas_call(
        kern,
        out_shape=jax.ShapeDtypeStruct((B, S, V), jnp.float32),
        grid_spec=pltpu.PrefetchScalarGridSpec(
            num_scalar_prefetch=0,
            grid=(B,),
            in_specs=in_specs,
            out_specs=pl.BlockSpec((1, S, V), lambda b: (b, 0, 0)),
        ),
        compiler_params=pltpu.CompilerParams(dimension_semantics=("parallel",)),
    )(x, encoded_memory, params["pe"],
      st["wqkv_s"], st["bqkv_s"], st["wo_s"], st["bo_s"],
      st["wqkv_c"], st["bqkv_c"], st["wo_c"], st["bo_c"],
      st["w1"], st["b1"], st["w2"], st["b2"],
      st["g1"], st["be1"], st["g2"], st["be2"], st["g3"], st["be3"],
      params["gf"], params["bef"], params["w_out"], params["b_out"])


# ----------------------------------------------------------------------------
# parameters (deterministic synthetic init)
# ----------------------------------------------------------------------------
def init_params(key, vocab_size, hidden_size, context_length,
                d_ff=D_FF, num_layers=NUM_LAYERS):
    E = hidden_size
    V = vocab_size
    keys = jax.random.split(key, 1 + num_layers)
    emb = jax.random.normal(keys[0], (V, E), jnp.float32)
    params = {"embedding": emb}

    # PositionalEncoding buffer (same formula as the PyTorch module)
    position = jnp.arange(context_length, dtype=jnp.float32)[:, None]
    div_term = jnp.exp(jnp.arange(0, E, 2, dtype=jnp.float32) * (-math.log(10000.0) / E))
    pe = jnp.zeros((context_length, E), jnp.float32)
    pe = pe.at[:, 0::2].set(jnp.sin(position * div_term))
    pe = pe.at[:, 1::2].set(jnp.cos(position * div_term))
    params["pe"] = pe

    s = 0.05
    layers = []
    for i in range(num_layers):
        lk = jax.random.split(keys[1 + i], 6)
        layers.append(dict(
            wqkv_s=(jax.random.normal(lk[0], (E, 3 * E), jnp.float32) * s).astype(jnp.bfloat16),
            bqkv_s=jnp.zeros((1, 3 * E), jnp.float32),
            wo_s=(jax.random.normal(lk[1], (E, E), jnp.float32) * s).astype(jnp.bfloat16),
            bo_s=jnp.zeros((1, E), jnp.float32),
            wqkv_c=(jax.random.normal(lk[2], (E, 3 * E), jnp.float32) * s).astype(jnp.bfloat16),
            bqkv_c=jnp.zeros((1, 3 * E), jnp.float32),
            wo_c=(jax.random.normal(lk[3], (E, E), jnp.float32) * s).astype(jnp.bfloat16),
            bo_c=jnp.zeros((1, E), jnp.float32),
            w1=(jax.random.normal(lk[4], (E, d_ff), jnp.float32) * s).astype(jnp.bfloat16),
            b1=jnp.zeros((1, d_ff), jnp.float32),
            w2=(jax.random.normal(lk[5], (d_ff, E), jnp.float32) * s).astype(jnp.bfloat16),
            b2=jnp.zeros((1, E), jnp.float32),
            g1=jnp.ones((1, E), jnp.float32), be1=jnp.zeros((1, E), jnp.float32),
            g2=jnp.ones((1, E), jnp.float32), be2=jnp.zeros((1, E), jnp.float32),
            g3=jnp.ones((1, E), jnp.float32), be3=jnp.zeros((1, E), jnp.float32),
        ))
    # stack per-layer weights along a leading L axis -> kept VMEM-resident in the fused kernel
    params["stack"] = {k: jnp.stack([lyr[k] for lyr in layers]) for k in layers[0]}

    params["gf"] = jnp.ones((1, E), jnp.float32)
    params["bef"] = jnp.zeros((1, E), jnp.float32)
    # tied output projection: out.weight = embedding.weight  ->  logits = x @ emb.T + b_out
    params["w_out"] = emb.T.astype(jnp.bfloat16)
    params["b_out"] = jnp.zeros((1, V), jnp.float32)
    return params


# ----------------------------------------------------------------------------
# pure-JAX reference (same math, mirrors the bf16 matmul operands) for correctness
# ----------------------------------------------------------------------------
def _mha_ref(q_in, kv_in, wqkv, bqkv, wo, bo, num_heads):
    B, Sq, E = q_in.shape
    Skv = kv_in.shape[1]
    hd = E // num_heads
    q = jnp.dot(q_in.astype(jnp.bfloat16), wqkv[:, :E],
                preferred_element_type=jnp.float32) + bqkv[:, :E]
    kv = jnp.dot(kv_in.astype(jnp.bfloat16), wqkv[:, E:],
                 preferred_element_type=jnp.float32) + bqkv[:, E:]
    k, v = kv[..., :E], kv[..., E:]
    q = q * (1.0 / math.sqrt(hd))
    qh = q.reshape(B, Sq, num_heads, hd).transpose(0, 2, 1, 3)
    kh = k.reshape(B, Skv, num_heads, hd).transpose(0, 2, 1, 3)
    vh = v.reshape(B, Skv, num_heads, hd).transpose(0, 2, 1, 3)
    scores = jnp.einsum("bhqd,bhkd->bhqk", qh, kh)
    attn = jax.nn.softmax(scores, axis=-1)
    ctx = jnp.einsum("bhqk,bhkd->bhqd", attn, vh).transpose(0, 2, 1, 3).reshape(B, Sq, E)
    return jnp.dot(ctx.astype(jnp.bfloat16), wo, preferred_element_type=jnp.float32) + bo


def _reference_layer(x, mem, p, num_heads):
    sa = _mha_ref(x, x, p["wqkv_s"], p["bqkv_s"], p["wo_s"], p["bo_s"], num_heads)
    x = _layernorm(x + sa, p["g1"], p["be1"])
    ca = _mha_ref(x, mem, p["wqkv_c"], p["bqkv_c"], p["wo_c"], p["bo_c"], num_heads)
    x = _layernorm(x + ca, p["g2"], p["be2"])
    h1 = jnp.maximum(jnp.dot(x.astype(jnp.bfloat16), p["w1"],
                             preferred_element_type=jnp.float32) + p["b1"], 0.0)
    ff = jnp.dot(h1.astype(jnp.bfloat16), p["w2"],
                 preferred_element_type=jnp.float32) + p["b2"]
    return _layernorm(x + ff, p["g3"], p["be3"])


def _reference_forward(encoded_memory, tokens, params, num_heads):
    x = jnp.take(params["embedding"], tokens, axis=0)
    x = x + params["pe"][None]
    st = params["stack"]
    for l in range(st["wqkv_s"].shape[0]):
        p = {k: st[k][l] for k in st}
        x = _reference_layer(x, encoded_memory, p, num_heads)
    x = _layernorm(x, params["gf"], params["bef"])
    return jnp.dot(x.astype(jnp.bfloat16), params["w_out"],
                   preferred_element_type=jnp.float32) + params["b_out"]


# ----------------------------------------------------------------------------
if __name__ == "__main__":
    vocab_size = 50
    hidden_size = 32
    num_heads = 4
    context_length = 16     # seq_len must equal context_length (PE slicing quirk, see header note)
    mem_len = 24
    batch = 2

    key = jax.random.PRNGKey(0)
    pkey, tkey, mkey = jax.random.split(key, 3)
    params = init_params(pkey, vocab_size, hidden_size, context_length)
    target_tokens = jax.random.randint(tkey, (batch, context_length), 0, vocab_size,
                                       dtype=jnp.int32)
    encoded_memory = jax.random.normal(mkey, (batch, mem_len, hidden_size), jnp.float32)

    out = decoder_transformer_forward(encoded_memory, target_tokens, params, num_heads)
    out = jax.block_until_ready(out)

    ref = _reference_forward(encoded_memory, target_tokens, params, num_heads)
    assert out.shape == (batch, context_length, vocab_size)
    assert bool(jnp.all(jnp.isfinite(out)))
    assert bool(jnp.allclose(out, ref, atol=3e-2, rtol=3e-2)), \
        f"max abs diff = {float(jnp.max(jnp.abs(out - ref)))}"

    print("KERNEL_OK")
</pallas_src>

<mosaic_0001>
module attributes {stable_mosaic.version = 11 : i64} {
  func.func @decoder_kernel(%arg0: i32, %arg1: memref<1x16x32xf32, #tpu.memory_space<vmem>>, %arg2: memref<1x24x32xf32, #tpu.memory_space<vmem>>, %arg3: memref<16x32xf32, #tpu.memory_space<vmem>>, %arg4: memref<3x32x96xbf16, #tpu.memory_space<vmem>>, %arg5: memref<3x1x96xf32, #tpu.memory_space<vmem>>, %arg6: memref<3x32x32xbf16, #tpu.memory_space<vmem>>, %arg7: memref<3x1x32xf32, #tpu.memory_space<vmem>>, %arg8: memref<3x32x96xbf16, #tpu.memory_space<vmem>>, %arg9: memref<3x1x96xf32, #tpu.memory_space<vmem>>, %arg10: memref<3x32x32xbf16, #tpu.memory_space<vmem>>, %arg11: memref<3x1x32xf32, #tpu.memory_space<vmem>>, %arg12: memref<3x32x2048xbf16, #tpu.memory_space<vmem>>, %arg13: memref<3x1x2048xf32, #tpu.memory_space<vmem>>, %arg14: memref<3x2048x32xbf16, #tpu.memory_space<vmem>>, %arg15: memref<3x1x32xf32, #tpu.memory_space<vmem>>, %arg16: memref<3x1x32xf32, #tpu.memory_space<vmem>>, %arg17: memref<3x1x32xf32, #tpu.memory_space<vmem>>, %arg18: memref<3x1x32xf32, #tpu.memory_space<vmem>>, %arg19: memref<3x1x32xf32, #tpu.memory_space<vmem>>, %arg20: memref<3x1x32xf32, #tpu.memory_space<vmem>>, %arg21: memref<3x1x32xf32, #tpu.memory_space<vmem>>, %arg22: memref<1x32xf32, #tpu.memory_space<vmem>>, %arg23: memref<1x32xf32, #tpu.memory_space<vmem>>, %arg24: memref<32x50xbf16, #tpu.memory_space<vmem>>, %arg25: memref<1x50xf32, #tpu.memory_space<vmem>>, %arg26: memref<1x16x50xf32, #tpu.memory_space<vmem>>) attributes {dimension_semantics = [#tpu.dimension_semantics<parallel>], iteration_bounds = array<i64: 2>, scalar_prefetch = 0 : i64, scratch_operands = 0 : i64, tpu.core_type = #tpu.core_type<tc>, window_params = [{transform_indices = @transform_0, window_bounds = array<i64: 1, 16, 32>}, {transform_indices = @transform_1, window_bounds = array<i64: 1, 24, 32>}, {pipeline_mode = #tpu.pipeline_mode<synchronous>, transform_indices = @transform_2, window_bounds = array<i64: 16, 32>}, {pipeline_mode = #tpu.pipeline_mode<synchronous>, transform_indices = @transform_3, window_bounds = array<i64: 3, 32, 96>}, {pipeline_mode = #tpu.pipeline_mode<synchronous>, transform_indices = @transform_4, window_bounds = array<i64: 3, 1, 96>}, {pipeline_mode = #tpu.pipeline_mode<synchronous>, transform_indices = @transform_5, window_bounds = array<i64: 3, 32, 32>}, {pipeline_mode = #tpu.pipeline_mode<synchronous>, transform_indices = @transform_6, window_bounds = array<i64: 3, 1, 32>}, {pipeline_mode = #tpu.pipeline_mode<synchronous>, transform_indices = @transform_7, window_bounds = array<i64: 3, 32, 96>}, {pipeline_mode = #tpu.pipeline_mode<synchronous>, transform_indices = @transform_8, window_bounds = array<i64: 3, 1, 96>}, {pipeline_mode = #tpu.pipeline_mode<synchronous>, transform_indices = @transform_9, window_bounds = array<i64: 3, 32, 32>}, {pipeline_mode = #tpu.pipeline_mode<synchronous>, transform_indices = @transform_10, window_bounds = array<i64: 3, 1, 32>}, {pipeline_mode = #tpu.pipeline_mode<synchronous>, transform_indices = @transform_11, window_bounds = array<i64: 3, 32, 2048>}, {pipeline_mode = #tpu.pipeline_mode<synchronous>, transform_indices = @transform_12, window_bounds = array<i64: 3, 1, 2048>}, {pipeline_mode = #tpu.pipeline_mode<synchronous>, transform_indices = @transform_13, window_bounds = array<i64: 3, 2048, 32>}, {pipeline_mode = #tpu.pipeline_mode<synchronous>, transform_indices = @transform_14, window_bounds = array<i64: 3, 1, 32>}, {pipeline_mode = #tpu.pipeline_mode<synchronous>, transform_indices = @transform_15, window_bounds = array<i64: 3, 1, 32>}, {pipeline_mode = #tpu.pipeline_mode<synchronous>, transform_indices = @transform_16, window_bounds = array<i64: 3, 1, 32>}, {pipeline_mode = #tpu.pipeline_mode<synchronous>, transform_indices = @transform_17, window_bounds = array<i64: 3, 1, 32>}, {pipeline_mode = #tpu.pipeline_mode<synchronous>, transform_indices = @transform_18, window_bounds = array<i64: 3, 1, 32>}, {pipeline_mode = #tpu.pipeline_mode<synchronous>, transform_indices = @transform_19, window_bounds = array<i64: 3, 1, 32>}, {pipeline_mode = #tpu.pipeline_mode<synchronous>, transform_indices = @transform_20, window_bounds = array<i64: 3, 1, 32>}, {pipeline_mode = #tpu.pipeline_mode<synchronous>, transform_indices = @transform_21, window_bounds = array<i64: 1, 32>}, {pipeline_mode = #tpu.pipeline_mode<synchronous>, transform_indices = @transform_22, window_bounds = array<i64: 1, 32>}, {pipeline_mode = #tpu.pipeline_mode<synchronous>, transform_indices = @transform_23, window_bounds = array<i64: 32, 50>}, {pipeline_mode = #tpu.pipeline_mode<synchronous>, transform_indices = @transform_24, window_bounds = array<i64: 1, 50>}, {transform_indices = @transform_25, window_bounds = array<i64: 1, 16, 50>}]} {
    %c0 = arith.constant 0 : index
    %c0_0 = arith.constant 0 : index
    %c0_1 = arith.constant 0 : index
    %0 = vector.load %arg1[%c0, %c0_0, %c0_1] : memref<1x16x32xf32, #tpu.memory_space<vmem>>, vector<1x16x32xf32>
    %1 = vector.shape_cast %0 : vector<1x16x32xf32> to vector<16x32xf32>
    %c0_2 = arith.constant 0 : index
    %c0_3 = arith.constant 0 : index
    %2 = vector.load %arg3[%c0_2, %c0_3] : memref<16x32xf32, #tpu.memory_space<vmem>>, vector<16x32xf32>
    %3 = arith.addf %1, %2 : vector<16x32xf32>
    %c0_4 = arith.constant 0 : index
    %c0_5 = arith.constant 0 : index
    %c0_6 = arith.constant 0 : index
    %4 = vector.load %arg2[%c0_4, %c0_5, %c0_6] : memref<1x24x32xf32, #tpu.memory_space<vmem>>, vector<1x24x32xf32>
    %5 = vector.shape_cast %4 : vector<1x24x32xf32> to vector<24x32xf32>
    %6 = arith.truncf %3 : vector<16x32xf32> to vector<16x32xbf16>
    %c0_7 = arith.constant 0 : index
    %c0_8 = arith.constant 0 : index
    %c0_9 = arith.constant 0 : index
    %7 = vector.load %arg4[%c0_7, %c0_8, %c0_9] : memref<3x32x96xbf16, #tpu.memory_space<vmem>>, vector<1x32x32xbf16>
    %8 = vector.shape_cast %7 : vector<1x32x32xbf16> to vector<32x32xbf16>
    %cst = arith.constant dense<0.000000e+00> : vector<16x32xf32>
    %9 = tpu.matmul %6, %8, %cst {dimension_numbers = #tpu.dot_dimension_numbers<[1], [0], [0], [1], [0, 0, 1, 1], [], []>} : vector<16x32xbf16>, vector<32x32xbf16>, vector<16x32xf32> -> vector<16x32xf32>
    %c0_10 = arith.constant 0 : index
    %c0_11 = arith.constant 0 : index
    %c0_12 = arith.constant 0 : index
    %10 = vector.load %arg5[%c0_10, %c0_11, %c0_12] : memref<3x1x96xf32, #tpu.memory_space<vmem>>, vector<1x1x32xf32>
    %11 = vector.shape_cast %10 : vector<1x1x32xf32> to vector<1x32xf32>
    %12 = vector.broadcast %11 : vector<1x32xf32> to vector<16x32xf32>
    %13 = arith.addf %9, %12 : vector<16x32xf32>
    %14 = arith.truncf %3 : vector<16x32xf32> to vector<16x32xbf16>
    %c0_13 = arith.constant 0 : index
    %c0_14 = arith.constant 0 : index
    %c32 = arith.constant 32 : index
    %15 = vector.load %arg4[%c0_13, %c0_14, %c32] : memref<3x32x96xbf16, #tpu.memory_space<vmem>>, vector<1x32x64xbf16>
    %16 = vector.shape_cast %15 : vector<1x32x64xbf16> to vector<32x64xbf16>
    %cst_15 = arith.constant dense<0.000000e+00> : vector<16x64xf32>
    %17 = tpu.matmul %14, %16, %cst_15 {dimension_numbers = #tpu.dot_dimension_numbers<[1], [0], [0], [1], [0, 0, 1, 1], [], []>} : vector<16x32xbf16>, vector<32x64xbf16>, vector<16x64xf32> -> vector<16x64xf32>
    %c0_16 = arith.constant 0 : index
    %c0_17 = arith.constant 0 : index
    %c32_18 = arith.constant 32 : index
    %18 = vector.load %arg5[%c0_16, %c0_17, %c32_18] : memref<3x1x96xf32, #tpu.memory_space<vmem>>, vector<1x1x64xf32>
    %19 = vector.shape_cast %18 : vector<1x1x64xf32> to vector<1x64xf32>
    %20 = vector.broadcast %19 : vector<1x64xf32> to vector<16x64xf32>
    %21 = arith.addf %17, %20 : vector<16x64xf32>
    %22 = vector.extract_strided_slice %21 {offsets = [0, 0], sizes = [16, 32], strides = [1, 1]} : vector<16x64xf32> to vector<16x32xf32>
    %23 = vector.extract_strided_slice %21 {offsets = [0, 32], sizes = [16, 32], strides = [1, 1]} : vector<16x64xf32> to vector<16x32xf32>
    %cst_19 = arith.constant 0.353553385 : f32
    %24 = vector.broadcast %cst_19 : f32 to vector<16x32xf32>
    %25 = arith.mulf %13, %24 : vector<16x32xf32>
    %cst_20 = arith.constant 0.000000e+00 : f32
    %26 = vector.broadcast %cst_20 : f32 to vector<16x32xf32>
    %27 = vector.extract_strided_slice %25 {offsets = [0, 0], sizes = [16, 8], strides = [1, 1]} : vector<16x32xf32> to vector<16x8xf32>
    %28 = vector.extract_strided_slice %22 {offsets = [0, 0], sizes = [16, 8], strides = [1, 1]} : vector<16x32xf32> to vector<16x8xf32>
    %cst_21 = arith.constant dense<0.000000e+00> : vector<16x16xf32>
    %29 = tpu.matmul %27, %28, %cst_21 {dimension_numbers = #tpu.dot_dimension_numbers<[1], [1], [0], [0], [0, 0, 1, 0], [], []>} : vector<16x8xf32>, vector<16x8xf32>, vector<16x16xf32> -> vector<16x16xf32>
    %cst_22 = arith.constant dense<0xFF800000> : vector<16xf32>
    %30 = vector.multi_reduction <maximumf>, %29, %cst_22 [1] : vector<16x16xf32> to vector<16xf32>
    %31 = vector.shape_cast %30 : vector<16xf32> to vector<16x1xf32>
    %32 = vector.broadcast %31 : vector<16x1xf32> to vector<16x16xf32>
    %33 = arith.subf %29, %32 : vector<16x16xf32>
    %34 = math.exp %33 : vector<16x16xf32>
    %cst_23 = arith.constant dense<0.000000e+00> : vector<16xf32>
    %35 = vector.multi_reduction <add>, %34, %cst_23 [1] : vector<16x16xf32> to vector<16xf32>
    %36 = vector.shape_cast %35 : vector<16xf32> to vector<16x1xf32>
    %37 = tpu.reciprocal %36 {approx = true} : vector<16x1xf32> -> vector<16x1xf32>
    %38 = vector.broadcast %37 : vector<16x1xf32> to vector<16x16xf32>
    %39 = arith.mulf %34, %38 : vector<16x16xf32>
    %40 = vector.extract_strided_slice %23 {offsets = [0, 0], sizes = [16, 8], strides = [1, 1]} : vector<16x32xf32> to vector<16x8xf32>
    %cst_24 = arith.constant dense<0.000000e+00> : vector<16x8xf32>
    %41 = tpu.matmul %39, %40, %cst_24 {dimension_numbers = #tpu.dot_dimension_numbers<[1], [0], [0], [1], [0, 0, 1, 1], [], []>} : vector<16x16xf32>, vector<16x8xf32>, vector<16x8xf32> -> vector<16x8xf32>
    %42 = arith.truncf %41 : vector<16x8xf32> to vector<16x8xbf16>
    %c0_25 = arith.constant 0 : index
    %c0_26 = arith.constant 0 : index
    %c0_27 = arith.constant 0 : index
    %43 = vector.load %arg6[%c0_25, %c0_26, %c0_27] : memref<3x32x32xbf16, #tpu.memory_space<vmem>>, vector<1x8x32xbf16>
    %44 = vector.shape_cast %43 : vector<1x8x32xbf16> to vector<8x32xbf16>
    %cst_28 = arith.constant dense<0.000000e+00> : vector<16x32xf32>
    %45 = tpu.matmul %42, %44, %cst_28 {dimension_numbers = #tpu.dot_dimension_numbers<[1], [0], [0], [1], [0, 0, 1, 1], [], []>} : vector<16x8xbf16>, vector<8x32xbf16>, vector<16x32xf32> -> vector<16x32xf32>
    %46 = arith.addf %26, %45 : vector<16x32xf32>
    %47 = vector.extract_strided_slice %25 {offsets = [0, 8], sizes = [16, 8], strides = [1, 1]} : vector<16x32xf32> to vector<16x8xf32>
    %48 = vector.extract_strided_slice %22 {offsets = [0, 8], sizes = [16, 8], strides = [1, 1]} : vector<16x32xf32> to vector<16x8xf32>
    %cst_29 = arith.constant dense<0.000000e+00> : vector<16x16xf32>
    %49 = tpu.matmul %47, %48, %cst_29 {dimension_numbers = #tpu.dot_dimension_numbers<[1], [1], [0], [0], [0, 0, 1, 0], [], []>} : vector<16x8xf32>, vector<16x8xf32>, vector<16x16xf32> -> vector<16x16xf32>
    %cst_30 = arith.constant dense<0xFF800000> : vector<16xf32>
    %50 = vector.multi_reduction <maximumf>, %49, %cst_30 [1] : vector<16x16xf32> to vector<16xf32>
    %51 = vector.shape_cast %50 : vector<16xf32> to vector<16x1xf32>
    %52 = vector.broadcast %51 : vector<16x1xf32> to vector<16x16xf32>
    %53 = arith.subf %49, %52 : vector<16x16xf32>
    %54 = math.exp %53 : vector<16x16xf32>
    %cst_31 = arith.constant dense<0.000000e+00> : vector<16xf32>
    %55 = vector.multi_reduction <add>, %54, %cst_31 [1] : vector<16x16xf32> to vector<16xf32>
    %56 = vector.shape_cast %55 : vector<16xf32> to vector<16x1xf32>
    %57 = tpu.reciprocal %56 {approx = true} : vector<16x1xf32> -> vector<16x1xf32>
    %58 = vector.broadcast %57 : vector<16x1xf32> to vector<16x16xf32>
    %59 = arith.mulf %54, %58 : vector<16x16xf32>
    %60 = vector.extract_strided_slice %23 {offsets = [0, 8], sizes = [16, 8], strides = [1, 1]} : vector<16x32xf32> to vector<16x8xf32>
    %cst_32 = arith.constant dense<0.000000e+00> : vector<16x8xf32>
    %61 = tpu.matmul %59, %60, %cst_32 {dimension_numbers = #tpu.dot_dimension_numbers<[1], [0], [0], [1], [0, 0, 1, 1], [], []>} : vector<16x16xf32>, vector<16x8xf32>, vector<16x8xf32> -> vector<16x8xf32>
    %62 = arith.truncf %61 : vector<16x8xf32> to vector<16x8xbf16>
    %c0_33 = arith.constant 0 : index
    %c8 = arith.constant 8 : index
    %c0_34 = arith.constant 0 : index
    %63 = vector.load %arg6[%c0_33, %c8, %c0_34] : memref<3x32x32xbf16, #tpu.memory_space<vmem>>, vector<1x8x32xbf16>
    %64 = vector.shape_cast %63 : vector<1x8x32xbf16> to vector<8x32xbf16>
    %cst_35 = arith.constant dense<0.000000e+00> : vector<16x32xf32>
    %65 = tpu.matmul %62, %64, %cst_35 {dimension_numbers = #tpu.dot_dimension_numbers<[1], [0], [0], [1], [0, 0, 1, 1], [], []>} : vector<16x8xbf16>, vector<8x32xbf16>, vector<16x32xf32> -> vector<16x32xf32>
    %66 = arith.addf %46, %65 : vector<16x32xf32>
    %67 = vector.extract_strided_slice %25 {offsets = [0, 16], sizes = [16, 8], strides = [1, 1]} : vector<16x32xf32> to vector<16x8xf32>
    %68 = vector.extract_strided_slice %22 {offsets = [0, 16], sizes = [16, 8], strides = [1, 1]} : vector<16x32xf32> to vector<16x8xf32>
    %cst_36 = arith.constant dense<0.000000e+00> : vector<16x16xf32>
    %69 = tpu.matmul %67, %68, %cst_36 {dimension_numbers = #tpu.dot_dimension_numbers<[1], [1], [0], [0], [0, 0, 1, 0], [], []>} : vector<16x8xf32>, vector<16x8xf32>, vector<16x16xf32> -> vector<16x16xf32>
    %cst_37 = arith.constant dense<0xFF800000> : vector<16xf32>
    %70 = vector.multi_reduction <maximumf>, %69, %cst_37 [1] : vector<16x16xf32> to vector<16xf32>
    %71 = vector.shape_cast %70 : vector<16xf32> to vector<16x1xf32>
    %72 = vector.broadcast %71 : vector<16x1xf32> to vector<16x16xf32>
    %73 = arith.subf %69, %72 : vector<16x16xf32>
    %74 = math.exp %73 : vector<16x16xf32>
    %cst_38 = arith.constant dense<0.000000e+00> : vector<16xf32>
    %75 = vector.multi_reduction <add>, %74, %cst_38 [1] : vector<16x16xf32> to vector<16xf32>
    %76 = vector.shape_cast %75 : vector<16xf32> to vector<16x1xf32>
    %77 = tpu.reciprocal %76 {approx = true} : vector<16x1xf32> -> vector<16x1xf32>
    %78 = vector.broadcast %77 : vector<16x1xf32> to vector<16x16xf32>
    %79 = arith.mulf %74, %78 : vector<16x16xf32>
    %80 = vector.extract_strided_slice %23 {offsets = [0, 16], sizes = [16, 8], strides = [1, 1]} : vector<16x32xf32> to vector<16x8xf32>
    %cst_39 = arith.constant dense<0.000000e+00> : vector<16x8xf32>
    %81 = tpu.matmul %79, %80, %cst_39 {dimension_numbers = #tpu.dot_dimension_numbers<[1], [0], [0], [1], [0, 0, 1, 1], [], []>} : vector<16x16xf32>, vector<16x8xf32>, vector<16x8xf32> -> vector<16x8xf32>
    %82 = arith.truncf %81 : vector<16x8xf32> to vector<16x8xbf16>
    %c0_40 = arith.constant 0 : index
    %c16 = arith.constant 16 : index
    %c0_41 = arith.constant 0 : index
    %83 = vector.load %arg6[%c0_40, %c16, %c0_41] : memref<3x32x32xbf16, #tpu.memory_space<vmem>>, vector<1x8x32xbf16>
    %84 = vector.shape_cast %83 : vector<1x8x32xbf16> to vector<8x32xbf16>
    %cst_42 = arith.constant dense<0.000000e+00> : vector<16x32xf32>
    %85 = tpu.matmul %82, %84, %cst_42 {dimension_numbers = #tpu.dot_dimension_numbers<[1], [0], [0], [1], [0, 0, 1, 1], [], []>} : vector<16x8xbf16>, vector<8x32xbf16>, vector<16x32xf32> -> vector<16x32xf32>
    %86 = arith.addf %66, %85 : vector<16x32xf32>
    %87 = vector.extract_strided_slice %25 {offsets = [0, 24], sizes = [16, 8], strides = [1, 1]} : vector<16x32xf32> to vector<16x8xf32>
    %88 = vector.extract_strided_slice %22 {offsets = [0, 24], sizes = [16, 8], strides = [1, 1]} : vector<16x32xf32> to vector<16x8xf32>
    %cst_43 = arith.constant dense<0.000000e+00> : vector<16x16xf32>
    %89 = tpu.matmul %87, %88, %cst_43 {dimension_numbers = #tpu.dot_dimension_numbers<[1], [1], [0], [0], [0, 0, 1, 0], [], []>} : vector<16x8xf32>, vector<16x8xf32>, vector<16x16xf32> -> vector<16x16xf32>
    %cst_44 = arith.constant dense<0xFF800000> : vector<16xf32>
    %90 = vector.multi_reduction <maximumf>, %89, %cst_44 [1] : vector<16x16xf32> to vector<16xf32>
    %91 = vector.shape_cast %90 : vector<16xf32> to vector<16x1xf32>
    %92 = vector.broadcast %91 : vector<16x1xf32> to vector<16x16xf32>
    %93 = arith.subf %89, %92 : vector<16x16xf32>
    %94 = math.exp %93 : vector<16x16xf32>
    %cst_45 = arith.constant dense<0.000000e+00> : vector<16xf32>
    %95 = vector.multi_reduction <add>, %94, %cst_45 [1] : vector<16x16xf32> to vector<16xf32>
    %96 = vector.shape_cast %95 : vector<16xf32> to vector<16x1xf32>
    %97 = tpu.reciprocal %96 {approx = true} : vector<16x1xf32> -> vector<16x1xf32>
    %98 = vector.broadcast %97 : vector<16x1xf32> to vector<16x16xf32>
    %99 = arith.mulf %94, %98 : vector<16x16xf32>
    %100 = vector.extract_strided_slice %23 {offsets = [0, 24], sizes = [16, 8], strides = [1, 1]} : vector<16x32xf32> to vector<16x8xf32>
    %cst_46 = arith.constant dense<0.000000e+00> : vector<16x8xf32>
    %101 = tpu.matmul %99, %100, %cst_46 {dimension_numbers = #tpu.dot_dimension_numbers<[1], [0], [0], [1], [0, 0, 1, 1], [], []>} : vector<16x16xf32>, vector<16x8xf32>, vector<16x8xf32> -> vector<16x8xf32>
    %102 = arith.truncf %101 : vector<16x8xf32> to vector<16x8xbf16>
    %c0_47 = arith.constant 0 : index
    %c24 = arith.constant 24 : index
    %c0_48 = arith.constant 0 : index
    %103 = vector.load %arg6[%c0_47, %c24, %c0_48] : memref<3x32x32xbf16, #tpu.memory_space<vmem>>, vector<1x8x32xbf16>
    %104 = vector.shape_cast %103 : vector<1x8x32xbf16> to vector<8x32xbf16>
    %cst_49 = arith.constant dense<0.000000e+00> : vector<16x32xf32>
    %105 = tpu.matmul %102, %104, %cst_49 {dimension_numbers = #tpu.dot_dimension_numbers<[1], [0], [0], [1], [0, 0, 1, 1], [], []>} : vector<16x8xbf16>, vector<8x32xbf16>, vector<16x32xf32> -> vector<16x32xf32>
    %106 = arith.addf %86, %105 : vector<16x32xf32>
    %c0_50 = arith.constant 0 : index
    %c0_51 = arith.constant 0 : index
    %c0_52 = arith.constant 0 : index
    %107 = vector.load %arg7[%c0_50, %c0_51, %c0_52] : memref<3x1x32xf32, #tpu.memory_space<vmem>>, vector<1x1x32xf32>
    %108 = vector.shape_cast %107 : vector<1x1x32xf32> to vector<1x32xf32>
    %109 = vector.broadcast %108 : vector<1x32xf32> to vector<16x32xf32>
    %110 = arith.addf %106, %109 : vector<16x32xf32>
    %111 = arith.addf %3, %110 : vector<16x32xf32>
    %c0_53 = arith.constant 0 : index
    %c0_54 = arith.constant 0 : index
    %c0_55 = arith.constant 0 : index
    %112 = vector.load %arg16[%c0_53, %c0_54, %c0_55] : memref<3x1x32xf32, #tpu.memory_space<vmem>>, vector<1x1x32xf32>
    %113 = vector.shape_cast %112 : vector<1x1x32xf32> to vector<1x32xf32>
    %c0_56 = arith.constant 0 : index
    %c0_57 = arith.constant 0 : index
    %c0_58 = arith.constant 0 : index
    %114 = vector.load %arg17[%c0_56, %c0_57, %c0_58] : memref<3x1x32xf32, #tpu.memory_space<vmem>>, vector<1x1x32xf32>
    %115 = vector.shape_cast %114 : vector<1x1x32xf32> to vector<1x32xf32>
    %cst_59 = arith.constant dense<0.000000e+00> : vector<16xf32>
    %116 = vector.multi_reduction <add>, %111, %cst_59 [1] : vector<16x32xf32> to vector<16xf32>
    %117 = vector.shape_cast %116 : vector<16xf32> to vector<16x1xf32>
    %cst_60 = arith.constant 3.200000e+01 : f32
    %118 = vector.broadcast %cst_60 : f32 to vector<16x1xf32>
    %119 = arith.divf %117, %118 : vector<16x1xf32>
    %120 = vector.broadcast %119 : vector<16x1xf32> to vector<16x32xf32>
    %121 = arith.subf %111, %120 : vector<16x32xf32>
    %122 = arith.mulf %121, %121 : vector<16x32xf32>
    %cst_61 = arith.constant dense<0.000000e+00> : vector<16xf32>
    %123 = vector.multi_reduction <add>, %122, %cst_61 [1] : vector<16x32xf32> to vector<16xf32>
    %124 = vector.shape_cast %123 : vector<16xf32> to vector<16x1xf32>
    %cst_62 = arith.constant 3.200000e+01 : f32
    %125 = vector.broadcast %cst_62 : f32 to vector<16x1xf32>
    %126 = arith.divf %124, %125 : vector<16x1xf32>
    %127 = vector.broadcast %119 : vector<16x1xf32> to vector<16x32xf32>
    %128 = arith.subf %111, %127 : vector<16x32xf32>
    %cst_63 = arith.constant 9.99999974E-6 : f32
    %129 = vector.broadcast %cst_63 : f32 to vector<16x1xf32>
    %130 = arith.addf %126, %129 : vector<16x1xf32>
    %131 = math.rsqrt %130 : vector<16x1xf32>
    %132 = vector.broadcast %131 : vector<16x1xf32> to vector<16x32xf32>
    %133 = arith.mulf %128, %132 : vector<16x32xf32>
    %134 = vector.broadcast %113 : vector<1x32xf32> to vector<16x32xf32>
    %135 = arith.mulf %133, %134 : vector<16x32xf32>
    %136 = vector.broadcast %115 : vector<1x32xf32> to vector<16x32xf32>
    %137 = arith.addf %135, %136 : vector<16x32xf32>
    %138 = arith.truncf %137 : vector<16x32xf32> to vector<16x32xbf16>
    %c0_64 = arith.constant 0 : index
    %c0_65 = arith.constant 0 : index
    %c0_66 = arith.constant 0 : index
    %139 = vector.load %arg8[%c0_64, %c0_65, %c0_66] : memref<3x32x96xbf16, #tpu.memory_space<vmem>>, vector<1x32x32xbf16>
    %140 = vector.shape_cast %139 : vector<1x32x32xbf16> to vector<32x32xbf16>
    %cst_67 = arith.constant dense<0.000000e+00> : vector<16x32xf32>
    %141 = tpu.matmul %138, %140, %cst_67 {dimension_numbers = #tpu.dot_dimension_numbers<[1], [0], [0], [1], [0, 0, 1, 1], [], []>} : vector<16x32xbf16>, vector<32x32xbf16>, vector<16x32xf32> -> vector<16x32xf32>
    %c0_68 = arith.constant 0 : index
    %c0_69 = arith.constant 0 : index
    %c0_70 = arith.constant 0 : index
    %142 = vector.load %arg9[%c0_68, %c0_69, %c0_70] : memref<3x1x96xf32, #tpu.memory_space<vmem>>, vector<1x1x32xf32>
    %143 = vector.shape_cast %142 : vector<1x1x32xf32> to vector<1x32xf32>
    %144 = vector.broadcast %143 : vector<1x32xf32> to vector<16x32xf32>
    %145 = arith.addf %141, %144 : vector<16x32xf32>
    %146 = arith.truncf %5 : vector<24x32xf32> to vector<24x32xbf16>
    %c0_71 = arith.constant 0 : index
    %c0_72 = arith.constant 0 : index
    %c32_73 = arith.constant 32 : index
    %147 = vector.load %arg8[%c0_71, %c0_72, %c32_73] : memref<3x32x96xbf16, #tpu.memory_space<vmem>>, vector<1x32x64xbf16>
    %148 = vector.shape_cast %147 : vector<1x32x64xbf16> to vector<32x64xbf16>
    %cst_74 = arith.constant dense<0.000000e+00> : vector<24x64xf32>
    %149 = tpu.matmul %146, %148, %cst_74 {dimension_numbers = #tpu.dot_dimension_numbers<[1], [0], [0], [1], [0, 0, 1, 1], [], []>} : vector<24x32xbf16>, vector<32x64xbf16>, vector<24x64xf32> -> vector<24x64xf32>
    %c0_75 = arith.constant 0 : index
    %c0_76 = arith.constant 0 : index
    %c32_77 = arith.constant 32 : index
    %150 = vector.load %arg9[%c0_75, %c0_76, %c32_77] : memref<3x1x96xf32, #tpu.memory_space<vmem>>, vector<1x1x64xf32>
    %151 = vector.shape_cast %150 : vector<1x1x64xf32> to vector<1x64xf32>
    %152 = vector.broadcast %151 : vector<1x64xf32> to vector<24x64xf32>
    %153 = arith.addf %149, %152 : vector<24x64xf32>
    %154 = vector.extract_strided_slice %153 {offsets = [0, 0], sizes = [24, 32], strides = [1, 1]} : vector<24x64xf32> to vector<24x32xf32>
    %155 = vector.extract_strided_slice %153 {offsets = [0, 32], sizes = [24, 32], strides = [1, 1]} : vector<24x64xf32> to vector<24x32xf32>
    %cst_78 = arith.constant 0.353553385 : f32
    %156 = vector.broadcast %cst_78 : f32 to vector<16x32xf32>
    %157 = arith.mulf %145, %156 : vector<16x32xf32>
    %cst_79 = arith.constant 0.000000e+00 : f32
    %158 = vector.broadcast %cst_79 : f32 to vector<16x32xf32>
    %159 = vector.extract_strided_slice %157 {offsets = [0, 0], sizes = [16, 8], strides = [1, 1]} : vector<16x32xf32> to vector<16x8xf32>
    %160 = vector.extract_strided_slice %154 {offsets = [0, 0], sizes = [24, 8], strides = [1, 1]} : vector<24x32xf32> to vector<24x8xf32>
    %cst_80 = arith.constant dense<0.000000e+00> : vector<16x24xf32>
    %161 = tpu.matmul %159, %160, %cst_80 {dimension_numbers = #tpu.dot_dimension_numbers<[1], [1], [0], [0], [0, 0, 1, 0], [], []>} : vector<16x8xf32>, vector<24x8xf32>, vector<16x24xf32> -> vector<16x24xf32>
    %cst_81 = arith.constant dense<0xFF800000> : vector<16xf32>
    %162 = vector.multi_reduction <maximumf>, %161, %cst_81 [1] : vector<16x24xf32> to vector<16xf32>
    %163 = vector.shape_cast %162 : vector<16xf32> to vector<16x1xf32>
    %164 = vector.broadcast %163 : vector<16x1xf32> to vector<16x24xf32>
    %165 = arith.subf %161, %164 : vector<16x24xf32>
    %166 = math.exp %165 : vector<16x24xf32>
    %cst_82 = arith.constant dense<0.000000e+00> : vector<16xf32>
    %167 = vector.multi_reduction <add>, %166, %cst_82 [1] : vector<16x24xf32> to vector<16xf32>
    %168 = vector.shape_cast %167 : vector<16xf32> to vector<16x1xf32>
    %169 = tpu.reciprocal %168 {approx = true} : vector<16x1xf32> -> vector<16x1xf32>
    %170 = vector.broadcast %169 : vector<16x1xf32> to vector<16x24xf32>
    %171 = arith.mulf %166, %170 : vector<16x24xf32>
    %172 = vector.extract_strided_slice %155 {offsets = [0, 0], sizes = [24, 8], strides = [1, 1]} : vector<24x32xf32> to vector<24x8xf32>
    %cst_83 = arith.constant dense<0.000000e+00> : vector<16x8xf32>
    %173 = tpu.matmul %171, %172, %cst_83 {dimension_numbers = #tpu.dot_dimension_numbers<[1], [0], [0], [1], [0, 0, 1, 1], [], []>} : vector<16x24xf32>, vector<24x8xf32>, vector<16x8xf32> -> vector<16x8xf32>
    %174 = arith.truncf %173 : vector<16x8xf32> to vector<16x8xbf16>
    %c0_84 = arith.constant 0 : index
    %c0_85 = arith.constant 0 : index
    %c0_86 = arith.constant 0 : index
    %175 = vector.load %arg10[%c0_84, %c0_85, %c0_86] : memref<3x32x32xbf16, #tpu.memory_space<vmem>>, vector<1x8x32xbf16>
    %176 = vector.shape_cast %175 : vector<1x8x32xbf16> to vector<8x32xbf16>
    %cst_87 = arith.constant dense<0.000000e+00> : vector<16x32xf32>
    %177 = tpu.matmul %174, %176, %cst_87 {dimension_numbers = #tpu.dot_dimension_numbers<[1], [0], [0], [1], [0, 0, 1, 1], [], []>} : vector<16x8xbf16>, vector<8x32xbf16>, vector<16x32xf32> -> vector<16x32xf32>
    %178 = arith.addf %158, %177 : vector<16x32xf32>
    %179 = vector.extract_strided_slice %157 {offsets = [0, 8], sizes = [16, 8], strides = [1, 1]} : vector<16x32xf32> to vector<16x8xf32>
    %180 = vector.extract_strided_slice %154 {offsets = [0, 8], sizes = [24, 8], strides = [1, 1]} : vector<24x32xf32> to vector<24x8xf32>
    %cst_88 = arith.constant dense<0.000000e+00> : vector<16x24xf32>
    %181 = tpu.matmul %179, %180, %cst_88 {dimension_numbers = #tpu.dot_dimension_numbers<[1], [1], [0], [0], [0, 0, 1, 0], [], []>} : vector<16x8xf32>, vector<24x8xf32>, vector<16x24xf32> -> vector<16x24xf32>
    %cst_89 = arith.constant dense<0xFF800000> : vector<16xf32>
    %182 = vector.multi_reduction <maximumf>, %181, %cst_89 [1] : vector<16x24xf32> to vector<16xf32>
    %183 = vector.shape_cast %182 : vector<16xf32> to vector<16x1xf32>
    %184 = vector.broadcast %183 : vector<16x1xf32> to vector<16x24xf32>
    %185 = arith.subf %181, %184 : vector<16x24xf32>
    %186 = math.exp %185 : vector<16x24xf32>
    %cst_90 = arith.constant dense<0.000000e+00> : vector<16xf32>
    %187 = vector.multi_reduction <add>, %186, %cst_90 [1] : vector<16x24xf32> to vector<16xf32>
    %188 = vector.shape_cast %187 : vector<16xf32> to vector<16x1xf32>
    %189 = tpu.reciprocal %188 {approx = true} : vector<16x1xf32> -> vector<16x1xf32>
    %190 = vector.broadcast %189 : vector<16x1xf32> to vector<16x24xf32>
    %191 = arith.mulf %186, %190 : vector<16x24xf32>
    %192 = vector.extract_strided_slice %155 {offsets = [0, 8], sizes = [24, 8], strides = [1, 1]} : vector<24x32xf32> to vector<24x8xf32>
    %cst_91 = arith.constant dense<0.000000e+00> : vector<16x8xf32>
    %193 = tpu.matmul %191, %192, %cst_91 {dimension_numbers = #tpu.dot_dimension_numbers<[1], [0], [0], [1], [0, 0, 1, 1], [], []>} : vector<16x24xf32>, vector<24x8xf32>, vector<16x8xf32> -> vector<16x8xf32>
    %194 = arith.truncf %193 : vector<16x8xf32> to vector<16x8xbf16>
    %c0_92 = arith.constant 0 : index
    %c8_93 = arith.constant 8 : index
    %c0_94 = arith.constant 0 : index
    %195 = vector.load %arg10[%c0_92, %c8_93, %c0_94] : memref<3x32x32xbf16, #tpu.memory_space<vmem>>, vector<1x8x32xbf16>
    %196 = vector.shape_cast %195 : vector<1x8x32xbf16> to vector<8x32xbf16>
    %cst_95 = arith.constant dense<0.000000e+00> : vector<16x32xf32>
    %197 = tpu.matmul %194, %196, %cst_95 {dimension_numbers = #tpu.dot_dimension_numbers<[1], [0], [0], [1], [0, 0, 1, 1], [], []>} : vector<16x8xbf16>, vector<8x32xbf16>, vector<16x32xf32> -> vector<16x32xf32>
    %198 = arith.addf %178, %197 : vector<16x32xf32>
    %199 = vector.extract_strided_slice %157 {offsets = [0, 16], sizes = [16, 8], strides = [1, 1]} : vector<16x32xf32> to vector<16x8xf32>
    %200 = vector.extract_strided_slice %154 {offsets = [0, 16], sizes = [24, 8], strides = [1, 1]} : vector<24x32xf32> to vector<24x8xf32>
    %cst_96 = arith.constant dense<0.000000e+00> : vector<16x24xf32>
    %201 = tpu.matmul %199, %200, %cst_96 {dimension_numbers = #tpu.dot_dimension_numbers<[1], [1], [0], [0], [0, 0, 1, 0], [], []>} : vector<16x8xf32>, vector<24x8xf32>, vector<16x24xf32> -> vector<16x24xf32>
    %cst_97 = arith.constant dense<0xFF800000> : vector<16xf32>
    %202 = vector.multi_reduction <maximumf>, %201, %cst_97 [1] : vector<16x24xf32> to vector<16xf32>
    %203 = vector.shape_cast %202 : vector<16xf32> to vector<16x1xf32>
    %204 = vector.broadcast %203 : vector<16x1xf32> to vector<16x24xf32>
    %205 = arith.subf %201, %204 : vector<16x24xf32>
    %206 = math.exp %205 : vector<16x24xf32>
    %cst_98 = arith.constant dense<0.000000e+00> : vector<16xf32>
    %207 = vector.multi_reduction <add>, %206, %cst_98 [1] : vector<16x24xf32> to vector<16xf32>
    %208 = vector.shape_cast %207 : vector<16xf32> to vector<16x1xf32>
    %209 = tpu.reciprocal %208 {approx = true} : vector<16x1xf32> -> vector<16x1xf32>
    %210 = vector.broadcast %209 : vector<16x1xf32> to vector<16x24xf32>
    %211 = arith.mulf %206, %210 : vector<16x24xf32>
    %212 = vector.extract_strided_slice %155 {offsets = [0, 16], sizes = [24, 8], strides = [1, 1]} : vector<24x32xf32> to vector<24x8xf32>
    %cst_99 = arith.constant dense<0.000000e+00> : vector<16x8xf32>
    %213 = tpu.matmul %211, %212, %cst_99 {dimension_numbers = #tpu.dot_dimension_numbers<[1], [0], [0], [1], [0, 0, 1, 1], [], []>} : vector<16x24xf32>, vector<24x8xf32>, vector<16x8xf32> -> vector<16x8xf32>
    %214 = arith.truncf %213 : vector<16x8xf32> to vector<16x8xbf16>
    %c0_100 = arith.constant 0 : index
    %c16_101 = arith.constant 16 : index
    %c0_102 = arith.constant 0 : index
    %215 = vector.load %arg10[%c0_100, %c16_101, %c0_102] : memref<3x32x32xbf16, #tpu.memory_space<vmem>>, vector<1x8x32xbf16>
    %216 = vector.shape_cast %215 : vector<1x8x32xbf16> to vector<8x32xbf16>
    %cst_103 = arith.constant dense<0.000000e+00> : vector<16x32xf32>
    %217 = tpu.matmul %214, %216, %cst_103 {dimension_numbers = #tpu.dot_dimension_numbers<[1], [0], [0], [1], [0, 0, 1, 1], [], []>} : vector<16x8xbf16>, vector<8x32xbf16>, vector<16x32xf32> -> vector<16x32xf32>
    %218 = arith.addf %198, %217 : vector<16x32xf32>
    %219 = vector.extract_strided_slice %157 {offsets = [0, 24], sizes = [16, 8], strides = [1, 1]} : vector<16x32xf32> to vector<16x8xf32>
    %220 = vector.extract_strided_slice %154 {offsets = [0, 24], sizes = [24, 8], strides = [1, 1]} : vector<24x32xf32> to vector<24x8xf32>
    %cst_104 = arith.constant dense<0.000000e+00> : vector<16x24xf32>
    %221 = tpu.matmul %219, %220, %cst_104 {dimension_numbers = #tpu.dot_dimension_numbers<[1], [1], [0], [0], [0, 0, 1, 0], [], []>} : vector<16x8xf32>, vector<24x8xf32>, vector<16x24xf32> -> vector<16x24xf32>
    %cst_105 = arith.constant dense<0xFF800000> : vector<16xf32>
    %222 = vector.multi_reduction <maximumf>, %221, %cst_105 [1] : vector<16x24xf32> to vector<16xf32>
    %223 = vector.shape_cast %222 : vector<16xf32> to vector<16x1xf32>
    %224 = vector.broadcast %223 : vector<16x1xf32> to vector<16x24xf32>
    %225 = arith.subf %221, %224 : vector<16x24xf32>
    %226 = math.exp %225 : vector<16x24xf32>
    %cst_106 = arith.constant dense<0.000000e+00> : vector<16xf32>
    %227 = vector.multi_reduction <add>, %226, %cst_106 [1] : vector<16x24xf32> to vector<16xf32>
    %228 = vector.shape_cast %227 : vector<16xf32> to vector<16x1xf32>
    %229 = tpu.reciprocal %228 {approx = true} : vector<16x1xf32> -> vector<16x1xf32>
    %230 = vector.broadcast %229 : vector<16x1xf32> to vector<16x24xf32>
    %231 = arith.mulf %226, %230 : vector<16x24xf32>
    %232 = vector.extract_strided_slice %155 {offsets = [0, 24], sizes = [24, 8], strides = [1, 1]} : vector<24x32xf32> to vector<24x8xf32>
    %cst_107 = arith.constant dense<0.000000e+00> : vector<16x8xf32>
    %233 = tpu.matmul %231, %232, %cst_107 {dimension_numbers = #tpu.dot_dimension_numbers<[1], [0], [0], [1], [0, 0, 1, 1], [], []>} : vector<16x24xf32>, vector<24x8xf32>, vector<16x8xf32> -> vector<16x8xf32>
    %234 = arith.truncf %233 : vector<16x8xf32> to vector<16x8xbf16>
    %c0_108 = arith.constant 0 : index
    %c24_109 = arith.constant 24 : index
    %c0_110 = arith.constant 0 : index
    %235 = vector.load %arg10[%c0_108, %c24_109, %c0_110] : memref<3x32x32xbf16, #tpu.memory_space<vmem>>, vector<1x8x32xbf16>
    %236 = vector.shape_cast %235 : vector<1x8x32xbf16> to vector<8x32xbf16>
    %cst_111 = arith.constant dense<0.000000e+00> : vector<16x32xf32>
    %237 = tpu.matmul %234, %236, %cst_111 {dimension_numbers = #tpu.dot_dimension_numbers<[1], [0], [0], [1], [0, 0, 1, 1], [], []>} : vector<16x8xbf16>, vector<8x32xbf16>, vector<16x32xf32> -> vector<16x32xf32>
    %238 = arith.addf %218, %237 : vector<16x32xf32>
    %c0_112 = arith.constant 0 : index
    %c0_113 = arith.constant 0 : index
    %c0_114 = arith.constant 0 : index
    %239 = vector.load %arg11[%c0_112, %c0_113, %c0_114] : memref<3x1x32xf32, #tpu.memory_space<vmem>>, vector<1x1x32xf32>
    %240 = vector.shape_cast %239 : vector<1x1x32xf32> to vector<1x32xf32>
    %241 = vector.broadcast %240 : vector<1x32xf32> to vector<16x32xf32>
    %242 = arith.addf %238, %241 : vector<16x32xf32>
    %243 = arith.addf %137, %242 : vector<16x32xf32>
    %c0_115 = arith.constant 0 : index
    %c0_116 = arith.constant 0 : index
    %c0_117 = arith.constant 0 : index
    %244 = vector.load %arg18[%c0_115, %c0_116, %c0_117] : memref<3x1x32xf32, #tpu.memory_space<vmem>>, vector<1x1x32xf32>
    %245 = vector.shape_cast %244 : vector<1x1x32xf32> to vector<1x32xf32>
    %c0_118 = arith.constant 0 : index
    %c0_119 = arith.constant 0 : index
    %c0_120 = arith.constant 0 : index
    %246 = vector.load %arg19[%c0_118, %c0_119, %c0_120] : memref<3x1x32xf32, #tpu.memory_space<vmem>>, vector<1x1x32xf32>
    %247 = vector.shape_cast %246 : vector<1x1x32xf32> to vector<1x32xf32>
    %cst_121 = arith.constant dense<0.000000e+00> : vector<16xf32>
    %248 = vector.multi_reduction <add>, %243, %cst_121 [1] : vector<16x32xf32> to vector<16xf32>
    %249 = vector.shape_cast %248 : vector<16xf32> to vector<16x1xf32>
    %cst_122 = arith.constant 3.200000e+01 : f32
    %250 = vector.broadcast %cst_122 : f32 to vector<16x1xf32>
    %251 = arith.divf %249, %250 : vector<16x1xf32>
    %252 = vector.broadcast %251 : vector<16x1xf32> to vector<16x32xf32>
    %253 = arith.subf %243, %252 : vector<16x32xf32>
    %254 = arith.mulf %253, %253 : vector<16x32xf32>
    %cst_123 = arith.constant dense<0.000000e+00> : vector<16xf32>
    %255 = vector.multi_reduction <add>, %254, %cst_123 [1] : vector<16x32xf32> to vector<16xf32>
    %256 = vector.shape_cast %255 : vector<16xf32> to vector<16x1xf32>
    %cst_124 = arith.constant 3.200000e+01 : f32
    %257 = vector.broadcast %cst_124 : f32 to vector<16x1xf32>
    %258 = arith.divf %256, %257 : vector<16x1xf32>
    %259 = vector.broadcast %251 : vector<16x1xf32> to vector<16x32xf32>
    %260 = arith.subf %243, %259 : vector<16x32xf32>
    %cst_125 = arith.constant 9.99999974E-6 : f32
    %261 = vector.broadcast %cst_125 : f32 to vector<16x1xf32>
    %262 = arith.addf %258, %261 : vector<16x1xf32>
    %263 = math.rsqrt %262 : vector<16x1xf32>
    %264 = vector.broadcast %263 : vector<16x1xf32> to vector<16x32xf32>
    %265 = arith.mulf %260, %264 : vector<16x32xf32>
    %266 = vector.broadcast %245 : vector<1x32xf32> to vector<16x32xf32>
    %267 = arith.mulf %265, %266 : vector<16x32xf32>
    %268 = vector.broadcast %247 : vector<1x32xf32> to vector<16x32xf32>
    %269 = arith.addf %267, %268 : vector<16x32xf32>
    %270 = arith.truncf %269 : vector<16x32xf32> to vector<16x32xbf16>
    %c0_126 = arith.constant 0 : index
    %c0_127 = arith.constant 0 : index
    %c0_128 = arith.constant 0 : index
    %271 = vector.load %arg12[%c0_126, %c0_127, %c0_128] : memref<3x32x2048xbf16, #tpu.memory_space<vmem>>, vector<1x32x2048xbf16>
    %272 = vector.shape_cast %271 : vector<1x32x2048xbf16> to vector<32x2048xbf16>
    %cst_129 = arith.constant dense<0.000000e+00> : vector<16x2048xf32>
    %273 = tpu.matmul %270, %272, %cst_129 {dimension_numbers = #tpu.dot_dimension_numbers<[1], [0], [0], [1], [0, 0, 1, 1], [], []>} : vector<16x32xbf16>, vector<32x2048xbf16>, vector<16x2048xf32> -> vector<16x2048xf32>
    %c0_130 = arith.constant 0 : index
    %c0_131 = arith.constant 0 : index
    %c0_132 = arith.constant 0 : index
    %274 = vector.load %arg13[%c0_130, %c0_131, %c0_132] : memref<3x1x2048xf32, #tpu.memory_space<vmem>>, vector<1x1x2048xf32>
    %275 = vector.shape_cast %274 : vector<1x1x2048xf32> to vector<1x2048xf32>
    %276 = vector.broadcast %275 : vector<1x2048xf32> to vector<16x2048xf32>
    %277 = arith.addf %273, %276 : vector<16x2048xf32>
    %cst_133 = arith.constant 0.000000e+00 : f32
    %278 = vector.broadcast %cst_133 : f32 to vector<16x2048xf32>
    %279 = arith.maximumf %277, %278 : vector<16x2048xf32>
    %280 = arith.truncf %279 : vector<16x2048xf32> to vector<16x2048xbf16>
    %c0_134 = arith.constant 0 : index
    %c0_135 = arith.constant 0 : index
    %c0_136 = arith.constant 0 : index
    %281 = vector.load %arg14[%c0_134, %c0_135, %c0_136] : memref<3x2048x32xbf16, #tpu.memory_space<vmem>>, vector<1x2048x32xbf16>
    %282 = vector.shape_cast %281 : vector<1x2048x32xbf16> to vector<2048x32xbf16>
    %cst_137 = arith.constant dense<0.000000e+00> : vector<16x32xf32>
    %283 = tpu.matmul %280, %282, %cst_137 {dimension_numbers = #tpu.dot_dimension_numbers<[1], [0], [0], [1], [0, 0, 1, 1], [], []>} : vector<16x2048xbf16>, vector<2048x32xbf16>, vector<16x32xf32> -> vector<16x32xf32>
    %c0_138 = arith.constant 0 : index
    %c0_139 = arith.constant 0 : index
    %c0_140 = arith.constant 0 : index
    %284 = vector.load %arg15[%c0_138, %c0_139, %c0_140] : memref<3x1x32xf32, #tpu.memory_space<vmem>>, vector<1x1x32xf32>
    %285 = vector.shape_cast %284 : vector<1x1x32xf32> to vector<1x32xf32>
    %286 = vector.broadcast %285 : vector<1x32xf32> to vector<16x32xf32>
    %287 = arith.addf %283, %286 : vector<16x32xf32>
    %288 = arith.addf %269, %287 : vector<16x32xf32>
    %c0_141 = arith.constant 0 : index
    %c0_142 = arith.constant 0 : index
    %c0_143 = arith.constant 0 : index
    %289 = vector.load %arg20[%c0_141, %c0_142, %c0_143] : memref<3x1x32xf32, #tpu.memory_space<vmem>>, vector<1x1x32xf32>
    %290 = vector.shape_cast %289 : vector<1x1x32xf32> to vector<1x32xf32>
    %c0_144 = arith.constant 0 : index
    %c0_145 = arith.constant 0 : index
    %c0_146 = arith.constant 0 : index
    %291 = vector.load %arg21[%c0_144, %c0_145, %c0_146] : memref<3x1x32xf32, #tpu.memory_space<vmem>>, vector<1x1x32xf32>
    %292 = vector.shape_cast %291 : vector<1x1x32xf32> to vector<1x32xf32>
    %cst_147 = arith.constant dense<0.000000e+00> : vector<16xf32>
    %293 = vector.multi_reduction <add>, %288, %cst_147 [1] : vector<16x32xf32> to vector<16xf32>
    %294 = vector.shape_cast %293 : vector<16xf32> to vector<16x1xf32>
    %cst_148 = arith.constant 3.200000e+01 : f32
    %295 = vector.broadcast %cst_148 : f32 to vector<16x1xf32>
    %296 = arith.divf %294, %295 : vector<16x1xf32>
    %297 = vector.broadcast %296 : vector<16x1xf32> to vector<16x32xf32>
    %298 = arith.subf %288, %297 : vector<16x32xf32>
    %299 = arith.mulf %298, %298 : vector<16x32xf32>
    %cst_149 = arith.constant dense<0.000000e+00> : vector<16xf32>
    %300 = vector.multi_reduction <add>, %299, %cst_149 [1] : vector<16x32xf32> to vector<16xf32>
    %301 = vector.shape_cast %300 : vector<16xf32> to vector<16x1xf32>
    %cst_150 = arith.constant 3.200000e+01 : f32
    %302 = vector.broadcast %cst_150 : f32 to vector<16x1xf32>
    %303 = arith.divf %301, %302 : vector<16x1xf32>
    %304 = vector.broadcast %296 : vector<16x1xf32> to vector<16x32xf32>
    %305 = arith.subf %288, %304 : vector<16x32xf32>
    %cst_151 = arith.constant 9.99999974E-6 : f32
    %306 = vector.broadcast %cst_151 : f32 to vector<16x1xf32>
    %307 = arith.addf %303, %306 : vector<16x1xf32>
    %308 = math.rsqrt %307 : vector<16x1xf32>
    %309 = vector.broadcast %308 : vector<16x1xf32> to vector<16x32xf32>
    %310 = arith.mulf %305, %309 : vector<16x32xf32>
    %311 = vector.broadcast %290 : vector<1x32xf32> to vector<16x32xf32>
    %312 = arith.mulf %310, %311 : vector<16x32xf32>
    %313 = vector.broadcast %292 : vector<1x32xf32> to vector<16x32xf32>
    %314 = arith.addf %312, %313 : vector<16x32xf32>
    %315 = arith.truncf %314 : vector<16x32xf32> to vector<16x32xbf16>
    %c1 = arith.constant 1 : index
    %c0_152 = arith.constant 0 : index
    %c0_153 = arith.constant 0 : index
    %316 = vector.load %arg4[%c1, %c0_152, %c0_153] : memref<3x32x96xbf16, #tpu.memory_space<vmem>>, vector<1x32x32xbf16>
    %317 = vector.shape_cast %316 : vector<1x32x32xbf16> to vector<32x32xbf16>
    %cst_154 = arith.constant dense<0.000000e+00> : vector<16x32xf32>
    %318 = tpu.matmul %315, %317, %cst_154 {dimension_numbers = #tpu.dot_dimension_numbers<[1], [0], [0], [1], [0, 0, 1, 1], [], []>} : vector<16x32xbf16>, vector<32x32xbf16>, vector<16x32xf32> -> vector<16x32xf32>
    %c1_155 = arith.constant 1 : index
    %c0_156 = arith.constant 0 : index
    %c0_157 = arith.constant 0 : index
    %319 = vector.load %arg5[%c1_155, %c0_156, %c0_157] : memref<3x1x96xf32, #tpu.memory_space<vmem>>, vector<1x1x32xf32>
    %320 = vector.shape_cast %319 : vector<1x1x32xf32> to vector<1x32xf32>
    %321 = vector.broadcast %320 : vector<1x32xf32> to vector<16x32xf32>
    %322 = arith.addf %318, %321 : vector<16x32xf32>
    %323 = arith.truncf %314 : vector<16x32xf32> to vector<16x32xbf16>
    %c1_158 = arith.constant 1 : index
    %c0_159 = arith.constant 0 : index
    %c32_160 = arith.constant 32 : index
    %324 = vector.load %arg4[%c1_158, %c0_159, %c32_160] : memref<3x32x96xbf16, #tpu.memory_space<vmem>>, vector<1x32x64xbf16>
    %325 = vector.shape_cast %324 : vector<1x32x64xbf16> to vector<32x64xbf16>
    %cst_161 = arith.constant dense<0.000000e+00> : vector<16x64xf32>
    %326 = tpu.matmul %323, %325, %cst_161 {dimension_numbers = #tpu.dot_dimension_numbers<[1], [0], [0], [1], [0, 0, 1, 1], [], []>} : vector<16x32xbf16>, vector<32x64xbf16>, vector<16x64xf32> -> vector<16x64xf32>
    %c1_162 = arith.constant 1 : index
    %c0_163 = arith.constant 0 : index
    %c32_164 = arith.constant 32 : index
    %327 = vector.load %arg5[%c1_162, %c0_163, %c32_164] : memref<3x1x96xf32, #tpu.memory_space<vmem>>, vector<1x1x64xf32>
    %328 = vector.shape_cast %327 : vector<1x1x64xf32> to vector<1x64xf32>
    %329 = vector.broadcast %328 : vector<1x64xf32> to vector<16x64xf32>
    %330 = arith.addf %326, %329 : vector<16x64xf32>
    %331 = vector.extract_strided_slice %330 {offsets = [0, 0], sizes = [16, 32], strides = [1, 1]} : vector<16x64xf32> to vector<16x32xf32>
    %332 = vector.extract_strided_slice %330 {offsets = [0, 32], sizes = [16, 32], strides = [1, 1]} : vector<16x64xf32> to vector<16x32xf32>
    %cst_165 = arith.constant 0.353553385 : f32
    %333 = vector.broadcast %cst_165 : f32 to vector<16x32xf32>
    %334 = arith.mulf %322, %333 : vector<16x32xf32>
    %cst_166 = arith.constant 0.000000e+00 : f32
    %335 = vector.broadcast %cst_166 : f32 to vector<16x32xf32>
    %336 = vector.extract_strided_slice %334 {offsets = [0, 0], sizes = [16, 8], strides = [1, 1]} : vector<16x32xf32> to vector<16x8xf32>
    %337 = vector.extract_strided_slice %331 {offsets = [0, 0], sizes = [16, 8], strides = [1, 1]} : vector<16x32xf32> to vector<16x8xf32>
    %cst_167 = arith.constant dense<0.000000e+00> : vector<16x16xf32>
    %338 = tpu.matmul %336, %337, %cst_167 {dimension_numbers = #tpu.dot_dimension_numbers<[1], [1], [0], [0], [0, 0, 1, 0], [], []>} : vector<16x8xf32>, vector<16x8xf32>, vector<16x16xf32> -> vector<16x16xf32>
    %cst_168 = arith.constant dense<0xFF800000> : vector<16xf32>
    %339 = vector.multi_reduction <maximumf>, %338, %cst_168 [1] : vector<16x16xf32> to vector<16xf32>
    %340 = vector.shape_cast %339 : vector<16xf32> to vector<16x1xf32>
    %341 = vector.broadcast %340 : vector<16x1xf32> to vector<16x16xf32>
    %342 = arith.subf %338, %341 : vector<16x16xf32>
    %343 = math.exp %342 : vector<16x16xf32>
    %cst_169 = arith.constant dense<0.000000e+00> : vector<16xf32>
    %344 = vector.multi_reduction <add>, %343, %cst_169 [1] : vector<16x16xf32> to vector<16xf32>
    %345 = vector.shape_cast %344 : vector<16xf32> to vector<16x1xf32>
    %346 = tpu.reciprocal %345 {approx = true} : vector<16x1xf32> -> vector<16x1xf32>
    %347 = vector.broadcast %346 : vector<16x1xf32> to vector<16x16xf32>
    %348 = arith.mulf %343, %347 : vector<16x16xf32>
    %349 = vector.extract_strided_slice %332 {offsets = [0, 0], sizes = [16, 8], strides = [1, 1]} : vector<16x32xf32> to vector<16x8xf32>
    %cst_170 = arith.constant dense<0.000000e+00> : vector<16x8xf32>
    %350 = tpu.matmul %348, %349, %cst_170 {dimension_numbers = #tpu.dot_dimension_numbers<[1], [0], [0], [1], [0, 0, 1, 1], [], []>} : vector<16x16xf32>, vector<16x8xf32>, vector<16x8xf32> -> vector<16x8xf32>
    %351 = arith.truncf %350 : vector<16x8xf32> to vector<16x8xbf16>
    %c1_171 = arith.constant 1 : index
    %c0_172 = arith.constant 0 : index
    %c0_173 = arith.constant 0 : index
    %352 = vector.load %arg6[%c1_171, %c0_172, %c0_173] : memref<3x32x32xbf16, #tpu.memory_space<vmem>>, vector<1x8x32xbf16>
    %353 = vector.shape_cast %352 : vector<1x8x32xbf16> to vector<8x32xbf16>
    %cst_174 = arith.constant dense<0.000000e+00> : vector<16x32xf32>
    %354 = tpu.matmul %351, %353, %cst_174 {dimension_numbers = #tpu.dot_dimension_numbers<[1], [0], [0], [1], [0, 0, 1, 1], [], []>} : vector<16x8xbf16>, vector<8x32xbf16>, vector<16x32xf32> -> vector<16x32xf32>
    %355 = arith.addf %335, %354 : vector<16x32xf32>
    %356 = vector.extract_strided_slice %334 {offsets = [0, 8], sizes = [16, 8], strides = [1, 1]} : vector<16x32xf32> to vector<16x8xf32>
    %357 = vector.extract_strided_slice %331 {offsets = [0, 8], sizes = [16, 8], strides = [1, 1]} : vector<16x32xf32> to vector<16x8xf32>
    %cst_175 = arith.constant dense<0.000000e+00> : vector<16x16xf32>
    %358 = tpu.matmul %356, %357, %cst_175 {dimension_numbers = #tpu.dot_dimension_numbers<[1], [1], [0], [0], [0, 0, 1, 0], [], []>} : vector<16x8xf32>, vector<16x8xf32>, vector<16x16xf32> -> vector<16x16xf32>
    %cst_176 = arith.constant dense<0xFF800000> : vector<16xf32>
    %359 = vector.multi_reduction <maximumf>, %358, %cst_176 [1] : vector<16x16xf32> to vector<16xf32>
    %360 = vector.shape_cast %359 : vector<16xf32> to vector<16x1xf32>
    %361 = vector.broadcast %360 : vector<16x1xf32> to vector<16x16xf32>
    %362 = arith.subf %358, %361 : vector<16x16xf32>
    %363 = math.exp %362 : vector<16x16xf32>
    %cst_177 = arith.constant dense<0.000000e+00> : vector<16xf32>
    %364 = vector.multi_reduction <add>, %363, %cst_177 [1] : vector<16x16xf32> to vector<16xf32>
    %365 = vector.shape_cast %364 : vector<16xf32> to vector<16x1xf32>
    %366 = tpu.reciprocal %365 {approx = true} : vector<16x1xf32> -> vector<16x1xf32>
    %367 = vector.broadcast %366 : vector<16x1xf32> to vector<16x16xf32>
    %368 = arith.mulf %363, %367 : vector<16x16xf32>
    %369 = vector.extract_strided_slice %332 {offsets = [0, 8], sizes = [16, 8], strides = [1, 1]} : vector<16x32xf32> to vector<16x8xf32>
    %cst_178 = arith.constant dense<0.000000e+00> : vector<16x8xf32>
    %370 = tpu.matmul %368, %369, %cst_178 {dimension_numbers = #tpu.dot_dimension_numbers<[1], [0], [0], [1], [0, 0, 1, 1], [], []>} : vector<16x16xf32>, vector<16x8xf32>, vector<16x8xf32> -> vector<16x8xf32>
    %371 = arith.truncf %370 : vector<16x8xf32> to vector<16x8xbf16>
    %c1_179 = arith.constant 1 : index
    %c8_180 = arith.constant 8 : index
    %c0_181 = arith.constant 0 : index
    %372 = vector.load %arg6[%c1_179, %c8_180, %c0_181] : memref<3x32x32xbf16, #tpu.memory_space<vmem>>, vector<1x8x32xbf16>
    %373 = vector.shape_cast %372 : vector<1x8x32xbf16> to vector<8x32xbf16>
    %cst_182 = arith.constant dense<0.000000e+00> : vector<16x32xf32>
    %374 = tpu.matmul %371, %373, %cst_182 {dimension_numbers = #tpu.dot_dimension_numbers<[1], [0], [0], [1], [0, 0, 1, 1], [], []>} : vector<16x8xbf16>, vector<8x32xbf16>, vector<16x32xf32> -> vector<16x32xf32>
    %375 = arith.addf %355, %374 : vector<16x32xf32>
    %376 = vector.extract_strided_slice %334 {offsets = [0, 16], sizes = [16, 8], strides = [1, 1]} : vector<16x32xf32> to vector<16x8xf32>
    %377 = vector.extract_strided_slice %331 {offsets = [0, 16], sizes = [16, 8], strides = [1, 1]} : vector<16x32xf32> to vector<16x8xf32>
    %cst_183 = arith.constant dense<0.000000e+00> : vector<16x16xf32>
    %378 = tpu.matmul %376, %377, %cst_183 {dimension_numbers = #tpu.dot_dimension_numbers<[1], [1], [0], [0], [0, 0, 1, 0], [], []>} : vector<16x8xf32>, vector<16x8xf32>, vector<16x16xf32> -> vector<16x16xf32>
    %cst_184 = arith.constant dense<0xFF800000> : vector<16xf32>
    %379 = vector.multi_reduction <maximumf>, %378, %cst_184 [1] : vector<16x16xf32> to vector<16xf32>
    %380 = vector.shape_cast %379 : vector<16xf32> to vector<16x1xf32>
    %381 = vector.broadcast %380 : vector<16x1xf32> to vector<16x16xf32>
    %382 = arith.subf %378, %381 : vector<16x16xf32>
    %383 = math.exp %382 : vector<16x16xf32>
    %cst_185 = arith.constant dense<0.000000e+00> : vector<16xf32>
    %384 = vector.multi_reduction <add>, %383, %cst_185 [1] : vector<16x16xf32> to vector<16xf32>
    %385 = vector.shape_cast %384 : vector<16xf32> to vector<16x1xf32>
    %386 = tpu.reciprocal %385 {approx = true} : vector<16x1xf32> -> vector<16x1xf32>
    %387 = vector.broadcast %386 : vector<16x1xf32> to vector<16x16xf32>
    %388 = arith.mulf %383, %387 : vector<16x16xf32>
    %389 = vector.extract_strided_slice %332 {offsets = [0, 16], sizes = [16, 8], strides = [1, 1]} : vector<16x32xf32> to vector<16x8xf32>
    %cst_186 = arith.constant dense<0.000000e+00> : vector<16x8xf32>
    %390 = tpu.matmul %388, %389, %cst_186 {dimension_numbers = #tpu.dot_dimension_numbers<[1], [0], [0], [1], [0, 0, 1, 1], [], []>} : vector<16x16xf32>, vector<16x8xf32>, vector<16x8xf32> -> vector<16x8xf32>
    %391 = arith.truncf %390 : vector<16x8xf32> to vector<16x8xbf16>
    %c1_187 = arith.constant 1 : index
    %c16_188 = arith.constant 16 : index
    %c0_189 = arith.constant 0 : index
    %392 = vector.load %arg6[%c1_187, %c16_188, %c0_189] : memref<3x32x32xbf16, #tpu.memory_space<vmem>>, vector<1x8x32xbf16>
    %393 = vector.shape_cast %392 : vector<1x8x32xbf16> to vector<8x32xbf16>
    %cst_190 = arith.constant dense<0.000000e+00> : vector<16x32xf32>
    %394 = tpu.matmul %391, %393, %cst_190 {dimension_numbers = #tpu.dot_dimension_numbers<[1], [0], [0], [1], [0, 0, 1, 1], [], []>} : vector<16x8xbf16>, vector<8x32xbf16>, vector<16x32xf32> -> vector<16x32xf32>
    %395 = arith.addf %375, %394 : vector<16x32xf32>
    %396 = vector.extract_strided_slice %334 {offsets = [0, 24], sizes = [16, 8], strides = [1, 1]} : vector<16x32xf32> to vector<16x8xf32>
    %397 = vector.extract_strided_slice %331 {offsets = [0, 24], sizes = [16, 8], strides = [1, 1]} : vector<16x32xf32> to vector<16x8xf32>
    %cst_191 = arith.constant dense<0.000000e+00> : vector<16x16xf32>
    %398 = tpu.matmul %396, %397, %cst_191 {dimension_numbers = #tpu.dot_dimension_numbers<[1], [1], [0], [0], [0, 0, 1, 0], [], []>} : vector<16x8xf32>, vector<16x8xf32>, vector<16x16xf32> -> vector<16x16xf32>
    %cst_192 = arith.constant dense<0xFF800000> : vector<16xf32>
    %399 = vector.multi_reduction <maximumf>, %398, %cst_192 [1] : vector<16x16xf32> to vector<16xf32>
    %400 = vector.shape_cast %399 : vector<16xf32> to vector<16x1xf32>
    %401 = vector.broadcast %400 : vector<16x1xf32> to vector<16x16xf32>
    %402 = arith.subf %398, %401 : vector<16x16xf32>
    %403 = math.exp %402 : vector<16x16xf32>
    %cst_193 = arith.constant dense<0.000000e+00> : vector<16xf32>
    %404 = vector.multi_reduction <add>, %403, %cst_193 [1] : vector<16x16xf32> to vector<16xf32>
    %405 = vector.shape_cast %404 : vector<16xf32> to vector<16x1xf32>
    %406 = tpu.reciprocal %405 {approx = true} : vector<16x1xf32> -> vector<16x1xf32>
    %407 = vector.broadcast %406 : vector<16x1xf32> to vector<16x16xf32>
    %408 = arith.mulf %403, %407 : vector<16x16xf32>
    %409 = vector.extract_strided_slice %332 {offsets = [0, 24], sizes = [16, 8], strides = [1, 1]} : vector<16x32xf32> to vector<16x8xf32>
    %cst_194 = arith.constant dense<0.000000e+00> : vector<16x8xf32>
    %410 = tpu.matmul %408, %409, %cst_194 {dimension_numbers = #tpu.dot_dimension_numbers<[1], [0], [0], [1], [0, 0, 1, 1], [], []>} : vector<16x16xf32>, vector<16x8xf32>, vector<16x8xf32> -> vector<16x8xf32>
    %411 = arith.truncf %410 : vector<16x8xf32> to vector<16x8xbf16>
    %c1_195 = arith.constant 1 : index
    %c24_196 = arith.constant 24 : index
    %c0_197 = arith.constant 0 : index
    %412 = vector.load %arg6[%c1_195, %c24_196, %c0_197] : memref<3x32x32xbf16, #tpu.memory_space<vmem>>, vector<1x8x32xbf16>
    %413 = vector.shape_cast %412 : vector<1x8x32xbf16> to vector<8x32xbf16>
    %cst_198 = arith.constant dense<0.000000e+00> : vector<16x32xf32>
    %414 = tpu.matmul %411, %413, %cst_198 {dimension_numbers = #tpu.dot_dimension_numbers<[1], [0], [0], [1], [0, 0, 1, 1], [], []>} : vector<16x8xbf16>, vector<8x32xbf16>, vector<16x32xf32> -> vector<16x32xf32>
    %415 = arith.addf %395, %414 : vector<16x32xf32>
    %c1_199 = arith.constant 1 : index
    %c0_200 = arith.constant 0 : index
    %c0_201 = arith.constant 0 : index
    %416 = vector.load %arg7[%c1_199, %c0_200, %c0_201] : memref<3x1x32xf32, #tpu.memory_space<vmem>>, vector<1x1x32xf32>
    %417 = vector.shape_cast %416 : vector<1x1x32xf32> to vector<1x32xf32>
    %418 = vector.broadcast %417 : vector<1x32xf32> to vector<16x32xf32>
    %419 = arith.addf %415, %418 : vector<16x32xf32>
    %420 = arith.addf %314, %419 : vector<16x32xf32>
    %c1_202 = arith.constant 1 : index
    %c0_203 = arith.constant 0 : index
    %c0_204 = arith.constant 0 : index
    %421 = vector.load %arg16[%c1_202, %c0_203, %c0_204] : memref<3x1x32xf32, #tpu.memory_space<vmem>>, vector<1x1x32xf32>
    %422 = vector.shape_cast %421 : vector<1x1x32xf32> to vector<1x32xf32>
    %c1_205 = arith.constant 1 : index
    %c0_206 = arith.constant 0 : index
    %c0_207 = arith.constant 0 : index
    %423 = vector.load %arg17[%c1_205, %c0_206, %c0_207] : memref<3x1x32xf32, #tpu.memory_space<vmem>>, vector<1x1x32xf32>
    %424 = vector.shape_cast %423 : vector<1x1x32xf32> to vector<1x32xf32>
    %cst_208 = arith.constant dense<0.000000e+00> : vector<16xf32>
    %425 = vector.multi_reduction <add>, %420, %cst_208 [1] : vector<16x32xf32> to vector<16xf32>
    %426 = vector.shape_cast %425 : vector<16xf32> to vector<16x1xf32>
    %cst_209 = arith.constant 3.200000e+01 : f32
    %427 = vector.broadcast %cst_209 : f32 to vector<16x1xf32>
    %428 = arith.divf %426, %427 : vector<16x1xf32>
    %429 = vector.broadcast %428 : vector<16x1xf32> to vector<16x32xf32>
    %430 = arith.subf %420, %429 : vector<16x32xf32>
    %431 = arith.mulf %430, %430 : vector<16x32xf32>
    %cst_210 = arith.constant dense<0.000000e+00> : vector<16xf32>
    %432 = vector.multi_reduction <add>, %431, %cst_210 [1] : vector<16x32xf32> to vector<16xf32>
    %433 = vector.shape_cast %432 : vector<16xf32> to vector<16x1xf32>
    %cst_211 = arith.constant 3.200000e+01 : f32
    %434 = vector.broadcast %cst_211 : f32 to vector<16x1xf32>
    %435 = arith.divf %433, %434 : vector<16x1xf32>
    %436 = vector.broadcast %428 : vector<16x1xf32> to vector<16x32xf32>
    %437 = arith.subf %420, %436 : vector<16x32xf32>
    %cst_212 = arith.constant 9.99999974E-6 : f32
    %438 = vector.broadcast %cst_212 : f32 to vector<16x1xf32>
    %439 = arith.addf %435, %438 : vector<16x1xf32>
    %440 = math.rsqrt %439 : vector<16x1xf32>
    %441 = vector.broadcast %440 : vector<16x1xf32> to vector<16x32xf32>
    %442 = arith.mulf %437, %441 : vector<16x32xf32>
    %443 = vector.broadcast %422 : vector<1x32xf32> to vector<16x32xf32>
    %444 = arith.mulf %442, %443 : vector<16x32xf32>
    %445 = vector.broadcast %424 : vector<1x32xf32> to vector<16x32xf32>
    %446 = arith.addf %444, %445 : vector<16x32xf32>
    %447 = arith.truncf %446 : vector<16x32xf32> to vector<16x32xbf16>
    %c1_213 = arith.constant 1 : index
    %c0_214 = arith.constant 0 : index
    %c0_215 = arith.constant 0 : index
    %448 = vector.load %arg8[%c1_213, %c0_214, %c0_215] : memref<3x32x96xbf16, #tpu.memory_space<vmem>>, vector<1x32x32xbf16>
    %449 = vector.shape_cast %448 : vector<1x32x32xbf16> to vector<32x32xbf16>
    %cst_216 = arith.constant dense<0.000000e+00> : vector<16x32xf32>
    %450 = tpu.matmul %447, %449, %cst_216 {dimension_numbers = #tpu.dot_dimension_numbers<[1], [0], [0], [1], [0, 0, 1, 1], [], []>} : vector<16x32xbf16>, vector<32x32xbf16>, vector<16x32xf32> -> vector<16x32xf32>
    %c1_217 = arith.constant 1 : index
    %c0_218 = arith.constant 0 : index
    %c0_219 = arith.constant 0 : index
    %451 = vector.load %arg9[%c1_217, %c0_218, %c0_219] : memref<3x1x96xf32, #tpu.memory_space<vmem>>, vector<1x1x32xf32>
    %452 = vector.shape_cast %451 : vector<1x1x32xf32> to vector<1x32xf32>
    %453 = vector.broadcast %452 : vector<1x32xf32> to vector<16x32xf32>
    %454 = arith.addf %450, %453 : vector<16x32xf32>
    %455 = arith.truncf %5 : vector<24x32xf32> to vector<24x32xbf16>
    %c1_220 = arith.constant 1 : index
    %c0_221 = arith.constant 0 : index
    %c32_222 = arith.constant 32 : index
    %456 = vector.load %arg8[%c1_220, %c0_221, %c32_222] : memref<3x32x96xbf16, #tpu.memory_space<vmem>>, vector<1x32x64xbf16>
    %457 = vector.shape_cast %456 : vector<1x32x64xbf16> to vector<32x64xbf16>
    %cst_223 = arith.constant dense<0.000000e+00> : vector<24x64xf32>
    %458 = tpu.matmul %455, %457, %cst_223 {dimension_numbers = #tpu.dot_dimension_numbers<[1], [0], [0], [1], [0, 0, 1, 1], [], []>} : vector<24x32xbf16>, vector<32x64xbf16>, vector<24x64xf32> -> vector<24x64xf32>
    %c1_224 = arith.constant 1 : index
    %c0_225 = arith.constant 0 : index
    %c32_226 = arith.constant 32 : index
    %459 = vector.load %arg9[%c1_224, %c0_225, %c32_226] : memref<3x1x96xf32, #tpu.memory_space<vmem>>, vector<1x1x64xf32>
    %460 = vector.shape_cast %459 : vector<1x1x64xf32> to vector<1x64xf32>
    %461 = vector.broadcast %460 : vector<1x64xf32> to vector<24x64xf32>
    %462 = arith.addf %458, %461 : vector<24x64xf32>
    %463 = vector.extract_strided_slice %462 {offsets = [0, 0], sizes = [24, 32], strides = [1, 1]} : vector<24x64xf32> to vector<24x32xf32>
    %464 = vector.extract_strided_slice %462 {offsets = [0, 32], sizes = [24, 32], strides = [1, 1]} : vector<24x64xf32> to vector<24x32xf32>
    %cst_227 = arith.constant 0.353553385 : f32
    %465 = vector.broadcast %cst_227 : f32 to vector<16x32xf32>
    %466 = arith.mulf %454, %465 : vector<16x32xf32>
    %cst_228 = arith.constant 0.000000e+00 : f32
    %467 = vector.broadcast %cst_228 : f32 to vector<16x32xf32>
    %468 = vector.extract_strided_slice %466 {offsets = [0, 0], sizes = [16, 8], strides = [1, 1]} : vector<16x32xf32> to vector<16x8xf32>
    %469 = vector.extract_strided_slice %463 {offsets = [0, 0], sizes = [24, 8], strides = [1, 1]} : vector<24x32xf32> to vector<24x8xf32>
    %cst_229 = arith.constant dense<0.000000e+00> : vector<16x24xf32>
    %470 = tpu.matmul %468, %469, %cst_229 {dimension_numbers = #tpu.dot_dimension_numbers<[1], [1], [0], [0], [0, 0, 1, 0], [], []>} : vector<16x8xf32>, vector<24x8xf32>, vector<16x24xf32> -> vector<16x24xf32>
    %cst_230 = arith.constant dense<0xFF800000> : vector<16xf32>
    %471 = vector.multi_reduction <maximumf>, %470, %cst_230 [1] : vector<16x24xf32> to vector<16xf32>
    %472 = vector.shape_cast %471 : vector<16xf32> to vector<16x1xf32>
    %473 = vector.broadcast %472 : vector<16x1xf32> to vector<16x24xf32>
    %474 = arith.subf %470, %473 : vector<16x24xf32>
    %475 = math.exp %474 : vector<16x24xf32>
    %cst_231 = arith.constant dense<0.000000e+00> : vector<16xf32>
    %476 = vector.multi_reduction <add>, %475, %cst_231 [1] : vector<16x24xf32> to vector<16xf32>
    %477 = vector.shape_cast %476 : vector<16xf32> to vector<16x1xf32>
    %478 = tpu.reciprocal %477 {approx = true} : vector<16x1xf32> -> vector<16x1xf32>
    %479 = vector.broadcast %478 : vector<16x1xf32> to vector<16x24xf32>
    %480 = arith.mulf %475, %479 : vector<16x24xf32>
    %481 = vector.extract_strided_slice %464 {offsets = [0, 0], sizes = [24, 8], strides = [1, 1]} : vector<24x32xf32> to vector<24x8xf32>
    %cst_232 = arith.constant dense<0.000000e+00> : vector<16x8xf32>
    %482 = tpu.matmul %480, %481, %cst_232 {dimension_numbers = #tpu.dot_dimension_numbers<[1], [0], [0], [1], [0, 0, 1, 1], [], []>} : vector<16x24xf32>, vector<24x8xf32>, vector<16x8xf32> -> vector<16x8xf32>
    %483 = arith.truncf %482 : vector<16x8xf32> to vector<16x8xbf16>
    %c1_233 = arith.constant 1 : index
    %c0_234 = arith.constant 0 : index
    %c0_235 = arith.constant 0 : index
    %484 = vector.load %arg10[%c1_233, %c0_234, %c0_235] : memref<3x32x32xbf16, #tpu.memory_space<vmem>>, vector<1x8x32xbf16>
    %485 = vector.shape_cast %484 : vector<1x8x32xbf16> to vector<8x32xbf16>
    %cst_236 = arith.constant dense<0.000000e+00> : vector<16x32xf32>
    %486 = tpu.matmul %483, %485, %cst_236 {dimension_numbers = #tpu.dot_dimension_numbers<[1], [0], [0], [1], [0, 0, 1, 1], [], []>} : vector<16x8xbf16>, vector<8x32xbf16>, vector<16x32xf32> -> vector<16x32xf32>
    %487 = arith.addf %467, %486 : vector<16x32xf32>
    %488 = vector.extract_strided_slice %466 {offsets = [0, 8], sizes = [16, 8], strides = [1, 1]} : vector<16x32xf32> to vector<16x8xf32>
    %489 = vector.extract_strided_slice %463 {offsets = [0, 8], sizes = [24, 8], strides = [1, 1]} : vector<24x32xf32> to vector<24x8xf32>
    %cst_237 = arith.constant dense<0.000000e+00> : vector<16x24xf32>
    %490 = tpu.matmul %488, %489, %cst_237 {dimension_numbers = #tpu.dot_dimension_numbers<[1], [1], [0], [0], [0, 0, 1, 0], [], []>} : vector<16x8xf32>, vector<24x8xf32>, vector<16x24xf32> -> vector<16x24xf32>
    %cst_238 = arith.constant dense<0xFF800000> : vector<16xf32>
    %491 = vector.multi_reduction <maximumf>, %490, %cst_238 [1] : vector<16x24xf32> to vector<16xf32>
    %492 = vector.shape_cast %491 : vector<16xf32> to vector<16x1xf32>
    %493 = vector.broadcast %492 : vector<16x1xf32> to vector<16x24xf32>
    %494 = arith.subf %490, %493 : vector<16x24xf32>
    %495 = math.exp %494 : vector<16x24xf32>
    %cst_239 = arith.constant dense<0.000000e+00> : vector<16xf32>
    %496 = vector.multi_reduction <add>, %495, %cst_239 [1] : vector<16x24xf32> to vector<16xf32>
    %497 = vector.shape_cast %496 : vector<16xf32> to vector<16x1xf32>
    %498 = tpu.reciprocal %497 {approx = true} : vector<16x1xf32> -> vector<16x1xf32>
    %499 = vector.broadcast %498 : vector<16x1xf32> to vector<16x24xf32>
    %500 = arith.mulf %495, %499 : vector<16x24xf32>
    %501 = vector.extract_strided_slice %464 {offsets = [0, 8], sizes = [24, 8], strides = [1, 1]} : vector<24x32xf32> to vector<24x8xf32>
    %cst_240 = arith.constant dense<0.000000e+00> : vector<16x8xf32>
    %502 = tpu.matmul %500, %501, %cst_240 {dimension_numbers = #tpu.dot_dimension_numbers<[1], [0], [0], [1], [0, 0, 1, 1], [], []>} : vector<16x24xf32>, vector<24x8xf32>, vector<16x8xf32> -> vector<16x8xf32>
    %503 = arith.truncf %502 : vector<16x8xf32> to vector<16x8xbf16>
    %c1_241 = arith.constant 1 : index
    %c8_242 = arith.constant 8 : index
    %c0_243 = arith.constant 0 : index
    %504 = vector.load %arg10[%c1_241, %c8_242, %c0_243] : memref<3x32x32xbf16, #tpu.memory_space<vmem>>, vector<1x8x32xbf16>
    %505 = vector.shape_cast %504 : vector<1x8x32xbf16> to vector<8x32xbf16>
    %cst_244 = arith.constant dense<0.000000e+00> : vector<16x32xf32>
    %506 = tpu.matmul %503, %505, %cst_244 {dimension_numbers = #tpu.dot_dimension_numbers<[1], [0], [0], [1], [0, 0, 1, 1], [], []>} : vector<16x8xbf16>, vector<8x32xbf16>, vector<16x32xf32> -> vector<16x32xf32>
    %507 = arith.addf %487, %506 : vector<16x32xf32>
    %508 = vector.extract_strided_slice %466 {offsets = [0, 16], sizes = [16, 8], strides = [1, 1]} : vector<16x32xf32> to vector<16x8xf32>
    %509 = vector.extract_strided_slice %463 {offsets = [0, 16], sizes = [24, 8], strides = [1, 1]} : vector<24x32xf32> to vector<24x8xf32>
    %cst_245 = arith.constant dense<0.000000e+00> : vector<16x24xf32>
    %510 = tpu.matmul %508, %509, %cst_245 {dimension_numbers = #tpu.dot_dimension_numbers<[1], [1], [0], [0], [0, 0, 1, 0], [], []>} : vector<16x8xf32>, vector<24x8xf32>, vector<16x24xf32> -> vector<16x24xf32>
    %cst_246 = arith.constant dense<0xFF800000> : vector<16xf32>
    %511 = vector.multi_reduction <maximumf>, %510, %cst_246 [1] : vector<16x24xf32> to vector<16xf32>
    %512 = vector.shape_cast %511 : vector<16xf32> to vector<16x1xf32>
    %513 = vector.broadcast %512 : vector<16x1xf32> to vector<16x24xf32>
    %514 = arith.subf %510, %513 : vector<16x24xf32>
    %515 = math.exp %514 : vector<16x24xf32>
    %cst_247 = arith.constant dense<0.000000e+00> : vector<16xf32>
    %516 = vector.multi_reduction <add>, %515, %cst_247 [1] : vector<16x24xf32> to vector<16xf32>
    %517 = vector.shape_cast %516 : vector<16xf32> to vector<16x1xf32>
    %518 = tpu.reciprocal %517 {approx = true} : vector<16x1xf32> -> vector<16x1xf32>
    %519 = vector.broadcast %518 : vector<16x1xf32> to vector<16x24xf32>
    %520 = arith.mulf %515, %519 : vector<16x24xf32>
    %521 = vector.extract_strided_slice %464 {offsets = [0, 16], sizes = [24, 8], strides = [1, 1]} : vector<24x32xf32> to vector<24x8xf32>
    %cst_248 = arith.constant dense<0.000000e+00> : vector<16x8xf32>
    %522 = tpu.matmul %520, %521, %cst_248 {dimension_numbers = #tpu.dot_dimension_numbers<[1], [0], [0], [1], [0, 0, 1, 1], [], []>} : vector<16x24xf32>, vector<24x8xf32>, vector<16x8xf32> -> vector<16x8xf32>
    %523 = arith.truncf %522 : vector<16x8xf32> to vector<16x8xbf16>
    %c1_249 = arith.constant 1 : index
    %c16_250 = arith.constant 16 : index
    %c0_251 = arith.constant 0 : index
    %524 = vector.load %arg10[%c1_249, %c16_250, %c0_251] : memref<3x32x32xbf16, #tpu.memory_space<vmem>>, vector<1x8x32xbf16>
    %525 = vector.shape_cast %524 : vector<1x8x32xbf16> to vector<8x32xbf16>
    %cst_252 = arith.constant dense<0.000000e+00> : vector<16x32xf32>
    %526 = tpu.matmul %523, %525, %cst_252 {dimension_numbers = #tpu.dot_dimension_numbers<[1], [0], [0], [1], [0, 0, 1, 1], [], []>} : vector<16x8xbf16>, vector<8x32xbf16>, vector<16x32xf32> -> vector<16x32xf32>
    %527 = arith.addf %507, %526 : vector<16x32xf32>
    %528 = vector.extract_strided_slice %466 {offsets = [0, 24], sizes = [16, 8], strides = [1, 1]} : vector<16x32xf32> to vector<16x8xf32>
    %529 = vector.extract_strided_slice %463 {offsets = [0, 24], sizes = [24, 8], strides = [1, 1]} : vector<24x32xf32> to vector<24x8xf32>
    %cst_253 = arith.constant dense<0.000000e+00> : vector<16x24xf32>
    %530 = tpu.matmul %528, %529, %cst_253 {dimension_numbers = #tpu.dot_dimension_numbers<[1], [1], [0], [0], [0, 0, 1, 0], [], []>} : vector<16x8xf32>, vector<24x8xf32>, vector<16x24xf32> -> vector<16x24xf32>
    %cst_254 = arith.constant dense<0xFF800000> : vector<16xf32>
    %531 = vector.multi_reduction <maximumf>, %530, %cst_254 [1] : vector<16x24xf32> to vector<16xf32>
    %532 = vector.shape_cast %531 : vector<16xf32> to vector<16x1xf32>
    %533 = vector.broadcast %532 : vector<16x1xf32> to vector<16x24xf32>
    %534 = arith.subf %530, %533 : vector<16x24xf32>
    %535 = math.exp %534 : vector<16x24xf32>
    %cst_255 = arith.constant dense<0.000000e+00> : vector<16xf32>
    %536 = vector.multi_reduction <add>, %535, %cst_255 [1] : vector<16x24xf32> to vector<16xf32>
    %537 = vector.shape_cast %536 : vector<16xf32> to vector<16x1xf32>
    %538 = tpu.reciprocal %537 {approx = true} : vector<16x1xf32> -> vector<16x1xf32>
    %539 = vector.broadcast %538 : vector<16x1xf32> to vector<16x24xf32>
    %540 = arith.mulf %535, %539 : vector<16x24xf32>
    %541 = vector.extract_strided_slice %464 {offsets = [0, 24], sizes = [24, 8], strides = [1, 1]} : vector<24x32xf32> to vector<24x8xf32>
    %cst_256 = arith.constant dense<0.000000e+00> : vector<16x8xf32>
    %542 = tpu.matmul %540, %541, %cst_256 {dimension_numbers = #tpu.dot_dimension_numbers<[1], [0], [0], [1], [0, 0, 1, 1], [], []>} : vector<16x24xf32>, vector<24x8xf32>, vector<16x8xf32> -> vector<16x8xf32>
    %543 = arith.truncf %542 : vector<16x8xf32> to vector<16x8xbf16>
    %c1_257 = arith.constant 1 : index
    %c24_258 = arith.constant 24 : index
    %c0_259 = arith.constant 0 : index
    %544 = vector.load %arg10[%c1_257, %c24_258, %c0_259] : memref<3x32x32xbf16, #tpu.memory_space<vmem>>, vector<1x8x32xbf16>
    %545 = vector.shape_cast %544 : vector<1x8x32xbf16> to vector<8x32xbf16>
    %cst_260 = arith.constant dense<0.000000e+00> : vector<16x32xf32>
    %546 = tpu.matmul %543, %545, %cst_260 {dimension_numbers = #tpu.dot_dimension_numbers<[1], [0], [0], [1], [0, 0, 1, 1], [], []>} : vector<16x8xbf16>, vector<8x32xbf16>, vector<16x32xf32> -> vector<16x32xf32>
    %547 = arith.addf %527, %546 : vector<16x32xf32>
    %c1_261 = arith.constant 1 : index
    %c0_262 = arith.constant 0 : index
    %c0_263 = arith.constant 0 : index
    %548 = vector.load %arg11[%c1_261, %c0_262, %c0_263] : memref<3x1x32xf32, #tpu.memory_space<vmem>>, vector<1x1x32xf32>
    %549 = vector.shape_cast %548 : vector<1x1x32xf32> to vector<1x32xf32>
    %550 = vector.broadcast %549 : vector<1x32xf32> to vector<16x32xf32>
    %551 = arith.addf %547, %550 : vector<16x32xf32>
    %552 = arith.addf %446, %551 : vector<16x32xf32>
    %c1_264 = arith.constant 1 : index
    %c0_265 = arith.constant 0 : index
    %c0_266 = arith.constant 0 : index
    %553 = vector.load %arg18[%c1_264, %c0_265, %c0_266] : memref<3x1x32xf32, #tpu.memory_space<vmem>>, vector<1x1x32xf32>
    %554 = vector.shape_cast %553 : vector<1x1x32xf32> to vector<1x32xf32>
    %c1_267 = arith.constant 1 : index
    %c0_268 = arith.constant 0 : index
    %c0_269 = arith.constant 0 : index
    %555 = vector.load %arg19[%c1_267, %c0_268, %c0_269] : memref<3x1x32xf32, #tpu.memory_space<vmem>>, vector<1x1x32xf32>
    %556 = vector.shape_cast %555 : vector<1x1x32xf32> to vector<1x32xf32>
    %cst_270 = arith.constant dense<0.000000e+00> : vector<16xf32>
    %557 = vector.multi_reduction <add>, %552, %cst_270 [1] : vector<16x32xf32> to vector<16xf32>
    %558 = vector.shape_cast %557 : vector<16xf32> to vector<16x1xf32>
    %cst_271 = arith.constant 3.200000e+01 : f32
    %559 = vector.broadcast %cst_271 : f32 to vector<16x1xf32>
    %560 = arith.divf %558, %559 : vector<16x1xf32>
    %561 = vector.broadcast %560 : vector<16x1xf32> to vector<16x32xf32>
    %562 = arith.subf %552, %561 : vector<16x32xf32>
    %563 = arith.mulf %562, %562 : vector<16x32xf32>
    %cst_272 = arith.constant dense<0.000000e+00> : vector<16xf32>
    %564 = vector.multi_reduction <add>, %563, %cst_272 [1] : vector<16x32xf32> to vector<16xf32>
    %565 = vector.shape_cast %564 : vector<16xf32> to vector<16x1xf32>
    %cst_273 = arith.constant 3.200000e+01 : f32
    %566 = vector.broadcast %cst_273 : f32 to vector<16x1xf32>
    %567 = arith.divf %565, %566 : vector<16x1xf32>
    %568 = vector.broadcast %560 : vector<16x1xf32> to vector<16x32xf32>
    %569 = arith.subf %552, %568 : vector<16x32xf32>
    %cst_274 = arith.constant 9.99999974E-6 : f32
    %570 = vector.broadcast %cst_274 : f32 to vector<16x1xf32>
    %571 = arith.addf %567, %570 : vector<16x1xf32>
    %572 = math.rsqrt %571 : vector<16x1xf32>
    %573 = vector.broadcast %572 : vector<16x1xf32> to vector<16x32xf32>
    %574 = arith.mulf %569, %573 : vector<16x32xf32>
    %575 = vector.broadcast %554 : vector<1x32xf32> to vector<16x32xf32>
    %576 = arith.mulf %574, %575 : vector<16x32xf32>
    %577 = vector.broadcast %556 : vector<1x32xf32> to vector<16x32xf32>
    %578 = arith.addf %576, %577 : vector<16x32xf32>
    %579 = arith.truncf %578 : vector<16x32xf32> to vector<16x32xbf16>
    %c1_275 = arith.constant 1 : index
    %c0_276 = arith.constant 0 : index
    %c0_277 = arith.constant 0 : index
    %580 = vector.load %arg12[%c1_275, %c0_276, %c0_277] : memref<3x32x2048xbf16, #tpu.memory_space<vmem>>, vector<1x32x2048xbf16>
    %581 = vector.shape_cast %580 : vector<1x32x2048xbf16> to vector<32x2048xbf16>
    %cst_278 = arith.constant dense<0.000000e+00> : vector<16x2048xf32>
    %582 = tpu.matmul %579, %581, %cst_278 {dimension_numbers = #tpu.dot_dimension_numbers<[1], [0], [0], [1], [0, 0, 1, 1], [], []>} : vector<16x32xbf16>, vector<32x2048xbf16>, vector<16x2048xf32> -> vector<16x2048xf32>
    %c1_279 = arith.constant 1 : index
    %c0_280 = arith.constant 0 : index
    %c0_281 = arith.constant 0 : index
    %583 = vector.load %arg13[%c1_279, %c0_280, %c0_281] : memref<3x1x2048xf32, #tpu.memory_space<vmem>>, vector<1x1x2048xf32>
    %584 = vector.shape_cast %583 : vector<1x1x2048xf32> to vector<1x2048xf32>
    %585 = vector.broadcast %584 : vector<1x2048xf32> to vector<16x2048xf32>
    %586 = arith.addf %582, %585 : vector<16x2048xf32>
    %cst_282 = arith.constant 0.000000e+00 : f32
    %587 = vector.broadcast %cst_282 : f32 to vector<16x2048xf32>
    %588 = arith.maximumf %586, %587 : vector<16x2048xf32>
    %589 = arith.truncf %588 : vector<16x2048xf32> to vector<16x2048xbf16>
    %c1_283 = arith.constant 1 : index
    %c0_284 = arith.constant 0 : index
    %c0_285 = arith.constant 0 : index
    %590 = vector.load %arg14[%c1_283, %c0_284, %c0_285] : memref<3x2048x32xbf16, #tpu.memory_space<vmem>>, vector<1x2048x32xbf16>
    %591 = vector.shape_cast %590 : vector<1x2048x32xbf16> to vector<2048x32xbf16>
    %cst_286 = arith.constant dense<0.000000e+00> : vector<16x32xf32>
    %592 = tpu.matmul %589, %591, %cst_286 {dimension_numbers = #tpu.dot_dimension_numbers<[1], [0], [0], [1], [0, 0, 1, 1], [], []>} : vector<16x2048xbf16>, vector<2048x32xbf16>, vector<16x32xf32> -> vector<16x32xf32>
    %c1_287 = arith.constant 1 : index
    %c0_288 = arith.constant 0 : index
    %c0_289 = arith.constant 0 : index
    %593 = vector.load %arg15[%c1_287, %c0_288, %c0_289] : memref<3x1x32xf32, #tpu.memory_space<vmem>>, vector<1x1x32xf32>
    %594 = vector.shape_cast %593 : vector<1x1x32xf32> to vector<1x32xf32>
    %595 = vector.broadcast %594 : vector<1x32xf32> to vector<16x32xf32>
    %596 = arith.addf %592, %595 : vector<16x32xf32>
    %597 = arith.addf %578, %596 : vector<16x32xf32>
    %c1_290 = arith.constant 1 : index
    %c0_291 = arith.constant 0 : index
    %c0_292 = arith.constant 0 : index
    %598 = vector.load %arg20[%c1_290, %c0_291, %c0_292] : memref<3x1x32xf32, #tpu.memory_space<vmem>>, vector<1x1x32xf32>
    %599 = vector.shape_cast %598 : vector<1x1x32xf32> to vector<1x32xf32>
    %c1_293 = arith.constant 1 : index
    %c0_294 = arith.constant 0 : index
    %c0_295 = arith.constant 0 : index
    %600 = vector.load %arg21[%c1_293, %c0_294, %c0_295] : memref<3x1x32xf32, #tpu.memory_space<vmem>>, vector<1x1x32xf32>
    %601 = vector.shape_cast %600 : vector<1x1x32xf32> to vector<1x32xf32>
    %cst_296 = arith.constant dense<0.000000e+00> : vector<16xf32>
    %602 = vector.multi_reduction <add>, %597, %cst_296 [1] : vector<16x32xf32> to vector<16xf32>
    %603 = vector.shape_cast %602 : vector<16xf32> to vector<16x1xf32>
    %cst_297 = arith.constant 3.200000e+01 : f32
    %604 = vector.broadcast %cst_297 : f32 to vector<16x1xf32>
    %605 = arith.divf %603, %604 : vector<16x1xf32>
    %606 = vector.broadcast %605 : vector<16x1xf32> to vector<16x32xf32>
    %607 = arith.subf %597, %606 : vector<16x32xf32>
    %608 = arith.mulf %607, %607 : vector<16x32xf32>
    %cst_298 = arith.constant dense<0.000000e+00> : vector<16xf32>
    %609 = vector.multi_reduction <add>, %608, %cst_298 [1] : vector<16x32xf32> to vector<16xf32>
    %610 = vector.shape_cast %609 : vector<16xf32> to vector<16x1xf32>
    %cst_299 = arith.constant 3.200000e+01 : f32
    %611 = vector.broadcast %cst_299 : f32 to vector<16x1xf32>
    %612 = arith.divf %610, %611 : vector<16x1xf32>
    %613 = vector.broadcast %605 : vector<16x1xf32> to vector<16x32xf32>
    %614 = arith.subf %597, %613 : vector<16x32xf32>
    %cst_300 = arith.constant 9.99999974E-6 : f32
    %615 = vector.broadcast %cst_300 : f32 to vector<16x1xf32>
    %616 = arith.addf %612, %615 : vector<16x1xf32>
    %617 = math.rsqrt %616 : vector<16x1xf32>
    %618 = vector.broadcast %617 : vector<16x1xf32> to vector<16x32xf32>
    %619 = arith.mulf %614, %618 : vector<16x32xf32>
    %620 = vector.broadcast %599 : vector<1x32xf32> to vector<16x32xf32>
    %621 = arith.mulf %619, %620 : vector<16x32xf32>
    %622 = vector.broadcast %601 : vector<1x32xf32> to vector<16x32xf32>
    %623 = arith.addf %621, %622 : vector<16x32xf32>
    %624 = arith.truncf %623 : vector<16x32xf32> to vector<16x32xbf16>
    %c2 = arith.constant 2 : index
    %c0_301 = arith.constant 0 : index
    %c0_302 = arith.constant 0 : index
    %625 = vector.load %arg4[%c2, %c0_301, %c0_302] : memref<3x32x96xbf16, #tpu.memory_space<vmem>>, vector<1x32x32xbf16>
    %626 = vector.shape_cast %625 : vector<1x32x32xbf16> to vector<32x32xbf16>
    %cst_303 = arith.constant dense<0.000000e+00> : vector<16x32xf32>
    %627 = tpu.matmul %624, %626, %cst_303 {dimension_numbers = #tpu.dot_dimension_numbers<[1], [0], [0], [1], [0, 0, 1, 1], [], []>} : vector<16x32xbf16>, vector<32x32xbf16>, vector<16x32xf32> -> vector<16x32xf32>
    %c2_304 = arith.constant 2 : index
    %c0_305 = arith.constant 0 : index
    %c0_306 = arith.constant 0 : index
    %628 = vector.load %arg5[%c2_304, %c0_305, %c0_306] : memref<3x1x96xf32, #tpu.memory_space<vmem>>, vector<1x1x32xf32>
    %629 = vector.shape_cast %628 : vector<1x1x32xf32> to vector<1x32xf32>
    %630 = vector.broadcast %629 : vector<1x32xf32> to vector<16x32xf32>
    %631 = arith.addf %627, %630 : vector<16x32xf32>
    %632 = arith.truncf %623 : vector<16x32xf32> to vector<16x32xbf16>
    %c2_307 = arith.constant 2 : index
    %c0_308 = arith.constant 0 : index
    %c32_309 = arith.constant 32 : index
    %633 = vector.load %arg4[%c2_307, %c0_308, %c32_309] : memref<3x32x96xbf16, #tpu.memory_space<vmem>>, vector<1x32x64xbf16>
    %634 = vector.shape_cast %633 : vector<1x32x64xbf16> to vector<32x64xbf16>
    %cst_310 = arith.constant dense<0.000000e+00> : vector<16x64xf32>
    %635 = tpu.matmul %632, %634, %cst_310 {dimension_numbers = #tpu.dot_dimension_numbers<[1], [0], [0], [1], [0, 0, 1, 1], [], []>} : vector<16x32xbf16>, vector<32x64xbf16>, vector<16x64xf32> -> vector<16x64xf32>
    %c2_311 = arith.constant 2 : index
    %c0_312 = arith.constant 0 : index
    %c32_313 = arith.constant 32 : index
    %636 = vector.load %arg5[%c2_311, %c0_312, %c32_313] : memref<3x1x96xf32, #tpu.memory_space<vmem>>, vector<1x1x64xf32>
    %637 = vector.shape_cast %636 : vector<1x1x64xf32> to vector<1x64xf32>
    %638 = vector.broadcast %637 : vector<1x64xf32> to vector<16x64xf32>
    %639 = arith.addf %635, %638 : vector<16x64xf32>
    %640 = vector.extract_strided_slice %639 {offsets = [0, 0], sizes = [16, 32], strides = [1, 1]} : vector<16x64xf32> to vector<16x32xf32>
    %641 = vector.extract_strided_slice %639 {offsets = [0, 32], sizes = [16, 32], strides = [1, 1]} : vector<16x64xf32> to vector<16x32xf32>
    %cst_314 = arith.constant 0.353553385 : f32
    %642 = vector.broadcast %cst_314 : f32 to vector<16x32xf32>
    %643 = arith.mulf %631, %642 : vector<16x32xf32>
    %cst_315 = arith.constant 0.000000e+00 : f32
    %644 = vector.broadcast %cst_315 : f32 to vector<16x32xf32>
    %645 = vector.extract_strided_slice %643 {offsets = [0, 0], sizes = [16, 8], strides = [1, 1]} : vector<16x32xf32> to vector<16x8xf32>
    %646 = vector.extract_strided_slice %640 {offsets = [0, 0], sizes = [16, 8], strides = [1, 1]} : vector<16x32xf32> to vector<16x8xf32>
    %cst_316 = arith.constant dense<0.000000e+00> : vector<16x16xf32>
    %647 = tpu.matmul %645, %646, %cst_316 {dimension_numbers = #tpu.dot_dimension_numbers<[1], [1], [0], [0], [0, 0, 1, 0], [], []>} : vector<16x8xf32>, vector<16x8xf32>, vector<16x16xf32> -> vector<16x16xf32>
    %cst_317 = arith.constant dense<0xFF800000> : vector<16xf32>
    %648 = vector.multi_reduction <maximumf>, %647, %cst_317 [1] : vector<16x16xf32> to vector<16xf32>
    %649 = vector.shape_cast %648 : vector<16xf32> to vector<16x1xf32>
    %650 = vector.broadcast %649 : vector<16x1xf32> to vector<16x16xf32>
    %651 = arith.subf %647, %650 : vector<16x16xf32>
    %652 = math.exp %651 : vector<16x16xf32>
    %cst_318 = arith.constant dense<0.000000e+00> : vector<16xf32>
    %653 = vector.multi_reduction <add>, %652, %cst_318 [1] : vector<16x16xf32> to vector<16xf32>
    %654 = vector.shape_cast %653 : vector<16xf32> to vector<16x1xf32>
    %655 = tpu.reciprocal %654 {approx = true} : vector<16x1xf32> -> vector<16x1xf32>
    %656 = vector.broadcast %655 : vector<16x1xf32> to vector<16x16xf32>
    %657 = arith.mulf %652, %656 : vector<16x16xf32>
    %658 = vector.extract_strided_slice %641 {offsets = [0, 0], sizes = [16, 8], strides = [1, 1]} : vector<16x32xf32> to vector<16x8xf32>
    %cst_319 = arith.constant dense<0.000000e+00> : vector<16x8xf32>
    %659 = tpu.matmul %657, %658, %cst_319 {dimension_numbers = #tpu.dot_dimension_numbers<[1], [0], [0], [1], [0, 0, 1, 1], [], []>} : vector<16x16xf32>, vector<16x8xf32>, vector<16x8xf32> -> vector<16x8xf32>
    %660 = arith.truncf %659 : vector<16x8xf32> to vector<16x8xbf16>
    %c2_320 = arith.constant 2 : index
    %c0_321 = arith.constant 0 : index
    %c0_322 = arith.constant 0 : index
    %661 = vector.load %arg6[%c2_320, %c0_321, %c0_322] : memref<3x32x32xbf16, #tpu.memory_space<vmem>>, vector<1x8x32xbf16>
    %662 = vector.shape_cast %661 : vector<1x8x32xbf16> to vector<8x32xbf16>
    %cst_323 = arith.constant dense<0.000000e+00> : vector<16x32xf32>
    %663 = tpu.matmul %660, %662, %cst_323 {dimension_numbers = #tpu.dot_dimension_numbers<[1], [0], [0], [1], [0, 0, 1, 1], [], []>} : vector<16x8xbf16>, vector<8x32xbf16>, vector<16x32xf32> -> vector<16x32xf32>
    %664 = arith.addf %644, %663 : vector<16x32xf32>
    %665 = vector.extract_strided_slice %643 {offsets = [0, 8], sizes = [16, 8], strides = [1, 1]} : vector<16x32xf32> to vector<16x8xf32>
    %666 = vector.extract_strided_slice %640 {offsets = [0, 8], sizes = [16, 8], strides = [1, 1]} : vector<16x32xf32> to vector<16x8xf32>
    %cst_324 = arith.constant dense<0.000000e+00> : vector<16x16xf32>
    %667 = tpu.matmul %665, %666, %cst_324 {dimension_numbers = #tpu.dot_dimension_numbers<[1], [1], [0], [0], [0, 0, 1, 0], [], []>} : vector<16x8xf32>, vector<16x8xf32>, vector<16x16xf32> -> vector<16x16xf32>
    %cst_325 = arith.constant dense<0xFF800000> : vector<16xf32>
    %668 = vector.multi_reduction <maximumf>, %667, %cst_325 [1] : vector<16x16xf32> to vector<16xf32>
    %669 = vector.shape_cast %668 : vector<16xf32> to vector<16x1xf32>
    %670 = vector.broadcast %669 : vector<16x1xf32> to vector<16x16xf32>
    %671 = arith.subf %667, %670 : vector<16x16xf32>
    %672 = math.exp %671 : vector<16x16xf32>
    %cst_326 = arith.constant dense<0.000000e+00> : vector<16xf32>
    %673 = vector.multi_reduction <add>, %672, %cst_326 [1] : vector<16x16xf32> to vector<16xf32>
    %674 = vector.shape_cast %673 : vector<16xf32> to vector<16x1xf32>
    %675 = tpu.reciprocal %674 {approx = true} : vector<16x1xf32> -> vector<16x1xf32>
    %676 = vector.broadcast %675 : vector<16x1xf32> to vector<16x16xf32>
    %677 = arith.mulf %672, %676 : vector<16x16xf32>
    %678 = vector.extract_strided_slice %641 {offsets = [0, 8], sizes = [16, 8], strides = [1, 1]} : vector<16x32xf32> to vector<16x8xf32>
    %cst_327 = arith.constant dense<0.000000e+00> : vector<16x8xf32>
    %679 = tpu.matmul %677, %678, %cst_327 {dimension_numbers = #tpu.dot_dimension_numbers<[1], [0], [0], [1], [0, 0, 1, 1], [], []>} : vector<16x16xf32>, vector<16x8xf32>, vector<16x8xf32> -> vector<16x8xf32>
    %680 = arith.truncf %679 : vector<16x8xf32> to vector<16x8xbf16>
    %c2_328 = arith.constant 2 : index
    %c8_329 = arith.constant 8 : index
    %c0_330 = arith.constant 0 : index
    %681 = vector.load %arg6[%c2_328, %c8_329, %c0_330] : memref<3x32x32xbf16, #tpu.memory_space<vmem>>, vector<1x8x32xbf16>
    %682 = vector.shape_cast %681 : vector<1x8x32xbf16> to vector<8x32xbf16>
    %cst_331 = arith.constant dense<0.000000e+00> : vector<16x32xf32>
    %683 = tpu.matmul %680, %682, %cst_331 {dimension_numbers = #tpu.dot_dimension_numbers<[1], [0], [0], [1], [0, 0, 1, 1], [], []>} : vector<16x8xbf16>, vector<8x32xbf16>, vector<16x32xf32> -> vector<16x32xf32>
    %684 = arith.addf %664, %683 : vector<16x32xf32>
    %685 = vector.extract_strided_slice %643 {offsets = [0, 16], sizes = [16, 8], strides = [1, 1]} : vector<16x32xf32> to vector<16x8xf32>
    %686 = vector.extract_strided_slice %640 {offsets = [0, 16], sizes = [16, 8], strides = [1, 1]} : vector<16x32xf32> to vector<16x8xf32>
    %cst_332 = arith.constant dense<0.000000e+00> : vector<16x16xf32>
    %687 = tpu.matmul %685, %686, %cst_332 {dimension_numbers = #tpu.dot_dimension_numbers<[1], [1], [0], [0], [0, 0, 1, 0], [], []>} : vector<16x8xf32>, vector<16x8xf32>, vector<16x16xf32> -> vector<16x16xf32>
    %cst_333 = arith.constant dense<0xFF800000> : vector<16xf32>
    %688 = vector.multi_reduction <maximumf>, %687, %cst_333 [1] : vector<16x16xf32> to vector<16xf32>
    %689 = vector.shape_cast %688 : vector<16xf32> to vector<16x1xf32>
    %690 = vector.broadcast %689 : vector<16x1xf32> to vector<16x16xf32>
    %691 = arith.subf %687, %690 : vector<16x16xf32>
    %692 = math.exp %691 : vector<16x16xf32>
    %cst_334 = arith.constant dense<0.000000e+00> : vector<16xf32>
    %693 = vector.multi_reduction <add>, %692, %cst_334 [1] : vector<16x16xf32> to vector<16xf32>
    %694 = vector.shape_cast %693 : vector<16xf32> to vector<16x1xf32>
    %695 = tpu.reciprocal %694 {approx = true} : vector<16x1xf32> -> vector<16x1xf32>
    %696 = vector.broadcast %695 : vector<16x1xf32> to vector<16x16xf32>
    %697 = arith.mulf %692, %696 : vector<16x16xf32>
    %698 = vector.extract_strided_slice %641 {offsets = [0, 16], sizes = [16, 8], strides = [1, 1]} : vector<16x32xf32> to vector<16x8xf32>
    %cst_335 = arith.constant dense<0.000000e+00> : vector<16x8xf32>
    %699 = tpu.matmul %697, %698, %cst_335 {dimension_numbers = #tpu.dot_dimension_numbers<[1], [0], [0], [1], [0, 0, 1, 1], [], []>} : vector<16x16xf32>, vector<16x8xf32>, vector<16x8xf32> -> vector<16x8xf32>
    %700 = arith.truncf %699 : vector<16x8xf32> to vector<16x8xbf16>
    %c2_336 = arith.constant 2 : index
    %c16_337 = arith.constant 16 : index
    %c0_338 = arith.constant 0 : index
    %701 = vector.load %arg6[%c2_336, %c16_337, %c0_338] : memref<3x32x32xbf16, #tpu.memory_space<vmem>>, vector<1x8x32xbf16>
    %702 = vector.shape_cast %701 : vector<1x8x32xbf16> to vector<8x32xbf16>
    %cst_339 = arith.constant dense<0.000000e+00> : vector<16x32xf32>
    %703 = tpu.matmul %700, %702, %cst_339 {dimension_numbers = #tpu.dot_dimension_numbers<[1], [0], [0], [1], [0, 0, 1, 1], [], []>} : vector<16x8xbf16>, vector<8x32xbf16>, vector<16x32xf32> -> vector<16x32xf32>
    %704 = arith.addf %684, %703 : vector<16x32xf32>
    %705 = vector.extract_strided_slice %643 {offsets = [0, 24], sizes = [16, 8], strides = [1, 1]} : vector<16x32xf32> to vector<16x8xf32>
    %706 = vector.extract_strided_slice %640 {offsets = [0, 24], sizes = [16, 8], strides = [1, 1]} : vector<16x32xf32> to vector<16x8xf32>
    %cst_340 = arith.constant dense<0.000000e+00> : vector<16x16xf32>
    %707 = tpu.matmul %705, %706, %cst_340 {dimension_numbers = #tpu.dot_dimension_numbers<[1], [1], [0], [0], [0, 0, 1, 0], [], []>} : vector<16x8xf32>, vector<16x8xf32>, vector<16x16xf32> -> vector<16x16xf32>
    %cst_341 = arith.constant dense<0xFF800000> : vector<16xf32>
    %708 = vector.multi_reduction <maximumf>, %707, %cst_341 [1] : vector<16x16xf32> to vector<16xf32>
    %709 = vector.shape_cast %708 : vector<16xf32> to vector<16x1xf32>
    %710 = vector.broadcast %709 : vector<16x1xf32> to vector<16x16xf32>
    %711 = arith.subf %707, %710 : vector<16x16xf32>
    %712 = math.exp %711 : vector<16x16xf32>
    %cst_342 = arith.constant dense<0.000000e+00> : vector<16xf32>
    %713 = vector.multi_reduction <add>, %712, %cst_342 [1] : vector<16x16xf32> to vector<16xf32>
    %714 = vector.shape_cast %713 : vector<16xf32> to vector<16x1xf32>
    %715 = tpu.reciprocal %714 {approx = true} : vector<16x1xf32> -> vector<16x1xf32>
    %716 = vector.broadcast %715 : vector<16x1xf32> to vector<16x16xf32>
    %717 = arith.mulf %712, %716 : vector<16x16xf32>
    %718 = vector.extract_strided_slice %641 {offsets = [0, 24], sizes = [16, 8], strides = [1, 1]} : vector<16x32xf32> to vector<16x8xf32>
    %cst_343 = arith.constant dense<0.000000e+00> : vector<16x8xf32>
    %719 = tpu.matmul %717, %718, %cst_343 {dimension_numbers = #tpu.dot_dimension_numbers<[1], [0], [0], [1], [0, 0, 1, 1], [], []>} : vector<16x16xf32>, vector<16x8xf32>, vector<16x8xf32> -> vector<16x8xf32>
    %720 = arith.truncf %719 : vector<16x8xf32> to vector<16x8xbf16>
    %c2_344 = arith.constant 2 : index
    %c24_345 = arith.constant 24 : index
    %c0_346 = arith.constant 0 : index
    %721 = vector.load %arg6[%c2_344, %c24_345, %c0_346] : memref<3x32x32xbf16, #tpu.memory_space<vmem>>, vector<1x8x32xbf16>
    %722 = vector.shape_cast %721 : vector<1x8x32xbf16> to vector<8x32xbf16>
    %cst_347 = arith.constant dense<0.000000e+00> : vector<16x32xf32>
    %723 = tpu.matmul %720, %722, %cst_347 {dimension_numbers = #tpu.dot_dimension_numbers<[1], [0], [0], [1], [0, 0, 1, 1], [], []>} : vector<16x8xbf16>, vector<8x32xbf16>, vector<16x32xf32> -> vector<16x32xf32>
    %724 = arith.addf %704, %723 : vector<16x32xf32>
    %c2_348 = arith.constant 2 : index
    %c0_349 = arith.constant 0 : index
    %c0_350 = arith.constant 0 : index
    %725 = vector.load %arg7[%c2_348, %c0_349, %c0_350] : memref<3x1x32xf32, #tpu.memory_space<vmem>>, vector<1x1x32xf32>
    %726 = vector.shape_cast %725 : vector<1x1x32xf32> to vector<1x32xf32>
    %727 = vector.broadcast %726 : vector<1x32xf32> to vector<16x32xf32>
    %728 = arith.addf %724, %727 : vector<16x32xf32>
    %729 = arith.addf %623, %728 : vector<16x32xf32>
    %c2_351 = arith.constant 2 : index
    %c0_352 = arith.constant 0 : index
    %c0_353 = arith.constant 0 : index
    %730 = vector.load %arg16[%c2_351, %c0_352, %c0_353] : memref<3x1x32xf32, #tpu.memory_space<vmem>>, vector<1x1x32xf32>
    %731 = vector.shape_cast %730 : vector<1x1x32xf32> to vector<1x32xf32>
    %c2_354 = arith.constant 2 : index
    %c0_355 = arith.constant 0 : index
    %c0_356 = arith.constant 0 : index
    %732 = vector.load %arg17[%c2_354, %c0_355, %c0_356] : memref<3x1x32xf32, #tpu.memory_space<vmem>>, vector<1x1x32xf32>
    %733 = vector.shape_cast %732 : vector<1x1x32xf32> to vector<1x32xf32>
    %cst_357 = arith.constant dense<0.000000e+00> : vector<16xf32>
    %734 = vector.multi_reduction <add>, %729, %cst_357 [1] : vector<16x32xf32> to vector<16xf32>
    %735 = vector.shape_cast %734 : vector<16xf32> to vector<16x1xf32>
    %cst_358 = arith.constant 3.200000e+01 : f32
    %736 = vector.broadcast %cst_358 : f32 to vector<16x1xf32>
    %737 = arith.divf %735, %736 : vector<16x1xf32>
    %738 = vector.broadcast %737 : vector<16x1xf32> to vector<16x32xf32>
    %739 = arith.subf %729, %738 : vector<16x32xf32>
    %740 = arith.mulf %739, %739 : vector<16x32xf32>
    %cst_359 = arith.constant dense<0.000000e+00> : vector<16xf32>
    %741 = vector.multi_reduction <add>, %740, %cst_359 [1] : vector<16x32xf32> to vector<16xf32>
    %742 = vector.shape_cast %741 : vector<16xf32> to vector<16x1xf32>
    %cst_360 = arith.constant 3.200000e+01 : f32
    %743 = vector.broadcast %cst_360 : f32 to vector<16x1xf32>
    %744 = arith.divf %742, %743 : vector<16x1xf32>
    %745 = vector.broadcast %737 : vector<16x1xf32> to vector<16x32xf32>
    %746 = arith.subf %729, %745 : vector<16x32xf32>
    %cst_361 = arith.constant 9.99999974E-6 : f32
    %747 = vector.broadcast %cst_361 : f32 to vector<16x1xf32>
    %748 = arith.addf %744, %747 : vector<16x1xf32>
    %749 = math.rsqrt %748 : vector<16x1xf32>
    %750 = vector.broadcast %749 : vector<16x1xf32> to vector<16x32xf32>
    %751 = arith.mulf %746, %750 : vector<16x32xf32>
    %752 = vector.broadcast %731 : vector<1x32xf32> to vector<16x32xf32>
    %753 = arith.mulf %751, %752 : vector<16x32xf32>
    %754 = vector.broadcast %733 : vector<1x32xf32> to vector<16x32xf32>
    %755 = arith.addf %753, %754 : vector<16x32xf32>
    %756 = arith.truncf %755 : vector<16x32xf32> to vector<16x32xbf16>
    %c2_362 = arith.constant 2 : index
    %c0_363 = arith.constant 0 : index
    %c0_364 = arith.constant 0 : index
    %757 = vector.load %arg8[%c2_362, %c0_363, %c0_364] : memref<3x32x96xbf16, #tpu.memory_space<vmem>>, vector<1x32x32xbf16>
    %758 = vector.shape_cast %757 : vector<1x32x32xbf16> to vector<32x32xbf16>
    %cst_365 = arith.constant dense<0.000000e+00> : vector<16x32xf32>
    %759 = tpu.matmul %756, %758, %cst_365 {dimension_numbers = #tpu.dot_dimension_numbers<[1], [0], [0], [1], [0, 0, 1, 1], [], []>} : vector<16x32xbf16>, vector<32x32xbf16>, vector<16x32xf32> -> vector<16x32xf32>
    %c2_366 = arith.constant 2 : index
    %c0_367 = arith.constant 0 : index
    %c0_368 = arith.constant 0 : index
    %760 = vector.load %arg9[%c2_366, %c0_367, %c0_368] : memref<3x1x96xf32, #tpu.memory_space<vmem>>, vector<1x1x32xf32>
    %761 = vector.shape_cast %760 : vector<1x1x32xf32> to vector<1x32xf32>
    %762 = vector.broadcast %761 : vector<1x32xf32> to vector<16x32xf32>
    %763 = arith.addf %759, %762 : vector<16x32xf32>
    %764 = arith.truncf %5 : vector<24x32xf32> to vector<24x32xbf16>
    %c2_369 = arith.constant 2 : index
    %c0_370 = arith.constant 0 : index
    %c32_371 = arith.constant 32 : index
    %765 = vector.load %arg8[%c2_369, %c0_370, %c32_371] : memref<3x32x96xbf16, #tpu.memory_space<vmem>>, vector<1x32x64xbf16>
    %766 = vector.shape_cast %765 : vector<1x32x64xbf16> to vector<32x64xbf16>
    %cst_372 = arith.constant dense<0.000000e+00> : vector<24x64xf32>
    %767 = tpu.matmul %764, %766, %cst_372 {dimension_numbers = #tpu.dot_dimension_numbers<[1], [0], [0], [1], [0, 0, 1, 1], [], []>} : vector<24x32xbf16>, vector<32x64xbf16>, vector<24x64xf32> -> vector<24x64xf32>
    %c2_373 = arith.constant 2 : index
    %c0_374 = arith.constant 0 : index
    %c32_375 = arith.constant 32 : index
    %768 = vector.load %arg9[%c2_373, %c0_374, %c32_375] : memref<3x1x96xf32, #tpu.memory_space<vmem>>, vector<1x1x64xf32>
    %769 = vector.shape_cast %768 : vector<1x1x64xf32> to vector<1x64xf32>
    %770 = vector.broadcast %769 : vector<1x64xf32> to vector<24x64xf32>
    %771 = arith.addf %767, %770 : vector<24x64xf32>
    %772 = vector.extract_strided_slice %771 {offsets = [0, 0], sizes = [24, 32], strides = [1, 1]} : vector<24x64xf32> to vector<24x32xf32>
    %773 = vector.extract_strided_slice %771 {offsets = [0, 32], sizes = [24, 32], strides = [1, 1]} : vector<24x64xf32> to vector<24x32xf32>
    %cst_376 = arith.constant 0.353553385 : f32
    %774 = vector.broadcast %cst_376 : f32 to vector<16x32xf32>
    %775 = arith.mulf %763, %774 : vector<16x32xf32>
    %cst_377 = arith.constant 0.000000e+00 : f32
    %776 = vector.broadcast %cst_377 : f32 to vector<16x32xf32>
    %777 = vector.extract_strided_slice %775 {offsets = [0, 0], sizes = [16, 8], strides = [1, 1]} : vector<16x32xf32> to vector<16x8xf32>
    %778 = vector.extract_strided_slice %772 {offsets = [0, 0], sizes = [24, 8], strides = [1, 1]} : vector<24x32xf32> to vector<24x8xf32>
    %cst_378 = arith.constant dense<0.000000e+00> : vector<16x24xf32>
    %779 = tpu.matmul %777, %778, %cst_378 {dimension_numbers = #tpu.dot_dimension_numbers<[1], [1], [0], [0], [0, 0, 1, 0], [], []>} : vector<16x8xf32>, vector<24x8xf32>, vector<16x24xf32> -> vector<16x24xf32>
    %cst_379 = arith.constant dense<0xFF800000> : vector<16xf32>
    %780 = vector.multi_reduction <maximumf>, %779, %cst_379 [1] : vector<16x24xf32> to vector<16xf32>
    %781 = vector.shape_cast %780 : vector<16xf32> to vector<16x1xf32>
    %782 = vector.broadcast %781 : vector<16x1xf32> to vector<16x24xf32>
    %783 = arith.subf %779, %782 : vector<16x24xf32>
    %784 = math.exp %783 : vector<16x24xf32>
    %cst_380 = arith.constant dense<0.000000e+00> : vector<16xf32>
    %785 = vector.multi_reduction <add>, %784, %cst_380 [1] : vector<16x24xf32> to vector<16xf32>
    %786 = vector.shape_cast %785 : vector<16xf32> to vector<16x1xf32>
    %787 = tpu.reciprocal %786 {approx = true} : vector<16x1xf32> -> vector<16x1xf32>
    %788 = vector.broadcast %787 : vector<16x1xf32> to vector<16x24xf32>
    %789 = arith.mulf %784, %788 : vector<16x24xf32>
    %790 = vector.extract_strided_slice %773 {offsets = [0, 0], sizes = [24, 8], strides = [1, 1]} : vector<24x32xf32> to vector<24x8xf32>
    %cst_381 = arith.constant dense<0.000000e+00> : vector<16x8xf32>
    %791 = tpu.matmul %789, %790, %cst_381 {dimension_numbers = #tpu.dot_dimension_numbers<[1], [0], [0], [1], [0, 0, 1, 1], [], []>} : vector<16x24xf32>, vector<24x8xf32>, vector<16x8xf32> -> vector<16x8xf32>
    %792 = arith.truncf %791 : vector<16x8xf32> to vector<16x8xbf16>
    %c2_382 = arith.constant 2 : index
    %c0_383 = arith.constant 0 : index
    %c0_384 = arith.constant 0 : index
    %793 = vector.load %arg10[%c2_382, %c0_383, %c0_384] : memref<3x32x32xbf16, #tpu.memory_space<vmem>>, vector<1x8x32xbf16>
    %794 = vector.shape_cast %793 : vector<1x8x32xbf16> to vector<8x32xbf16>
    %cst_385 = arith.constant dense<0.000000e+00> : vector<16x32xf32>
    %795 = tpu.matmul %792, %794, %cst_385 {dimension_numbers = #tpu.dot_dimension_numbers<[1], [0], [0], [1], [0, 0, 1, 1], [], []>} : vector<16x8xbf16>, vector<8x32xbf16>, vector<16x32xf32> -> vector<16x32xf32>
    %796 = arith.addf %776, %795 : vector<16x32xf32>
    %797 = vector.extract_strided_slice %775 {offsets = [0, 8], sizes = [16, 8], strides = [1, 1]} : vector<16x32xf32> to vector<16x8xf32>
    %798 = vector.extract_strided_slice %772 {offsets = [0, 8], sizes = [24, 8], strides = [1, 1]} : vector<24x32xf32> to vector<24x8xf32>
    %cst_386 = arith.constant dense<0.000000e+00> : vector<16x24xf32>
    %799 = tpu.matmul %797, %798, %cst_386 {dimension_numbers = #tpu.dot_dimension_numbers<[1], [1], [0], [0], [0, 0, 1, 0], [], []>} : vector<16x8xf32>, vector<24x8xf32>, vector<16x24xf32> -> vector<16x24xf32>
    %cst_387 = arith.constant dense<0xFF800000> : vector<16xf32>
    %800 = vector.multi_reduction <maximumf>, %799, %cst_387 [1] : vector<16x24xf32> to vector<16xf32>
    %801 = vector.shape_cast %800 : vector<16xf32> to vector<16x1xf32>
    %802 = vector.broadcast %801 : vector<16x1xf32> to vector<16x24xf32>
    %803 = arith.subf %799, %802 : vector<16x24xf32>
    %804 = math.exp %803 : vector<16x24xf32>
    %cst_388 = arith.constant dense<0.000000e+00> : vector<16xf32>
    %805 = vector.multi_reduction <add>, %804, %cst_388 [1] : vector<16x24xf32> to vector<16xf32>
    %806 = vector.shape_cast %805 : vector<16xf32> to vector<16x1xf32>
    %807 = tpu.reciprocal %806 {approx = true} : vector<16x1xf32> -> vector<16x1xf32>
    %808 = vector.broadcast %807 : vector<16x1xf32> to vector<16x24xf32>
    %809 = arith.mulf %804, %808 : vector<16x24xf32>
    %810 = vector.extract_strided_slice %773 {offsets = [0, 8], sizes = [24, 8], strides = [1, 1]} : vector<24x32xf32> to vector<24x8xf32>
    %cst_389 = arith.constant dense<0.000000e+00> : vector<16x8xf32>
    %811 = tpu.matmul %809, %810, %cst_389 {dimension_numbers = #tpu.dot_dimension_numbers<[1], [0], [0], [1], [0, 0, 1, 1], [], []>} : vector<16x24xf32>, vector<24x8xf32>, vector<16x8xf32> -> vector<16x8xf32>
    %812 = arith.truncf %811 : vector<16x8xf32> to vector<16x8xbf16>
    %c2_390 = arith.constant 2 : index
    %c8_391 = arith.constant 8 : index
    %c0_392 = arith.constant 0 : index
    %813 = vector.load %arg10[%c2_390, %c8_391, %c0_392] : memref<3x32x32xbf16, #tpu.memory_space<vmem>>, vector<1x8x32xbf16>
    %814 = vector.shape_cast %813 : vector<1x8x32xbf16> to vector<8x32xbf16>
    %cst_393 = arith.constant dense<0.000000e+00> : vector<16x32xf32>
    %815 = tpu.matmul %812, %814, %cst_393 {dimension_numbers = #tpu.dot_dimension_numbers<[1], [0], [0], [1], [0, 0, 1, 1], [], []>} : vector<16x8xbf16>, vector<8x32xbf16>, vector<16x32xf32> -> vector<16x32xf32>
    %816 = arith.addf %796, %815 : vector<16x32xf32>
    %817 = vector.extract_strided_slice %775 {offsets = [0, 16], sizes = [16, 8], strides = [1, 1]} : vector<16x32xf32> to vector<16x8xf32>
    %818 = vector.extract_strided_slice %772 {offsets = [0, 16], sizes = [24, 8], strides = [1, 1]} : vector<24x32xf32> to vector<24x8xf32>
    %cst_394 = arith.constant dense<0.000000e+00> : vector<16x24xf32>
    %819 = tpu.matmul %817, %818, %cst_394 {dimension_numbers = #tpu.dot_dimension_numbers<[1], [1], [0], [0], [0, 0, 1, 0], [], []>} : vector<16x8xf32>, vector<24x8xf32>, vector<16x24xf32> -> vector<16x24xf32>
    %cst_395 = arith.constant dense<0xFF800000> : vector<16xf32>
    %820 = vector.multi_reduction <maximumf>, %819, %cst_395 [1] : vector<16x24xf32> to vector<16xf32>
    %821 = vector.shape_cast %820 : vector<16xf32> to vector<16x1xf32>
    %822 = vector.broadcast %821 : vector<16x1xf32> to vector<16x24xf32>
    %823 = arith.subf %819, %822 : vector<16x24xf32>
    %824 = math.exp %823 : vector<16x24xf32>
    %cst_396 = arith.constant dense<0.000000e+00> : vector<16xf32>
    %825 = vector.multi_reduction <add>, %824, %cst_396 [1] : vector<16x24xf32> to vector<16xf32>
    %826 = vector.shape_cast %825 : vector<16xf32> to vector<16x1xf32>
    %827 = tpu.reciprocal %826 {approx = true} : vector<16x1xf32> -> vector<16x1xf32>
    %828 = vector.broadcast %827 : vector<16x1xf32> to vector<16x24xf32>
    %829 = arith.mulf %824, %828 : vector<16x24xf32>
    %830 = vector.extract_strided_slice %773 {offsets = [0, 16], sizes = [24, 8], strides = [1, 1]} : vector<24x32xf32> to vector<24x8xf32>
    %cst_397 = arith.constant dense<0.000000e+00> : vector<16x8xf32>
    %831 = tpu.matmul %829, %830, %cst_397 {dimension_numbers = #tpu.dot_dimension_numbers<[1], [0], [0], [1], [0, 0, 1, 1], [], []>} : vector<16x24xf32>, vector<24x8xf32>, vector<16x8xf32> -> vector<16x8xf32>
    %832 = arith.truncf %831 : vector<16x8xf32> to vector<16x8xbf16>
    %c2_398 = arith.constant 2 : index
    %c16_399 = arith.constant 16 : index
    %c0_400 = arith.constant 0 : index
    %833 = vector.load %arg10[%c2_398, %c16_399, %c0_400] : memref<3x32x32xbf16, #tpu.memory_space<vmem>>, vector<1x8x32xbf16>
    %834 = vector.shape_cast %833 : vector<1x8x32xbf16> to vector<8x32xbf16>
    %cst_401 = arith.constant dense<0.000000e+00> : vector<16x32xf32>
    %835 = tpu.matmul %832, %834, %cst_401 {dimension_numbers = #tpu.dot_dimension_numbers<[1], [0], [0], [1], [0, 0, 1, 1], [], []>} : vector<16x8xbf16>, vector<8x32xbf16>, vector<16x32xf32> -> vector<16x32xf32>
    %836 = arith.addf %816, %835 : vector<16x32xf32>
    %837 = vector.extract_strided_slice %775 {offsets = [0, 24], sizes = [16, 8], strides = [1, 1]} : vector<16x32xf32> to vector<16x8xf32>
    %838 = vector.extract_strided_slice %772 {offsets = [0, 24], sizes = [24, 8], strides = [1, 1]} : vector<24x32xf32> to vector<24x8xf32>
    %cst_402 = arith.constant dense<0.000000e+00> : vector<16x24xf32>
    %839 = tpu.matmul %837, %838, %cst_402 {dimension_numbers = #tpu.dot_dimension_numbers<[1], [1], [0], [0], [0, 0, 1, 0], [], []>} : vector<16x8xf32>, vector<24x8xf32>, vector<16x24xf32> -> vector<16x24xf32>
    %cst_403 = arith.constant dense<0xFF800000> : vector<16xf32>
    %840 = vector.multi_reduction <maximumf>, %839, %cst_403 [1] : vector<16x24xf32> to vector<16xf32>
    %841 = vector.shape_cast %840 : vector<16xf32> to vector<16x1xf32>
    %842 = vector.broadcast %841 : vector<16x1xf32> to vector<16x24xf32>
    %843 = arith.subf %839, %842 : vector<16x24xf32>
    %844 = math.exp %843 : vector<16x24xf32>
    %cst_404 = arith.constant dense<0.000000e+00> : vector<16xf32>
    %845 = vector.multi_reduction <add>, %844, %cst_404 [1] : vector<16x24xf32> to vector<16xf32>
    %846 = vector.shape_cast %845 : vector<16xf32> to vector<16x1xf32>
    %847 = tpu.reciprocal %846 {approx = true} : vector<16x1xf32> -> vector<16x1xf32>
    %848 = vector.broadcast %847 : vector<16x1xf32> to vector<16x24xf32>
    %849 = arith.mulf %844, %848 : vector<16x24xf32>
    %850 = vector.extract_strided_slice %773 {offsets = [0, 24], sizes = [24, 8], strides = [1, 1]} : vector<24x32xf32> to vector<24x8xf32>
    %cst_405 = arith.constant dense<0.000000e+00> : vector<16x8xf32>
    %851 = tpu.matmul %849, %850, %cst_405 {dimension_numbers = #tpu.dot_dimension_numbers<[1], [0], [0], [1], [0, 0, 1, 1], [], []>} : vector<16x24xf32>, vector<24x8xf32>, vector<16x8xf32> -> vector<16x8xf32>
    %852 = arith.truncf %851 : vector<16x8xf32> to vector<16x8xbf16>
    %c2_406 = arith.constant 2 : index
    %c24_407 = arith.constant 24 : index
    %c0_408 = arith.constant 0 : index
    %853 = vector.load %arg10[%c2_406, %c24_407, %c0_408] : memref<3x32x32xbf16, #tpu.memory_space<vmem>>, vector<1x8x32xbf16>
    %854 = vector.shape_cast %853 : vector<1x8x32xbf16> to vector<8x32xbf16>
    %cst_409 = arith.constant dense<0.000000e+00> : vector<16x32xf32>
    %855 = tpu.matmul %852, %854, %cst_409 {dimension_numbers = #tpu.dot_dimension_numbers<[1], [0], [0], [1], [0, 0, 1, 1], [], []>} : vector<16x8xbf16>, vector<8x32xbf16>, vector<16x32xf32> -> vector<16x32xf32>
    %856 = arith.addf %836, %855 : vector<16x32xf32>
    %c2_410 = arith.constant 2 : index
    %c0_411 = arith.constant 0 : index
    %c0_412 = arith.constant 0 : index
    %857 = vector.load %arg11[%c2_410, %c0_411, %c0_412] : memref<3x1x32xf32, #tpu.memory_space<vmem>>, vector<1x1x32xf32>
    %858 = vector.shape_cast %857 : vector<1x1x32xf32> to vector<1x32xf32>
    %859 = vector.broadcast %858 : vector<1x32xf32> to vector<16x32xf32>
    %860 = arith.addf %856, %859 : vector<16x32xf32>
    %861 = arith.addf %755, %860 : vector<16x32xf32>
    %c2_413 = arith.constant 2 : index
    %c0_414 = arith.constant 0 : index
    %c0_415 = arith.constant 0 : index
    %862 = vector.load %arg18[%c2_413, %c0_414, %c0_415] : memref<3x1x32xf32, #tpu.memory_space<vmem>>, vector<1x1x32xf32>
    %863 = vector.shape_cast %862 : vector<1x1x32xf32> to vector<1x32xf32>
    %c2_416 = arith.constant 2 : index
    %c0_417 = arith.constant 0 : index
    %c0_418 = arith.constant 0 : index
    %864 = vector.load %arg19[%c2_416, %c0_417, %c0_418] : memref<3x1x32xf32, #tpu.memory_space<vmem>>, vector<1x1x32xf32>
    %865 = vector.shape_cast %864 : vector<1x1x32xf32> to vector<1x32xf32>
    %cst_419 = arith.constant dense<0.000000e+00> : vector<16xf32>
    %866 = vector.multi_reduction <add>, %861, %cst_419 [1] : vector<16x32xf32> to vector<16xf32>
    %867 = vector.shape_cast %866 : vector<16xf32> to vector<16x1xf32>
    %cst_420 = arith.constant 3.200000e+01 : f32
    %868 = vector.broadcast %cst_420 : f32 to vector<16x1xf32>
    %869 = arith.divf %867, %868 : vector<16x1xf32>
    %870 = vector.broadcast %869 : vector<16x1xf32> to vector<16x32xf32>
    %871 = arith.subf %861, %870 : vector<16x32xf32>
    %872 = arith.mulf %871, %871 : vector<16x32xf32>
    %cst_421 = arith.constant dense<0.000000e+00> : vector<16xf32>
    %873 = vector.multi_reduction <add>, %872, %cst_421 [1] : vector<16x32xf32> to vector<16xf32>
    %874 = vector.shape_cast %873 : vector<16xf32> to vector<16x1xf32>
    %cst_422 = arith.constant 3.200000e+01 : f32
    %875 = vector.broadcast %cst_422 : f32 to vector<16x1xf32>
    %876 = arith.divf %874, %875 : vector<16x1xf32>
    %877 = vector.broadcast %869 : vector<16x1xf32> to vector<16x32xf32>
    %878 = arith.subf %861, %877 : vector<16x32xf32>
    %cst_423 = arith.constant 9.99999974E-6 : f32
    %879 = vector.broadcast %cst_423 : f32 to vector<16x1xf32>
    %880 = arith.addf %876, %879 : vector<16x1xf32>
    %881 = math.rsqrt %880 : vector<16x1xf32>
    %882 = vector.broadcast %881 : vector<16x1xf32> to vector<16x32xf32>
    %883 = arith.mulf %878, %882 : vector<16x32xf32>
    %884 = vector.broadcast %863 : vector<1x32xf32> to vector<16x32xf32>
    %885 = arith.mulf %883, %884 : vector<16x32xf32>
    %886 = vector.broadcast %865 : vector<1x32xf32> to vector<16x32xf32>
    %887 = arith.addf %885, %886 : vector<16x32xf32>
    %888 = arith.truncf %887 : vector<16x32xf32> to vector<16x32xbf16>
    %c2_424 = arith.constant 2 : index
    %c0_425 = arith.constant 0 : index
    %c0_426 = arith.constant 0 : index
    %889 = vector.load %arg12[%c2_424, %c0_425, %c0_426] : memref<3x32x2048xbf16, #tpu.memory_space<vmem>>, vector<1x32x2048xbf16>
    %890 = vector.shape_cast %889 : vector<1x32x2048xbf16> to vector<32x2048xbf16>
    %cst_427 = arith.constant dense<0.000000e+00> : vector<16x2048xf32>
    %891 = tpu.matmul %888, %890, %cst_427 {dimension_numbers = #tpu.dot_dimension_numbers<[1], [0], [0], [1], [0, 0, 1, 1], [], []>} : vector<16x32xbf16>, vector<32x2048xbf16>, vector<16x2048xf32> -> vector<16x2048xf32>
    %c2_428 = arith.constant 2 : index
    %c0_429 = arith.constant 0 : index
    %c0_430 = arith.constant 0 : index
    %892 = vector.load %arg13[%c2_428, %c0_429, %c0_430] : memref<3x1x2048xf32, #tpu.memory_space<vmem>>, vector<1x1x2048xf32>
    %893 = vector.shape_cast %892 : vector<1x1x2048xf32> to vector<1x2048xf32>
    %894 = vector.broadcast %893 : vector<1x2048xf32> to vector<16x2048xf32>
    %895 = arith.addf %891, %894 : vector<16x2048xf32>
    %cst_431 = arith.constant 0.000000e+00 : f32
    %896 = vector.broadcast %cst_431 : f32 to vector<16x2048xf32>
    %897 = arith.maximumf %895, %896 : vector<16x2048xf32>
    %898 = arith.truncf %897 : vector<16x2048xf32> to vector<16x2048xbf16>
    %c2_432 = arith.constant 2 : index
    %c0_433 = arith.constant 0 : index
    %c0_434 = arith.constant 0 : index
    %899 = vector.load %arg14[%c2_432, %c0_433, %c0_434] : memref<3x2048x32xbf16, #tpu.memory_space<vmem>>, vector<1x2048x32xbf16>
    %900 = vector.shape_cast %899 : vector<1x2048x32xbf16> to vector<2048x32xbf16>
    %cst_435 = arith.constant dense<0.000000e+00> : vector<16x32xf32>
    %901 = tpu.matmul %898, %900, %cst_435 {dimension_numbers = #tpu.dot_dimension_numbers<[1], [0], [0], [1], [0, 0, 1, 1], [], []>} : vector<16x2048xbf16>, vector<2048x32xbf16>, vector<16x32xf32> -> vector<16x32xf32>
    %c2_436 = arith.constant 2 : index
    %c0_437 = arith.constant 0 : index
    %c0_438 = arith.constant 0 : index
    %902 = vector.load %arg15[%c2_436, %c0_437, %c0_438] : memref<3x1x32xf32, #tpu.memory_space<vmem>>, vector<1x1x32xf32>
    %903 = vector.shape_cast %902 : vector<1x1x32xf32> to vector<1x32xf32>
    %904 = vector.broadcast %903 : vector<1x32xf32> to vector<16x32xf32>
    %905 = arith.addf %901, %904 : vector<16x32xf32>
    %906 = arith.addf %887, %905 : vector<16x32xf32>
    %c2_439 = arith.constant 2 : index
    %c0_440 = arith.constant 0 : index
    %c0_441 = arith.constant 0 : index
    %907 = vector.load %arg20[%c2_439, %c0_440, %c0_441] : memref<3x1x32xf32, #tpu.memory_space<vmem>>, vector<1x1x32xf32>
    %908 = vector.shape_cast %907 : vector<1x1x32xf32> to vector<1x32xf32>
    %c2_442 = arith.constant 2 : index
    %c0_443 = arith.constant 0 : index
    %c0_444 = arith.constant 0 : index
    %909 = vector.load %arg21[%c2_442, %c0_443, %c0_444] : memref<3x1x32xf32, #tpu.memory_space<vmem>>, vector<1x1x32xf32>
    %910 = vector.shape_cast %909 : vector<1x1x32xf32> to vector<1x32xf32>
    %cst_445 = arith.constant dense<0.000000e+00> : vector<16xf32>
    %911 = vector.multi_reduction <add>, %906, %cst_445 [1] : vector<16x32xf32> to vector<16xf32>
    %912 = vector.shape_cast %911 : vector<16xf32> to vector<16x1xf32>
    %cst_446 = arith.constant 3.200000e+01 : f32
    %913 = vector.broadcast %cst_446 : f32 to vector<16x1xf32>
    %914 = arith.divf %912, %913 : vector<16x1xf32>
    %915 = vector.broadcast %914 : vector<16x1xf32> to vector<16x32xf32>
    %916 = arith.subf %906, %915 : vector<16x32xf32>
    %917 = arith.mulf %916, %916 : vector<16x32xf32>
    %cst_447 = arith.constant dense<0.000000e+00> : vector<16xf32>
    %918 = vector.multi_reduction <add>, %917, %cst_447 [1] : vector<16x32xf32> to vector<16xf32>
    %919 = vector.shape_cast %918 : vector<16xf32> to vector<16x1xf32>
    %cst_448 = arith.constant 3.200000e+01 : f32
    %920 = vector.broadcast %cst_448 : f32 to vector<16x1xf32>
    %921 = arith.divf %919, %920 : vector<16x1xf32>
    %922 = vector.broadcast %914 : vector<16x1xf32> to vector<16x32xf32>
    %923 = arith.subf %906, %922 : vector<16x32xf32>
    %cst_449 = arith.constant 9.99999974E-6 : f32
    %924 = vector.broadcast %cst_449 : f32 to vector<16x1xf32>
    %925 = arith.addf %921, %924 : vector<16x1xf32>
    %926 = math.rsqrt %925 : vector<16x1xf32>
    %927 = vector.broadcast %926 : vector<16x1xf32> to vector<16x32xf32>
    %928 = arith.mulf %923, %927 : vector<16x32xf32>
    %929 = vector.broadcast %908 : vector<1x32xf32> to vector<16x32xf32>
    %930 = arith.mulf %928, %929 : vector<16x32xf32>
    %931 = vector.broadcast %910 : vector<1x32xf32> to vector<16x32xf32>
    %932 = arith.addf %930, %931 : vector<16x32xf32>
    %c0_450 = arith.constant 0 : index
    %c0_451 = arith.constant 0 : index
    %933 = vector.load %arg22[%c0_450, %c0_451] : memref<1x32xf32, #tpu.memory_space<vmem>>, vector<1x32xf32>
    %c0_452 = arith.constant 0 : index
    %c0_453 = arith.constant 0 : index
    %934 = vector.load %arg23[%c0_452, %c0_453] : memref<1x32xf32, #tpu.memory_space<vmem>>, vector<1x32xf32>
    %cst_454 = arith.constant dense<0.000000e+00> : vector<16xf32>
    %935 = vector.multi_reduction <add>, %932, %cst_454 [1] : vector<16x32xf32> to vector<16xf32>
    %936 = vector.shape_cast %935 : vector<16xf32> to vector<16x1xf32>
    %cst_455 = arith.constant 3.200000e+01 : f32
    %937 = vector.broadcast %cst_455 : f32 to vector<16x1xf32>
    %938 = arith.divf %936, %937 : vector<16x1xf32>
    %939 = vector.broadcast %938 : vector<16x1xf32> to vector<16x32xf32>
    %940 = arith.subf %932, %939 : vector<16x32xf32>
    %941 = arith.mulf %940, %940 : vector<16x32xf32>
    %cst_456 = arith.constant dense<0.000000e+00> : vector<16xf32>
    %942 = vector.multi_reduction <add>, %941, %cst_456 [1] : vector<16x32xf32> to vector<16xf32>
    %943 = vector.shape_cast %942 : vector<16xf32> to vector<16x1xf32>
    %cst_457 = arith.constant 3.200000e+01 : f32
    %944 = vector.broadcast %cst_457 : f32 to vector<16x1xf32>
    %945 = arith.divf %943, %944 : vector<16x1xf32>
    %946 = vector.broadcast %938 : vector<16x1xf32> to vector<16x32xf32>
    %947 = arith.subf %932, %946 : vector<16x32xf32>
    %cst_458 = arith.constant 9.99999974E-6 : f32
    %948 = vector.broadcast %cst_458 : f32 to vector<16x1xf32>
    %949 = arith.addf %945, %948 : vector<16x1xf32>
    %950 = math.rsqrt %949 : vector<16x1xf32>
    %951 = vector.broadcast %950 : vector<16x1xf32> to vector<16x32xf32>
    %952 = arith.mulf %947, %951 : vector<16x32xf32>
    %953 = vector.broadcast %933 : vector<1x32xf32> to vector<16x32xf32>
    %954 = arith.mulf %952, %953 : vector<16x32xf32>
    %955 = vector.broadcast %934 : vector<1x32xf32> to vector<16x32xf32>
    %956 = arith.addf %954, %955 : vector<16x32xf32>
    %957 = arith.truncf %956 : vector<16x32xf32> to vector<16x32xbf16>
    %c0_459 = arith.constant 0 : index
    %c0_460 = arith.constant 0 : index
    %958 = vector.load %arg24[%c0_459, %c0_460] : memref<32x50xbf16, #tpu.memory_space<vmem>>, vector<32x50xbf16>
    %cst_461 = arith.constant dense<0.000000e+00> : vector<16x50xf32>
    %959 = tpu.matmul %957, %958, %cst_461 {dimension_numbers = #tpu.dot_dimension_numbers<[1], [0], [0], [1], [0, 0, 1, 1], [], []>} : vector<16x32xbf16>, vector<32x50xbf16>, vector<16x50xf32> -> vector<16x50xf32>
    %c0_462 = arith.constant 0 : index
    %c0_463 = arith.constant 0 : index
    %960 = vector.load %arg25[%c0_462, %c0_463] : memref<1x50xf32, #tpu.memory_space<vmem>>, vector<1x50xf32>
    %961 = vector.broadcast %960 : vector<1x50xf32> to vector<16x50xf32>
    %962 = arith.addf %959, %961 : vector<16x50xf32>
    %963 = vector.shape_cast %962 : vector<16x50xf32> to vector<1x16x50xf32>
    %c0_464 = arith.constant 0 : index
    %c0_465 = arith.constant 0 : index
    %c0_466 = arith.constant 0 : index
    %964 = vector.load %arg26[%c0_464, %c0_465, %c0_466] : memref<1x16x50xf32, #tpu.memory_space<vmem>>, vector<1x16x50xf32>
    tpu.vector_store %arg26[%c0_464, %c0_465, %c0_466], %963 {strides = array<i32>} : memref<1x16x50xf32, #tpu.memory_space<vmem>>, vector<1x16x50xf32>,
    return
  }
  func.func @transform_0(%arg0: i32) -> (i32, i32, i32) {
    %c0_i32 = arith.constant 0 : i32
    %c0_i32_0 = arith.constant 0 : i32
    %c0_i32_1 = arith.constant 0 : i32
    return %arg0, %c0_i32, %c0_i32_0 : i32, i32, i32
  }
  func.func @transform_1(%arg0: i32) -> (i32, i32, i32) {
    %c0_i32 = arith.constant 0 : i32
    %c0_i32_0 = arith.constant 0 : i32
    %c0_i32_1 = arith.constant 0 : i32
    return %arg0, %c0_i32, %c0_i32_0 : i32, i32, i32
  }
  func.func @transform_2(%arg0: i32) -> (i32, i32) {
    %c0_i32 = arith.constant 0 : i32
    %c0_i32_0 = arith.constant 0 : i32
    %c0_i32_1 = arith.constant 0 : i32
    return %c0_i32, %c0_i32_0 : i32, i32
  }
  func.func @transform_3(%arg0: i32) -> (i32, i32, i32) {
    %c0_i32 = arith.constant 0 : i32
    %c0_i32_0 = arith.constant 0 : i32
    %c0_i32_1 = arith.constant 0 : i32
    %c0_i32_2 = arith.constant 0 : i32
    return %c0_i32, %c0_i32_0, %c0_i32_1 : i32, i32, i32
  }
  func.func @transform_4(%arg0: i32) -> (i32, i32, i32) {
    %c0_i32 = arith.constant 0 : i32
    %c0_i32_0 = arith.constant 0 : i32
    %c0_i32_1 = arith.constant 0 : i32
    %c0_i32_2 = arith.constant 0 : i32
    return %c0_i32, %c0_i32_0, %c0_i32_1 : i32, i32, i32
  }
  func.func @transform_5(%arg0: i32) -> (i32, i32, i32) {
    %c0_i32 = arith.constant 0 : i32
    %c0_i32_0 = arith.constant 0 : i32
    %c0_i32_1 = arith.constant 0 : i32
    %c0_i32_2 = arith.constant 0 : i32
    return %c0_i32, %c0_i32_0, %c0_i32_1 : i32, i32, i32
  }
  func.func @transform_6(%arg0: i32) -> (i32, i32, i32) {
    %c0_i32 = arith.constant 0 : i32
    %c0_i32_0 = arith.constant 0 : i32
    %c0_i32_1 = arith.constant 0 : i32
    %c0_i32_2 = arith.constant 0 : i32
    return %c0_i32, %c0_i32_0, %c0_i32_1 : i32, i32, i32
  }
  func.func @transform_7(%arg0: i32) -> (i32, i32, i32) {
    %c0_i32 = arith.constant 0 : i32
    %c0_i32_0 = arith.constant 0 : i32
    %c0_i32_1 = arith.constant 0 : i32
    %c0_i32_2 = arith.constant 0 : i32
    return %c0_i32, %c0_i32_0, %c0_i32_1 : i32, i32, i32
  }
  func.func @transform_8(%arg0: i32) -> (i32, i32, i32) {
    %c0_i32 = arith.constant 0 : i32
    %c0_i32_0 = arith.constant 0 : i32
    %c0_i32_1 = arith.constant 0 : i32
    %c0_i32_2 = arith.constant 0 : i32
    return %c0_i32, %c0_i32_0, %c0_i32_1 : i32, i32, i32
  }
  func.func @transform_9(%arg0: i32) -> (i32, i32, i32) {
    %c0_i32 = arith.constant 0 : i32
    %c0_i32_0 = arith.constant 0 : i32
    %c0_i32_1 = arith.constant 0 : i32
    %c0_i32_2 = arith.constant 0 : i32
    return %c0_i32, %c0_i32_0, %c0_i32_1 : i32, i32, i32
  }
  func.func @transform_10(%arg0: i32) -> (i32, i32, i32) {
    %c0_i32 = arith.constant 0 : i32
    %c0_i32_0 = arith.constant 0 : i32
    %c0_i32_1 = arith.constant 0 : i32
    %c0_i32_2 = arith.constant 0 : i32
    return %c0_i32, %c0_i32_0, %c0_i32_1 : i32, i32, i32
  }
  func.func @transform_11(%arg0: i32) -> (i32, i32, i32) {
    %c0_i32 = arith.constant 0 : i32
    %c0_i32_0 = arith.constant 0 : i32
    %c0_i32_1 = arith.constant 0 : i32
    %c0_i32_2 = arith.constant 0 : i32
    return %c0_i32, %c0_i32_0, %c0_i32_1 : i32, i32, i32
  }
  func.func @transform_12(%arg0: i32) -> (i32, i32, i32) {
    %c0_i32 = arith.constant 0 : i32
    %c0_i32_0 = arith.constant 0 : i32
    %c0_i32_1 = arith.constant 0 : i32
    %c0_i32_2 = arith.constant 0 : i32
    return %c0_i32, %c0_i32_0, %c0_i32_1 : i32, i32, i32
  }
  func.func @transform_13(%arg0: i32) -> (i32, i32, i32) {
    %c0_i32 = arith.constant 0 : i32
    %c0_i32_0 = arith.constant 0 : i32
    %c0_i32_1 = arith.constant 0 : i32
    %c0_i32_2 = arith.constant 0 : i32
    return %c0_i32, %c0_i32_0, %c0_i32_1 : i32, i32, i32
  }
  func.func @transform_14(%arg0: i32) -> (i32, i32, i32) {
    %c0_i32 = arith.constant 0 : i32
    %c0_i32_0 = arith.constant 0 : i32
    %c0_i32_1 = arith.constant 0 : i32
    %c0_i32_2 = arith.constant 0 : i32
    return %c0_i32, %c0_i32_0, %c0_i32_1 : i32, i32, i32
  }
  func.func @transform_15(%arg0: i32) -> (i32, i32, i32) {
    %c0_i32 = arith.constant 0 : i32
    %c0_i32_0 = arith.constant 0 : i32
    %c0_i32_1 = arith.constant 0 : i32
    %c0_i32_2 = arith.constant 0 : i32
    return %c0_i32, %c0_i32_0, %c0_i32_1 : i32, i32, i32
  }
  func.func @transform_16(%arg0: i32) -> (i32, i32, i32) {
    %c0_i32 = arith.constant 0 : i32
    %c0_i32_0 = arith.constant 0 : i32
    %c0_i32_1 = arith.constant 0 : i32
    %c0_i32_2 = arith.constant 0 : i32
    return %c0_i32, %c0_i32_0, %c0_i32_1 : i32, i32, i32
  }
  func.func @transform_17(%arg0: i32) -> (i32, i32, i32) {
    %c0_i32 = arith.constant 0 : i32
    %c0_i32_0 = arith.constant 0 : i32
    %c0_i32_1 = arith.constant 0 : i32
    %c0_i32_2 = arith.constant 0 : i32
    return %c0_i32, %c0_i32_0, %c0_i32_1 : i32, i32, i32
  }
  func.func @transform_18(%arg0: i32) -> (i32, i32, i32) {
    %c0_i32 = arith.constant 0 : i32
    %c0_i32_0 = arith.constant 0 : i32
    %c0_i32_1 = arith.constant 0 : i32
    %c0_i32_2 = arith.constant 0 : i32
    return %c0_i32, %c0_i32_0, %c0_i32_1 : i32, i32, i32
  }
  func.func @transform_19(%arg0: i32) -> (i32, i32, i32) {
    %c0_i32 = arith.constant 0 : i32
    %c0_i32_0 = arith.constant 0 : i32
    %c0_i32_1 = arith.constant 0 : i32
    %c0_i32_2 = arith.constant 0 : i32
    return %c0_i32, %c0_i32_0, %c0_i32_1 : i32, i32, i32
  }
  func.func @transform_20(%arg0: i32) -> (i32, i32, i32) {
    %c0_i32 = arith.constant 0 : i32
    %c0_i32_0 = arith.constant 0 : i32
    %c0_i32_1 = arith.constant 0 : i32
    %c0_i32_2 = arith.constant 0 : i32
    return %c0_i32, %c0_i32_0, %c0_i32_1 : i32, i32, i32
  }
  func.func @transform_21(%arg0: i32) -> (i32, i32) {
    %c0_i32 = arith.constant 0 : i32
    %c0_i32_0 = arith.constant 0 : i32
    %c0_i32_1 = arith.constant 0 : i32
    return %c0_i32, %c0_i32_0 : i32, i32
  }
  func.func @transform_22(%arg0: i32) -> (i32, i32) {
    %c0_i32 = arith.constant 0 : i32
    %c0_i32_0 = arith.constant 0 : i32
    %c0_i32_1 = arith.constant 0 : i32
    return %c0_i32, %c0_i32_0 : i32, i32
  }
  func.func @transform_23(%arg0: i32) -> (i32, i32) {
    %c0_i32 = arith.constant 0 : i32
    %c0_i32_0 = arith.constant 0 : i32
    %c0_i32_1 = arith.constant 0 : i32
    return %c0_i32, %c0_i32_0 : i32, i32
  }
  func.func @transform_24(%arg0: i32) -> (i32, i32) {
    %c0_i32 = arith.constant 0 : i32
    %c0_i32_0 = arith.constant 0 : i32
    %c0_i32_1 = arith.constant 0 : i32
    return %c0_i32, %c0_i32_0 : i32, i32
  }
  func.func @transform_25(%arg0: i32) -> (i32, i32, i32) {
    %c0_i32 = arith.constant 0 : i32
    %c0_i32_0 = arith.constant 0 : i32
    %c0_i32_1 = arith.constant 0 : i32
    return %arg0, %c0_i32, %c0_i32_0 : i32, i32, i32
  }
}

</mosaic_0001>

<llo_original>
// kernel: tpu_custom_call.1
$region0: #{tpu_custom_call.1}
  #allocation0 [shape = 'u32[]', space=smem, size = 0x4, offset = 0x4, fixed_abs, tag = 'smem constant byte address 0x4 - core index']
  #allocation1 [shape = 'u32[72,128]{1,0:T(1,128)}', space=vmem, size = 0x9000, scoped, tag = 'internal scratch']
  %s0 = inlined_call_operand.vmem [shape: f32[2,16,32], index: 0, kind: input, shape index: {}]
  %s1 = inlined_call_operand.vmem [shape: f32[2,24,32], index: 1, kind: input, shape index: {}]
  %s2 = inlined_call_operand.vmem [shape: f32[16,32], index: 2, kind: input, shape index: {}]
  %s3 = inlined_call_operand.vmem [shape: bf16[3,32,96], index: 3, kind: input, shape index: {}]
  %s4 = inlined_call_operand.vmem [shape: f32[3,1,96], index: 4, kind: input, shape index: {}]
  %s5 = inlined_call_operand.vmem [shape: bf16[3,32,32], index: 5, kind: input, shape index: {}]
  %s6 = inlined_call_operand.vmem [shape: f32[3,1,32], index: 6, kind: input, shape index: {}]
  %s7 = inlined_call_operand.vmem [shape: bf16[3,32,96], index: 7, kind: input, shape index: {}]
  %s8 = inlined_call_operand.vmem [shape: f32[3,1,96], index: 8, kind: input, shape index: {}]
  %s9 = inlined_call_operand.vmem [shape: bf16[3,32,32], index: 9, kind: input, shape index: {}]
  %s10 = inlined_call_operand.vmem [shape: f32[3,1,32], index: 10, kind: input, shape index: {}]
  %s11 = inlined_call_operand.vmem [shape: bf16[3,32,2048], index: 11, kind: input, shape index: {}]
  %s12 = inlined_call_operand.vmem [shape: f32[3,1,2048], index: 12, kind: input, shape index: {}]
  %s13 = inlined_call_operand.vmem [shape: bf16[3,2048,32], index: 13, kind: input, shape index: {}]
  %s14 = inlined_call_operand.vmem [shape: f32[3,1,32], index: 14, kind: input, shape index: {}]
  %s15 = inlined_call_operand.vmem [shape: f32[3,1,32], index: 15, kind: input, shape index: {}]
  %s16 = inlined_call_operand.vmem [shape: f32[3,1,32], index: 16, kind: input, shape index: {}]
  %s17 = inlined_call_operand.vmem [shape: f32[3,1,32], index: 17, kind: input, shape index: {}]
  %s18 = inlined_call_operand.vmem [shape: f32[3,1,32], index: 18, kind: input, shape index: {}]
  %s19 = inlined_call_operand.vmem [shape: f32[3,1,32], index: 19, kind: input, shape index: {}]
  %s20 = inlined_call_operand.vmem [shape: f32[3,1,32], index: 20, kind: input, shape index: {}]
  %s21 = inlined_call_operand.vmem [shape: f32[1,32], index: 21, kind: input, shape index: {}]
  %s22 = inlined_call_operand.vmem [shape: f32[1,32], index: 22, kind: input, shape index: {}]
  %s23 = inlined_call_operand.vmem [shape: bf16[32,50], index: 23, kind: input, shape index: {}]
  %s24 = inlined_call_operand.vmem [shape: f32[1,50], index: 24, kind: input, shape index: {}]
  %s25 = inlined_call_operand.hbm [shape: f32[2,16,50], index: 25, kind: output, shape index: {}]
  %s26 = sld [smem:[#allocation0]]
  $region133: #{tpu_custom_call.1} parent=0
    _
  %s28 = ssub.s32 1, %s26
  %s29 = scalar_select 0, %s28, %s26
  $region1: #{tpu_custom_call.1} parent=0
    #allocation2 [shape = 'u8[16384]{0}', space=vmem, size = 0x4000, scoped, tag = 'output window, operand 0']
    #allocation3 [shape = 's32[2]{0}', space=sflag, size = 0x8, scoped, tag = 'scoped memory for tpu_custom_call.1']
    %30 = vsyncpa [#allocation3], 0
    %s31 = scalar_lea.sflag [#allocation3], 1
    %32 = vsyncpa %s31, 0
    loop: start=0, step=1, limit=4
    $region2: #{tpu_custom_call.1} parent=1 // loop_pre_header
      _
    $region3: #{tpu_custom_call.1} parent=1 // loop_header
      %s34 = sphi 0, %s38
      %p35 = scmp.ge.s32.totalorder %s34, 4
      %s44 = sphi 0, %s46
      %s47 = sphi 0, %s44
      %s48 = sphi 0, %s47
      %s64 = sphi 0, %s48
      %s70 = sphi 0, %s72
      %s73 = sphi 0, %s70
      %s74 = sphi 0, %s73
      %s90 = sphi 0, %s74
      %s94 = sphi 0, %s94
      %s96 = sphi 0, %s94
      %s97 = sphi 0, %s96
      %s111 = sphi 0, %s97
      %s115 = sphi 0, %s115
      %s117 = sphi 0, %s115
      %s118 = sphi 0, %s117
      %s132 = sphi 0, %s118
      %s136 = sphi 0, %s136
      %s138 = sphi 0, %s136
      %s139 = sphi 0, %s138
      %s153 = sphi 0, %s139
      %s157 = sphi 0, %s157
      %s159 = sphi 0, %s157
      %s160 = sphi 0, %s159
      %s174 = sphi 0, %s160
      %s178 = sphi 0, %s178
      %s180 = sphi 0, %s178
      %s181 = sphi 0, %s180
      %s195 = sphi 0, %s181
      %s199 = sphi 0, %s199
      %s201 = sphi 0, %s199
      %s202 = sphi 0, %s201
      %s216 = sphi 0, %s202
      %s220 = sphi 0, %s220
      %s222 = sphi 0, %s220
      %s223 = sphi 0, %s222
      %s237 = sphi 0, %s223
      %s241 = sphi 0, %s241
      %s243 = sphi 0, %s241
      %s244 = sphi 0, %s243
      %s258 = sphi 0, %s244
      %s262 = sphi 0, %s262
      %s264 = sphi 0, %s262
      %s265 = sphi 0, %s264
      %s279 = sphi 0, %s265
      %s283 = sphi 0, %s283
      %s285 = sphi 0, %s283
      %s286 = sphi 0, %s285
      %s300 = sphi 0, %s286
      %s304 = sphi 0, %s304
      %s306 = sphi 0, %s304
      %s307 = sphi 0, %s306
      %s321 = sphi 0, %s307
      %s325 = sphi 0, %s325
      %s327 = sphi 0, %s325
      %s328 = sphi 0, %s327
      %s342 = sphi 0, %s328
      %s346 = sphi 0, %s346
      %s348 = sphi 0, %s346
      %s349 = sphi 0, %s348
      %s363 = sphi 0, %s349
      %s367 = sphi 0, %s367
      %s369 = sphi 0, %s367
      %s370 = sphi 0, %s369
      %s384 = sphi 0, %s370
      %s388 = sphi 0, %s388
      %s390 = sphi 0, %s388
      %s391 = sphi 0, %s390
      %s405 = sphi 0, %s391
      %s409 = sphi 0, %s409
      %s411 = sphi 0, %s409
      %s412 = sphi 0, %s411
      %s426 = sphi 0, %s412
      %s430 = sphi 0, %s430
      %s432 = sphi 0, %s430
      %s433 = sphi 0, %s432
      %s447 = sphi 0, %s433
      %s451 = sphi 0, %s451
      %s453 = sphi 0, %s451
      %s454 = sphi 0, %s453
      %s468 = sphi 0, %s454
      %s472 = sphi 0, %s472
      %s474 = sphi 0, %s472
      %s475 = sphi 0, %s474
      %s489 = sphi 0, %s475
      %s493 = sphi 0, %s493
      %s495 = sphi 0, %s493
      %s496 = sphi 0, %s495
      %s510 = sphi 0, %s496
      %s514 = sphi 0, %s514
      %s516 = sphi 0, %s514
      %s517 = sphi 0, %s516
      %s531 = sphi 0, %s517
      %s535 = sphi 0, %s535
      %s537 = sphi 0, %s535
      %s538 = sphi 0, %s537
      %s552 = sphi 0, %s538
      %s556 = sphi 0, %s556
      %s558 = sphi 0, %s556
      %s559 = sphi 0, %s558
      %s573 = sphi 0, %s559
      %s579 = sphi 0, %s581
      %s582 = sphi 0, %s579
      %s583 = sphi 0, %s582
      %s599 = sphi 0, %s583
    $region4: #{tpu_custom_call.1} parent=1 // loop_header_branch
      %37 = sbr.rel (%p35) target = $region8
    $region5: #{tpu_custom_call.1} parent=1 // loop_body
      %s39 = ssub.s32 %s34, 1
      %s40 = ssub.s32 %s34, 2
      %s41 = sadd.s32 %s34, 1
      %s42 = ssub.s32 %s34, %s41
      %p43 = scmp.eq.s32.totalorder %s42, 0
      %s45 = sadd.s32 %s44, 1
      %s46 = scalar_select %p43, %s44, %s45
      %p49 = pneg %p43
      %p50 = scmp.eq.s32.totalorder %s34, 1
      %p51 = por %p49, %p50
      %p52 = scmp.ne.s32.totalorder %s44, %s47
      %p53 = scmp.eq.s32.totalorder %s34, 0
      %p54 = por %p52, %p53
      %p55 = scmp.ne.s32.totalorder %s44, %s47
      %p56 = scmp.eq.s32.totalorder %s39, 1
      %p57 = por %p55, %p56
      %p58 = scmp.ne.s32.totalorder %s47, %s48
      %p59 = scmp.eq.s32.totalorder %s39, 0
      %p60 = por %p58, %p59
      %p61 = scmp.ne.s32.totalorder %s47, %s48
      %p62 = scmp.eq.s32.totalorder %s40, 1
      %p63 = por %p61, %p62
      %p65 = scmp.ne.s32.totalorder %s48, %s64
      %p66 = scmp.eq.s32.totalorder %s40, 0
      %p67 = por %p65, %p66
      %s68 = ssub.s32 %s34, %s41
      %p69 = scmp.eq.s32.totalorder %s68, 0
      %s71 = sadd.s32 %s70, 1
      %s72 = scalar_select %p69, %s70, %s71
      %p75 = pneg %p69
      %p76 = scmp.eq.s32.totalorder %s34, 1
      %p77 = por %p75, %p76
      %p78 = scmp.ne.s32.totalorder %s70, %s73
      %p79 = scmp.eq.s32.totalorder %s34, 0
      %p80 = por %p78, %p79
      %p81 = scmp.ne.s32.totalorder %s70, %s73
      %p82 = scmp.eq.s32.totalorder %s39, 1
      %p83 = por %p81, %p82
      %p84 = scmp.ne.s32.totalorder %s73, %s74
      %p85 = scmp.eq.s32.totalorder %s39, 0
      %p86 = por %p84, %p85
      %p87 = scmp.ne.s32.totalorder %s73, %s74
      %p88 = scmp.eq.s32.totalorder %s40, 1
      %p89 = por %p87, %p88
      %p91 = scmp.ne.s32.totalorder %s74, %s90
      %p92 = scmp.eq.s32.totalorder %s40, 0
      %p93 = por %p91, %p92
      %s95 = sadd.s32 %s94, 1
      %p98 = scmp.eq.s32.totalorder %s34, 1
      %p99 = scmp.ne.s32.totalorder %s94, %s96
      %p100 = scmp.eq.s32.totalorder %s34, 0
      %p101 = por %p99, %p100
      %p102 = scmp.ne.s32.totalorder %s94, %s96
      %p103 = scmp.eq.s32.totalorder %s39, 1
      %p104 = por %p102, %p103
      %p105 = scmp.ne.s32.totalorder %s96, %s97
      %p106 = scmp.eq.s32.totalorder %s39, 0
      %p107 = por %p105, %p106
      %p108 = scmp.ne.s32.totalorder %s96, %s97
      %p109 = scmp.eq.s32.totalorder %s40, 1
      %p110 = por %p108, %p109
      %p112 = scmp.ne.s32.totalorder %s97, %s111
      %p113 = scmp.eq.s32.totalorder %s40, 0
      %p114 = por %p112, %p113
      %s116 = sadd.s32 %s115, 1
      %p119 = scmp.eq.s32.totalorder %s34, 1
      %p120 = scmp.ne.s32.totalorder %s115, %s117
      %p121 = scmp.eq.s32.totalorder %s34, 0
      %p122 = por %p120, %p121
      %p123 = scmp.ne.s32.totalorder %s115, %s117
      %p124 = scmp.eq.s32.totalorder %s39, 1
      %p125 = por %p123, %p124
      %p126 = scmp.ne.s32.totalorder %s117, %s118
      %p127 = scmp.eq.s32.totalorder %s39, 0
      %p128 = por %p126, %p127
      %p129 = scmp.ne.s32.totalorder %s117, %s118
      %p130 = scmp.eq.s32.totalorder %s40, 1
      %p131 = por %p129, %p130
      %p133 = scmp.ne.s32.totalorder %s118, %s132
      %p134 = scmp.eq.s32.totalorder %s40, 0
      %p135 = por %p133, %p134
      %s137 = sadd.s32 %s136, 1
      %p140 = scmp.eq.s32.totalorder %s34, 1
      %p141 = scmp.ne.s32.totalorder %s136, %s138
      %p142 = scmp.eq.s32.totalorder %s34, 0
      %p143 = por %p141, %p142
      %p144 = scmp.ne.s32.totalorder %s136, %s138
      %p145 = scmp.eq.s32.totalorder %s39, 1
      %p146 = por %p144, %p145
      %p147 = scmp.ne.s32.totalorder %s138, %s139
      %p148 = scmp.eq.s32.totalorder %s39, 0
      %p149 = por %p147, %p148
      %p150 = scmp.ne.s32.totalorder %s138, %s139
      %p151 = scmp.eq.s32.totalorder %s40, 1
      %p152 = por %p150, %p151
      %p154 = scmp.ne.s32.totalorder %s139, %s153
      %p155 = scmp.eq.s32.totalorder %s40, 0
      %p156 = por %p154, %p155
      %s158 = sadd.s32 %s157, 1
      %p161 = scmp.eq.s32.totalorder %s34, 1
      %p162 = scmp.ne.s32.totalorder %s157, %s159
      %p163 = scmp.eq.s32.totalorder %s34, 0
      %p164 = por %p162, %p163
      %p165 = scmp.ne.s32.totalorder %s157, %s159
      %p166 = scmp.eq.s32.totalorder %s39, 1
      %p167 = por %p165, %p166
      %p168 = scmp.ne.s32.totalorder %s159, %s160
      %p169 = scmp.eq.s32.totalorder %s39, 0
      %p170 = por %p168, %p169
      %p171 = scmp.ne.s32.totalorder %s159, %s160
      %p172 = scmp.eq.s32.totalorder %s40, 1
      %p173 = por %p171, %p172
      %p175 = scmp.ne.s32.totalorder %s160, %s174
      %p176 = scmp.eq.s32.totalorder %s40, 0
      %p177 = por %p175, %p176
      %s179 = sadd.s32 %s178, 1
      %p182 = scmp.eq.s32.totalorder %s34, 1
      %p183 = scmp.ne.s32.totalorder %s178, %s180
      %p184 = scmp.eq.s32.totalorder %s34, 0
      %p185 = por %p183, %p184
      %p186 = scmp.ne.s32.totalorder %s178, %s180
      %p187 = scmp.eq.s32.totalorder %s39, 1
      %p188 = por %p186, %p187
      %p189 = scmp.ne.s32.totalorder %s180, %s181
      %p190 = scmp.eq.s32.totalorder %s39, 0
      %p191 = por %p189, %p190
      %p192 = scmp.ne.s32.totalorder %s180, %s181
      %p193 = scmp.eq.s32.totalorder %s40, 1
      %p194 = por %p192, %p193
      %p196 = scmp.ne.s32.totalorder %s181, %s195
      %p197 = scmp.eq.s32.totalorder %s40, 0
      %p198 = por %p196, %p197
      %s200 = sadd.s32 %s199, 1
      %p203 = scmp.eq.s32.totalorder %s34, 1
      %p204 = scmp.ne.s32.totalorder %s199, %s201
      %p205 = scmp.eq.s32.totalorder %s34, 0
      %p206 = por %p204, %p205
      %p207 = scmp.ne.s32.totalorder %s199, %s201
      %p208 = scmp.eq.s32.totalorder %s39, 1
      %p209 = por %p207, %p208
      %p210 = scmp.ne.s32.totalorder %s201, %s202
      %p211 = scmp.eq.s32.totalorder %s39, 0
      %p212 = por %p210, %p211
      %p213 = scmp.ne.s32.totalorder %s201, %s202
      %p214 = scmp.eq.s32.totalorder %s40, 1
      %p215 = por %p213, %p214
      %p217 = scmp.ne.s32.totalorder %s202, %s216
      %p218 = scmp.eq.s32.totalorder %s40, 0
      %p219 = por %p217, %p218
      %s221 = sadd.s32 %s220, 1
      %p224 = scmp.eq.s32.totalorder %s34, 1
      %p225 = scmp.ne.s32.totalorder %s220, %s222
      %p226 = scmp.eq.s32.totalorder %s34, 0
      %p227 = por %p225, %p226
      %p228 = scmp.ne.s32.totalorder %s220, %s222
      %p229 = scmp.eq.s32.totalorder %s39, 1
      %p230 = por %p228, %p229
      %p231 = scmp.ne.s32.totalorder %s222, %s223
      %p232 = scmp.eq.s32.totalorder %s39, 0
      %p233 = por %p231, %p232
      %p234 = scmp.ne.s32.totalorder %s222, %s223
      %p235 = scmp.eq.s32.totalorder %s40, 1
      %p236 = por %p234, %p235
      %p238 = scmp.ne.s32.totalorder %s223, %s237
      %p239 = scmp.eq.s32.totalorder %s40, 0
      %p240 = por %p238, %p239
      %s242 = sadd.s32 %s241, 1
      %p245 = scmp.eq.s32.totalorder %s34, 1
      %p246 = scmp.ne.s32.totalorder %s241, %s243
      %p247 = scmp.eq.s32.totalorder %s34, 0
      %p248 = por %p246, %p247
      %p249 = scmp.ne.s32.totalorder %s241, %s243
      %p250 = scmp.eq.s32.totalorder %s39, 1
      %p251 = por %p249, %p250
      %p252 = scmp.ne.s32.totalorder %s243, %s244
      %p253 = scmp.eq.s32.totalorder %s39, 0
      %p254 = por %p252, %p253
      %p255 = scmp.ne.s32.totalorder %s243, %s244
      %p256 = scmp.eq.s32.totalorder %s40, 1
      %p257 = por %p255, %p256
      %p259 = scmp.ne.s32.totalorder %s244, %s258
      %p260 = scmp.eq.s32.totalorder %s40, 0
      %p261 = por %p259, %p260
      %s263 = sadd.s32 %s262, 1
      %p266 = scmp.eq.s32.totalorder %s34, 1
      %p267 = scmp.ne.s32.totalorder %s262, %s264
      %p268 = scmp.eq.s32.totalorder %s34, 0
      %p269 = por %p267, %p268
      %p270 = scmp.ne.s32.totalorder %s262, %s264
      %p271 = scmp.eq.s32.totalorder %s39, 1
      %p272 = por %p270, %p271
      %p273 = scmp.ne.s32.totalorder %s264, %s265
      %p274 = scmp.eq.s32.totalorder %s39, 0
      %p275 = por %p273, %p274
      %p276 = scmp.ne.s32.totalorder %s264, %s265
      %p277 = scmp.eq.s32.totalorder %s40, 1
      %p278 = por %p276, %p277
      %p280 = scmp.ne.s32.totalorder %s265, %s279
      %p281 = scmp.eq.s32.totalorder %s40, 0
      %p282 = por %p280, %p281
      %s284 = sadd.s32 %s283, 1
      %p287 = scmp.eq.s32.totalorder %s34, 1
      %p288 = scmp.ne.s32.totalorder %s283, %s285
      %p289 = scmp.eq.s32.totalorder %s34, 0
      %p290 = por %p288, %p289
      %p291 = scmp.ne.s32.totalorder %s283, %s285
      %p292 = scmp.eq.s32.totalorder %s39, 1
      %p293 = por %p291, %p292
      %p294 = scmp.ne.s32.totalorder %s285, %s286
      %p295 = scmp.eq.s32.totalorder %s39, 0
      %p296 = por %p294, %p295
      %p297 = scmp.ne.s32.totalorder %s285, %s286
      %p298 = scmp.eq.s32.totalorder %s40, 1
      %p299 = por %p297, %p298
      %p301 = scmp.ne.s32.totalorder %s286, %s300
      %p302 = scmp.eq.s32.totalorder %s40, 0
      %p303 = por %p301, %p302
      %s305 = sadd.s32 %s304, 1
      %p308 = scmp.eq.s32.totalorder %s34, 1
      %p309 = scmp.ne.s32.totalorder %s304, %s306
      %p310 = scmp.eq.s32.totalorder %s34, 0
      %p311 = por %p309, %p310
      %p312 = scmp.ne.s32.totalorder %s304, %s306
      %p313 = scmp.eq.s32.totalorder %s39, 1
      %p314 = por %p312, %p313
      %p315 = scmp.ne.s32.totalorder %s306, %s307
      %p316 = scmp.eq.s32.totalorder %s39, 0
      %p317 = por %p315, %p316
      %p318 = scmp.ne.s32.totalorder %s306, %s307
      %p319 = scmp.eq.s32.totalorder %s40, 1
      %p320 = por %p318, %p319
      %p322 = scmp.ne.s32.totalorder %s307, %s321
      %p323 = scmp.eq.s32.totalorder %s40, 0
      %p324 = por %p322, %p323
      %s326 = sadd.s32 %s325, 1
      %p329 = scmp.eq.s32.totalorder %s34, 1
      %p330 = scmp.ne.s32.totalorder %s325, %s327
      %p331 = scmp.eq.s32.totalorder %s34, 0
      %p332 = por %p330, %p331
      %p333 = scmp.ne.s32.totalorder %s325, %s327
      %p334 = scmp.eq.s32.totalorder %s39, 1
      %p335 = por %p333, %p334
      %p336 = scmp.ne.s32.totalorder %s327, %s328
      %p337 = scmp.eq.s32.totalorder %s39, 0
      %p338 = por %p336, %p337
      %p339 = scmp.ne.s32.totalorder %s327, %s328
      %p340 = scmp.eq.s32.totalorder %s40, 1
      %p341 = por %p339, %p340
      %p343 = scmp.ne.s32.totalorder %s328, %s342
      %p344 = scmp.eq.s32.totalorder %s40, 0
      %p345 = por %p343, %p344
      %s347 = sadd.s32 %s346, 1
      %p350 = scmp.eq.s32.totalorder %s34, 1
      %p351 = scmp.ne.s32.totalorder %s346, %s348
      %p352 = scmp.eq.s32.totalorder %s34, 0
      %p353 = por %p351, %p352
      %p354 = scmp.ne.s32.totalorder %s346, %s348
      %p355 = scmp.eq.s32.totalorder %s39, 1
      %p356 = por %p354, %p355
      %p357 = scmp.ne.s32.totalorder %s348, %s349
      %p358 = scmp.eq.s32.totalorder %s39, 0
      %p359 = por %p357, %p358
      %p360 = scmp.ne.s32.totalorder %s348, %s349
      %p361 = scmp.eq.s32.totalorder %s40, 1
      %p362 = por %p360, %p361
      %p364 = scmp.ne.s32.totalorder %s349, %s363
      %p365 = scmp.eq.s32.totalorder %s40, 0
      %p366 = por %p364, %p365
      %s368 = sadd.s32 %s367, 1
      %p371 = scmp.eq.s32.totalorder %s34, 1
      %p372 = scmp.ne.s32.totalorder %s367, %s369
      %p373 = scmp.eq.s32.totalorder %s34, 0
      %p374 = por %p372, %p373
      %p375 = scmp.ne.s32.totalorder %s367, %s369
      %p376 = scmp.eq.s32.totalorder %s39, 1
      %p377 = por %p375, %p376
      %p378 = scmp.ne.s32.totalorder %s369, %s370
      %p379 = scmp.eq.s32.totalorder %s39, 0
      %p380 = por %p378, %p379
      %p381 = scmp.ne.s32.totalorder %s369, %s370
      %p382 = scmp.eq.s32.totalorder %s40, 1
      %p383 = por %p381, %p382
      %p385 = scmp.ne.s32.totalorder %s370, %s384
      %p386 = scmp.eq.s32.totalorder %s40, 0
      %p387 = por %p385, %p386
      %s389 = sadd.s32 %s388, 1
      %p392 = scmp.eq.s32.totalorder %s34, 1
      %p393 = scmp.ne.s32.totalorder %s388, %s390
      %p394 = scmp.eq.s32.totalorder %s34, 0
      %p395 = por %p393, %p394
      %p396 = scmp.ne.s32.totalorder %s388, %s390
      %p397 = scmp.eq.s32.totalorder %s39, 1
      %p398 = por %p396, %p397
      %p399 = scmp.ne.s32.totalorder %s390, %s391
      %p400 = scmp.eq.s32.totalorder %s39, 0
      %p401 = por %p399, %p400
      %p402 = scmp.ne.s32.totalorder %s390, %s391
      %p403 = scmp.eq.s32.totalorder %s40, 1
      %p404 = por %p402, %p403
      %p406 = scmp.ne.s32.totalorder %s391, %s405
      %p407 = scmp.eq.s32.totalorder %s40, 0
      %p408 = por %p406, %p407
      %s410 = sadd.s32 %s409, 1
      %p413 = scmp.eq.s32.totalorder %s34, 1
      %p414 = scmp.ne.s32.totalorder %s409, %s411
      %p415 = scmp.eq.s32.totalorder %s34, 0
      %p416 = por %p414, %p415
      %p417 = scmp.ne.s32.totalorder %s409, %s411
      %p418 = scmp.eq.s32.totalorder %s39, 1
      %p419 = por %p417, %p418
      %p420 = scmp.ne.s32.totalorder %s411, %s412
      %p421 = scmp.eq.s32.totalorder %s39, 0
      %p422 = por %p420, %p421
      %p423 = scmp.ne.s32.totalorder %s411, %s412
      %p424 = scmp.eq.s32.totalorder %s40, 1
      %p425 = por %p423, %p424
      %p427 = scmp.ne.s32.totalorder %s412, %s426
      %p428 = scmp.eq.s32.totalorder %s40, 0
      %p429 = por %p427, %p428
      %s431 = sadd.s32 %s430, 1
      %p434 = scmp.eq.s32.totalorder %s34, 1
      %p435 = scmp.ne.s32.totalorder %s430, %s432
      %p436 = scmp.eq.s32.totalorder %s34, 0
      %p437 = por %p435, %p436
      %p438 = scmp.ne.s32.totalorder %s430, %s432
      %p439 = scmp.eq.s32.totalorder %s39, 1
      %p440 = por %p438, %p439
      %p441 = scmp.ne.s32.totalorder %s432, %s433
      %p442 = scmp.eq.s32.totalorder %s39, 0
      %p443 = por %p441, %p442
      %p444 = scmp.ne.s32.totalorder %s432, %s433
      %p445 = scmp.eq.s32.totalorder %s40, 1
      %p446 = por %p444, %p445
      %p448 = scmp.ne.s32.totalorder %s433, %s447
      %p449 = scmp.eq.s32.totalorder %s40, 0
      %p450 = por %p448, %p449
      %s452 = sadd.s32 %s451, 1
      %p455 = scmp.eq.s32.totalorder %s34, 1
      %p456 = scmp.ne.s32.totalorder %s451, %s453
      %p457 = scmp.eq.s32.totalorder %s34, 0
      %p458 = por %p456, %p457
      %p459 = scmp.ne.s32.totalorder %s451, %s453
      %p460 = scmp.eq.s32.totalorder %s39, 1
      %p461 = por %p459, %p460
      %p462 = scmp.ne.s32.totalorder %s453, %s454
      %p463 = scmp.eq.s32.totalorder %s39, 0
      %p464 = por %p462, %p463
      %p465 = scmp.ne.s32.totalorder %s453, %s454
      %p466 = scmp.eq.s32.totalorder %s40, 1
      %p467 = por %p465, %p466
      %p469 = scmp.ne.s32.totalorder %s454, %s468
      %p470 = scmp.eq.s32.totalorder %s40, 0
      %p471 = por %p469, %p470
      %s473 = sadd.s32 %s472, 1
      %p476 = scmp.eq.s32.totalorder %s34, 1
      %p477 = scmp.ne.s32.totalorder %s472, %s474
      %p478 = scmp.eq.s32.totalorder %s34, 0
      %p479 = por %p477, %p478
      %p480 = scmp.ne.s32.totalorder %s472, %s474
      %p481 = scmp.eq.s32.totalorder %s39, 1
      %p482 = por %p480, %p481
      %p483 = scmp.ne.s32.totalorder %s474, %s475
      %p484 = scmp.eq.s32.totalorder %s39, 0
      %p485 = por %p483, %p484
      %p486 = scmp.ne.s32.totalorder %s474, %s475
      %p487 = scmp.eq.s32.totalorder %s40, 1
      %p488 = por %p486, %p487
      %p490 = scmp.ne.s32.totalorder %s475, %s489
      %p491 = scmp.eq.s32.totalorder %s40, 0
      %p492 = por %p490, %p491
      %s494 = sadd.s32 %s493, 1
      %p497 = scmp.eq.s32.totalorder %s34, 1
      %p498 = scmp.ne.s32.totalorder %s493, %s495
      %p499 = scmp.eq.s32.totalorder %s34, 0
      %p500 = por %p498, %p499
      %p501 = scmp.ne.s32.totalorder %s493, %s495
      %p502 = scmp.eq.s32.totalorder %s39, 1
      %p503 = por %p501, %p502
      %p504 = scmp.ne.s32.totalorder %s495, %s496
      %p505 = scmp.eq.s32.totalorder %s39, 0
      %p506 = por %p504, %p505
      %p507 = scmp.ne.s32.totalorder %s495, %s496
      %p508 = scmp.eq.s32.totalorder %s40, 1
      %p509 = por %p507, %p508
      %p511 = scmp.ne.s32.totalorder %s496, %s510
      %p512 = scmp.eq.s32.totalorder %s40, 0
      %p513 = por %p511, %p512
      %s515 = sadd.s32 %s514, 1
      %p518 = scmp.eq.s32.totalorder %s34, 1
      %p519 = scmp.ne.s32.totalorder %s514, %s516
      %p520 = scmp.eq.s32.totalorder %s34, 0
      %p521 = por %p519, %p520
      %p522 = scmp.ne.s32.totalorder %s514, %s516
      %p523 = scmp.eq.s32.totalorder %s39, 1
      %p524 = por %p522, %p523
      %p525 = scmp.ne.s32.totalorder %s516, %s517
      %p526 = scmp.eq.s32.totalorder %s39, 0
      %p527 = por %p525, %p526
      %p528 = scmp.ne.s32.totalorder %s516, %s517
      %p529 = scmp.eq.s32.totalorder %s40, 1
      %p530 = por %p528, %p529
      %p532 = scmp.ne.s32.totalorder %s517, %s531
      %p533 = scmp.eq.s32.totalorder %s40, 0
      %p534 = por %p532, %p533
      %s536 = sadd.s32 %s535, 1
      %p539 = scmp.eq.s32.totalorder %s34, 1
      %p540 = scmp.ne.s32.totalorder %s535, %s537
      %p541 = scmp.eq.s32.totalorder %s34, 0
      %p542 = por %p540, %p541
      %p543 = scmp.ne.s32.totalorder %s535, %s537
      %p544 = scmp.eq.s32.totalorder %s39, 1
      %p545 = por %p543, %p544
      %p546 = scmp.ne.s32.totalorder %s537, %s538
      %p547 = scmp.eq.s32.totalorder %s39, 0
      %p548 = por %p546, %p547
      %p549 = scmp.ne.s32.totalorder %s537, %s538
      %p550 = scmp.eq.s32.totalorder %s40, 1
      %p551 = por %p549, %p550
      %p553 = scmp.ne.s32.totalorder %s538, %s552
      %p554 = scmp.eq.s32.totalorder %s40, 0
      %p555 = por %p553, %p554
      %s557 = sadd.s32 %s556, 1
      %p560 = scmp.eq.s32.totalorder %s34, 1
      %p561 = scmp.ne.s32.totalorder %s556, %s558
      %p562 = scmp.eq.s32.totalorder %s34, 0
      %p563 = por %p561, %p562
      %p564 = scmp.ne.s32.totalorder %s556, %s558
      %p565 = scmp.eq.s32.totalorder %s39, 1
      %p566 = por %p564, %p565
      %p567 = scmp.ne.s32.totalorder %s558, %s559
      %p568 = scmp.eq.s32.totalorder %s39, 0
      %p569 = por %p567, %p568
      %p570 = scmp.ne.s32.totalorder %s558, %s559
      %p571 = scmp.eq.s32.totalorder %s40, 1
      %p572 = por %p570, %p571
      %p574 = scmp.ne.s32.totalorder %s559, %s573
      %p575 = scmp.eq.s32.totalorder %s40, 0
      %p576 = por %p574, %p575
      %s577 = ssub.s32 %s34, %s41
      %p578 = scmp.eq.s32.totalorder %s577, 0
      %s580 = sadd.s32 %s579, 1
      %s581 = scalar_select %p578, %s579, %s580
      %p584 = pneg %p578
      %p585 = scmp.eq.s32.totalorder %s34, 1
      %p586 = por %p584, %p585
      %p587 = scmp.ne.s32.totalorder %s579, %s582
      %p588 = scmp.eq.s32.totalorder %s34, 0
      %p589 = por %p587, %p588
      %p590 = scmp.ne.s32.totalorder %s579, %s582
      %p591 = scmp.eq.s32.totalorder %s39, 1
      %p592 = por %p590, %p591
      %p593 = scmp.ne.s32.totalorder %s582, %s583
      %p594 = scmp.eq.s32.totalorder %s39, 0
      %p595 = por %p593, %p594
      %p596 = scmp.ne.s32.totalorder %s582, %s583
      %p597 = scmp.eq.s32.totalorder %s40, 1
      %p598 = por %p596, %p597
      %p600 = scmp.ne.s32.totalorder %s583, %s599
      %p601 = scmp.eq.s32.totalorder %s40, 0
      %p602 = por %p600, %p601
      %p603 = scmp.le.s32.totalorder 1, %s34
      %p604 = scmp.lt.s32.totalorder %s34, 3
      %p605 = pnand %p603, %p604
      %p606 = pneg %p605
      // Predicated region
      $region9: #{tpu_custom_call.1} parent=5 // pred_check
        _
      $region10: #{tpu_custom_call.1} parent=5 // pred_check_branch
        %608 = sbr.rel (%p605) target = $region12
      $region11: #{tpu_custom_call.1} parent=5 // pred_region
        %s609 = ssub.s32 %s34, 1
        // Predicated region
        $region13: #{tpu_custom_call.1} parent=11 // pred_check
          %p610 = pneg %p107
        $region14: #{tpu_custom_call.1} parent=11 // pred_check_branch
          %612 = sbr.rel (%p610) target = $region16
        $region15: #{tpu_custom_call.1} parent=11 // pred_region
          _
        $region16: #{tpu_custom_call.1} parent=11 // pred_fallthru
          _
        // Predicated region
        $region17: #{tpu_custom_call.1} parent=11 // pred_check
          %p613 = pneg %p128
        $region18: #{tpu_custom_call.1} parent=11 // pred_check_branch
          %615 = sbr.rel (%p613) target = $region20
        $region19: #{tpu_custom_call.1} parent=11 // pred_region
          _
        $region20: #{tpu_custom_call.1} parent=11 // pred_fallthru
          _
        // Predicated region
        $region21: #{tpu_custom_call.1} parent=11 // pred_check
          %p616 = pneg %p149
        $region22: #{tpu_custom_call.1} parent=11 // pred_check_branch
          %618 = sbr.rel (%p616) target = $region24
        $region23: #{tpu_custom_call.1} parent=11 // pred_region
          _
        $region24: #{tpu_custom_call.1} parent=11 // pred_fallthru
          _
        // Predicated region
        $region25: #{tpu_custom_call.1} parent=11 // pred_check
          %p619 = pneg %p170
        $region26: #{tpu_custom_call.1} parent=11 // pred_check_branch
          %621 = sbr.rel (%p619) target = $region28
        $region27: #{tpu_custom_call.1} parent=11 // pred_region
          _
        $region28: #{tpu_custom_call.1} parent=11 // pred_fallthru
          _
        // Predicated region
        $region29: #{tpu_custom_call.1} parent=11 // pred_check
          %p622 = pneg %p191
        $region30: #{tpu_custom_call.1} parent=11 // pred_check_branch
          %624 = sbr.rel (%p622) target = $region32
        $region31: #{tpu_custom_call.1} parent=11 // pred_region
          _
        $region32: #{tpu_custom_call.1} parent=11 // pred_fallthru
          _
        // Predicated region
        $region33: #{tpu_custom_call.1} parent=11 // pred_check
          %p625 = pneg %p212
        $region34: #{tpu_custom_call.1} parent=11 // pred_check_branch
          %627 = sbr.rel (%p625) target = $region36
        $region35: #{tpu_custom_call.1} parent=11 // pred_region
          _
        $region36: #{tpu_custom_call.1} parent=11 // pred_fallthru
          _
        // Predicated region
        $region37: #{tpu_custom_call.1} parent=11 // pred_check
          %p628 = pneg %p233
        $region38: #{tpu_custom_call.1} parent=11 // pred_check_branch
          %630 = sbr.rel (%p628) target = $region40
        $region39: #{tpu_custom_call.1} parent=11 // pred_region
          _
        $region40: #{tpu_custom_call.1} parent=11 // pred_fallthru
          _
        // Predicated region
        $region41: #{tpu_custom_call.1} parent=11 // pred_check
          %p631 = pneg %p254
        $region42: #{tpu_custom_call.1} parent=11 // pred_check_branch
          %633 = sbr.rel (%p631) target = $region44
        $region43: #{tpu_custom_call.1} parent=11 // pred_region
          _
        $region44: #{tpu_custom_call.1} parent=11 // pred_fallthru
          _
        // Predicated region
        $region45: #{tpu_custom_call.1} parent=11 // pred_check
          %p634 = pneg %p275
        $region46: #{tpu_custom_call.1} parent=11 // pred_check_branch
          %636 = sbr.rel (%p634) target = $region48
        $region47: #{tpu_custom_call.1} parent=11 // pred_region
          _
        $region48: #{tpu_custom_call.1} parent=11 // pred_fallthru
          _
        // Predicated region
        $region49: #{tpu_custom_call.1} parent=11 // pred_check
          %p637 = pneg %p296
        $region50: #{tpu_custom_call.1} parent=11 // pred_check_branch
          %639 = sbr.rel (%p637) target = $region52
        $region51: #{tpu_custom_call.1} parent=11 // pred_region
          _
        $region52: #{tpu_custom_call.1} parent=11 // pred_fallthru
          _
        // Predicated region
        $region53: #{tpu_custom_call.1} parent=11 // pred_check
          %p640 = pneg %p317
        $region54: #{tpu_custom_call.1} parent=11 // pred_check_branch
          %642 = sbr.rel (%p640) target = $region56
        $region55: #{tpu_custom_call.1} parent=11 // pred_region
          _
        $region56: #{tpu_custom_call.1} parent=11 // pred_fallthru
          _
        // Predicated region
        $region57: #{tpu_custom_call.1} parent=11 // pred_check
          %p643 = pneg %p338
        $region58: #{tpu_custom_call.1} parent=11 // pred_check_branch
          %645 = sbr.rel (%p643) target = $region60
        $region59: #{tpu_custom_call.1} parent=11 // pred_region
          _
        $region60: #{tpu_custom_call.1} parent=11 // pred_fallthru
          _
        // Predicated region
        $region61: #{tpu_custom_call.1} parent=11 // pred_check
          %p646 = pneg %p359
        $region62: #{tpu_custom_call.1} parent=11 // pred_check_branch
          %648 = sbr.rel (%p646) target = $region64
        $region63: #{tpu_custom_call.1} parent=11 // pred_region
          _
        $region64: #{tpu_custom_call.1} parent=11 // pred_fallthru
          _
        // Predicated region
        $region65: #{tpu_custom_call.1} parent=11 // pred_check
          %p649 = pneg %p380
        $region66: #{tpu_custom_call.1} parent=11 // pred_check_branch
          %651 = sbr.rel (%p649) target = $region68
        $region67: #{tpu_custom_call.1} parent=11 // pred_region
          _
        $region68: #{tpu_custom_call.1} parent=11 // pred_fallthru
          _
        // Predicated region
        $region69: #{tpu_custom_call.1} parent=11 // pred_check
          %p652 = pneg %p401
        $region70: #{tpu_custom_call.1} parent=11 // pred_check_branch
          %654 = sbr.rel (%p652) target = $region72
        $region71: #{tpu_custom_call.1} parent=11 // pred_region
          _
        $region72: #{tpu_custom_call.1} parent=11 // pred_fallthru
          _
        // Predicated region
        $region73: #{tpu_custom_call.1} parent=11 // pred_check
          %p655 = pneg %p422
        $region74: #{tpu_custom_call.1} parent=11 // pred_check_branch
          %657 = sbr.rel (%p655) target = $region76
        $region75: #{tpu_custom_call.1} parent=11 // pred_region
          _
        $region76: #{tpu_custom_call.1} parent=11 // pred_fallthru
          _
        // Predicated region
        $region77: #{tpu_custom_call.1} parent=11 // pred_check
          %p658 = pneg %p443
        $region78: #{tpu_custom_call.1} parent=11 // pred_check_branch
          %660 = sbr.rel (%p658) target = $region80
        $region79: #{tpu_custom_call.1} parent=11 // pred_region
          _
        $region80: #{tpu_custom_call.1} parent=11 // pred_fallthru
          _
        // Predicated region
        $region81: #{tpu_custom_call.1} parent=11 // pred_check
          %p661 = pneg %p464
        $region82: #{tpu_custom_call.1} parent=11 // pred_check_branch
          %663 = sbr.rel (%p661) target = $region84
        $region83: #{tpu_custom_call.1} parent=11 // pred_region
          _
        $region84: #{tpu_custom_call.1} parent=11 // pred_fallthru
          _
        // Predicated region
        $region85: #{tpu_custom_call.1} parent=11 // pred_check
          %p664 = pneg %p485
        $region86: #{tpu_custom_call.1} parent=11 // pred_check_branch
          %666 = sbr.rel (%p664) target = $region88
        $region87: #{tpu_custom_call.1} parent=11 // pred_region
          _
        $region88: #{tpu_custom_call.1} parent=11 // pred_fallthru
          _
        // Predicated region
        $region89: #{tpu_custom_call.1} parent=11 // pred_check
          %p667 = pneg %p506
        $region90: #{tpu_custom_call.1} parent=11 // pred_check_branch
          %669 = sbr.rel (%p667) target = $region92
        $region91: #{tpu_custom_call.1} parent=11 // pred_region
          _
        $region92: #{tpu_custom_call.1} parent=11 // pred_fallthru
          _
        // Predicated region
        $region93: #{tpu_custom_call.1} parent=11 // pred_check
          %p670 = pneg %p527
        $region94: #{tpu_custom_call.1} parent=11 // pred_check_branch
          %672 = sbr.rel (%p670) target = $region96
        $region95: #{tpu_custom_call.1} parent=11 // pred_region
          _
        $region96: #{tpu_custom_call.1} parent=11 // pred_fallthru
          _
        // Predicated region
        $region97: #{tpu_custom_call.1} parent=11 // pred_check
          %p673 = pneg %p548
        $region98: #{tpu_custom_call.1} parent=11 // pred_check_branch
          %675 = sbr.rel (%p673) target = $region100
        $region99: #{tpu_custom_call.1} parent=11 // pred_region
          _
        $region100: #{tpu_custom_call.1} parent=11 // pred_fallthru
          _
        // Predicated region
        $region101: #{tpu_custom_call.1} parent=11 // pred_check
          %p676 = pneg %p569
        $region102: #{tpu_custom_call.1} parent=11 // pred_check_branch
          %678 = sbr.rel (%p676) target = $region104
        $region103: #{tpu_custom_call.1} parent=11 // pred_region
          _
        $region104: #{tpu_custom_call.1} parent=11 // pred_fallthru
          _
      $region12: #{tpu_custom_call.1} parent=5 // pred_fallthru
        _
      %p679 = scmp.lt.s32.totalorder %s34, 2
      // Predicated region
      $region105: #{tpu_custom_call.1} parent=5 // pred_check
        %p680 = pneg %p679
      $region106: #{tpu_custom_call.1} parent=5 // pred_check_branch
        %682 = sbr.rel (%p680) target = $region108
      $region107: #{tpu_custom_call.1} parent=5 // pred_region
        // Predicated region
        $region109: #{tpu_custom_call.1} parent=107 // pred_check
          %p683 = pneg %p54
        $region110: #{tpu_custom_call.1} parent=107 // pred_check_branch
          %685 = sbr.rel (%p683) target = $region112
        $region111: #{tpu_custom_call.1} parent=107 // pred_region
          %p686 = scmp.lt.s32.totalorder %s34, 1
          %s687 = scalar_select %p686, %s34, 1
          %s688 = smul.addr %s687, 2
          %s689 = smul.addr %s688, 8
          %s690 = scalar_lea.vmem %s0, %s689
        $region112: #{tpu_custom_call.1} parent=107 // pred_fallthru
          _
        // Predicated region
        $region113: #{tpu_custom_call.1} parent=107 // pred_check
          %p691 = pneg %p80
        $region114: #{tpu_custom_call.1} parent=107 // pred_check_branch
          %693 = sbr.rel (%p691) target = $region116
        $region115: #{tpu_custom_call.1} parent=107 // pred_region
          %p694 = scmp.lt.s32.totalorder %s34, 1
          %s695 = scalar_select %p694, %s34, 1
          %s696 = smul.addr %s695, 3
          %s697 = smul.addr %s696, 8
          %s698 = scalar_lea.vmem %s1, %s697
        $region116: #{tpu_custom_call.1} parent=107 // pred_fallthru
          _
      $region108: #{tpu_custom_call.1} parent=5 // pred_fallthru
        _
      %p699 = scmp.le.s32.totalorder 1, %s34
      %p700 = scmp.lt.s32.totalorder %s34, 3
      %p701 = pnand %p699, %p700
      %p702 = pneg %p701
      // Predicated region
      $region117: #{tpu_custom_call.1} parent=5 // pred_check
        _
      $region118: #{tpu_custom_call.1} parent=5 // pred_check_branch
        %704 = sbr.rel (%p701) target = $region120
      $region119: #{tpu_custom_call.1} parent=5 // pred_region
        %s705 = ssub.s32 %s34, 1
        %p706 = scmp.lt.s32.totalorder %s39, 1
        %s707 = scalar_select %p706, %s39, 1
        %s708 = smul.addr %s707, 2
        %s709 = smul.addr %s708, 8
        %s710 = scalar_lea.vmem %s0, %s709
        %p711 = pneg %p60
        %p712 = pneg %p57
        %p713 = scmp.lt.s32.totalorder %s39, 1
        %s714 = scalar_select %p713, %s39, 1
        %s715 = smul.addr %s714, 3
        %s716 = smul.addr %s715, 8
        %s717 = scalar_lea.vmem %s1, %s716
        %p718 = pneg %p86
        %p719 = pneg %p83
        %p720 = pneg %p107
        %p721 = pneg %p104
        %p722 = pneg %p128
        %p723 = pneg %p125
        %p724 = pneg %p149
        %p725 = pneg %p146
        %p726 = pneg %p170
        %p727 = pneg %p167
        %p728 = pneg %p191
        %p729 = pneg %p188
        %p730 = pneg %p212
        %p731 = pneg %p209
        %p732 = pneg %p233
        %p733 = pneg %p230
        %p734 = pneg %p254
        %p735 = pneg %p251
        %p736 = pneg %p275
        %p737 = pneg %p272
        %p738 = pneg %p296
        %p739 = pneg %p293
        %p740 = pneg %p317
        %p741 = pneg %p314
        %p742 = pneg %p338
        %p743 = pneg %p335
        %p744 = pneg %p359
        %p745 = pneg %p356
        %p746 = pneg %p380
        %p747 = pneg %p377
        %p748 = pneg %p401
        %p749 = pneg %p398
        %p750 = pneg %p422
        %p751 = pneg %p419
        %p752 = pneg %p443
        %p753 = pneg %p440
        %p754 = pneg %p464
        %p755 = pneg %p461
        %p756 = pneg %p485
        %p757 = pneg %p482
        %p758 = pneg %p506
        %p759 = pneg %p503
        %p760 = pneg %p527
        %p761 = pneg %p524
        %p762 = pneg %p548
        %p763 = pneg %p545
        %p764 = pneg %p569
        %p765 = pneg %p566
        %p766 = pneg %p595
        %p767 = pneg %p592
        %s768 = sand.u32 %s582, 1
        %s769 = scalar_lea.sflag [#allocation3], %s768
        %s770 = sand.u32 %s582, 1
        %s771 = smul.addr %s770, 16
        %s772 = scalar_lea.vmem [#allocation2], %s771
        %p773 = scmp.lt.s32.totalorder %s39, 1
        %s774 = scalar_select %p773, %s39, 1
        %s775 = smul.addr %s774, 2
        %s776 = smul.addr %s775, 8
        %s777 = scalar_lea.vmem %s0, %s776
        %p778 = scmp.lt.s32.totalorder %s39, 1
        %s779 = scalar_select %p778, %s39, 1
        %s780 = smul.addr %s779, 3
        %s781 = smul.addr %s780, 8
        %s782 = scalar_lea.vmem %s1, %s781
        %v784 = vld [vmem:[%s777] sm:$0xff]
        %v785 = vld [vmem:[%s777 + $0x8] sm:$0xff]
        %v786 = vld [vmem:[%s2] sm:$0xff]
        %v787 = vld [vmem:[%s2 + $0x8] sm:$0xff]
        %v788 = vadd.f32 %v784, %v786
        %v789 = vadd.f32 %v785, %v787
        %v790 = vld [vmem:[%s782] sm:$0xff]
        %v791 = vld [vmem:[%s782 + $0x8] sm:$0xff]
        %v792 = vld [vmem:[%s782 + $0x10] sm:$0xff]
        %v793 = vpack.c.bf16 %v789, %v788
        %v794 = vld [vmem:[%s3] sm:$0xf]
        %v795 = vld [vmem:[%s3 + $0x4] sm:$0xf]
        %v796 = vld [vmem:[%s3 + $0x8] sm:$0xf]
        %v797 = vld [vmem:[%s3 + $0xc] sm:$0xf]
        %v798 = vld [vmem:[%s4] sm:$0x1]
        %v800 = vperm.slane %v798, 0
        %v806 = vunpack.c.l.b16 %v794
        %v807 = vunpack.c.l.b16 %v795
        %v808 = vunpack.c.l.b16 %v796
        %v809 = vunpack.c.l.b16 %v797
        %v810 = vpack.c.b16 %v807, %v806
        %v811 = vpack.c.b16 %v809, %v808
        %vm814 = vcmask 261120
        %v816 = vsel %vm814, %v793, 0
        %818 = vmatpush.bf16.msra.mxu0 0
        %819 = vmatpush.bf16.msra.mxu0 0
        %820 = vmatpush.bf16.msra.mxu0 0
        %821 = vmatpush.bf16.msra.mxu0 0
        %822 = vmatpush.bf16.msra.mxu0 0
        %823 = vmatpush.bf16.msra.mxu0 0
        %824 = vmatpush.bf16.msra.mxu0 %v811
        %825 = vmatpush.bf16.msra.mxu0 %v810
        %826 = vmatmul.bf16.gmra.mxu0 %v816
        %v827 = vpop.f32.mrf.mxu0
        %v828 = vadd.f32 %v800, %v827
        %v829 = vpop.f32.mrf.mxu0
        %v830 = vadd.f32 %v800, %v829
        %831 = vdwg.mxu0
        %832 = vrot.lane.b32.xlu0 %v810, 96
        %v833 = vpop.permute.xlu0 %832
        %834 = vrot.lane.b32.xlu0 %v811, 96
        %v835 = vpop.permute.xlu0 %834
        %838 = vrot.lane.b32.xlu0 %v800, 96
        %v839 = vpop.permute.xlu0 %838
        %841 = vmatpush.bf16.msra.mxu0 0
        %842 = vmatpush.bf16.msra.mxu0 0
        %843 = vmatpush.bf16.msra.mxu0 0
        %844 = vmatpush.bf16.msra.mxu0 0
        %845 = vmatpush.bf16.msra.mxu0 0
        %846 = vmatpush.bf16.msra.mxu0 0
        %847 = vmatpush.bf16.msra.mxu0 %v835
        %848 = vmatpush.bf16.msra.mxu0 %v833
        %849 = vmatmul.bf16.gmra.mxu0 %v816
        %v850 = vpop.f32.mrf.mxu0
        %v851 = vadd.f32 %v839, %v850
        %v852 = vpop.f32.mrf.mxu0
        %v853 = vadd.f32 %v839, %v852
        %854 = vdwg.mxu0
        %v855 = vmul.f32 %v828, 0.35355338
        %v856 = vmul.f32 %v830, 0.35355338
        %vm857 = vcmask 64512
        %v859 = vsel %vm857, %v855, 0
        %v862 = vsel %vm857, %v856, 0
        %v865 = vsel %vm857, %v851, 0
        %v868 = vsel %vm857, %v853, 0
        %870 = vmatpush.xpose.msra.mxu0 0.0
        %871 = vmatpush.xpose.msra.mxu0 0.0
        %872 = vmatpush.xpose.msra.mxu0 0.0
        %873 = vmatpush.xpose.msra.mxu0 0.0
        %874 = vmatpush.xpose.msra.mxu0 0.0
        %875 = vmatpush.xpose.msra.mxu0 0.0
        %876 = vmatpush.xpose.msra.mxu0 0.0
        %877 = vmatpush.xpose.msra.mxu0 0.0
        %878 = vmatpush.xpose.msra.mxu0 0.0
        %879 = vmatpush.xpose.msra.mxu0 0.0
        %880 = vmatpush.xpose.msra.mxu0 0.0
        %881 = vmatpush.xpose.msra.mxu0 0.0
        %882 = vmatpush.xpose.msra.mxu0 0.0
        %883 = vmatpush.xpose.msra.mxu0 0.0
        %884 = vmatpush.xpose.msra.mxu0 %v868
        %885 = vmatpush.xpose.msra.mxu0 %v865
        %886 = vmatmul.f32.gmra.mxu0 %v859
        %v887 = vpop.f32.mrf.mxu0
        %v888 = vadd.f32 0.0, %v887
        %889 = vmatmul.f32.gmra.mxu0 %v862
        %v890 = vpop.f32.mrf.mxu0
        %v891 = vadd.f32 0.0, %v890
        %892 = vdwg.mxu0
        %vm893 = vcmask 130048
        %v894 = vsel %vm893, %v888, -inf
        %895 = vmax.xlane.f32.xlu0 %v894
        %v896 = vpop.xlane.xlu0 %895
        %v897 = vsel %vm893, %v891, -inf
        %898 = vmax.xlane.f32.xlu0 %v897
        %v899 = vpop.xlane.xlu0 %898
        %v900 = vsub.f32 %v888, %v896
        %v901 = vsub.f32 %v891, %v899
        %v902 = vmul.f32 %v900, 1.442695
        %v903 = vpow.pop %v902
        %v904 = vmul.f32 %v901, 1.442695
        %v905 = vpow.pop %v904
        %v906 = vsel %vm893, %v903, 0.0
        %907 = vadd.xlane.f32.xlu0 %v906
        %v908 = vpop.xlane.xlu0 %907
        %v909 = vsel %vm893, %v905, 0.0
        %910 = vadd.xlane.f32.xlu0 %v909
        %v911 = vpop.xlane.xlu0 %910
        %v912 = vrcp.pop %v908
        %v913 = vrcp.pop %v911
        %v914 = vmul.f32 %v903, %v912
        %v915 = vmul.f32 %v905, %v913
        %916 = vrot.lane.b32.xlu0 %v851, 96
        %v917 = vpop.permute.xlu0 %916
        %918 = vrot.lane.b32.xlu0 %v853, 96
        %v919 = vpop.permute.xlu0 %918
        %v923 = vsel %vm893, %v914, 0
        %v926 = vsel %vm893, %v915, 0
        %928 = vmatpush.msra.mxu0 0.0
        %929 = vmatpush.msra.mxu0 0.0
        %930 = vmatpush.msra.mxu0 0.0
        %931 = vmatpush.msra.mxu0 0.0
        %932 = vmatpush.msra.mxu0 0.0
        %933 = vmatpush.msra.mxu0 0.0
        %934 = vmatpush.msra.mxu0 0.0
        %935 = vmatpush.msra.mxu0 0.0
        %936 = vmatpush.msra.mxu0 0.0
        %937 = vmatpush.msra.mxu0 0.0
        %938 = vmatpush.msra.mxu0 0.0
        %939 = vmatpush.msra.mxu0 0.0
        %940 = vmatpush.msra.mxu0 0.0
        %941 = vmatpush.msra.mxu0 0.0
        %942 = vmatpush.msra.mxu0 %v919
        %943 = vmatpush.msra.mxu0 %v917
        %944 = vmatmul.f32.gmra.mxu0 %v923
        %v945 = vpop.f32.mrf.mxu0
        %v946 = vadd.f32 0.0, %v945
        %947 = vmatmul.f32.gmra.mxu0 %v926
        %v948 = vpop.f32.mrf.mxu0
        %v949 = vadd.f32 0.0, %v948
        %950 = vdwg.mxu0
        %v951 = vpack.c.bf16 %v949, %v946
        %v952 = vld [vmem:[%s5] sm:$0xf]
        %953 = vrot.lane.b32.xlu0 %v855, 120
        %v954 = vpop.permute.xlu0 %953
        %955 = vrot.lane.b32.xlu0 %v856, 120
        %v956 = vpop.permute.xlu0 %955
        %957 = vrot.lane.b32.xlu0 %v851, 120
        %v958 = vpop.permute.xlu0 %957
        %959 = vrot.lane.b32.xlu0 %v853, 120
        %v960 = vpop.permute.xlu0 %959
        %v961 = vsel %vm857, %v954, 0
        %v963 = vsel %vm857, %v956, 0
        %v965 = vsel %vm857, %v958, 0
        %v967 = vsel %vm857, %v960, 0
        %969 = vmatpush.xpose.msra.mxu0 0.0
        %970 = vmatpush.xpose.msra.mxu0 0.0
        %971 = vmatpush.xpose.msra.mxu0 0.0
        %972 = vmatpush.xpose.msra.mxu0 0.0
        %973 = vmatpush.xpose.msra.mxu0 0.0
        %974 = vmatpush.xpose.msra.mxu0 0.0
        %975 = vmatpush.xpose.msra.mxu0 0.0
        %976 = vmatpush.xpose.msra.mxu0 0.0
        %977 = vmatpush.xpose.msra.mxu0 0.0
        %978 = vmatpush.xpose.msra.mxu0 0.0
        %979 = vmatpush.xpose.msra.mxu0 0.0
        %980 = vmatpush.xpose.msra.mxu0 0.0
        %981 = vmatpush.xpose.msra.mxu0 0.0
        %982 = vmatpush.xpose.msra.mxu0 0.0
        %983 = vmatpush.xpose.msra.mxu0 %v967
        %984 = vmatpush.xpose.msra.mxu0 %v965
        %985 = vmatmul.f32.gmra.mxu0 %v961
        %v986 = vpop.f32.mrf.mxu0
        %v987 = vadd.f32 0.0, %v986
        %988 = vmatmul.f32.gmra.mxu0 %v963
        %v989 = vpop.f32.mrf.mxu0
        %v990 = vadd.f32 0.0, %v989
        %991 = vdwg.mxu0
        %v992 = vsel %vm893, %v987, -inf
        %993 = vmax.xlane.f32.xlu0 %v992
        %v994 = vpop.xlane.xlu0 %993
        %v995 = vsel %vm893, %v990, -inf
        %996 = vmax.xlane.f32.xlu0 %v995
        %v997 = vpop.xlane.xlu0 %996
        %v998 = vsub.f32 %v987, %v994
        %v999 = vsub.f32 %v990, %v997
        %v1000 = vmul.f32 %v998, 1.442695
        %v1001 = vpow.pop %v1000
        %v1002 = vmul.f32 %v999, 1.442695
        %v1003 = vpow.pop %v1002
        %v1004 = vsel %vm893, %v1001, 0.0
        %1005 = vadd.xlane.f32.xlu0 %v1004
        %v1006 = vpop.xlane.xlu0 %1005
        %v1007 = vsel %vm893, %v1003, 0.0
        %1008 = vadd.xlane.f32.xlu0 %v1007
        %v1009 = vpop.xlane.xlu0 %1008
        %v1010 = vrcp.pop %v1006
        %v1011 = vrcp.pop %v1009
        %v1012 = vmul.f32 %v1001, %v1010
        %v1013 = vmul.f32 %v1003, %v1011
        %1014 = vrot.lane.b32.xlu0 %v851, 88
        %v1015 = vpop.permute.xlu0 %1014
        %1016 = vrot.lane.b32.xlu0 %v853, 88
        %v1017 = vpop.permute.xlu0 %1016
        %v1021 = vsel %vm893, %v1012, 0
        %v1024 = vsel %vm893, %v1013, 0
        %1026 = vmatpush.msra.mxu0 0.0
        %1027 = vmatpush.msra.mxu0 0.0
        %1028 = vmatpush.msra.mxu0 0.0
        %1029 = vmatpush.msra.mxu0 0.0
        %1030 = vmatpush.msra.mxu0 0.0
        %1031 = vmatpush.msra.mxu0 0.0
        %1032 = vmatpush.msra.mxu0 0.0
        %1033 = vmatpush.msra.mxu0 0.0
        %1034 = vmatpush.msra.mxu0 0.0
        %1035 = vmatpush.msra.mxu0 0.0
        %1036 = vmatpush.msra.mxu0 0.0
        %1037 = vmatpush.msra.mxu0 0.0
        %1038 = vmatpush.msra.mxu0 0.0
        %1039 = vmatpush.msra.mxu0 0.0
        %1040 = vmatpush.msra.mxu0 %v1017
        %1041 = vmatpush.msra.mxu0 %v1015
        %1042 = vmatmul.f32.gmra.mxu0 %v1021
        %v1043 = vpop.f32.mrf.mxu0
        %v1044 = vadd.f32 0.0, %v1043
        %1045 = vmatmul.f32.gmra.mxu0 %v1024
        %v1046 = vpop.f32.mrf.mxu0
        %v1047 = vadd.f32 0.0, %v1046
        %1048 = vdwg.mxu0
        %v1049 = vpack.c.bf16 %v1047, %v1044
        %v1050 = vld [vmem:[%s5 + $0x4] sm:$0xf]
        %v1052 = vsel %vm857, %v1049, 0
        %vm1054 = vcmask 1043456
        %v1056 = vsel %vm1054, %v1050, 0
        %1058 = vmatpush.bf16.msra.mxu0 0
        %1059 = vmatpush.bf16.msra.mxu0 0
        %1060 = vmatpush.bf16.msra.mxu0 0
        %1061 = vmatpush.bf16.msra.mxu0 0
        %1062 = vmatpush.bf16.msra.mxu0 0
        %1063 = vmatpush.bf16.msra.mxu0 0
        %1064 = vmatpush.bf16.msra.mxu0 0
        %1065 = vmatpush.bf16.msra.mxu0 %v1056
        %1066 = vmatmul.bf16.gmra.mxu0 %v1052
        %v1067 = vpop.f32.mrf.mxu0
        %v1068 = vadd.f32 0.0, %v1067
        %v1069 = vpop.f32.mrf.mxu0
        %v1070 = vadd.f32 0.0, %v1069
        %1071 = vdwg.mxu0
        %v1073 = vsel %vm857, %v951, 0
        %v1076 = vsel %vm1054, %v952, 0
        %1078 = vmatpush.bf16.msra.mxu0 0
        %1079 = vmatpush.bf16.msra.mxu0 0
        %1080 = vmatpush.bf16.msra.mxu0 0
        %1081 = vmatpush.bf16.msra.mxu0 0
        %1082 = vmatpush.bf16.msra.mxu0 0
        %1083 = vmatpush.bf16.msra.mxu0 0
        %1084 = vmatpush.bf16.msra.mxu0 0
        %1085 = vmatpush.bf16.msra.mxu0 %v1076
        %1086 = vmatmul.bf16.gmra.mxu0 %v1073
        %v1087 = vpop.f32.mrf.mxu0
        %v1088 = vadd.f32 %v1068, %v1087
        %v1089 = vpop.f32.mrf.mxu0
        %v1090 = vadd.f32 %v1070, %v1089
        %1091 = vdwg.mxu0
        %1092 = vrot.lane.b32.xlu0 %v855, 112
        %v1093 = vpop.permute.xlu0 %1092
        %1094 = vrot.lane.b32.xlu0 %v856, 112
        %v1095 = vpop.permute.xlu0 %1094
        %1096 = vrot.lane.b32.xlu0 %v851, 112
        %v1097 = vpop.permute.xlu0 %1096
        %1098 = vrot.lane.b32.xlu0 %v853, 112
        %v1099 = vpop.permute.xlu0 %1098
        %v1100 = vsel %vm857, %v1093, 0
        %v1102 = vsel %vm857, %v1095, 0
        %v1104 = vsel %vm857, %v1097, 0
        %v1106 = vsel %vm857, %v1099, 0
        %1108 = vmatpush.xpose.msra.mxu0 0.0
        %1109 = vmatpush.xpose.msra.mxu0 0.0
        %1110 = vmatpush.xpose.msra.mxu0 0.0
        %1111 = vmatpush.xpose.msra.mxu0 0.0
        %1112 = vmatpush.xpose.msra.mxu0 0.0
        %1113 = vmatpush.xpose.msra.mxu0 0.0
        %1114 = vmatpush.xpose.msra.mxu0 0.0
        %1115 = vmatpush.xpose.msra.mxu0 0.0
        %1116 = vmatpush.xpose.msra.mxu0 0.0
        %1117 = vmatpush.xpose.msra.mxu0 0.0
        %1118 = vmatpush.xpose.msra.mxu0 0.0
        %1119 = vmatpush.xpose.msra.mxu0 0.0
        %1120 = vmatpush.xpose.msra.mxu0 0.0
        %1121 = vmatpush.xpose.msra.mxu0 0.0
        %1122 = vmatpush.xpose.msra.mxu0 %v1106
        %1123 = vmatpush.xpose.msra.mxu0 %v1104
        %1124 = vmatmul.f32.gmra.mxu0 %v1100
        %v1125 = vpop.f32.mrf.mxu0
        %v1126 = vadd.f32 0.0, %v1125
        %1127 = vmatmul.f32.gmra.mxu0 %v1102
        %v1128 = vpop.f32.mrf.mxu0
        %v1129 = vadd.f32 0.0, %v1128
        %1130 = vdwg.mxu0
        %v1131 = vsel %vm893, %v1126, -inf
        %1132 = vmax.xlane.f32.xlu0 %v1131
        %v1133 = vpop.xlane.xlu0 %1132
        %v1134 = vsel %vm893, %v1129, -inf
        %1135 = vmax.xlane.f32.xlu0 %v1134
        %v1136 = vpop.xlane.xlu0 %1135
        %v1137 = vsub.f32 %v1126, %v1133
        %v1138 = vsub.f32 %v1129, %v1136
        %v1139 = vmul.f32 %v1137, 1.442695
        %v1140 = vpow.pop %v1139
        %v1141 = vmul.f32 %v1138, 1.442695
        %v1142 = vpow.pop %v1141
        %v1143 = vsel %vm893, %v1140, 0.0
        %1144 = vadd.xlane.f32.xlu0 %v1143
        %v1145 = vpop.xlane.xlu0 %1144
        %v1146 = vsel %vm893, %v1142, 0.0
        %1147 = vadd.xlane.f32.xlu0 %v1146
        %v1148 = vpop.xlane.xlu0 %1147
        %v1149 = vrcp.pop %v1145
        %v1150 = vrcp.pop %v1148
        %v1151 = vmul.f32 %v1140, %v1149
        %v1152 = vmul.f32 %v1142, %v1150
        %1153 = vrot.lane.b32.xlu0 %v851, 80
        %v1154 = vpop.permute.xlu0 %1153
        %1155 = vrot.lane.b32.xlu0 %v853, 80
        %v1156 = vpop.permute.xlu0 %1155
        %v1160 = vsel %vm893, %v1151, 0
        %v1163 = vsel %vm893, %v1152, 0
        %1165 = vmatpush.msra.mxu0 0.0
        %1166 = vmatpush.msra.mxu0 0.0
        %1167 = vmatpush.msra.mxu0 0.0
        %1168 = vmatpush.msra.mxu0 0.0
        %1169 = vmatpush.msra.mxu0 0.0
        %1170 = vmatpush.msra.mxu0 0.0
        %1171 = vmatpush.msra.mxu0 0.0
        %1172 = vmatpush.msra.mxu0 0.0
        %1173 = vmatpush.msra.mxu0 0.0
        %1174 = vmatpush.msra.mxu0 0.0
        %1175 = vmatpush.msra.mxu0 0.0
        %1176 = vmatpush.msra.mxu0 0.0
        %1177 = vmatpush.msra.mxu0 0.0
        %1178 = vmatpush.msra.mxu0 0.0
        %1179 = vmatpush.msra.mxu0 %v1156
        %1180 = vmatpush.msra.mxu0 %v1154
        %1181 = vmatmul.f32.gmra.mxu0 %v1160
        %v1182 = vpop.f32.mrf.mxu0
        %v1183 = vadd.f32 0.0, %v1182
        %1184 = vmatmul.f32.gmra.mxu0 %v1163
        %v1185 = vpop.f32.mrf.mxu0
        %v1186 = vadd.f32 0.0, %v1185
        %1187 = vdwg.mxu0
        %v1188 = vpack.c.bf16 %v1186, %v1183
        %v1189 = vld [vmem:[%s5 + $0x8] sm:$0xf]
        %v1191 = vsel %vm857, %v1188, 0
        %v1194 = vsel %vm1054, %v1189, 0
        %1196 = vmatpush.bf16.msra.mxu0 0
        %1197 = vmatpush.bf16.msra.mxu0 0
        %1198 = vmatpush.bf16.msra.mxu0 0
        %1199 = vmatpush.bf16.msra.mxu0 0
        %1200 = vmatpush.bf16.msra.mxu0 0
        %1201 = vmatpush.bf16.msra.mxu0 0
        %1202 = vmatpush.bf16.msra.mxu0 0
        %1203 = vmatpush.bf16.msra.mxu0 %v1194
        %1204 = vmatmul.bf16.gmra.mxu0 %v1191
        %v1205 = vpop.f32.mrf.mxu0
        %v1206 = vadd.f32 0.0, %v1205
        %v1207 = vpop.f32.mrf.mxu0
        %v1208 = vadd.f32 0.0, %v1207
        %1209 = vdwg.mxu0
        %v1210 = vadd.f32 %v1088, %v1206
        %v1211 = vadd.f32 %v1090, %v1208
        %1212 = vrot.lane.b32.xlu0 %v855, 104
        %v1213 = vpop.permute.xlu0 %1212
        %1214 = vrot.lane.b32.xlu0 %v856, 104
        %v1215 = vpop.permute.xlu0 %1214
        %1216 = vrot.lane.b32.xlu0 %v851, 104
        %v1217 = vpop.permute.xlu0 %1216
        %1218 = vrot.lane.b32.xlu0 %v853, 104
        %v1219 = vpop.permute.xlu0 %1218
        %v1220 = vsel %vm857, %v1213, 0
        %v1222 = vsel %vm857, %v1215, 0
        %v1224 = vsel %vm857, %v1217, 0
        %v1226 = vsel %vm857, %v1219, 0
        %1228 = vmatpush.xpose.msra.mxu0 0.0
        %1229 = vmatpush.xpose.msra.mxu0 0.0
        %1230 = vmatpush.xpose.msra.mxu0 0.0
        %1231 = vmatpush.xpose.msra.mxu0 0.0
        %1232 = vmatpush.xpose.msra.mxu0 0.0
        %1233 = vmatpush.xpose.msra.mxu0 0.0
        %1234 = vmatpush.xpose.msra.mxu0 0.0
        %1235 = vmatpush.xpose.msra.mxu0 0.0
        %1236 = vmatpush.xpose.msra.mxu0 0.0
        %1237 = vmatpush.xpose.msra.mxu0 0.0
        %1238 = vmatpush.xpose.msra.mxu0 0.0
        %1239 = vmatpush.xpose.msra.mxu0 0.0
        %1240 = vmatpush.xpose.msra.mxu0 0.0
        %1241 = vmatpush.xpose.msra.mxu0 0.0
        %1242 = vmatpush.xpose.msra.mxu0 %v1226
        %1243 = vmatpush.xpose.msra.mxu0 %v1224
        %1244 = vmatmul.f32.gmra.mxu0 %v1220
        %v1245 = vpop.f32.mrf.mxu0
        %v1246 = vadd.f32 0.0, %v1245
        %1247 = vmatmul.f32.gmra.mxu0 %v1222
        %v1248 = vpop.f32.mrf.mxu0
        %v1249 = vadd.f32 0.0, %v1248
        %1250 = vdwg.mxu0
        %v1251 = vsel %vm893, %v1246, -inf
        %1252 = vmax.xlane.f32.xlu0 %v1251
        %v1253 = vpop.xlane.xlu0 %1252
        %v1254 = vsel %vm893, %v1249, -inf
        %1255 = vmax.xlane.f32.xlu0 %v1254
        %v1256 = vpop.xlane.xlu0 %1255
        %v1257 = vsub.f32 %v1246, %v1253
        %v1258 = vsub.f32 %v1249, %v1256
        %v1259 = vmul.f32 %v1257, 1.442695
        %v1260 = vpow.pop %v1259
        %v1261 = vmul.f32 %v1258, 1.442695
        %v1262 = vpow.pop %v1261
        %v1263 = vsel %vm893, %v1260, 0.0
        %1264 = vadd.xlane.f32.xlu0 %v1263
        %v1265 = vpop.xlane.xlu0 %1264
        %v1266 = vsel %vm893, %v1262, 0.0
        %1267 = vadd.xlane.f32.xlu0 %v1266
        %v1268 = vpop.xlane.xlu0 %1267
        %v1269 = vrcp.pop %v1265
        %v1270 = vrcp.pop %v1268
        %v1271 = vmul.f32 %v1260, %v1269
        %v1272 = vmul.f32 %v1262, %v1270
        %1273 = vrot.lane.b32.xlu0 %v851, 72
        %v1274 = vpop.permute.xlu0 %1273
        %1275 = vrot.lane.b32.xlu0 %v853, 72
        %v1276 = vpop.permute.xlu0 %1275
        %v1280 = vsel %vm893, %v1271, 0
        %v1283 = vsel %vm893, %v1272, 0
        %1285 = vmatpush.msra.mxu0 0.0
        %1286 = vmatpush.msra.mxu0 0.0
        %1287 = vmatpush.msra.mxu0 0.0
        %1288 = vmatpush.msra.mxu0 0.0
        %1289 = vmatpush.msra.mxu0 0.0
        %1290 = vmatpush.msra.mxu0 0.0
        %1291 = vmatpush.msra.mxu0 0.0
        %1292 = vmatpush.msra.mxu0 0.0
        %1293 = vmatpush.msra.mxu0 0.0
        %1294 = vmatpush.msra.mxu0 0.0
        %1295 = vmatpush.msra.mxu0 0.0
        %1296 = vmatpush.msra.mxu0 0.0
        %1297 = vmatpush.msra.mxu0 0.0
        %1298 = vmatpush.msra.mxu0 0.0
        %1299 = vmatpush.msra.mxu0 %v1276
        %1300 = vmatpush.msra.mxu0 %v1274
        %1301 = vmatmul.f32.gmra.mxu0 %v1280
        %v1302 = vpop.f32.mrf.mxu0
        %v1303 = vadd.f32 0.0, %v1302
        %1304 = vmatmul.f32.gmra.mxu0 %v1283
        %v1305 = vpop.f32.mrf.mxu0
        %v1306 = vadd.f32 0.0, %v1305
        %1307 = vdwg.mxu0
        %v1308 = vpack.c.bf16 %v1306, %v1303
        %v1309 = vld [vmem:[%s5 + $0xc] sm:$0xf]
        %v1311 = vsel %vm857, %v1308, 0
        %v1314 = vsel %vm1054, %v1309, 0
        %1316 = vmatpush.bf16.msra.mxu0 0
        %1317 = vmatpush.bf16.msra.mxu0 0
        %1318 = vmatpush.bf16.msra.mxu0 0
        %1319 = vmatpush.bf16.msra.mxu0 0
        %1320 = vmatpush.bf16.msra.mxu0 0
        %1321 = vmatpush.bf16.msra.mxu0 0
        %1322 = vmatpush.bf16.msra.mxu0 0
        %1323 = vmatpush.bf16.msra.mxu0 %v1314
        %1324 = vmatmul.bf16.gmra.mxu0 %v1311
        %v1325 = vpop.f32.mrf.mxu0
        %v1326 = vadd.f32 0.0, %v1325
        %v1327 = vpop.f32.mrf.mxu0
        %v1328 = vadd.f32 0.0, %v1327
        %1329 = vdwg.mxu0
        %v1330 = vadd.f32 %v1210, %v1326
        %v1331 = vadd.f32 %v1211, %v1328
        %v1332 = vld [vmem:[%s6] sm:$0x1]
        %v1334 = vperm.slane %v1332, 0
        %v1336 = vadd.f32 %v1330, %v1334
        %v1337 = vadd.f32 %v1331, %v1334
        %v1338 = vadd.f32 %v788, %v1336
        %v1339 = vadd.f32 %v789, %v1337
        %v1340 = vld [vmem:[%s15] sm:$0x1]
        %v1341 = vld [vmem:[%s16] sm:$0x1]
        %v1342 = vsel %vm814, %v1338, 0.0
        %1343 = vadd.xlane.f32.xlu0 %v1342
        %v1344 = vpop.xlane.xlu0 %1343
        %v1345 = vsel %vm814, %v1339, 0.0
        %1346 = vadd.xlane.f32.xlu0 %v1345
        %v1347 = vpop.xlane.xlu0 %1346
        %v1348 = vrcp.pop 32.0
        %v1349 = vmul.f32 32.0, %v1348
        %v1350 = vsub.f32 1.0, %v1349
        %v1351 = vmul.f32 %v1348, %v1350
        %v1352 = vadd.f32 %v1348, %v1351
        %vm1353 = vweird.f32 %v1348
        %v1354 = vsel %vm1353, %v1348, %v1352
        %v1355 = vmul.f32 %v1344, %v1354
        %v1356 = vmul.f32 %v1347, %v1354
        %v1357 = vsub.f32 %v1338, %v1355
        %v1358 = vsub.f32 %v1339, %v1356
        %v1359 = vmul.f32 %v1357, %v1357
        %v1360 = vmul.f32 %v1358, %v1358
        %v1361 = vsel %vm814, %v1359, 0.0
        %1362 = vadd.xlane.f32.xlu0 %v1361
        %v1363 = vpop.xlane.xlu0 %1362
        %v1364 = vsel %vm814, %v1360, 0.0
        %1365 = vadd.xlane.f32.xlu0 %v1364
        %v1366 = vpop.xlane.xlu0 %1365
        %v1367 = vmul.f32 %v1363, %v1354
        %v1368 = vmul.f32 %v1366, %v1354
        %v1369 = vadd.f32 %v1367, 1e-05
        %v1370 = vadd.f32 %v1368, 1e-05
        %v1371 = vrsqrt.pop %v1369
        %v1372 = vmul.f32 %v1371, %v1369
        %v1373 = vmul.f32 %v1372, %v1371
        %v1374 = vmul.f32 0.5, %v1373
        %v1375 = vsub.f32 1.5, %v1374
        %v1376 = vmul.f32 %v1371, %v1375
        %vm1377 = vweird.f32 %v1369
        %vm1378 = vweird.f32 %v1371
        %vm1379 = vmor %vm1377, %vm1378
        %v1380 = vsel %vm1379, %v1371, %v1376
        %v1381 = vrsqrt.pop %v1370
        %v1382 = vmul.f32 %v1381, %v1370
        %v1383 = vmul.f32 %v1382, %v1381
        %v1384 = vmul.f32 0.5, %v1383
        %v1385 = vsub.f32 1.5, %v1384
        %v1386 = vmul.f32 %v1381, %v1385
        %vm1387 = vweird.f32 %v1370
        %vm1388 = vweird.f32 %v1381
        %vm1389 = vmor %vm1387, %vm1388
        %v1390 = vsel %vm1389, %v1381, %v1386
        %v1391 = vmul.f32 %v1357, %v1380
        %v1392 = vmul.f32 %v1358, %v1390
        %v1394 = vperm.slane %v1340, 0
        %v1396 = vmul.f32 %v1391, %v1394
        %v1397 = vmul.f32 %v1392, %v1394
        %v1399 = vperm.slane %v1341, 0
        %v1401 = vadd.f32 %v1396, %v1399
        %v1402 = vadd.f32 %v1397, %v1399
        %v1403 = vpack.c.bf16 %v1402, %v1401
        %v1404 = vld [vmem:[%s7] sm:$0xf]
        %v1405 = vld [vmem:[%s7 + $0x4] sm:$0xf]
        %v1406 = vld [vmem:[%s7 + $0x8] sm:$0xf]
        %v1407 = vld [vmem:[%s7 + $0xc] sm:$0xf]
        %v1408 = vld [vmem:[%s8] sm:$0x1]
        %v1410 = vperm.slane %v1408, 0
        %v1416 = vunpack.c.l.b16 %v1404
        %v1417 = vunpack.c.l.b16 %v1405
        %v1418 = vunpack.c.l.b16 %v1406
        %v1419 = vunpack.c.l.b16 %v1407
        %v1420 = vpack.c.b16 %v1417, %v1416
        %v1421 = vpack.c.b16 %v1419, %v1418
        %v1425 = vsel %vm814, %v1403, 0
        %1427 = vmatpush.bf16.msra.mxu0 0
        %1428 = vmatpush.bf16.msra.mxu0 0
        %1429 = vmatpush.bf16.msra.mxu0 0
        %1430 = vmatpush.bf16.msra.mxu0 0
        %1431 = vmatpush.bf16.msra.mxu0 0
        %1432 = vmatpush.bf16.msra.mxu0 0
        %1433 = vmatpush.bf16.msra.mxu0 %v1421
        %1434 = vmatpush.bf16.msra.mxu0 %v1420
        %1435 = vmatmul.bf16.gmra.mxu0 %v1425
        %v1436 = vpop.f32.mrf.mxu0
        %v1437 = vadd.f32 %v1410, %v1436
        %v1438 = vpop.f32.mrf.mxu0
        %v1439 = vadd.f32 %v1410, %v1438
        %1440 = vdwg.mxu0
        %v1441 = vpack.c.bf16 %v791, %v790
        %v1442 = vpack.c.bf16 %v792, %v792
        %1443 = vrot.lane.b32.xlu0 %v1420, 96
        %v1444 = vpop.permute.xlu0 %1443
        %1445 = vrot.lane.b32.xlu0 %v1421, 96
        %v1446 = vpop.permute.xlu0 %1445
        %1449 = vrot.lane.b32.xlu0 %v1410, 96
        %v1450 = vpop.permute.xlu0 %1449
        %v1453 = vsel %vm814, %v1441, 0
        %v1456 = vsel %vm814, %v1442, 0
        %1458 = vmatpush.bf16.msra.mxu0 0
        %1459 = vmatpush.bf16.msra.mxu0 0
        %1460 = vmatpush.bf16.msra.mxu0 0
        %1461 = vmatpush.bf16.msra.mxu0 0
        %1462 = vmatpush.bf16.msra.mxu0 0
        %1463 = vmatpush.bf16.msra.mxu0 0
        %1464 = vmatpush.bf16.msra.mxu0 %v1446
        %1465 = vmatpush.bf16.msra.mxu0 %v1444
        %1466 = vmatmul.bf16.gmra.mxu0 %v1453
        %v1467 = vpop.f32.mrf.mxu0
        %v1468 = vadd.f32 %v1450, %v1467
        %v1469 = vpop.f32.mrf.mxu0
        %v1470 = vadd.f32 %v1450, %v1469
        %1471 = vmatmul.bf16.gmra.mxu0 %v1456
        %v1472 = vpop.f32.mrf.mxu0
        %v1473 = vadd.f32 %v1450, %v1472
        %v1474 = vpop.f32.mrf.mxu0
        %1475 = vdwg.mxu0
        %v1476 = vmul.f32 %v1437, 0.35355338
        %v1477 = vmul.f32 %v1439, 0.35355338
        %v1479 = vsel %vm857, %v1476, 0
        %v1482 = vsel %vm857, %v1477, 0
        %v1485 = vsel %vm857, %v1468, 0
        %v1488 = vsel %vm857, %v1470, 0
        %v1491 = vsel %vm857, %v1473, 0
        %1493 = vmatpush.xpose.msra.mxu0 0.0
        %1494 = vmatpush.xpose.msra.mxu0 0.0
        %1495 = vmatpush.xpose.msra.mxu0 0.0
        %1496 = vmatpush.xpose.msra.mxu0 0.0
        %1497 = vmatpush.xpose.msra.mxu0 0.0
        %1498 = vmatpush.xpose.msra.mxu0 0.0
        %1499 = vmatpush.xpose.msra.mxu0 0.0
        %1500 = vmatpush.xpose.msra.mxu0 0.0
        %1501 = vmatpush.xpose.msra.mxu0 0.0
        %1502 = vmatpush.xpose.msra.mxu0 0.0
        %1503 = vmatpush.xpose.msra.mxu0 0.0
        %1504 = vmatpush.xpose.msra.mxu0 0.0
        %1505 = vmatpush.xpose.msra.mxu0 0.0
        %1506 = vmatpush.xpose.msra.mxu0 %v1491
        %1507 = vmatpush.xpose.msra.mxu0 %v1488
        %1508 = vmatpush.xpose.msra.mxu0 %v1485
        %1509 = vmatmul.f32.gmra.mxu0 %v1479
        %v1510 = vpop.f32.mrf.mxu0
        %v1511 = vadd.f32 0.0, %v1510
        %1512 = vmatmul.f32.gmra.mxu0 %v1482
        %v1513 = vpop.f32.mrf.mxu0
        %v1514 = vadd.f32 0.0, %v1513
        %1515 = vdwg.mxu0
        %vm1516 = vcmask 195584
        %v1517 = vsel %vm1516, %v1511, -inf
        %1518 = vmax.xlane.f32.xlu0 %v1517
        %v1519 = vpop.xlane.xlu0 %1518
        %v1520 = vsel %vm1516, %v1514, -inf
        %1521 = vmax.xlane.f32.xlu0 %v1520
        %v1522 = vpop.xlane.xlu0 %1521
        %v1523 = vsub.f32 %v1511, %v1519
        %v1524 = vsub.f32 %v1514, %v1522
        %v1525 = vmul.f32 %v1523, 1.442695
        %v1526 = vpow.pop %v1525
        %v1527 = vmul.f32 %v1524, 1.442695
        %v1528 = vpow.pop %v1527
        %v1529 = vsel %vm1516, %v1526, 0.0
        %1530 = vadd.xlane.f32.xlu0 %v1529
        %v1531 = vpop.xlane.xlu0 %1530
        %v1532 = vsel %vm1516, %v1528, 0.0
        %1533 = vadd.xlane.f32.xlu0 %v1532
        %v1534 = vpop.xlane.xlu0 %1533
        %v1535 = vrcp.pop %v1531
        %v1536 = vrcp.pop %v1534
        %v1537 = vmul.f32 %v1526, %v1535
        %v1538 = vmul.f32 %v1528, %v1536
        %1539 = vrot.lane.b32.xlu0 %v1468, 96
        %v1540 = vpop.permute.xlu0 %1539
        %1541 = vrot.lane.b32.xlu0 %v1470, 96
        %v1542 = vpop.permute.xlu0 %1541
        %1543 = vrot.lane.b32.xlu0 %v1473, 96
        %v1544 = vpop.permute.xlu0 %1543
        %v1549 = vsel %vm1516, %v1537, 0
        %v1552 = vsel %vm1516, %v1538, 0
        %1554 = vmatpush.msra.mxu0 0.0
        %1555 = vmatpush.msra.mxu0 0.0
        %1556 = vmatpush.msra.mxu0 0.0
        %1557 = vmatpush.msra.mxu0 0.0
        %1558 = vmatpush.msra.mxu0 0.0
        %1559 = vmatpush.msra.mxu0 0.0
        %1560 = vmatpush.msra.mxu0 0.0
        %1561 = vmatpush.msra.mxu0 0.0
        %1562 = vmatpush.msra.mxu0 0.0
        %1563 = vmatpush.msra.mxu0 0.0
        %1564 = vmatpush.msra.mxu0 0.0
        %1565 = vmatpush.msra.mxu0 0.0
        %1566 = vmatpush.msra.mxu0 0.0
        %1567 = vmatpush.msra.mxu0 %v1544
        %1568 = vmatpush.msra.mxu0 %v1542
        %1569 = vmatpush.msra.mxu0 %v1540
        %1570 = vmatmul.f32.gmra.mxu0 %v1549
        %v1571 = vpop.f32.mrf.mxu0
        %v1572 = vadd.f32 0.0, %v1571
        %1573 = vmatmul.f32.gmra.mxu0 %v1552
        %v1574 = vpop.f32.mrf.mxu0
        %v1575 = vadd.f32 0.0, %v1574
        %1576 = vdwg.mxu0
        %v1577 = vpack.c.bf16 %v1575, %v1572
        %v1578 = vld [vmem:[%s9] sm:$0xf]
        %1579 = vrot.lane.b32.xlu0 %v1476, 120
        %v1580 = vpop.permute.xlu0 %1579
        %1581 = vrot.lane.b32.xlu0 %v1477, 120
        %v1582 = vpop.permute.xlu0 %1581
        %1583 = vrot.lane.b32.xlu0 %v1468, 120
        %v1584 = vpop.permute.xlu0 %1583
        %1585 = vrot.lane.b32.xlu0 %v1470, 120
        %v1586 = vpop.permute.xlu0 %1585
        %1587 = vrot.lane.b32.xlu0 %v1473, 120
        %v1588 = vpop.permute.xlu0 %1587
        %v1589 = vsel %vm857, %v1580, 0
        %v1591 = vsel %vm857, %v1582, 0
        %v1593 = vsel %vm857, %v1584, 0
        %v1595 = vsel %vm857, %v1586, 0
        %v1597 = vsel %vm857, %v1588, 0
        %1599 = vmatpush.xpose.msra.mxu0 0.0
        %1600 = vmatpush.xpose.msra.mxu0 0.0
        %1601 = vmatpush.xpose.msra.mxu0 0.0
        %1602 = vmatpush.xpose.msra.mxu0 0.0
        %1603 = vmatpush.xpose.msra.mxu0 0.0
        %1604 = vmatpush.xpose.msra.mxu0 0.0
        %1605 = vmatpush.xpose.msra.mxu0 0.0
        %1606 = vmatpush.xpose.msra.mxu0 0.0
        %1607 = vmatpush.xpose.msra.mxu0 0.0
        %1608 = vmatpush.xpose.msra.mxu0 0.0
        %1609 = vmatpush.xpose.msra.mxu0 0.0
        %1610 = vmatpush.xpose.msra.mxu0 0.0
        %1611 = vmatpush.xpose.msra.mxu0 0.0
        %1612 = vmatpush.xpose.msra.mxu0 %v1597
        %1613 = vmatpush.xpose.msra.mxu0 %v1595
        %1614 = vmatpush.xpose.msra.mxu0 %v1593
        %1615 = vmatmul.f32.gmra.mxu0 %v1589
        %v1616 = vpop.f32.mrf.mxu0
        %v1617 = vadd.f32 0.0, %v1616
        %1618 = vmatmul.f32.gmra.mxu0 %v1591
        %v1619 = vpop.f32.mrf.mxu0
        %v1620 = vadd.f32 0.0, %v1619
        %1621 = vdwg.mxu0
        %v1622 = vsel %vm1516, %v1617, -inf
        %1623 = vmax.xlane.f32.xlu0 %v1622
        %v1624 = vpop.xlane.xlu0 %1623
        %v1625 = vsel %vm1516, %v1620, -inf
        %1626 = vmax.xlane.f32.xlu0 %v1625
        %v1627 = vpop.xlane.xlu0 %1626
        %v1628 = vsub.f32 %v1617, %v1624
        %v1629 = vsub.f32 %v1620, %v1627
        %v1630 = vmul.f32 %v1628, 1.442695
        %v1631 = vpow.pop %v1630
        %v1632 = vmul.f32 %v1629, 1.442695
        %v1633 = vpow.pop %v1632
        %v1634 = vsel %vm1516, %v1631, 0.0
        %1635 = vadd.xlane.f32.xlu0 %v1634
        %v1636 = vpop.xlane.xlu0 %1635
        %v1637 = vsel %vm1516, %v1633, 0.0
        %1638 = vadd.xlane.f32.xlu0 %v1637
        %v1639 = vpop.xlane.xlu0 %1638
        %v1640 = vrcp.pop %v1636
        %v1641 = vrcp.pop %v1639
        %v1642 = vmul.f32 %v1631, %v1640
        %v1643 = vmul.f32 %v1633, %v1641
        %1644 = vrot.lane.b32.xlu0 %v1468, 88
        %v1645 = vpop.permute.xlu0 %1644
        %1646 = vrot.lane.b32.xlu0 %v1470, 88
        %v1647 = vpop.permute.xlu0 %1646
        %1648 = vrot.lane.b32.xlu0 %v1473, 88
        %v1649 = vpop.permute.xlu0 %1648
        %v1654 = vsel %vm1516, %v1642, 0
        %v1657 = vsel %vm1516, %v1643, 0
        %1659 = vmatpush.msra.mxu0 0.0
        %1660 = vmatpush.msra.mxu0 0.0
        %1661 = vmatpush.msra.mxu0 0.0
        %1662 = vmatpush.msra.mxu0 0.0
        %1663 = vmatpush.msra.mxu0 0.0
        %1664 = vmatpush.msra.mxu0 0.0
        %1665 = vmatpush.msra.mxu0 0.0
        %1666 = vmatpush.msra.mxu0 0.0
        %1667 = vmatpush.msra.mxu0 0.0
        %1668 = vmatpush.msra.mxu0 0.0
        %1669 = vmatpush.msra.mxu0 0.0
        %1670 = vmatpush.msra.mxu0 0.0
        %1671 = vmatpush.msra.mxu0 0.0
        %1672 = vmatpush.msra.mxu0 %v1649
        %1673 = vmatpush.msra.mxu0 %v1647
        %1674 = vmatpush.msra.mxu0 %v1645
        %1675 = vmatmul.f32.gmra.mxu0 %v1654
        %v1676 = vpop.f32.mrf.mxu0
        %v1677 = vadd.f32 0.0, %v1676
        %1678 = vmatmul.f32.gmra.mxu0 %v1657
        %v1679 = vpop.f32.mrf.mxu0
        %v1680 = vadd.f32 0.0, %v1679
        %1681 = vdwg.mxu0
        %v1682 = vpack.c.bf16 %v1680, %v1677
        %v1683 = vld [vmem:[%s9 + $0x4] sm:$0xf]
        %v1685 = vsel %vm857, %v1682, 0
        %v1688 = vsel %vm1054, %v1683, 0
        %1690 = vmatpush.bf16.msra.mxu0 0
        %1691 = vmatpush.bf16.msra.mxu0 0
        %1692 = vmatpush.bf16.msra.mxu0 0
        %1693 = vmatpush.bf16.msra.mxu0 0
        %1694 = vmatpush.bf16.msra.mxu0 0
        %1695 = vmatpush.bf16.msra.mxu0 0
        %1696 = vmatpush.bf16.msra.mxu0 0
        %1697 = vmatpush.bf16.msra.mxu0 %v1688
        %1698 = vmatmul.bf16.gmra.mxu0 %v1685
        %v1699 = vpop.f32.mrf.mxu0
        %v1700 = vadd.f32 0.0, %v1699
        %v1701 = vpop.f32.mrf.mxu0
        %v1702 = vadd.f32 0.0, %v1701
        %1703 = vdwg.mxu0
        %v1705 = vsel %vm857, %v1577, 0
        %v1708 = vsel %vm1054, %v1578, 0
        %1710 = vmatpush.bf16.msra.mxu0 0
        %1711 = vmatpush.bf16.msra.mxu0 0
        %1712 = vmatpush.bf16.msra.mxu0 0
        %1713 = vmatpush.bf16.msra.mxu0 0
        %1714 = vmatpush.bf16.msra.mxu0 0
        %1715 = vmatpush.bf16.msra.mxu0 0
        %1716 = vmatpush.bf16.msra.mxu0 0
        %1717 = vmatpush.bf16.msra.mxu0 %v1708
        %1718 = vmatmul.bf16.gmra.mxu0 %v1705
        %v1719 = vpop.f32.mrf.mxu0
        %v1720 = vadd.f32 %v1700, %v1719
        %v1721 = vpop.f32.mrf.mxu0
        %v1722 = vadd.f32 %v1702, %v1721
        %1723 = vdwg.mxu0
        %1724 = vrot.lane.b32.xlu0 %v1476, 112
        %v1725 = vpop.permute.xlu0 %1724
        %1726 = vrot.lane.b32.xlu0 %v1477, 112
        %v1727 = vpop.permute.xlu0 %1726
        %1728 = vrot.lane.b32.xlu0 %v1468, 112
        %v1729 = vpop.permute.xlu0 %1728
        %1730 = vrot.lane.b32.xlu0 %v1470, 112
        %v1731 = vpop.permute.xlu0 %1730
        %1732 = vrot.lane.b32.xlu0 %v1473, 112
        %v1733 = vpop.permute.xlu0 %1732
        %v1734 = vsel %vm857, %v1725, 0
        %v1736 = vsel %vm857, %v1727, 0
        %v1738 = vsel %vm857, %v1729, 0
        %v1740 = vsel %vm857, %v1731, 0
        %v1742 = vsel %vm857, %v1733, 0
        %1744 = vmatpush.xpose.msra.mxu0 0.0
        %1745 = vmatpush.xpose.msra.mxu0 0.0
        %1746 = vmatpush.xpose.msra.mxu0 0.0
        %1747 = vmatpush.xpose.msra.mxu0 0.0
        %1748 = vmatpush.xpose.msra.mxu0 0.0
        %1749 = vmatpush.xpose.msra.mxu0 0.0
        %1750 = vmatpush.xpose.msra.mxu0 0.0
        %1751 = vmatpush.xpose.msra.mxu0 0.0
        %1752 = vmatpush.xpose.msra.mxu0 0.0
        %1753 = vmatpush.xpose.msra.mxu0 0.0
        %1754 = vmatpush.xpose.msra.mxu0 0.0
        %1755 = vmatpush.xpose.msra.mxu0 0.0
        %1756 = vmatpush.xpose.msra.mxu0 0.0
        %1757 = vmatpush.xpose.msra.mxu0 %v1742
        %1758 = vmatpush.xpose.msra.mxu0 %v1740
        %1759 = vmatpush.xpose.msra.mxu0 %v1738
        %1760 = vmatmul.f32.gmra.mxu0 %v1734
        %v1761 = vpop.f32.mrf.mxu0
        %v1762 = vadd.f32 0.0, %v1761
        %1763 = vmatmul.f32.gmra.mxu0 %v1736
        %v1764 = vpop.f32.mrf.mxu0
        %v1765 = vadd.f32 0.0, %v1764
        %1766 = vdwg.mxu0
        %v1767 = vsel %vm1516, %v1762, -inf
        %1768 = vmax.xlane.f32.xlu0 %v1767
        %v1769 = vpop.xlane.xlu0 %1768
        %v1770 = vsel %vm1516, %v1765, -inf
        %1771 = vmax.xlane.f32.xlu0 %v1770
        %v1772 = vpop.xlane.xlu0 %1771
        %v1773 = vsub.f32 %v1762, %v1769
        %v1774 = vsub.f32 %v1765, %v1772
        %v1775 = vmul.f32 %v1773, 1.442695
        %v1776 = vpow.pop %v1775
        %v1777 = vmul.f32 %v1774, 1.442695
        %v1778 = vpow.pop %v1777
        %v1779 = vsel %vm1516, %v1776, 0.0
        %1780 = vadd.xlane.f32.xlu0 %v1779
        %v1781 = vpop.xlane.xlu0 %1780
        %v1782 = vsel %vm1516, %v1778, 0.0
        %1783 = vadd.xlane.f32.xlu0 %v1782
        %v1784 = vpop.xlane.xlu0 %1783
        %v1785 = vrcp.pop %v1781
        %v1786 = vrcp.pop %v1784
        %v1787 = vmul.f32 %v1776, %v1785
        %v1788 = vmul.f32 %v1778, %v1786
        %1789 = vrot.lane.b32.xlu0 %v1468, 80
        %v1790 = vpop.permute.xlu0 %1789
        %1791 = vrot.lane.b32.xlu0 %v1470, 80
        %v1792 = vpop.permute.xlu0 %1791
        %1793 = vrot.lane.b32.xlu0 %v1473, 80
        %v1794 = vpop.permute.xlu0 %1793
        %v1799 = vsel %vm1516, %v1787, 0
        %v1802 = vsel %vm1516, %v1788, 0
        %1804 = vmatpush.msra.mxu0 0.0
        %1805 = vmatpush.msra.mxu0 0.0
        %1806 = vmatpush.msra.mxu0 0.0
        %1807 = vmatpush.msra.mxu0 0.0
        %1808 = vmatpush.msra.mxu0 0.0
        %1809 = vmatpush.msra.mxu0 0.0
        %1810 = vmatpush.msra.mxu0 0.0
        %1811 = vmatpush.msra.mxu0 0.0
        %1812 = vmatpush.msra.mxu0 0.0
        %1813 = vmatpush.msra.mxu0 0.0
        %1814 = vmatpush.msra.mxu0 0.0
        %1815 = vmatpush.msra.mxu0 0.0
        %1816 = vmatpush.msra.mxu0 0.0
        %1817 = vmatpush.msra.mxu0 %v1794
        %1818 = vmatpush.msra.mxu0 %v1792
        %1819 = vmatpush.msra.mxu0 %v1790
        %1820 = vmatmul.f32.gmra.mxu0 %v1799
        %v1821 = vpop.f32.mrf.mxu0
        %v1822 = vadd.f32 0.0, %v1821
        %1823 = vmatmul.f32.gmra.mxu0 %v1802
        %v1824 = vpop.f32.mrf.mxu0
        %v1825 = vadd.f32 0.0, %v1824
        %1826 = vdwg.mxu0
        %v1827 = vpack.c.bf16 %v1825, %v1822
        %v1828 = vld [vmem:[%s9 + $0x8] sm:$0xf]
        %v1830 = vsel %vm857, %v1827, 0
        %v1833 = vsel %vm1054, %v1828, 0
        %1835 = vmatpush.bf16.msra.mxu0 0
        %1836 = vmatpush.bf16.msra.mxu0 0
        %1837 = vmatpush.bf16.msra.mxu0 0
        %1838 = vmatpush.bf16.msra.mxu0 0
        %1839 = vmatpush.bf16.msra.mxu0 0
        %1840 = vmatpush.bf16.msra.mxu0 0
        %1841 = vmatpush.bf16.msra.mxu0 0
        %1842 = vmatpush.bf16.msra.mxu0 %v1833
        %1843 = vmatmul.bf16.gmra.mxu0 %v1830
        %v1844 = vpop.f32.mrf.mxu0
        %v1845 = vadd.f32 0.0, %v1844
        %v1846 = vpop.f32.mrf.mxu0
        %v1847 = vadd.f32 0.0, %v1846
        %1848 = vdwg.mxu0
        %v1849 = vadd.f32 %v1720, %v1845
        %v1850 = vadd.f32 %v1722, %v1847
        %1851 = vrot.lane.b32.xlu0 %v1476, 104
        %v1852 = vpop.permute.xlu0 %1851
        %1853 = vrot.lane.b32.xlu0 %v1477, 104
        %v1854 = vpop.permute.xlu0 %1853
        %1855 = vrot.lane.b32.xlu0 %v1468, 104
        %v1856 = vpop.permute.xlu0 %1855
        %1857 = vrot.lane.b32.xlu0 %v1470, 104
        %v1858 = vpop.permute.xlu0 %1857
        %1859 = vrot.lane.b32.xlu0 %v1473, 104
        %v1860 = vpop.permute.xlu0 %1859
        %v1861 = vsel %vm857, %v1852, 0
        %v1863 = vsel %vm857, %v1854, 0
        %v1865 = vsel %vm857, %v1856, 0
        %v1867 = vsel %vm857, %v1858, 0
        %v1869 = vsel %vm857, %v1860, 0
        %1871 = vmatpush.xpose.msra.mxu0 0.0
        %1872 = vmatpush.xpose.msra.mxu0 0.0
        %1873 = vmatpush.xpose.msra.mxu0 0.0
        %1874 = vmatpush.xpose.msra.mxu0 0.0
        %1875 = vmatpush.xpose.msra.mxu0 0.0
        %1876 = vmatpush.xpose.msra.mxu0 0.0
        %1877 = vmatpush.xpose.msra.mxu0 0.0
        %1878 = vmatpush.xpose.msra.mxu0 0.0
        %1879 = vmatpush.xpose.msra.mxu0 0.0
        %1880 = vmatpush.xpose.msra.mxu0 0.0
        %1881 = vmatpush.xpose.msra.mxu0 0.0
        %1882 = vmatpush.xpose.msra.mxu0 0.0
        %1883 = vmatpush.xpose.msra.mxu0 0.0
        %1884 = vmatpush.xpose.msra.mxu0 %v1869
        %1885 = vmatpush.xpose.msra.mxu0 %v1867
        %1886 = vmatpush.xpose.msra.mxu0 %v1865
        %1887 = vmatmul.f32.gmra.mxu0 %v1861
        %v1888 = vpop.f32.mrf.mxu0
        %v1889 = vadd.f32 0.0, %v1888
        %1890 = vmatmul.f32.gmra.mxu0 %v1863
        %v1891 = vpop.f32.mrf.mxu0
        %v1892 = vadd.f32 0.0, %v1891
        %1893 = vdwg.mxu0
        %v1894 = vsel %vm1516, %v1889, -inf
        %1895 = vmax.xlane.f32.xlu0 %v1894
        %v1896 = vpop.xlane.xlu0 %1895
        %v1897 = vsel %vm1516, %v1892, -inf
        %1898 = vmax.xlane.f32.xlu0 %v1897
        %v1899 = vpop.xlane.xlu0 %1898
        %v1900 = vsub.f32 %v1889, %v1896
        %v1901 = vsub.f32 %v1892, %v1899
        %v1902 = vmul.f32 %v1900, 1.442695
        %v1903 = vpow.pop %v1902
        %v1904 = vmul.f32 %v1901, 1.442695
        %v1905 = vpow.pop %v1904
        %v1906 = vsel %vm1516, %v1903, 0.0
        %1907 = vadd.xlane.f32.xlu0 %v1906
        %v1908 = vpop.xlane.xlu0 %1907
        %v1909 = vsel %vm1516, %v1905, 0.0
        %1910 = vadd.xlane.f32.xlu0 %v1909
        %v1911 = vpop.xlane.xlu0 %1910
        %v1912 = vrcp.pop %v1908
        %v1913 = vrcp.pop %v1911
        %v1914 = vmul.f32 %v1903, %v1912
        %v1915 = vmul.f32 %v1905, %v1913
        %1916 = vrot.lane.b32.xlu0 %v1468, 72
        %v1917 = vpop.permute.xlu0 %1916
        %1918 = vrot.lane.b32.xlu0 %v1470, 72
        %v1919 = vpop.permute.xlu0 %1918
        %1920 = vrot.lane.b32.xlu0 %v1473, 72
        %v1921 = vpop.permute.xlu0 %1920
        %v1926 = vsel %vm1516, %v1914, 0
        %v1929 = vsel %vm1516, %v1915, 0
        %1931 = vmatpush.msra.mxu0 0.0
        %1932 = vmatpush.msra.mxu0 0.0
        %1933 = vmatpush.msra.mxu0 0.0
        %1934 = vmatpush.msra.mxu0 0.0
        %1935 = vmatpush.msra.mxu0 0.0
        %1936 = vmatpush.msra.mxu0 0.0
        %1937 = vmatpush.msra.mxu0 0.0
        %1938 = vmatpush.msra.mxu0 0.0
        %1939 = vmatpush.msra.mxu0 0.0
        %1940 = vmatpush.msra.mxu0 0.0
        %1941 = vmatpush.msra.mxu0 0.0
        %1942 = vmatpush.msra.mxu0 0.0
        %1943 = vmatpush.msra.mxu0 0.0
        %1944 = vmatpush.msra.mxu0 %v1921
        %1945 = vmatpush.msra.mxu0 %v1919
        %1946 = vmatpush.msra.mxu0 %v1917
        %1947 = vmatmul.f32.gmra.mxu0 %v1926
        %v1948 = vpop.f32.mrf.mxu0
        %v1949 = vadd.f32 0.0, %v1948
        %1950 = vmatmul.f32.gmra.mxu0 %v1929
        %v1951 = vpop.f32.mrf.mxu0
        %v1952 = vadd.f32 0.0, %v1951
        %1953 = vdwg.mxu0
        %v1954 = vpack.c.bf16 %v1952, %v1949
        %v1955 = vld [vmem:[%s9 + $0xc] sm:$0xf]
        %v1957 = vsel %vm857, %v1954, 0
        %v1960 = vsel %vm1054, %v1955, 0
        %1962 = vmatpush.bf16.msra.mxu0 0
        %1963 = vmatpush.bf16.msra.mxu0 0
        %1964 = vmatpush.bf16.msra.mxu0 0
        %1965 = vmatpush.bf16.msra.mxu0 0
        %1966 = vmatpush.bf16.msra.mxu0 0
        %1967 = vmatpush.bf16.msra.mxu0 0
        %1968 = vmatpush.bf16.msra.mxu0 0
        %1969 = vmatpush.bf16.msra.mxu0 %v1960
        %1970 = vmatmul.bf16.gmra.mxu0 %v1957
        %v1971 = vpop.f32.mrf.mxu0
        %v1972 = vadd.f32 0.0, %v1971
        %v1973 = vpop.f32.mrf.mxu0
        %v1974 = vadd.f32 0.0, %v1973
        %1975 = vdwg.mxu0
        %v1976 = vadd.f32 %v1849, %v1972
        %v1977 = vadd.f32 %v1850, %v1974
        %v1978 = vld [vmem:[%s10] sm:$0x1]
        %v1980 = vperm.slane %v1978, 0
        %v1982 = vadd.f32 %v1976, %v1980
        %v1983 = vadd.f32 %v1977, %v1980
        %v1984 = vadd.f32 %v1401, %v1982
        %v1985 = vadd.f32 %v1402, %v1983
        %v1986 = vld [vmem:[%s17] sm:$0x1]
        %v1987 = vld [vmem:[%s18] sm:$0x1]
        %v1988 = vsel %vm814, %v1984, 0.0
        %1989 = vadd.xlane.f32.xlu0 %v1988
        %v1990 = vpop.xlane.xlu0 %1989
        %v1991 = vsel %vm814, %v1985, 0.0
        %1992 = vadd.xlane.f32.xlu0 %v1991
        %v1993 = vpop.xlane.xlu0 %1992
        %v1994 = vmul.f32 %v1990, %v1354
        %v1995 = vmul.f32 %v1993, %v1354
        %v1996 = vsub.f32 %v1984, %v1994
        %v1997 = vsub.f32 %v1985, %v1995
        %v1998 = vmul.f32 %v1996, %v1996
        %v1999 = vmul.f32 %v1997, %v1997
        %v2000 = vsel %vm814, %v1998, 0.0
        %2001 = vadd.xlane.f32.xlu0 %v2000
        %v2002 = vpop.xlane.xlu0 %2001
        %v2003 = vsel %vm814, %v1999, 0.0
        %2004 = vadd.xlane.f32.xlu0 %v2003
        %v2005 = vpop.xlane.xlu0 %2004
        %v2006 = vmul.f32 %v2002, %v1354
        %v2007 = vmul.f32 %v2005, %v1354
        %v2008 = vadd.f32 %v2006, 1e-05
        %v2009 = vadd.f32 %v2007, 1e-05
        %v2010 = vrsqrt.pop %v2008
        %v2011 = vmul.f32 %v2010, %v2008
        %v2012 = vmul.f32 %v2011, %v2010
        %v2013 = vmul.f32 0.5, %v2012
        %v2014 = vsub.f32 1.5, %v2013
        %v2015 = vmul.f32 %v2010, %v2014
        %vm2016 = vweird.f32 %v2008
        %vm2017 = vweird.f32 %v2010
        %vm2018 = vmor %vm2016, %vm2017
        %v2019 = vsel %vm2018, %v2010, %v2015
        %v2020 = vrsqrt.pop %v2009
        %v2021 = vmul.f32 %v2020, %v2009
        %v2022 = vmul.f32 %v2021, %v2020
        %v2023 = vmul.f32 0.5, %v2022
        %v2024 = vsub.f32 1.5, %v2023
        %v2025 = vmul.f32 %v2020, %v2024
        %vm2026 = vweird.f32 %v2009
        %vm2027 = vweird.f32 %v2020
        %vm2028 = vmor %vm2026, %vm2027
        %v2029 = vsel %vm2028, %v2020, %v2025
        %v2030 = vmul.f32 %v1996, %v2019
        %v2031 = vmul.f32 %v1997, %v2029
        %v2033 = vperm.slane %v1986, 0
        %v2035 = vmul.f32 %v2030, %v2033
        %v2036 = vmul.f32 %v2031, %v2033
        %v2038 = vperm.slane %v1987, 0
        %v2040 = vadd.f32 %v2035, %v2038
        %v2041 = vadd.f32 %v2036, %v2038
        %v2042 = vpack.c.bf16 %v2041, %v2040
        %v2043 = vld [vmem:[%s11] sm:$0xff]
        %v2044 = vld [vmem:[%s11 + $0x8] sm:$0xff]
        %v2045 = vld [vmem:[%s11 + $0x10] sm:$0xff]
        %v2046 = vld [vmem:[%s11 + $0x18] sm:$0xff]
        %v2047 = vld [vmem:[%s11 + $0x20] sm:$0xff]
        %v2048 = vld [vmem:[%s11 + $0x28] sm:$0xff]
        %v2049 = vld [vmem:[%s11 + $0x30] sm:$0xff]
        %v2050 = vld [vmem:[%s11 + $0x38] sm:$0xff]
        %v2051 = vld [vmem:[%s11 + $0x40] sm:$0xff]
        %v2052 = vld [vmem:[%s11 + $0x48] sm:$0xff]
        %v2053 = vld [vmem:[%s11 + $0x50] sm:$0xff]
        %v2054 = vld [vmem:[%s11 + $0x58] sm:$0xff]
        %v2055 = vld [vmem:[%s11 + $0x60] sm:$0xff]
        %v2056 = vld [vmem:[%s11 + $0x68] sm:$0xff]
        %v2057 = vld [vmem:[%s11 + $0x70] sm:$0xff]
        %v2058 = vld [vmem:[%s11 + $0x78] sm:$0xff]
        %v2059 = vld [vmem:[%s11 + $0x80] sm:$0xff]
        %v2060 = vld [vmem:[%s11 + $0x88] sm:$0xff]
        %v2061 = vld [vmem:[%s11 + $0x90] sm:$0xff]
        %v2062 = vld [vmem:[%s11 + $0x98] sm:$0xff]
        %v2063 = vld [vmem:[%s11 + $0xa0] sm:$0xff]
        %v2064 = vld [vmem:[%s11 + $0xa8] sm:$0xff]
        %v2065 = vld [vmem:[%s11 + $0xb0] sm:$0xff]
        %v2066 = vld [vmem:[%s11 + $0xb8] sm:$0xff]
        %v2067 = vld [vmem:[%s11 + $0xc0] sm:$0xff]
        %v2068 = vld [vmem:[%s11 + $0xc8] sm:$0xff]
        %v2069 = vld [vmem:[%s11 + $0xd0] sm:$0xff]
        %v2070 = vld [vmem:[%s11 + $0xd8] sm:$0xff]
        %v2071 = vld [vmem:[%s11 + $0xe0] sm:$0xff]
        %v2072 = vld [vmem:[%s11 + $0xe8] sm:$0xff]
        %v2073 = vld [vmem:[%s11 + $0xf0] sm:$0xff]
        %v2074 = vld [vmem:[%s11 + $0xf8] sm:$0xff]
        %v2075 = vld [vmem:[%s12] sm:$0xff]
        %v2076 = vld [vmem:[%s12 + $0x8] sm:$0xff]
        %v2079 = vperm.slane %v2075, 0
        %v2080 = vperm.slane %v2075, 1
        %v2081 = vperm.slane %v2075, 2
        %v2082 = vperm.slane %v2075, 3
        %v2083 = vperm.slane %v2075, 4
        %v2084 = vperm.slane %v2075, 5
        %v2085 = vperm.slane %v2075, 6
        %v2086 = vperm.slane %v2075, 7
        %v2087 = vperm.slane %v2076, 0
        %v2088 = vperm.slane %v2076, 1
        %v2089 = vperm.slane %v2076, 2
        %v2090 = vperm.slane %v2076, 3
        %v2091 = vperm.slane %v2076, 4
        %v2092 = vperm.slane %v2076, 5
        %v2093 = vperm.slane %v2076, 6
        %v2094 = vperm.slane %v2076, 7
        %v2143 = vunpack.c.l.b16 %v2043
        %v2144 = vunpack.c.h.b16 %v2043
        %v2145 = vunpack.c.l.b16 %v2044
        %v2146 = vunpack.c.h.b16 %v2044
        %v2147 = vunpack.c.l.b16 %v2045
        %v2148 = vunpack.c.h.b16 %v2045
        %v2149 = vunpack.c.l.b16 %v2046
        %v2150 = vunpack.c.h.b16 %v2046
        %v2151 = vunpack.c.l.b16 %v2047
        %v2152 = vunpack.c.h.b16 %v2047
        %v2153 = vunpack.c.l.b16 %v2048
        %v2154 = vunpack.c.h.b16 %v2048
        %v2155 = vunpack.c.l.b16 %v2049
        %v2156 = vunpack.c.h.b16 %v2049
        %v2157 = vunpack.c.l.b16 %v2050
        %v2158 = vunpack.c.h.b16 %v2050
        %v2159 = vunpack.c.l.b16 %v2051
        %v2160 = vunpack.c.h.b16 %v2051
        %v2161 = vunpack.c.l.b16 %v2052
        %v2162 = vunpack.c.h.b16 %v2052
        %v2163 = vunpack.c.l.b16 %v2053
        %v2164 = vunpack.c.h.b16 %v2053
        %v2165 = vunpack.c.l.b16 %v2054
        %v2166 = vunpack.c.h.b16 %v2054
        %v2167 = vunpack.c.l.b16 %v2055
        %v2168 = vunpack.c.h.b16 %v2055
        %v2169 = vunpack.c.l.b16 %v2056
        %v2170 = vunpack.c.h.b16 %v2056
        %v2171 = vunpack.c.l.b16 %v2057
        %v2172 = vunpack.c.h.b16 %v2057
        %v2173 = vunpack.c.l.b16 %v2058
        %v2174 = vunpack.c.h.b16 %v2058
        %v2175 = vunpack.c.l.b16 %v2059
        %v2176 = vunpack.c.h.b16 %v2059
        %v2177 = vunpack.c.l.b16 %v2060
        %v2178 = vunpack.c.h.b16 %v2060
        %v2179 = vunpack.c.l.b16 %v2061
        %v2180 = vunpack.c.h.b16 %v2061
        %v2181 = vunpack.c.l.b16 %v2062
        %v2182 = vunpack.c.h.b16 %v2062
        %v2183 = vunpack.c.l.b16 %v2063
        %v2184 = vunpack.c.h.b16 %v2063
        %v2185 = vunpack.c.l.b16 %v2064
        %v2186 = vunpack.c.h.b16 %v2064
        %v2187 = vunpack.c.l.b16 %v2065
        %v2188 = vunpack.c.h.b16 %v2065
        %v2189 = vunpack.c.l.b16 %v2066
        %v2190 = vunpack.c.h.b16 %v2066
        %v2191 = vunpack.c.l.b16 %v2067
        %v2192 = vunpack.c.h.b16 %v2067
        %v2193 = vunpack.c.l.b16 %v2068
        %v2194 = vunpack.c.h.b16 %v2068
        %v2195 = vunpack.c.l.b16 %v2069
        %v2196 = vunpack.c.h.b16 %v2069
        %v2197 = vunpack.c.l.b16 %v2070
        %v2198 = vunpack.c.h.b16 %v2070
        %v2199 = vunpack.c.l.b16 %v2071
        %v2200 = vunpack.c.h.b16 %v2071
        %v2201 = vunpack.c.l.b16 %v2072
        %v2202 = vunpack.c.h.b16 %v2072
        %v2203 = vunpack.c.l.b16 %v2073
        %v2204 = vunpack.c.h.b16 %v2073
        %v2205 = vunpack.c.l.b16 %v2074
        %v2206 = vunpack.c.h.b16 %v2074
        %v2207 = vpack.c.b16 %v2159, %v2143
        %v2208 = vpack.c.b16 %v2160, %v2144
        %v2209 = vpack.c.b16 %v2161, %v2145
        %v2210 = vpack.c.b16 %v2162, %v2146
        %v2211 = vpack.c.b16 %v2163, %v2147
        %v2212 = vpack.c.b16 %v2164, %v2148
        %v2213 = vpack.c.b16 %v2165, %v2149
        %v2214 = vpack.c.b16 %v2166, %v2150
        %v2215 = vpack.c.b16 %v2167, %v2151
        %v2216 = vpack.c.b16 %v2168, %v2152
        %v2217 = vpack.c.b16 %v2169, %v2153
        %v2218 = vpack.c.b16 %v2170, %v2154
        %v2219 = vpack.c.b16 %v2171, %v2155
        %v2220 = vpack.c.b16 %v2172, %v2156
        %v2221 = vpack.c.b16 %v2173, %v2157
        %v2222 = vpack.c.b16 %v2174, %v2158
        %v2223 = vpack.c.b16 %v2191, %v2175
        %v2224 = vpack.c.b16 %v2192, %v2176
        %v2225 = vpack.c.b16 %v2193, %v2177
        %v2226 = vpack.c.b16 %v2194, %v2178
        %v2227 = vpack.c.b16 %v2195, %v2179
        %v2228 = vpack.c.b16 %v2196, %v2180
        %v2229 = vpack.c.b16 %v2197, %v2181
        %v2230 = vpack.c.b16 %v2198, %v2182
        %v2231 = vpack.c.b16 %v2199, %v2183
        %v2232 = vpack.c.b16 %v2200, %v2184
        %v2233 = vpack.c.b16 %v2201, %v2185
        %v2234 = vpack.c.b16 %v2202, %v2186
        %v2235 = vpack.c.b16 %v2203, %v2187
        %v2236 = vpack.c.b16 %v2204, %v2188
        %v2237 = vpack.c.b16 %v2205, %v2189
        %v2238 = vpack.c.b16 %v2206, %v2190
        %v2272 = vsel %vm814, %v2042, 0
        %2274 = vmatpush.bf16.msra.mxu0 0
        %2275 = vmatpush.bf16.msra.mxu0 0
        %2276 = vmatpush.bf16.msra.mxu0 0
        %2277 = vmatpush.bf16.msra.mxu0 0
        %2278 = vmatpush.bf16.msra.mxu0 0
        %2279 = vmatpush.bf16.msra.mxu0 0
        %2280 = vmatpush.bf16.msra.mxu0 %v2223
        %2281 = vmatpush.bf16.msra.mxu0 %v2207
        %2282 = vmatmul.bf16.gmra.mxu0 %v2272
        %v2283 = vpop.f32.mrf.mxu0
        %v2284 = vadd.f32 %v2079, %v2283
        %v2285 = vpop.f32.mrf.mxu0
        %v2286 = vadd.f32 %v2079, %v2285
        %2287 = vdwg.mxu0
        %2288 = vmatpush.bf16.msra.mxu0 0
        %2289 = vmatpush.bf16.msra.mxu0 0
        %2290 = vmatpush.bf16.msra.mxu0 0
        %2291 = vmatpush.bf16.msra.mxu0 0
        %2292 = vmatpush.bf16.msra.mxu0 0
        %2293 = vmatpush.bf16.msra.mxu0 0
        %2294 = vmatpush.bf16.msra.mxu0 %v2224
        %2295 = vmatpush.bf16.msra.mxu0 %v2208
        %2296 = vmatmul.bf16.gmra.mxu0 %v2272
        %v2297 = vpop.f32.mrf.mxu0
        %v2298 = vadd.f32 %v2080, %v2297
        %v2299 = vpop.f32.mrf.mxu0
        %v2300 = vadd.f32 %v2080, %v2299
        %2301 = vdwg.mxu0
        %2302 = vmatpush.bf16.msra.mxu0 0
        %2303 = vmatpush.bf16.msra.mxu0 0
        %2304 = vmatpush.bf16.msra.mxu0 0
        %2305 = vmatpush.bf16.msra.mxu0 0
        %2306 = vmatpush.bf16.msra.mxu0 0
        %2307 = vmatpush.bf16.msra.mxu0 0
        %2308 = vmatpush.bf16.msra.mxu0 %v2225
        %2309 = vmatpush.bf16.msra.mxu0 %v2209
        %2310 = vmatmul.bf16.gmra.mxu0 %v2272
        %v2311 = vpop.f32.mrf.mxu0
        %v2312 = vadd.f32 %v2081, %v2311
        %v2313 = vpop.f32.mrf.mxu0
        %v2314 = vadd.f32 %v2081, %v2313
        %2315 = vdwg.mxu0
        %2316 = vmatpush.bf16.msra.mxu0 0
        %2317 = vmatpush.bf16.msra.mxu0 0
        %2318 = vmatpush.bf16.msra.mxu0 0
        %2319 = vmatpush.bf16.msra.mxu0 0
        %2320 = vmatpush.bf16.msra.mxu0 0
        %2321 = vmatpush.bf16.msra.mxu0 0
        %2322 = vmatpush.bf16.msra.mxu0 %v2226
        %2323 = vmatpush.bf16.msra.mxu0 %v2210
        %2324 = vmatmul.bf16.gmra.mxu0 %v2272
        %v2325 = vpop.f32.mrf.mxu0
        %v2326 = vadd.f32 %v2082, %v2325
        %v2327 = vpop.f32.mrf.mxu0
        %v2328 = vadd.f32 %v2082, %v2327
        %2329 = vdwg.mxu0
        %2330 = vmatpush.bf16.msra.mxu0 0
        %2331 = vmatpush.bf16.msra.mxu0 0
        %2332 = vmatpush.bf16.msra.mxu0 0
        %2333 = vmatpush.bf16.msra.mxu0 0
        %2334 = vmatpush.bf16.msra.mxu0 0
        %2335 = vmatpush.bf16.msra.mxu0 0
        %2336 = vmatpush.bf16.msra.mxu0 %v2227
        %2337 = vmatpush.bf16.msra.mxu0 %v2211
        %2338 = vmatmul.bf16.gmra.mxu0 %v2272
        %v2339 = vpop.f32.mrf.mxu0
        %v2340 = vadd.f32 %v2083, %v2339
        %v2341 = vpop.f32.mrf.mxu0
        %v2342 = vadd.f32 %v2083, %v2341
        %2343 = vdwg.mxu0
        %2344 = vmatpush.bf16.msra.mxu0 0
        %2345 = vmatpush.bf16.msra.mxu0 0
        %2346 = vmatpush.bf16.msra.mxu0 0
        %2347 = vmatpush.bf16.msra.mxu0 0
        %2348 = vmatpush.bf16.msra.mxu0 0
        %2349 = vmatpush.bf16.msra.mxu0 0
        %2350 = vmatpush.bf16.msra.mxu0 %v2228
        %2351 = vmatpush.bf16.msra.mxu0 %v2212
        %2352 = vmatmul.bf16.gmra.mxu0 %v2272
        %v2353 = vpop.f32.mrf.mxu0
        %v2354 = vadd.f32 %v2084, %v2353
        %v2355 = vpop.f32.mrf.mxu0
        %v2356 = vadd.f32 %v2084, %v2355
        %2357 = vdwg.mxu0
        %2358 = vmatpush.bf16.msra.mxu0 0
        %2359 = vmatpush.bf16.msra.mxu0 0
        %2360 = vmatpush.bf16.msra.mxu0 0
        %2361 = vmatpush.bf16.msra.mxu0 0
        %2362 = vmatpush.bf16.msra.mxu0 0
        %2363 = vmatpush.bf16.msra.mxu0 0
        %2364 = vmatpush.bf16.msra.mxu0 %v2229
        %2365 = vmatpush.bf16.msra.mxu0 %v2213
        %2366 = vmatmul.bf16.gmra.mxu0 %v2272
        %v2367 = vpop.f32.mrf.mxu0
        %v2368 = vadd.f32 %v2085, %v2367
        %v2369 = vpop.f32.mrf.mxu0
        %v2370 = vadd.f32 %v2085, %v2369
        %2371 = vdwg.mxu0
        %2372 = vmatpush.bf16.msra.mxu0 0
        %2373 = vmatpush.bf16.msra.mxu0 0
        %2374 = vmatpush.bf16.msra.mxu0 0
        %2375 = vmatpush.bf16.msra.mxu0 0
        %2376 = vmatpush.bf16.msra.mxu0 0
        %2377 = vmatpush.bf16.msra.mxu0 0
        %2378 = vmatpush.bf16.msra.mxu0 %v2230
        %2379 = vmatpush.bf16.msra.mxu0 %v2214
        %2380 = vmatmul.bf16.gmra.mxu0 %v2272
        %v2381 = vpop.f32.mrf.mxu0
        %v2382 = vadd.f32 %v2086, %v2381
        %v2383 = vpop.f32.mrf.mxu0
        %v2384 = vadd.f32 %v2086, %v2383
        %2385 = vdwg.mxu0
        %2386 = vmatpush.bf16.msra.mxu0 0
        %2387 = vmatpush.bf16.msra.mxu0 0
        %2388 = vmatpush.bf16.msra.mxu0 0
        %2389 = vmatpush.bf16.msra.mxu0 0
        %2390 = vmatpush.bf16.msra.mxu0 0
        %2391 = vmatpush.bf16.msra.mxu0 0
        %2392 = vmatpush.bf16.msra.mxu0 %v2231
        %2393 = vmatpush.bf16.msra.mxu0 %v2215
        %2394 = vmatmul.bf16.gmra.mxu0 %v2272
        %v2395 = vpop.f32.mrf.mxu0
        %v2396 = vadd.f32 %v2087, %v2395
        %v2397 = vpop.f32.mrf.mxu0
        %v2398 = vadd.f32 %v2087, %v2397
        %2399 = vdwg.mxu0
        %2400 = vmatpush.bf16.msra.mxu0 0
        %2401 = vmatpush.bf16.msra.mxu0 0
        %2402 = vmatpush.bf16.msra.mxu0 0
        %2403 = vmatpush.bf16.msra.mxu0 0
        %2404 = vmatpush.bf16.msra.mxu0 0
        %2405 = vmatpush.bf16.msra.mxu0 0
        %2406 = vmatpush.bf16.msra.mxu0 %v2232
        %2407 = vmatpush.bf16.msra.mxu0 %v2216
        %2408 = vmatmul.bf16.gmra.mxu0 %v2272
        %v2409 = vpop.f32.mrf.mxu0
        %v2410 = vadd.f32 %v2088, %v2409
        %v2411 = vpop.f32.mrf.mxu0
        %v2412 = vadd.f32 %v2088, %v2411
        %2413 = vdwg.mxu0
        %2414 = vmatpush.bf16.msra.mxu0 0
        %2415 = vmatpush.bf16.msra.mxu0 0
        %2416 = vmatpush.bf16.msra.mxu0 0
        %2417 = vmatpush.bf16.msra.mxu0 0
        %2418 = vmatpush.bf16.msra.mxu0 0
        %2419 = vmatpush.bf16.msra.mxu0 0
        %2420 = vmatpush.bf16.msra.mxu0 %v2233
        %2421 = vmatpush.bf16.msra.mxu0 %v2217
        %2422 = vmatmul.bf16.gmra.mxu0 %v2272
        %v2423 = vpop.f32.mrf.mxu0
        %v2424 = vadd.f32 %v2089, %v2423
        %v2425 = vpop.f32.mrf.mxu0
        %v2426 = vadd.f32 %v2089, %v2425
        %2427 = vdwg.mxu0
        %2428 = vmatpush.bf16.msra.mxu0 0
        %2429 = vmatpush.bf16.msra.mxu0 0
        %2430 = vmatpush.bf16.msra.mxu0 0
        %2431 = vmatpush.bf16.msra.mxu0 0
        %2432 = vmatpush.bf16.msra.mxu0 0
        %2433 = vmatpush.bf16.msra.mxu0 0
        %2434 = vmatpush.bf16.msra.mxu0 %v2234
        %2435 = vmatpush.bf16.msra.mxu0 %v2218
        %2436 = vmatmul.bf16.gmra.mxu0 %v2272
        %v2437 = vpop.f32.mrf.mxu0
        %v2438 = vadd.f32 %v2090, %v2437
        %v2439 = vpop.f32.mrf.mxu0
        %v2440 = vadd.f32 %v2090, %v2439
        %2441 = vdwg.mxu0
        %2442 = vmatpush.bf16.msra.mxu0 0
        %2443 = vmatpush.bf16.msra.mxu0 0
        %2444 = vmatpush.bf16.msra.mxu0 0
        %2445 = vmatpush.bf16.msra.mxu0 0
        %2446 = vmatpush.bf16.msra.mxu0 0
        %2447 = vmatpush.bf16.msra.mxu0 0
        %2448 = vmatpush.bf16.msra.mxu0 %v2235
        %2449 = vmatpush.bf16.msra.mxu0 %v2219
        %2450 = vmatmul.bf16.gmra.mxu0 %v2272
        %v2451 = vpop.f32.mrf.mxu0
        %v2452 = vadd.f32 %v2091, %v2451
        %v2453 = vpop.f32.mrf.mxu0
        %v2454 = vadd.f32 %v2091, %v2453
        %2455 = vdwg.mxu0
        %2456 = vmatpush.bf16.msra.mxu0 0
        %2457 = vmatpush.bf16.msra.mxu0 0
        %2458 = vmatpush.bf16.msra.mxu0 0
        %2459 = vmatpush.bf16.msra.mxu0 0
        %2460 = vmatpush.bf16.msra.mxu0 0
        %2461 = vmatpush.bf16.msra.mxu0 0
        %2462 = vmatpush.bf16.msra.mxu0 %v2236
        %2463 = vmatpush.bf16.msra.mxu0 %v2220
        %2464 = vmatmul.bf16.gmra.mxu0 %v2272
        %v2465 = vpop.f32.mrf.mxu0
        %v2466 = vadd.f32 %v2092, %v2465
        %v2467 = vpop.f32.mrf.mxu0
        %v2468 = vadd.f32 %v2092, %v2467
        %2469 = vdwg.mxu0
        %2470 = vmatpush.bf16.msra.mxu0 0
        %2471 = vmatpush.bf16.msra.mxu0 0
        %2472 = vmatpush.bf16.msra.mxu0 0
        %2473 = vmatpush.bf16.msra.mxu0 0
        %2474 = vmatpush.bf16.msra.mxu0 0
        %2475 = vmatpush.bf16.msra.mxu0 0
        %2476 = vmatpush.bf16.msra.mxu0 %v2237
        %2477 = vmatpush.bf16.msra.mxu0 %v2221
        %2478 = vmatmul.bf16.gmra.mxu0 %v2272
        %v2479 = vpop.f32.mrf.mxu0
        %v2480 = vadd.f32 %v2093, %v2479
        %v2481 = vpop.f32.mrf.mxu0
        %v2482 = vadd.f32 %v2093, %v2481
        %2483 = vdwg.mxu0
        %2484 = vmatpush.bf16.msra.mxu0 0
        %2485 = vmatpush.bf16.msra.mxu0 0
        %2486 = vmatpush.bf16.msra.mxu0 0
        %2487 = vmatpush.bf16.msra.mxu0 0
        %2488 = vmatpush.bf16.msra.mxu0 0
        %2489 = vmatpush.bf16.msra.mxu0 0
        %2490 = vmatpush.bf16.msra.mxu0 %v2238
        %2491 = vmatpush.bf16.msra.mxu0 %v2222
        %2492 = vmatmul.bf16.gmra.mxu0 %v2272
        %v2493 = vpop.f32.mrf.mxu0
        %v2494 = vadd.f32 %v2094, %v2493
        %v2495 = vpop.f32.mrf.mxu0
        %v2496 = vadd.f32 %v2094, %v2495
        %2497 = vdwg.mxu0
        %v2498 = vmax.f32 %v2284, 0.0
        %v2499 = vmax.f32 %v2298, 0.0
        %v2500 = vmax.f32 %v2312, 0.0
        %v2501 = vmax.f32 %v2326, 0.0
        %v2502 = vmax.f32 %v2340, 0.0
        %v2503 = vmax.f32 %v2354, 0.0
        %v2504 = vmax.f32 %v2368, 0.0
        %v2505 = vmax.f32 %v2382, 0.0
        %v2506 = vmax.f32 %v2396, 0.0
        %v2507 = vmax.f32 %v2410, 0.0
        %v2508 = vmax.f32 %v2424, 0.0
        %v2509 = vmax.f32 %v2438, 0.0
        %v2510 = vmax.f32 %v2452, 0.0
        %v2511 = vmax.f32 %v2466, 0.0
        %v2512 = vmax.f32 %v2480, 0.0
        %v2513 = vmax.f32 %v2494, 0.0
        %v2514 = vmax.f32 %v2286, 0.0
        %v2515 = vmax.f32 %v2300, 0.0
        %v2516 = vmax.f32 %v2314, 0.0
        %v2517 = vmax.f32 %v2328, 0.0
        %v2518 = vmax.f32 %v2342, 0.0
        %v2519 = vmax.f32 %v2356, 0.0
        %v2520 = vmax.f32 %v2370, 0.0
        %v2521 = vmax.f32 %v2384, 0.0
        %v2522 = vmax.f32 %v2398, 0.0
        %v2523 = vmax.f32 %v2412, 0.0
        %v2524 = vmax.f32 %v2426, 0.0
        %v2525 = vmax.f32 %v2440, 0.0
        %v2526 = vmax.f32 %v2454, 0.0
        %v2527 = vmax.f32 %v2468, 0.0
        %v2528 = vmax.f32 %v2482, 0.0
        %v2529 = vmax.f32 %v2496, 0.0
        %v2530 = vpack.c.bf16 %v2514, %v2498
        %v2531 = vpack.c.bf16 %v2515, %v2499
        %v2532 = vpack.c.bf16 %v2516, %v2500
        %v2533 = vpack.c.bf16 %v2517, %v2501
        %v2534 = vpack.c.bf16 %v2518, %v2502
        %v2535 = vpack.c.bf16 %v2519, %v2503
        %v2536 = vpack.c.bf16 %v2520, %v2504
        %v2537 = vpack.c.bf16 %v2521, %v2505
        %v2538 = vpack.c.bf16 %v2522, %v2506
        %v2539 = vpack.c.bf16 %v2523, %v2507
        %v2540 = vpack.c.bf16 %v2524, %v2508
        %v2541 = vpack.c.bf16 %v2525, %v2509
        %v2542 = vpack.c.bf16 %v2526, %v2510
        %v2543 = vpack.c.bf16 %v2527, %v2511
        %v2544 = vpack.c.bf16 %v2528, %v2512
        %v2545 = vpack.c.bf16 %v2529, %v2513
        %v2546 = vld [vmem:[%s13] sm:$0xf]
        %v2547 = vld [vmem:[%s13 + $0x4] sm:$0xf]
        %v2548 = vld [vmem:[%s13 + $0x8] sm:$0xf]
        %v2549 = vld [vmem:[%s13 + $0xc] sm:$0xf]
        %v2550 = vld [vmem:[%s13 + $0x10] sm:$0xf]
        %v2551 = vld [vmem:[%s13 + $0x14] sm:$0xf]
        %v2552 = vld [vmem:[%s13 + $0x18] sm:$0xf]
        %v2553 = vld [vmem:[%s13 + $0x1c] sm:$0xf]
        %v2554 = vld [vmem:[%s13 + $0x20] sm:$0xf]
        %v2555 = vld [vmem:[%s13 + $0x24] sm:$0xf]
        %v2556 = vld [vmem:[%s13 + $0x28] sm:$0xf]
        %v2557 = vld [vmem:[%s13 + $0x2c] sm:$0xf]
        %v2558 = vld [vmem:[%s13 + $0x30] sm:$0xf]
        %v2559 = vld [vmem:[%s13 + $0x34] sm:$0xf]
        %v2560 = vld [vmem:[%s13 + $0x38] sm:$0xf]
        %v2561 = vld [vmem:[%s13 + $0x3c] sm:$0xf]
        %v2562 = vld [vmem:[%s13 + $0x40] sm:$0xf]
        %v2563 = vld [vmem:[%s13 + $0x44] sm:$0xf]
        %v2564 = vld [vmem:[%s13 + $0x48] sm:$0xf]
        %v2565 = vld [vmem:[%s13 + $0x4c] sm:$0xf]
        %v2566 = vld [vmem:[%s13 + $0x50] sm:$0xf]
        %v2567 = vld [vmem:[%s13 + $0x54] sm:$0xf]
        %v2568 = vld [vmem:[%s13 + $0x58] sm:$0xf]
        %v2569 = vld [vmem:[%s13 + $0x5c] sm:$0xf]
        %v2570 = vld [vmem:[%s13 + $0x60] sm:$0xf]
        %v2571 = vld [vmem:[%s13 + $0x64] sm:$0xf]
        %v2572 = vld [vmem:[%s13 + $0x68] sm:$0xf]
        %v2573 = vld [vmem:[%s13 + $0x6c] sm:$0xf]
        %v2574 = vld [vmem:[%s13 + $0x70] sm:$0xf]
        %v2575 = vld [vmem:[%s13 + $0x74] sm:$0xf]
        %v2576 = vld [vmem:[%s13 + $0x78] sm:$0xf]
        %v2577 = vld [vmem:[%s13 + $0x7c] sm:$0xf]
        %v2578 = vld [vmem:[%s13 + $0x80] sm:$0xf]
        %v2579 = vld [vmem:[%s13 + $0x84] sm:$0xf]
        %v2580 = vld [vmem:[%s13 + $0x88] sm:$0xf]
        %v2581 = vld [vmem:[%s13 + $0x8c] sm:$0xf]
        %v2582 = vld [vmem:[%s13 + $0x90] sm:$0xf]
        %v2583 = vld [vmem:[%s13 + $0x94] sm:$0xf]
        %v2584 = vld [vmem:[%s13 + $0x98] sm:$0xf]
        %v2585 = vld [vmem:[%s13 + $0x9c] sm:$0xf]
        %v2586 = vld [vmem:[%s13 + $0xa0] sm:$0xf]
        %v2587 = vld [vmem:[%s13 + $0xa4] sm:$0xf]
        %v2588 = vld [vmem:[%s13 + $0xa8] sm:$0xf]
        %v2589 = vld [vmem:[%s13 + $0xac] sm:$0xf]
        %v2590 = vld [vmem:[%s13 + $0xb0] sm:$0xf]
        %v2591 = vld [vmem:[%s13 + $0xb4] sm:$0xf]
        %v2592 = vld [vmem:[%s13 + $0xb8] sm:$0xf]
        %v2593 = vld [vmem:[%s13 + $0xbc] sm:$0xf]
        %v2594 = vld [vmem:[%s13 + $0xc0] sm:$0xf]
        %v2595 = vld [vmem:[%s13 + $0xc4] sm:$0xf]
        %v2596 = vld [vmem:[%s13 + $0xc8] sm:$0xf]
        %v2597 = vld [vmem:[%s13 + $0xcc] sm:$0xf]
        %v2598 = vld [vmem:[%s13 + $0xd0] sm:$0xf]
        %v2599 = vld [vmem:[%s13 + $0xd4] sm:$0xf]
        %v2600 = vld [vmem:[%s13 + $0xd8] sm:$0xf]
        %v2601 = vld [vmem:[%s13 + $0xdc] sm:$0xf]
        %v2602 = vld [vmem:[%s13 + $0xe0] sm:$0xf]
        %v2603 = vld [vmem:[%s13 + $0xe4] sm:$0xf]
        %v2604 = vld [vmem:[%s13 + $0xe8] sm:$0xf]
        %v2605 = vld [vmem:[%s13 + $0xec] sm:$0xf]
        %v2606 = vld [vmem:[%s13 + $0xf0] sm:$0xf]
        %v2607 = vld [vmem:[%s13 + $0xf4] sm:$0xf]
        %v2608 = vld [vmem:[%s13 + $0xf8] sm:$0xf]
        %v2609 = vld [vmem:[%s13 + $0xfc] sm:$0xf]
        %v2610 = vld [vmem:[%s13 + $0x100] sm:$0xf]
        %v2611 = vld [vmem:[%s13 + $0x104] sm:$0xf]
        %v2612 = vld [vmem:[%s13 + $0x108] sm:$0xf]
        %v2613 = vld [vmem:[%s13 + $0x10c] sm:$0xf]
        %v2614 = vld [vmem:[%s13 + $0x110] sm:$0xf]
        %v2615 = vld [vmem:[%s13 + $0x114] sm:$0xf]
        %v2616 = vld [vmem:[%s13 + $0x118] sm:$0xf]
        %v2617 = vld [vmem:[%s13 + $0x11c] sm:$0xf]
        %v2618 = vld [vmem:[%s13 + $0x120] sm:$0xf]
        %v2619 = vld [vmem:[%s13 + $0x124] sm:$0xf]
        %v2620 = vld [vmem:[%s13 + $0x128] sm:$0xf]
        %v2621 = vld [vmem:[%s13 + $0x12c] sm:$0xf]
        %v2622 = vld [vmem:[%s13 + $0x130] sm:$0xf]
        %v2623 = vld [vmem:[%s13 + $0x134] sm:$0xf]
        %v2624 = vld [vmem:[%s13 + $0x138] sm:$0xf]
        %v2625 = vld [vmem:[%s13 + $0x13c] sm:$0xf]
        %v2626 = vld [vmem:[%s13 + $0x140] sm:$0xf]
        %v2627 = vld [vmem:[%s13 + $0x144] sm:$0xf]
        %v2628 = vld [vmem:[%s13 + $0x148] sm:$0xf]
        %v2629 = vld [vmem:[%s13 + $0x14c] sm:$0xf]
        %v2630 = vld [vmem:[%s13 + $0x150] sm:$0xf]
        %v2631 = vld [vmem:[%s13 + $0x154] sm:$0xf]
        %v2632 = vld [vmem:[%s13 + $0x158] sm:$0xf]
        %v2633 = vld [vmem:[%s13 + $0x15c] sm:$0xf]
        %v2634 = vld [vmem:[%s13 + $0x160] sm:$0xf]
        %v2635 = vld [vmem:[%s13 + $0x164] sm:$0xf]
        %v2636 = vld [vmem:[%s13 + $0x168] sm:$0xf]
        %v2637 = vld [vmem:[%s13 + $0x16c] sm:$0xf]
        %v2638 = vld [vmem:[%s13 + $0x170] sm:$0xf]
        %v2639 = vld [vmem:[%s13 + $0x174] sm:$0xf]
        %v2640 = vld [vmem:[%s13 + $0x178] sm:$0xf]
        %v2641 = vld [vmem:[%s13 + $0x17c] sm:$0xf]
        %v2642 = vld [vmem:[%s13 + $0x180] sm:$0xf]
        %v2643 = vld [vmem:[%s13 + $0x184] sm:$0xf]
        %v2644 = vld [vmem:[%s13 + $0x188] sm:$0xf]
        %v2645 = vld [vmem:[%s13 + $0x18c] sm:$0xf]
        %v2646 = vld [vmem:[%s13 + $0x190] sm:$0xf]
        %v2647 = vld [vmem:[%s13 + $0x194] sm:$0xf]
        %v2648 = vld [vmem:[%s13 + $0x198] sm:$0xf]
        %v2649 = vld [vmem:[%s13 + $0x19c] sm:$0xf]
        %v2650 = vld [vmem:[%s13 + $0x1a0] sm:$0xf]
        %v2651 = vld [vmem:[%s13 + $0x1a4] sm:$0xf]
        %v2652 = vld [vmem:[%s13 + $0x1a8] sm:$0xf]
        %v2653 = vld [vmem:[%s13 + $0x1ac] sm:$0xf]
        %v2654 = vld [vmem:[%s13 + $0x1b0] sm:$0xf]
        %v2655 = vld [vmem:[%s13 + $0x1b4] sm:$0xf]
        %v2656 = vld [vmem:[%s13 + $0x1b8] sm:$0xf]
        %v2657 = vld [vmem:[%s13 + $0x1bc] sm:$0xf]
        %v2658 = vld [vmem:[%s13 + $0x1c0] sm:$0xf]
        %v2659 = vld [vmem:[%s13 + $0x1c4] sm:$0xf]
        %v2660 = vld [vmem:[%s13 + $0x1c8] sm:$0xf]
        %v2661 = vld [vmem:[%s13 + $0x1cc] sm:$0xf]
        %v2662 = vld [vmem:[%s13 + $0x1d0] sm:$0xf]
        %v2663 = vld [vmem:[%s13 + $0x1d4] sm:$0xf]
        %v2664 = vld [vmem:[%s13 + $0x1d8] sm:$0xf]
        %v2665 = vld [vmem:[%s13 + $0x1dc] sm:$0xf]
        %v2666 = vld [vmem:[%s13 + $0x1e0] sm:$0xf]
        %v2667 = vld [vmem:[%s13 + $0x1e4] sm:$0xf]
        %v2668 = vld [vmem:[%s13 + $0x1e8] sm:$0xf]
        %v2669 = vld [vmem:[%s13 + $0x1ec] sm:$0xf]
        %v2670 = vld [vmem:[%s13 + $0x1f0] sm:$0xf]
        %v2671 = vld [vmem:[%s13 + $0x1f4] sm:$0xf]
        %v2672 = vld [vmem:[%s13 + $0x1f8] sm:$0xf]
        %v2673 = vld [vmem:[%s13 + $0x1fc] sm:$0xf]
        %v2674 = vld [vmem:[%s13 + $0x200] sm:$0xf]
        %v2675 = vld [vmem:[%s13 + $0x204] sm:$0xf]
        %v2676 = vld [vmem:[%s13 + $0x208] sm:$0xf]
        %v2677 = vld [vmem:[%s13 + $0x20c] sm:$0xf]
        %v2678 = vld [vmem:[%s13 + $0x210] sm:$0xf]
        %v2679 = vld [vmem:[%s13 + $0x214] sm:$0xf]
        %v2680 = vld [vmem:[%s13 + $0x218] sm:$0xf]
        %v2681 = vld [vmem:[%s13 + $0x21c] sm:$0xf]
        %v2682 = vld [vmem:[%s13 + $0x220] sm:$0xf]
        %v2683 = vld [vmem:[%s13 + $0x224] sm:$0xf]
        %v2684 = vld [vmem:[%s13 + $0x228] sm:$0xf]
        %v2685 = vld [vmem:[%s13 + $0x22c] sm:$0xf]
        %v2686 = vld [vmem:[%s13 + $0x230] sm:$0xf]
        %v2687 = vld [vmem:[%s13 + $0x234] sm:$0xf]
        %v2688 = vld [vmem:[%s13 + $0x238] sm:$0xf]
        %v2689 = vld [vmem:[%s13 + $0x23c] sm:$0xf]
        %v2690 = vld [vmem:[%s13 + $0x240] sm:$0xf]
        %v2691 = vld [vmem:[%s13 + $0x244] sm:$0xf]
        %v2692 = vld [vmem:[%s13 + $0x248] sm:$0xf]
        %v2693 = vld [vmem:[%s13 + $0x24c] sm:$0xf]
        %v2694 = vld [vmem:[%s13 + $0x250] sm:$0xf]
        %v2695 = vld [vmem:[%s13 + $0x254] sm:$0xf]
        %v2696 = vld [vmem:[%s13 + $0x258] sm:$0xf]
        %v2697 = vld [vmem:[%s13 + $0x25c] sm:$0xf]
        %v2698 = vld [vmem:[%s13 + $0x260] sm:$0xf]
        %v2699 = vld [vmem:[%s13 + $0x264] sm:$0xf]
        %v2700 = vld [vmem:[%s13 + $0x268] sm:$0xf]
        %v2701 = vld [vmem:[%s13 + $0x26c] sm:$0xf]
        %v2702 = vld [vmem:[%s13 + $0x270] sm:$0xf]
        %v2703 = vld [vmem:[%s13 + $0x274] sm:$0xf]
        %v2704 = vld [vmem:[%s13 + $0x278] sm:$0xf]
        %v2705 = vld [vmem:[%s13 + $0x27c] sm:$0xf]
        %v2706 = vld [vmem:[%s13 + $0x280] sm:$0xf]
        %v2707 = vld [vmem:[%s13 + $0x284] sm:$0xf]
        %v2708 = vld [vmem:[%s13 + $0x288] sm:$0xf]
        %v2709 = vld [vmem:[%s13 + $0x28c] sm:$0xf]
        %v2710 = vld [vmem:[%s13 + $0x290] sm:$0xf]
        %v2711 = vld [vmem:[%s13 + $0x294] sm:$0xf]
        %v2712 = vld [vmem:[%s13 + $0x298] sm:$0xf]
        %v2713 = vld [vmem:[%s13 + $0x29c] sm:$0xf]
        %v2714 = vld [vmem:[%s13 + $0x2a0] sm:$0xf]
        %v2715 = vld [vmem:[%s13 + $0x2a4] sm:$0xf]
        %v2716 = vld [vmem:[%s13 + $0x2a8] sm:$0xf]
        %v2717 = vld [vmem:[%s13 + $0x2ac] sm:$0xf]
        %v2718 = vld [vmem:[%s13 + $0x2b0] sm:$0xf]
        %v2719 = vld [vmem:[%s13 + $0x2b4] sm:$0xf]
        %v2720 = vld [vmem:[%s13 + $0x2b8] sm:$0xf]
        %v2721 = vld [vmem:[%s13 + $0x2bc] sm:$0xf]
        %v2722 = vld [vmem:[%s13 + $0x2c0] sm:$0xf]
        %v2723 = vld [vmem:[%s13 + $0x2c4] sm:$0xf]
        %v2724 = vld [vmem:[%s13 + $0x2c8] sm:$0xf]
        %v2725 = vld [vmem:[%s13 + $0x2cc] sm:$0xf]
        %v2726 = vld [vmem:[%s13 + $0x2d0] sm:$0xf]
        %v2727 = vld [vmem:[%s13 + $0x2d4] sm:$0xf]
        %v2728 = vld [vmem:[%s13 + $0x2d8] sm:$0xf]
        %v2729 = vld [vmem:[%s13 + $0x2dc] sm:$0xf]
        %v2730 = vld [vmem:[%s13 + $0x2e0] sm:$0xf]
        %v2731 = vld [vmem:[%s13 + $0x2e4] sm:$0xf]
        %v2732 = vld [vmem:[%s13 + $0x2e8] sm:$0xf]
        %v2733 = vld [vmem:[%s13 + $0x2ec] sm:$0xf]
        %v2734 = vld [vmem:[%s13 + $0x2f0] sm:$0xf]
        %v2735 = vld [vmem:[%s13 + $0x2f4] sm:$0xf]
        %v2736 = vld [vmem:[%s13 + $0x2f8] sm:$0xf]
        %v2737 = vld [vmem:[%s13 + $0x2fc] sm:$0xf]
        %v2738 = vld [vmem:[%s13 + $0x300] sm:$0xf]
        %v2739 = vld [vmem:[%s13 + $0x304] sm:$0xf]
        %v2740 = vld [vmem:[%s13 + $0x308] sm:$0xf]
        %v2741 = vld [vmem:[%s13 + $0x30c] sm:$0xf]
        %v2742 = vld [vmem:[%s13 + $0x310] sm:$0xf]
        %v2743 = vld [vmem:[%s13 + $0x314] sm:$0xf]
        %v2744 = vld [vmem:[%s13 + $0x318] sm:$0xf]
        %v2745 = vld [vmem:[%s13 + $0x31c] sm:$0xf]
        %v2746 = vld [vmem:[%s13 + $0x320] sm:$0xf]
        %v2747 = vld [vmem:[%s13 + $0x324] sm:$0xf]
        %v2748 = vld [vmem:[%s13 + $0x328] sm:$0xf]
        %v2749 = vld [vmem:[%s13 + $0x32c] sm:$0xf]
        %v2750 = vld [vmem:[%s13 + $0x330] sm:$0xf]
        %v2751 = vld [vmem:[%s13 + $0x334] sm:$0xf]
        %v2752 = vld [vmem:[%s13 + $0x338] sm:$0xf]
        %v2753 = vld [vmem:[%s13 + $0x33c] sm:$0xf]
        %v2754 = vld [vmem:[%s13 + $0x340] sm:$0xf]
        %v2755 = vld [vmem:[%s13 + $0x344] sm:$0xf]
        %v2756 = vld [vmem:[%s13 + $0x348] sm:$0xf]
        %v2757 = vld [vmem:[%s13 + $0x34c] sm:$0xf]
        %v2758 = vld [vmem:[%s13 + $0x350] sm:$0xf]
        %v2759 = vld [vmem:[%s13 + $0x354] sm:$0xf]
        %v2760 = vld [vmem:[%s13 + $0x358] sm:$0xf]
        %v2761 = vld [vmem:[%s13 + $0x35c] sm:$0xf]
        %v2762 = vld [vmem:[%s13 + $0x360] sm:$0xf]
        %v2763 = vld [vmem:[%s13 + $0x364] sm:$0xf]
        %v2764 = vld [vmem:[%s13 + $0x368] sm:$0xf]
        %v2765 = vld [vmem:[%s13 + $0x36c] sm:$0xf]
        %v2766 = vld [vmem:[%s13 + $0x370] sm:$0xf]
        %v2767 = vld [vmem:[%s13 + $0x374] sm:$0xf]
        %v2768 = vld [vmem:[%s13 + $0x378] sm:$0xf]
        %v2769 = vld [vmem:[%s13 + $0x37c] sm:$0xf]
        %v2770 = vld [vmem:[%s13 + $0x380] sm:$0xf]
        %v2771 = vld [vmem:[%s13 + $0x384] sm:$0xf]
        %v2772 = vld [vmem:[%s13 + $0x388] sm:$0xf]
        %v2773 = vld [vmem:[%s13 + $0x38c] sm:$0xf]
        %v2774 = vld [vmem:[%s13 + $0x390] sm:$0xf]
        %v2775 = vld [vmem:[%s13 + $0x394] sm:$0xf]
        %v2776 = vld [vmem:[%s13 + $0x398] sm:$0xf]
        %v2777 = vld [vmem:[%s13 + $0x39c] sm:$0xf]
        %v2778 = vld [vmem:[%s13 + $0x3a0] sm:$0xf]
        %v2779 = vld [vmem:[%s13 + $0x3a4] sm:$0xf]
        %v2780 = vld [vmem:[%s13 + $0x3a8] sm:$0xf]
        %v2781 = vld [vmem:[%s13 + $0x3ac] sm:$0xf]
        %v2782 = vld [vmem:[%s13 + $0x3b0] sm:$0xf]
        %v2783 = vld [vmem:[%s13 + $0x3b4] sm:$0xf]
        %v2784 = vld [vmem:[%s13 + $0x3b8] sm:$0xf]
        %v2785 = vld [vmem:[%s13 + $0x3bc] sm:$0xf]
        %v2786 = vld [vmem:[%s13 + $0x3c0] sm:$0xf]
        %v2787 = vld [vmem:[%s13 + $0x3c4] sm:$0xf]
        %v2788 = vld [vmem:[%s13 + $0x3c8] sm:$0xf]
        %v2789 = vld [vmem:[%s13 + $0x3cc] sm:$0xf]
        %v2790 = vld [vmem:[%s13 + $0x3d0] sm:$0xf]
        %v2791 = vld [vmem:[%s13 + $0x3d4] sm:$0xf]
        %v2792 = vld [vmem:[%s13 + $0x3d8] sm:$0xf]
        %v2793 = vld [vmem:[%s13 + $0x3dc] sm:$0xf]
        %v2794 = vld [vmem:[%s13 + $0x3e0] sm:$0xf]
        %v2795 = vld [vmem:[%s13 + $0x3e4] sm:$0xf]
        %v2796 = vld [vmem:[%s13 + $0x3e8] sm:$0xf]
        %v2797 = vld [vmem:[%s13 + $0x3ec] sm:$0xf]
        %v2798 = vld [vmem:[%s13 + $0x3f0] sm:$0xf]
        %v2799 = vld [vmem:[%s13 + $0x3f4] sm:$0xf]
        %v2800 = vld [vmem:[%s13 + $0x3f8] sm:$0xf]
        %v2801 = vld [vmem:[%s13 + $0x3fc] sm:$0xf]
        %v2802 = vld [vmem:[%s14] sm:$0x1]
        %v2804 = vperm.slane %v2802, 0
        %v3062 = vunpack.c.l.b16 %v2546
        %v3063 = vunpack.c.l.b16 %v2547
        %v3064 = vunpack.c.l.b16 %v2548
        %v3065 = vunpack.c.l.b16 %v2549
        %v3066 = vunpack.c.l.b16 %v2550
        %v3067 = vunpack.c.l.b16 %v2551
        %v3068 = vunpack.c.l.b16 %v2552
        %v3069 = vunpack.c.l.b16 %v2553
        %v3070 = vunpack.c.l.b16 %v2554
        %v3071 = vunpack.c.l.b16 %v2555
        %v3072 = vunpack.c.l.b16 %v2556
        %v3073 = vunpack.c.l.b16 %v2557
        %v3074 = vunpack.c.l.b16 %v2558
        %v3075 = vunpack.c.l.b16 %v2559
        %v3076 = vunpack.c.l.b16 %v2560
        %v3077 = vunpack.c.l.b16 %v2561
        %v3078 = vunpack.c.l.b16 %v2562
        %v3079 = vunpack.c.l.b16 %v2563
        %v3080 = vunpack.c.l.b16 %v2564
        %v3081 = vunpack.c.l.b16 %v2565
        %v3082 = vunpack.c.l.b16 %v2566
        %v3083 = vunpack.c.l.b16 %v2567
        %v3084 = vunpack.c.l.b16 %v2568
        %v3085 = vunpack.c.l.b16 %v2569
        %v3086 = vunpack.c.l.b16 %v2570
        %v3087 = vunpack.c.l.b16 %v2571
        %v3088 = vunpack.c.l.b16 %v2572
        %v3089 = vunpack.c.l.b16 %v2573
        %v3090 = vunpack.c.l.b16 %v2574
        %v3091 = vunpack.c.l.b16 %v2575
        %v3092 = vunpack.c.l.b16 %v2576
        %v3093 = vunpack.c.l.b16 %v2577
        %v3094 = vunpack.c.l.b16 %v2578
        %v3095 = vunpack.c.l.b16 %v2579
        %v3096 = vunpack.c.l.b16 %v2580
        %v3097 = vunpack.c.l.b16 %v2581
        %v3098 = vunpack.c.l.b16 %v2582
        %v3099 = vunpack.c.l.b16 %v2583
        %v3100 = vunpack.c.l.b16 %v2584
        %v3101 = vunpack.c.l.b16 %v2585
        %v3102 = vunpack.c.l.b16 %v2586
        %v3103 = vunpack.c.l.b16 %v2587
        %v3104 = vunpack.c.l.b16 %v2588
        %v3105 = vunpack.c.l.b16 %v2589
        %v3106 = vunpack.c.l.b16 %v2590
        %v3107 = vunpack.c.l.b16 %v2591
        %v3108 = vunpack.c.l.b16 %v2592
        %v3109 = vunpack.c.l.b16 %v2593
        %v3110 = vunpack.c.l.b16 %v2594
        %v3111 = vunpack.c.l.b16 %v2595
        %v3112 = vunpack.c.l.b16 %v2596
        %v3113 = vunpack.c.l.b16 %v2597
        %v3114 = vunpack.c.l.b16 %v2598
        %v3115 = vunpack.c.l.b16 %v2599
        %v3116 = vunpack.c.l.b16 %v2600
        %v3117 = vunpack.c.l.b16 %v2601
        %v3118 = vunpack.c.l.b16 %v2602
        %v3119 = vunpack.c.l.b16 %v2603
        %v3120 = vunpack.c.l.b16 %v2604
        %v3121 = vunpack.c.l.b16 %v2605
        %v3122 = vunpack.c.l.b16 %v2606
        %v3123 = vunpack.c.l.b16 %v2607
        %v3124 = vunpack.c.l.b16 %v2608
        %v3125 = vunpack.c.l.b16 %v2609
        %v3126 = vunpack.c.l.b16 %v2610
        %v3127 = vunpack.c.l.b16 %v2611
        %v3128 = vunpack.c.l.b16 %v2612
        %v3129 = vunpack.c.l.b16 %v2613
        %v3130 = vunpack.c.l.b16 %v2614
        %v3131 = vunpack.c.l.b16 %v2615
        %v3132 = vunpack.c.l.b16 %v2616
        %v3133 = vunpack.c.l.b16 %v2617
        %v3134 = vunpack.c.l.b16 %v2618
        %v3135 = vunpack.c.l.b16 %v2619
        %v3136 = vunpack.c.l.b16 %v2620
        %v3137 = vunpack.c.l.b16 %v2621
        %v3138 = vunpack.c.l.b16 %v2622
        %v3139 = vunpack.c.l.b16 %v2623
        %v3140 = vunpack.c.l.b16 %v2624
        %v3141 = vunpack.c.l.b16 %v2625
        %v3142 = vunpack.c.l.b16 %v2626
        %v3143 = vunpack.c.l.b16 %v2627
        %v3144 = vunpack.c.l.b16 %v2628
        %v3145 = vunpack.c.l.b16 %v2629
        %v3146 = vunpack.c.l.b16 %v2630
        %v3147 = vunpack.c.l.b16 %v2631
        %v3148 = vunpack.c.l.b16 %v2632
        %v3149 = vunpack.c.l.b16 %v2633
        %v3150 = vunpack.c.l.b16 %v2634
        %v3151 = vunpack.c.l.b16 %v2635
        %v3152 = vunpack.c.l.b16 %v2636
        %v3153 = vunpack.c.l.b16 %v2637
        %v3154 = vunpack.c.l.b16 %v2638
        %v3155 = vunpack.c.l.b16 %v2639
        %v3156 = vunpack.c.l.b16 %v2640
        %v3157 = vunpack.c.l.b16 %v2641
        %v3158 = vunpack.c.l.b16 %v2642
        %v3159 = vunpack.c.l.b16 %v2643
        %v3160 = vunpack.c.l.b16 %v2644
        %v3161 = vunpack.c.l.b16 %v2645
        %v3162 = vunpack.c.l.b16 %v2646
        %v3163 = vunpack.c.l.b16 %v2647
        %v3164 = vunpack.c.l.b16 %v2648
        %v3165 = vunpack.c.l.b16 %v2649
        %v3166 = vunpack.c.l.b16 %v2650
        %v3167 = vunpack.c.l.b16 %v2651
        %v3168 = vunpack.c.l.b16 %v2652
        %v3169 = vunpack.c.l.b16 %v2653
        %v3170 = vunpack.c.l.b16 %v2654
        %v3171 = vunpack.c.l.b16 %v2655
        %v3172 = vunpack.c.l.b16 %v2656
        %v3173 = vunpack.c.l.b16 %v2657
        %v3174 = vunpack.c.l.b16 %v2658
        %v3175 = vunpack.c.l.b16 %v2659
        %v3176 = vunpack.c.l.b16 %v2660
        %v3177 = vunpack.c.l.b16 %v2661
        %v3178 = vunpack.c.l.b16 %v2662
        %v3179 = vunpack.c.l.b16 %v2663
        %v3180 = vunpack.c.l.b16 %v2664
        %v3181 = vunpack.c.l.b16 %v2665
        %v3182 = vunpack.c.l.b16 %v2666
        %v3183 = vunpack.c.l.b16 %v2667
        %v3184 = vunpack.c.l.b16 %v2668
        %v3185 = vunpack.c.l.b16 %v2669
        %v3186 = vunpack.c.l.b16 %v2670
        %v3187 = vunpack.c.l.b16 %v2671
        %v3188 = vunpack.c.l.b16 %v2672
        %v3189 = vunpack.c.l.b16 %v2673
        %v3190 = vunpack.c.l.b16 %v2674
        %v3191 = vunpack.c.l.b16 %v2675
        %v3192 = vunpack.c.l.b16 %v2676
        %v3193 = vunpack.c.l.b16 %v2677
        %v3194 = vunpack.c.l.b16 %v2678
        %v3195 = vunpack.c.l.b16 %v2679
        %v3196 = vunpack.c.l.b16 %v2680
        %v3197 = vunpack.c.l.b16 %v2681
        %v3198 = vunpack.c.l.b16 %v2682
        %v3199 = vunpack.c.l.b16 %v2683
        %v3200 = vunpack.c.l.b16 %v2684
        %v3201 = vunpack.c.l.b16 %v2685
        %v3202 = vunpack.c.l.b16 %v2686
        %v3203 = vunpack.c.l.b16 %v2687
        %v3204 = vunpack.c.l.b16 %v2688
        %v3205 = vunpack.c.l.b16 %v2689
        %v3206 = vunpack.c.l.b16 %v2690
        %v3207 = vunpack.c.l.b16 %v2691
        %v3208 = vunpack.c.l.b16 %v2692
        %v3209 = vunpack.c.l.b16 %v2693
        %v3210 = vunpack.c.l.b16 %v2694
        %v3211 = vunpack.c.l.b16 %v2695
        %v3212 = vunpack.c.l.b16 %v2696
        %v3213 = vunpack.c.l.b16 %v2697
        %v3214 = vunpack.c.l.b16 %v2698
        %v3215 = vunpack.c.l.b16 %v2699
        %v3216 = vunpack.c.l.b16 %v2700
        %v3217 = vunpack.c.l.b16 %v2701
        %v3218 = vunpack.c.l.b16 %v2702
        %v3219 = vunpack.c.l.b16 %v2703
        %v3220 = vunpack.c.l.b16 %v2704
        %v3221 = vunpack.c.l.b16 %v2705
        %v3222 = vunpack.c.l.b16 %v2706
        %v3223 = vunpack.c.l.b16 %v2707
        %v3224 = vunpack.c.l.b16 %v2708
        %v3225 = vunpack.c.l.b16 %v2709
        %v3226 = vunpack.c.l.b16 %v2710
        %v3227 = vunpack.c.l.b16 %v2711
        %v3228 = vunpack.c.l.b16 %v2712
        %v3229 = vunpack.c.l.b16 %v2713
        %v3230 = vunpack.c.l.b16 %v2714
        %v3231 = vunpack.c.l.b16 %v2715
        %v3232 = vunpack.c.l.b16 %v2716
        %v3233 = vunpack.c.l.b16 %v2717
        %v3234 = vunpack.c.l.b16 %v2718
        %v3235 = vunpack.c.l.b16 %v2719
        %v3236 = vunpack.c.l.b16 %v2720
        %v3237 = vunpack.c.l.b16 %v2721
        %v3238 = vunpack.c.l.b16 %v2722
        %v3239 = vunpack.c.l.b16 %v2723
        %v3240 = vunpack.c.l.b16 %v2724
        %v3241 = vunpack.c.l.b16 %v2725
        %v3242 = vunpack.c.l.b16 %v2726
        %v3243 = vunpack.c.l.b16 %v2727
        %v3244 = vunpack.c.l.b16 %v2728
        %v3245 = vunpack.c.l.b16 %v2729
        %v3246 = vunpack.c.l.b16 %v2730
        %v3247 = vunpack.c.l.b16 %v2731
        %v3248 = vunpack.c.l.b16 %v2732
        %v3249 = vunpack.c.l.b16 %v2733
        %v3250 = vunpack.c.l.b16 %v2734
        %v3251 = vunpack.c.l.b16 %v2735
        %v3252 = vunpack.c.l.b16 %v2736
        %v3253 = vunpack.c.l.b16 %v2737
        %v3254 = vunpack.c.l.b16 %v2738
        %v3255 = vunpack.c.l.b16 %v2739
        %v3256 = vunpack.c.l.b16 %v2740
        %v3257 = vunpack.c.l.b16 %v2741
        %v3258 = vunpack.c.l.b16 %v2742
        %v3259 = vunpack.c.l.b16 %v2743
        %v3260 = vunpack.c.l.b16 %v2744
        %v3261 = vunpack.c.l.b16 %v2745
        %v3262 = vunpack.c.l.b16 %v2746
        %v3263 = vunpack.c.l.b16 %v2747
        %v3264 = vunpack.c.l.b16 %v2748
        %v3265 = vunpack.c.l.b16 %v2749
        %v3266 = vunpack.c.l.b16 %v2750
        %v3267 = vunpack.c.l.b16 %v2751
        %v3268 = vunpack.c.l.b16 %v2752
        %v3269 = vunpack.c.l.b16 %v2753
        %v3270 = vunpack.c.l.b16 %v2754
        %v3271 = vunpack.c.l.b16 %v2755
        %v3272 = vunpack.c.l.b16 %v2756
        %v3273 = vunpack.c.l.b16 %v2757
        %v3274 = vunpack.c.l.b16 %v2758
        %v3275 = vunpack.c.l.b16 %v2759
        %v3276 = vunpack.c.l.b16 %v2760
        %v3277 = vunpack.c.l.b16 %v2761
        %v3278 = vunpack.c.l.b16 %v2762
        %v3279 = vunpack.c.l.b16 %v2763
        %v3280 = vunpack.c.l.b16 %v2764
        %v3281 = vunpack.c.l.b16 %v2765
        %v3282 = vunpack.c.l.b16 %v2766
        %v3283 = vunpack.c.l.b16 %v2767
        %v3284 = vunpack.c.l.b16 %v2768
        %v3285 = vunpack.c.l.b16 %v2769
        %v3286 = vunpack.c.l.b16 %v2770
        %v3287 = vunpack.c.l.b16 %v2771
        %v3288 = vunpack.c.l.b16 %v2772
        %v3289 = vunpack.c.l.b16 %v2773
        %v3290 = vunpack.c.l.b16 %v2774
        %v3291 = vunpack.c.l.b16 %v2775
        %v3292 = vunpack.c.l.b16 %v2776
        %v3293 = vunpack.c.l.b16 %v2777
        %v3294 = vunpack.c.l.b16 %v2778
        %v3295 = vunpack.c.l.b16 %v2779
        %v3296 = vunpack.c.l.b16 %v2780
        %v3297 = vunpack.c.l.b16 %v2781
        %v3298 = vunpack.c.l.b16 %v2782
        %v3299 = vunpack.c.l.b16 %v2783
        %v3300 = vunpack.c.l.b16 %v2784
        %v3301 = vunpack.c.l.b16 %v2785
        %v3302 = vunpack.c.l.b16 %v2786
        %v3303 = vunpack.c.l.b16 %v2787
        %v3304 = vunpack.c.l.b16 %v2788
        %v3305 = vunpack.c.l.b16 %v2789
        %v3306 = vunpack.c.l.b16 %v2790
        %v3307 = vunpack.c.l.b16 %v2791
        %v3308 = vunpack.c.l.b16 %v2792
        %v3309 = vunpack.c.l.b16 %v2793
        %v3310 = vunpack.c.l.b16 %v2794
        %v3311 = vunpack.c.l.b16 %v2795
        %v3312 = vunpack.c.l.b16 %v2796
        %v3313 = vunpack.c.l.b16 %v2797
        %v3314 = vunpack.c.l.b16 %v2798
        %v3315 = vunpack.c.l.b16 %v2799
        %v3316 = vunpack.c.l.b16 %v2800
        %v3317 = vunpack.c.l.b16 %v2801
        %v3318 = vpack.c.b16 %v3063, %v3062
        %v3319 = vpack.c.b16 %v3065, %v3064
        %v3320 = vpack.c.b16 %v3067, %v3066
        %v3321 = vpack.c.b16 %v3069, %v3068
        %v3322 = vpack.c.b16 %v3071, %v3070
        %v3323 = vpack.c.b16 %v3073, %v3072
        %v3324 = vpack.c.b16 %v3075, %v3074
        %v3325 = vpack.c.b16 %v3077, %v3076
        %v3326 = vpack.c.b16 %v3079, %v3078
        %v3327 = vpack.c.b16 %v3081, %v3080
        %v3328 = vpack.c.b16 %v3083, %v3082
        %v3329 = vpack.c.b16 %v3085, %v3084
        %v3330 = vpack.c.b16 %v3087, %v3086
        %v3331 = vpack.c.b16 %v3089, %v3088
        %v3332 = vpack.c.b16 %v3091, %v3090
        %v3333 = vpack.c.b16 %v3093, %v3092
        %v3334 = vpack.c.b16 %v3095, %v3094
        %v3335 = vpack.c.b16 %v3097, %v3096
        %v3336 = vpack.c.b16 %v3099, %v3098
        %v3337 = vpack.c.b16 %v3101, %v3100
        %v3338 = vpack.c.b16 %v3103, %v3102
        %v3339 = vpack.c.b16 %v3105, %v3104
        %v3340 = vpack.c.b16 %v3107, %v3106
        %v3341 = vpack.c.b16 %v3109, %v3108
        %v3342 = vpack.c.b16 %v3111, %v3110
        %v3343 = vpack.c.b16 %v3113, %v3112
        %v3344 = vpack.c.b16 %v3115, %v3114
        %v3345 = vpack.c.b16 %v3117, %v3116
        %v3346 = vpack.c.b16 %v3119, %v3118
        %v3347 = vpack.c.b16 %v3121, %v3120
        %v3348 = vpack.c.b16 %v3123, %v3122
        %v3349 = vpack.c.b16 %v3125, %v3124
        %v3350 = vpack.c.b16 %v3127, %v3126
        %v3351 = vpack.c.b16 %v3129, %v3128
        %v3352 = vpack.c.b16 %v3131, %v3130
        %v3353 = vpack.c.b16 %v3133, %v3132
        %v3354 = vpack.c.b16 %v3135, %v3134
        %v3355 = vpack.c.b16 %v3137, %v3136
        %v3356 = vpack.c.b16 %v3139, %v3138
        %v3357 = vpack.c.b16 %v3141, %v3140
        %v3358 = vpack.c.b16 %v3143, %v3142
        %v3359 = vpack.c.b16 %v3145, %v3144
        %v3360 = vpack.c.b16 %v3147, %v3146
        %v3361 = vpack.c.b16 %v3149, %v3148
        %v3362 = vpack.c.b16 %v3151, %v3150
        %v3363 = vpack.c.b16 %v3153, %v3152
        %v3364 = vpack.c.b16 %v3155, %v3154
        %v3365 = vpack.c.b16 %v3157, %v3156
        %v3366 = vpack.c.b16 %v3159, %v3158
        %v3367 = vpack.c.b16 %v3161, %v3160
        %v3368 = vpack.c.b16 %v3163, %v3162
        %v3369 = vpack.c.b16 %v3165, %v3164
        %v3370 = vpack.c.b16 %v3167, %v3166
        %v3371 = vpack.c.b16 %v3169, %v3168
        %v3372 = vpack.c.b16 %v3171, %v3170
        %v3373 = vpack.c.b16 %v3173, %v3172
        %v3374 = vpack.c.b16 %v3175, %v3174
        %v3375 = vpack.c.b16 %v3177, %v3176
        %v3376 = vpack.c.b16 %v3179, %v3178
        %v3377 = vpack.c.b16 %v3181, %v3180
        %v3378 = vpack.c.b16 %v3183, %v3182
        %v3379 = vpack.c.b16 %v3185, %v3184
        %v3380 = vpack.c.b16 %v3187, %v3186
        %v3381 = vpack.c.b16 %v3189, %v3188
        %v3382 = vpack.c.b16 %v3191, %v3190
        %v3383 = vpack.c.b16 %v3193, %v3192
        %v3384 = vpack.c.b16 %v3195, %v3194
        %v3385 = vpack.c.b16 %v3197, %v3196
        %v3386 = vpack.c.b16 %v3199, %v3198
        %v3387 = vpack.c.b16 %v3201, %v3200
        %v3388 = vpack.c.b16 %v3203, %v3202
        %v3389 = vpack.c.b16 %v3205, %v3204
        %v3390 = vpack.c.b16 %v3207, %v3206
        %v3391 = vpack.c.b16 %v3209, %v3208
        %v3392 = vpack.c.b16 %v3211, %v3210
        %v3393 = vpack.c.b16 %v3213, %v3212
        %v3394 = vpack.c.b16 %v3215, %v3214
        %v3395 = vpack.c.b16 %v3217, %v3216
        %v3396 = vpack.c.b16 %v3219, %v3218
        %v3397 = vpack.c.b16 %v3221, %v3220
        %v3398 = vpack.c.b16 %v3223, %v3222
        %v3399 = vpack.c.b16 %v3225, %v3224
        %v3400 = vpack.c.b16 %v3227, %v3226
        %v3401 = vpack.c.b16 %v3229, %v3228
        %v3402 = vpack.c.b16 %v3231, %v3230
        %v3403 = vpack.c.b16 %v3233, %v3232
        %v3404 = vpack.c.b16 %v3235, %v3234
        %v3405 = vpack.c.b16 %v3237, %v3236
        %v3406 = vpack.c.b16 %v3239, %v3238
        %v3407 = vpack.c.b16 %v3241, %v3240
        %v3408 = vpack.c.b16 %v3243, %v3242
        %v3409 = vpack.c.b16 %v3245, %v3244
        %v3410 = vpack.c.b16 %v3247, %v3246
        %v3411 = vpack.c.b16 %v3249, %v3248
        %v3412 = vpack.c.b16 %v3251, %v3250
        %v3413 = vpack.c.b16 %v3253, %v3252
        %v3414 = vpack.c.b16 %v3255, %v3254
        %v3415 = vpack.c.b16 %v3257, %v3256
        %v3416 = vpack.c.b16 %v3259, %v3258
        %v3417 = vpack.c.b16 %v3261, %v3260
        %v3418 = vpack.c.b16 %v3263, %v3262
        %v3419 = vpack.c.b16 %v3265, %v3264
        %v3420 = vpack.c.b16 %v3267, %v3266
        %v3421 = vpack.c.b16 %v3269, %v3268
        %v3422 = vpack.c.b16 %v3271, %v3270
        %v3423 = vpack.c.b16 %v3273, %v3272
        %v3424 = vpack.c.b16 %v3275, %v3274
        %v3425 = vpack.c.b16 %v3277, %v3276
        %v3426 = vpack.c.b16 %v3279, %v3278
        %v3427 = vpack.c.b16 %v3281, %v3280
        %v3428 = vpack.c.b16 %v3283, %v3282
        %v3429 = vpack.c.b16 %v3285, %v3284
        %v3430 = vpack.c.b16 %v3287, %v3286
        %v3431 = vpack.c.b16 %v3289, %v3288
        %v3432 = vpack.c.b16 %v3291, %v3290
        %v3433 = vpack.c.b16 %v3293, %v3292
        %v3434 = vpack.c.b16 %v3295, %v3294
        %v3435 = vpack.c.b16 %v3297, %v3296
        %v3436 = vpack.c.b16 %v3299, %v3298
        %v3437 = vpack.c.b16 %v3301, %v3300
        %v3438 = vpack.c.b16 %v3303, %v3302
        %v3439 = vpack.c.b16 %v3305, %v3304
        %v3440 = vpack.c.b16 %v3307, %v3306
        %v3441 = vpack.c.b16 %v3309, %v3308
        %v3442 = vpack.c.b16 %v3311, %v3310
        %v3443 = vpack.c.b16 %v3313, %v3312
        %v3444 = vpack.c.b16 %v3315, %v3314
        %v3445 = vpack.c.b16 %v3317, %v3316
        %3574 = vmatpush.bf16.msra.mxu0 %v3325
        %3575 = vmatpush.bf16.msra.mxu0 %v3324
        %3576 = vmatpush.bf16.msra.mxu0 %v3323
        %3577 = vmatpush.bf16.msra.mxu0 %v3322
        %3578 = vmatpush.bf16.msra.mxu0 %v3321
        %3579 = vmatpush.bf16.msra.mxu0 %v3320
        %3580 = vmatpush.bf16.msra.mxu0 %v3319
        %3581 = vmatpush.bf16.msra.mxu0 %v3318
        %3582 = vmatmul.bf16.gmra.mxu0 %v2530
        %v3583 = vpop.f32.mrf.mxu0
        %v3584 = vadd.f32 %v2804, %v3583
        %v3585 = vpop.f32.mrf.mxu0
        %v3586 = vadd.f32 %v2804, %v3585
        %3587 = vdwg.mxu0
        %3588 = vmatpush.bf16.msra.mxu0 %v3333
        %3589 = vmatpush.bf16.msra.mxu0 %v3332
        %3590 = vmatpush.bf16.msra.mxu0 %v3331
        %3591 = vmatpush.bf16.msra.mxu0 %v3330
        %3592 = vmatpush.bf16.msra.mxu0 %v3329
        %3593 = vmatpush.bf16.msra.mxu0 %v3328
        %3594 = vmatpush.bf16.msra.mxu0 %v3327
        %3595 = vmatpush.bf16.msra.mxu0 %v3326
        %3596 = vmatmul.bf16.gmra.mxu0 %v2531
        %v3597 = vpop.f32.mrf.mxu0
        %v3598 = vadd.f32 %v3584, %v3597
        %v3599 = vpop.f32.mrf.mxu0
        %v3600 = vadd.f32 %v3586, %v3599
        %3601 = vdwg.mxu0
        %3602 = vmatpush.bf16.msra.mxu0 %v3341
        %3603 = vmatpush.bf16.msra.mxu0 %v3340
        %3604 = vmatpush.bf16.msra.mxu0 %v3339
        %3605 = vmatpush.bf16.msra.mxu0 %v3338
        %3606 = vmatpush.bf16.msra.mxu0 %v3337
        %3607 = vmatpush.bf16.msra.mxu0 %v3336
        %3608 = vmatpush.bf16.msra.mxu0 %v3335
        %3609 = vmatpush.bf16.msra.mxu0 %v3334
        %3610 = vmatmul.bf16.gmra.mxu0 %v2532
        %v3611 = vpop.f32.mrf.mxu0
        %v3612 = vadd.f32 %v3598, %v3611
        %v3613 = vpop.f32.mrf.mxu0
        %v3614 = vadd.f32 %v3600, %v3613
        %3615 = vdwg.mxu0
        %3616 = vmatpush.bf16.msra.mxu0 %v3349
        %3617 = vmatpush.bf16.msra.mxu0 %v3348
        %3618 = vmatpush.bf16.msra.mxu0 %v3347
        %3619 = vmatpush.bf16.msra.mxu0 %v3346
        %3620 = vmatpush.bf16.msra.mxu0 %v3345
        %3621 = vmatpush.bf16.msra.mxu0 %v3344
        %3622 = vmatpush.bf16.msra.mxu0 %v3343
        %3623 = vmatpush.bf16.msra.mxu0 %v3342
        %3624 = vmatmul.bf16.gmra.mxu0 %v2533
        %v3625 = vpop.f32.mrf.mxu0
        %v3626 = vadd.f32 %v3612, %v3625
        %v3627 = vpop.f32.mrf.mxu0
        %v3628 = vadd.f32 %v3614, %v3627
        %3629 = vdwg.mxu0
        %3630 = vmatpush.bf16.msra.mxu0 %v3357
        %3631 = vmatpush.bf16.msra.mxu0 %v3356
        %3632 = vmatpush.bf16.msra.mxu0 %v3355
        %3633 = vmatpush.bf16.msra.mxu0 %v3354
        %3634 = vmatpush.bf16.msra.mxu0 %v3353
        %3635 = vmatpush.bf16.msra.mxu0 %v3352
        %3636 = vmatpush.bf16.msra.mxu0 %v3351
        %3637 = vmatpush.bf16.msra.mxu0 %v3350
        %3638 = vmatmul.bf16.gmra.mxu0 %v2534
        %v3639 = vpop.f32.mrf.mxu0
        %v3640 = vadd.f32 %v3626, %v3639
        %v3641 = vpop.f32.mrf.mxu0
        %v3642 = vadd.f32 %v3628, %v3641
        %3643 = vdwg.mxu0
        %3644 = vmatpush.bf16.msra.mxu0 %v3365
        %3645 = vmatpush.bf16.msra.mxu0 %v3364
        %3646 = vmatpush.bf16.msra.mxu0 %v3363
        %3647 = vmatpush.bf16.msra.mxu0 %v3362
        %3648 = vmatpush.bf16.msra.mxu0 %v3361
        %3649 = vmatpush.bf16.msra.mxu0 %v3360
        %3650 = vmatpush.bf16.msra.mxu0 %v3359
        %3651 = vmatpush.bf16.msra.mxu0 %v3358
        %3652 = vmatmul.bf16.gmra.mxu0 %v2535
        %v3653 = vpop.f32.mrf.mxu0
        %v3654 = vadd.f32 %v3640, %v3653
        %v3655 = vpop.f32.mrf.mxu0
        %v3656 = vadd.f32 %v3642, %v3655
        %3657 = vdwg.mxu0
        %3658 = vmatpush.bf16.msra.mxu0 %v3373
        %3659 = vmatpush.bf16.msra.mxu0 %v3372
        %3660 = vmatpush.bf16.msra.mxu0 %v3371
        %3661 = vmatpush.bf16.msra.mxu0 %v3370
        %3662 = vmatpush.bf16.msra.mxu0 %v3369
        %3663 = vmatpush.bf16.msra.mxu0 %v3368
        %3664 = vmatpush.bf16.msra.mxu0 %v3367
        %3665 = vmatpush.bf16.msra.mxu0 %v3366
        %3666 = vmatmul.bf16.gmra.mxu0 %v2536
        %v3667 = vpop.f32.mrf.mxu0
        %v3668 = vadd.f32 %v3654, %v3667
        %v3669 = vpop.f32.mrf.mxu0
        %v3670 = vadd.f32 %v3656, %v3669
        %3671 = vdwg.mxu0
        %3672 = vmatpush.bf16.msra.mxu0 %v3381
        %3673 = vmatpush.bf16.msra.mxu0 %v3380
        %3674 = vmatpush.bf16.msra.mxu0 %v3379
        %3675 = vmatpush.bf16.msra.mxu0 %v3378
        %3676 = vmatpush.bf16.msra.mxu0 %v3377
        %3677 = vmatpush.bf16.msra.mxu0 %v3376
        %3678 = vmatpush.bf16.msra.mxu0 %v3375
        %3679 = vmatpush.bf16.msra.mxu0 %v3374
        %3680 = vmatmul.bf16.gmra.mxu0 %v2537
        %v3681 = vpop.f32.mrf.mxu0
        %v3682 = vadd.f32 %v3668, %v3681
        %v3683 = vpop.f32.mrf.mxu0
        %v3684 = vadd.f32 %v3670, %v3683
        %3685 = vdwg.mxu0
        %3686 = vmatpush.bf16.msra.mxu0 %v3389
        %3687 = vmatpush.bf16.msra.mxu0 %v3388
        %3688 = vmatpush.bf16.msra.mxu0 %v3387
        %3689 = vmatpush.bf16.msra.mxu0 %v3386
        %3690 = vmatpush.bf16.msra.mxu0 %v3385
        %3691 = vmatpush.bf16.msra.mxu0 %v3384
        %3692 = vmatpush.bf16.msra.mxu0 %v3383
        %3693 = vmatpush.bf16.msra.mxu0 %v3382
        %3694 = vmatmul.bf16.gmra.mxu0 %v2538
        %v3695 = vpop.f32.mrf.mxu0
        %v3696 = vadd.f32 %v3682, %v3695
        %v3697 = vpop.f32.mrf.mxu0
        %v3698 = vadd.f32 %v3684, %v3697
        %3699 = vdwg.mxu0
        %3700 = vmatpush.bf16.msra.mxu0 %v3397
        %3701 = vmatpush.bf16.msra.mxu0 %v3396
        %3702 = vmatpush.bf16.msra.mxu0 %v3395
        %3703 = vmatpush.bf16.msra.mxu0 %v3394
        %3704 = vmatpush.bf16.msra.mxu0 %v3393
        %3705 = vmatpush.bf16.msra.mxu0 %v3392
        %3706 = vmatpush.bf16.msra.mxu0 %v3391
        %3707 = vmatpush.bf16.msra.mxu0 %v3390
        %3708 = vmatmul.bf16.gmra.mxu0 %v2539
        %v3709 = vpop.f32.mrf.mxu0
        %v3710 = vadd.f32 %v3696, %v3709
        %v3711 = vpop.f32.mrf.mxu0
        %v3712 = vadd.f32 %v3698, %v3711
        %3713 = vdwg.mxu0
        %3714 = vmatpush.bf16.msra.mxu0 %v3405
        %3715 = vmatpush.bf16.msra.mxu0 %v3404
        %3716 = vmatpush.bf16.msra.mxu0 %v3403
        %3717 = vmatpush.bf16.msra.mxu0 %v3402
        %3718 = vmatpush.bf16.msra.mxu0 %v3401
        %3719 = vmatpush.bf16.msra.mxu0 %v3400
        %3720 = vmatpush.bf16.msra.mxu0 %v3399
        %3721 = vmatpush.bf16.msra.mxu0 %v3398
        %3722 = vmatmul.bf16.gmra.mxu0 %v2540
        %v3723 = vpop.f32.mrf.mxu0
        %v3724 = vadd.f32 %v3710, %v3723
        %v3725 = vpop.f32.mrf.mxu0
        %v3726 = vadd.f32 %v3712, %v3725
        %3727 = vdwg.mxu0
        %3728 = vmatpush.bf16.msra.mxu0 %v3413
        %3729 = vmatpush.bf16.msra.mxu0 %v3412
        %3730 = vmatpush.bf16.msra.mxu0 %v3411
        %3731 = vmatpush.bf16.msra.mxu0 %v3410
        %3732 = vmatpush.bf16.msra.mxu0 %v3409
        %3733 = vmatpush.bf16.msra.mxu0 %v3408
        %3734 = vmatpush.bf16.msra.mxu0 %v3407
        %3735 = vmatpush.bf16.msra.mxu0 %v3406
        %3736 = vmatmul.bf16.gmra.mxu0 %v2541
        %v3737 = vpop.f32.mrf.mxu0
        %v3738 = vadd.f32 %v3724, %v3737
        %v3739 = vpop.f32.mrf.mxu0
        %v3740 = vadd.f32 %v3726, %v3739
        %3741 = vdwg.mxu0
        %3742 = vmatpush.bf16.msra.mxu0 %v3421
        %3743 = vmatpush.bf16.msra.mxu0 %v3420
        %3744 = vmatpush.bf16.msra.mxu0 %v3419
        %3745 = vmatpush.bf16.msra.mxu0 %v3418
        %3746 = vmatpush.bf16.msra.mxu0 %v3417
        %3747 = vmatpush.bf16.msra.mxu0 %v3416
        %3748 = vmatpush.bf16.msra.mxu0 %v3415
        %3749 = vmatpush.bf16.msra.mxu0 %v3414
        %3750 = vmatmul.bf16.gmra.mxu0 %v2542
        %v3751 = vpop.f32.mrf.mxu0
        %v3752 = vadd.f32 %v3738, %v3751
        %v3753 = vpop.f32.mrf.mxu0
        %v3754 = vadd.f32 %v3740, %v3753
        %3755 = vdwg.mxu0
        %3756 = vmatpush.bf16.msra.mxu0 %v3429
        %3757 = vmatpush.bf16.msra.mxu0 %v3428
        %3758 = vmatpush.bf16.msra.mxu0 %v3427
        %3759 = vmatpush.bf16.msra.mxu0 %v3426
        %3760 = vmatpush.bf16.msra.mxu0 %v3425
        %3761 = vmatpush.bf16.msra.mxu0 %v3424
        %3762 = vmatpush.bf16.msra.mxu0 %v3423
        %3763 = vmatpush.bf16.msra.mxu0 %v3422
        %3764 = vmatmul.bf16.gmra.mxu0 %v2543
        %v3765 = vpop.f32.mrf.mxu0
        %v3766 = vadd.f32 %v3752, %v3765
        %v3767 = vpop.f32.mrf.mxu0
        %v3768 = vadd.f32 %v3754, %v3767
        %3769 = vdwg.mxu0
        %3770 = vmatpush.bf16.msra.mxu0 %v3437
        %3771 = vmatpush.bf16.msra.mxu0 %v3436
        %3772 = vmatpush.bf16.msra.mxu0 %v3435
        %3773 = vmatpush.bf16.msra.mxu0 %v3434
        %3774 = vmatpush.bf16.msra.mxu0 %v3433
        %3775 = vmatpush.bf16.msra.mxu0 %v3432
        %3776 = vmatpush.bf16.msra.mxu0 %v3431
        %3777 = vmatpush.bf16.msra.mxu0 %v3430
        %3778 = vmatmul.bf16.gmra.mxu0 %v2544
        %v3779 = vpop.f32.mrf.mxu0
        %v3780 = vadd.f32 %v3766, %v3779
        %v3781 = vpop.f32.mrf.mxu0
        %v3782 = vadd.f32 %v3768, %v3781
        %3783 = vdwg.mxu0
        %3784 = vmatpush.bf16.msra.mxu0 %v3445
        %3785 = vmatpush.bf16.msra.mxu0 %v3444
        %3786 = vmatpush.bf16.msra.mxu0 %v3443
        %3787 = vmatpush.bf16.msra.mxu0 %v3442
        %3788 = vmatpush.bf16.msra.mxu0 %v3441
        %3789 = vmatpush.bf16.msra.mxu0 %v3440
        %3790 = vmatpush.bf16.msra.mxu0 %v3439
        %3791 = vmatpush.bf16.msra.mxu0 %v3438
        %3792 = vmatmul.bf16.gmra.mxu0 %v2545
        %v3793 = vpop.f32.mrf.mxu0
        %v3794 = vadd.f32 %v3780, %v3793
        %v3795 = vpop.f32.mrf.mxu0
        %v3796 = vadd.f32 %v3782, %v3795
        %3797 = vdwg.mxu0
        %v3798 = vadd.f32 %v2040, %v3794
        %v3799 = vadd.f32 %v2041, %v3796
        %v3800 = vld [vmem:[%s19] sm:$0x1]
        %v3801 = vld [vmem:[%s20] sm:$0x1]
        %v3802 = vsel %vm814, %v3798, 0.0
        %3803 = vadd.xlane.f32.xlu0 %v3802
        %v3804 = vpop.xlane.xlu0 %3803
        %v3805 = vsel %vm814, %v3799, 0.0
        %3806 = vadd.xlane.f32.xlu0 %v3805
        %v3807 = vpop.xlane.xlu0 %3806
        %v3808 = vmul.f32 %v3804, %v1354
        %v3809 = vmul.f32 %v3807, %v1354
        %v3810 = vsub.f32 %v3798, %v3808
        %v3811 = vsub.f32 %v3799, %v3809
        %v3812 = vmul.f32 %v3810, %v3810
        %v3813 = vmul.f32 %v3811, %v3811
        %v3814 = vsel %vm814, %v3812, 0.0
        %3815 = vadd.xlane.f32.xlu0 %v3814
        %v3816 = vpop.xlane.xlu0 %3815
        %v3817 = vsel %vm814, %v3813, 0.0
        %3818 = vadd.xlane.f32.xlu0 %v3817
        %v3819 = vpop.xlane.xlu0 %3818
        %v3820 = vmul.f32 %v3816, %v1354
        %v3821 = vmul.f32 %v3819, %v1354
        %v3822 = vadd.f32 %v3820, 1e-05
        %v3823 = vadd.f32 %v3821, 1e-05
        %v3824 = vrsqrt.pop %v3822
        %v3825 = vmul.f32 %v3824, %v3822
        %v3826 = vmul.f32 %v3825, %v3824
        %v3827 = vmul.f32 0.5, %v3826
        %v3828 = vsub.f32 1.5, %v3827
        %v3829 = vmul.f32 %v3824, %v3828
        %vm3830 = vweird.f32 %v3822
        %vm3831 = vweird.f32 %v3824
        %vm3832 = vmor %vm3830, %vm3831
        %v3833 = vsel %vm3832, %v3824, %v3829
        %v3834 = vrsqrt.pop %v3823
        %v3835 = vmul.f32 %v3834, %v3823
        %v3836 = vmul.f32 %v3835, %v3834
        %v3837 = vmul.f32 0.5, %v3836
        %v3838 = vsub.f32 1.5, %v3837
        %v3839 = vmul.f32 %v3834, %v3838
        %vm3840 = vweird.f32 %v3823
        %vm3841 = vweird.f32 %v3834
        %vm3842 = vmor %vm3840, %vm3841
        %v3843 = vsel %vm3842, %v3834, %v3839
        %v3844 = vmul.f32 %v3810, %v3833
        %v3845 = vmul.f32 %v3811, %v3843
        %v3847 = vperm.slane %v3800, 0
        %v3849 = vmul.f32 %v3844, %v3847
        %v3850 = vmul.f32 %v3845, %v3847
        %v3852 = vperm.slane %v3801, 0
        %v3854 = vadd.f32 %v3849, %v3852
        %v3855 = vadd.f32 %v3850, %v3852
        %v3856 = vpack.c.bf16 %v3855, %v3854
        %s3857 = scalar_lea.vmem %s3, 16
        %v3858 = vld [vmem:[%s3857] sm:$0xf]
        %v3859 = vld [vmem:[%s3857 + $0x4] sm:$0xf]
        %v3860 = vld [vmem:[%s3857 + $0x8] sm:$0xf]
        %v3861 = vld [vmem:[%s3857 + $0xc] sm:$0xf]
        %s3862 = scalar_lea.vmem %s4, 1
        %v3863 = vld [vmem:[%s3862] sm:$0x1]
        %v3865 = vperm.slane %v3863, 0
        %v3871 = vunpack.c.l.b16 %v3858
        %v3872 = vunpack.c.l.b16 %v3859
        %v3873 = vunpack.c.l.b16 %v3860
        %v3874 = vunpack.c.l.b16 %v3861
        %v3875 = vpack.c.b16 %v3872, %v3871
        %v3876 = vpack.c.b16 %v3874, %v3873
        %v3880 = vsel %vm814, %v3856, 0
        %3882 = vmatpush.bf16.msra.mxu0 0
        %3883 = vmatpush.bf16.msra.mxu0 0
        %3884 = vmatpush.bf16.msra.mxu0 0
        %3885 = vmatpush.bf16.msra.mxu0 0
        %3886 = vmatpush.bf16.msra.mxu0 0
        %3887 = vmatpush.bf16.msra.mxu0 0
        %3888 = vmatpush.bf16.msra.mxu0 %v3876
        %3889 = vmatpush.bf16.msra.mxu0 %v3875
        %3890 = vmatmul.bf16.gmra.mxu0 %v3880
        %v3891 = vpop.f32.mrf.mxu0
        %v3892 = vadd.f32 %v3865, %v3891
        %v3893 = vpop.f32.mrf.mxu0
        %v3894 = vadd.f32 %v3865, %v3893
        %3895 = vdwg.mxu0
        %3896 = vrot.lane.b32.xlu0 %v3875, 96
        %v3897 = vpop.permute.xlu0 %3896
        %3898 = vrot.lane.b32.xlu0 %v3876, 96
        %v3899 = vpop.permute.xlu0 %3898
        %3902 = vrot.lane.b32.xlu0 %v3865, 96
        %v3903 = vpop.permute.xlu0 %3902
        %3905 = vmatpush.bf16.msra.mxu0 0
        %3906 = vmatpush.bf16.msra.mxu0 0
        %3907 = vmatpush.bf16.msra.mxu0 0
        %3908 = vmatpush.bf16.msra.mxu0 0
        %3909 = vmatpush.bf16.msra.mxu0 0
        %3910 = vmatpush.bf16.msra.mxu0 0
        %3911 = vmatpush.bf16.msra.mxu0 %v3899
        %3912 = vmatpush.bf16.msra.mxu0 %v3897
        %3913 = vmatmul.bf16.gmra.mxu0 %v3880
        %v3914 = vpop.f32.mrf.mxu0
        %v3915 = vadd.f32 %v3903, %v3914
        %v3916 = vpop.f32.mrf.mxu0
        %v3917 = vadd.f32 %v3903, %v3916
        %3918 = vdwg.mxu0
        %v3919 = vmul.f32 %v3892, 0.35355338
        %v3920 = vmul.f32 %v3894, 0.35355338
        %v3922 = vsel %vm857, %v3919, 0
        %v3925 = vsel %vm857, %v3920, 0
        %v3928 = vsel %vm857, %v3915, 0
        %v3931 = vsel %vm857, %v3917, 0
        %3933 = vmatpush.xpose.msra.mxu0 0.0
        %3934 = vmatpush.xpose.msra.mxu0 0.0
        %3935 = vmatpush.xpose.msra.mxu0 0.0
        %3936 = vmatpush.xpose.msra.mxu0 0.0
        %3937 = vmatpush.xpose.msra.mxu0 0.0
        %3938 = vmatpush.xpose.msra.mxu0 0.0
        %3939 = vmatpush.xpose.msra.mxu0 0.0
        %3940 = vmatpush.xpose.msra.mxu0 0.0
        %3941 = vmatpush.xpose.msra.mxu0 0.0
        %3942 = vmatpush.xpose.msra.mxu0 0.0
        %3943 = vmatpush.xpose.msra.mxu0 0.0
        %3944 = vmatpush.xpose.msra.mxu0 0.0
        %3945 = vmatpush.xpose.msra.mxu0 0.0
        %3946 = vmatpush.xpose.msra.mxu0 0.0
        %3947 = vmatpush.xpose.msra.mxu0 %v3931
        %3948 = vmatpush.xpose.msra.mxu0 %v3928
        %3949 = vmatmul.f32.gmra.mxu0 %v3922
        %v3950 = vpop.f32.mrf.mxu0
        %v3951 = vadd.f32 0.0, %v3950
        %3952 = vmatmul.f32.gmra.mxu0 %v3925
        %v3953 = vpop.f32.mrf.mxu0
        %v3954 = vadd.f32 0.0, %v3953
        %3955 = vdwg.mxu0
        %v3956 = vsel %vm893, %v3951, -inf
        %3957 = vmax.xlane.f32.xlu0 %v3956
        %v3958 = vpop.xlane.xlu0 %3957
        %v3959 = vsel %vm893, %v3954, -inf
        %3960 = vmax.xlane.f32.xlu0 %v3959
        %v3961 = vpop.xlane.xlu0 %3960
        %v3962 = vsub.f32 %v3951, %v3958
        %v3963 = vsub.f32 %v3954, %v3961
        %v3964 = vmul.f32 %v3962, 1.442695
        %v3965 = vpow.pop %v3964
        %v3966 = vmul.f32 %v3963, 1.442695
        %v3967 = vpow.pop %v3966
        %v3968 = vsel %vm893, %v3965, 0.0
        %3969 = vadd.xlane.f32.xlu0 %v3968
        %v3970 = vpop.xlane.xlu0 %3969
        %v3971 = vsel %vm893, %v3967, 0.0
        %3972 = vadd.xlane.f32.xlu0 %v3971
        %v3973 = vpop.xlane.xlu0 %3972
        %v3974 = vrcp.pop %v3970
        %v3975 = vrcp.pop %v3973
        %v3976 = vmul.f32 %v3965, %v3974
        %v3977 = vmul.f32 %v3967, %v3975
        %3978 = vrot.lane.b32.xlu0 %v3915, 96
        %v3979 = vpop.permute.xlu0 %3978
        %3980 = vrot.lane.b32.xlu0 %v3917, 96
        %v3981 = vpop.permute.xlu0 %3980
        %v3985 = vsel %vm893, %v3976, 0
        %v3988 = vsel %vm893, %v3977, 0
        %3990 = vmatpush.msra.mxu0 0.0
        %3991 = vmatpush.msra.mxu0 0.0
        %3992 = vmatpush.msra.mxu0 0.0
        %3993 = vmatpush.msra.mxu0 0.0
        %3994 = vmatpush.msra.mxu0 0.0
        %3995 = vmatpush.msra.mxu0 0.0
        %3996 = vmatpush.msra.mxu0 0.0
        %3997 = vmatpush.msra.mxu0 0.0
        %3998 = vmatpush.msra.mxu0 0.0
        %3999 = vmatpush.msra.mxu0 0.0
        %4000 = vmatpush.msra.mxu0 0.0
        %4001 = vmatpush.msra.mxu0 0.0
        %4002 = vmatpush.msra.mxu0 0.0
        %4003 = vmatpush.msra.mxu0 0.0
        %4004 = vmatpush.msra.mxu0 %v3981
        %4005 = vmatpush.msra.mxu0 %v3979
        %4006 = vmatmul.f32.gmra.mxu0 %v3985
        %v4007 = vpop.f32.mrf.mxu0
        %v4008 = vadd.f32 0.0, %v4007
        %4009 = vmatmul.f32.gmra.mxu0 %v3988
        %v4010 = vpop.f32.mrf.mxu0
        %v4011 = vadd.f32 0.0, %v4010
        %4012 = vdwg.mxu0
        %v4013 = vpack.c.bf16 %v4011, %v4008
        %s4014 = scalar_lea.vmem %s5, 16
        %v4015 = vld [vmem:[%s4014] sm:$0xf]
        %4016 = vrot.lane.b32.xlu0 %v3919, 120
        %v4017 = vpop.permute.xlu0 %4016
        %4018 = vrot.lane.b32.xlu0 %v3920, 120
        %v4019 = vpop.permute.xlu0 %4018
        %4020 = vrot.lane.b32.xlu0 %v3915, 120
        %v4021 = vpop.permute.xlu0 %4020
        %4022 = vrot.lane.b32.xlu0 %v3917, 120
        %v4023 = vpop.permute.xlu0 %4022
        %v4024 = vsel %vm857, %v4017, 0
        %v4026 = vsel %vm857, %v4019, 0
        %v4028 = vsel %vm857, %v4021, 0
        %v4030 = vsel %vm857, %v4023, 0
        %4032 = vmatpush.xpose.msra.mxu0 0.0
        %4033 = vmatpush.xpose.msra.mxu0 0.0
        %4034 = vmatpush.xpose.msra.mxu0 0.0
        %4035 = vmatpush.xpose.msra.mxu0 0.0
        %4036 = vmatpush.xpose.msra.mxu0 0.0
        %4037 = vmatpush.xpose.msra.mxu0 0.0
        %4038 = vmatpush.xpose.msra.mxu0 0.0
        %4039 = vmatpush.xpose.msra.mxu0 0.0
        %4040 = vmatpush.xpose.msra.mxu0 0.0
        %4041 = vmatpush.xpose.msra.mxu0 0.0
        %4042 = vmatpush.xpose.msra.mxu0 0.0
        %4043 = vmatpush.xpose.msra.mxu0 0.0
        %4044 = vmatpush.xpose.msra.mxu0 0.0
        %4045 = vmatpush.xpose.msra.mxu0 0.0
        %4046 = vmatpush.xpose.msra.mxu0 %v4030
        %4047 = vmatpush.xpose.msra.mxu0 %v4028
        %4048 = vmatmul.f32.gmra.mxu0 %v4024
        %v4049 = vpop.f32.mrf.mxu0
        %v4050 = vadd.f32 0.0, %v4049
        %4051 = vmatmul.f32.gmra.mxu0 %v4026
        %v4052 = vpop.f32.mrf.mxu0
        %v4053 = vadd.f32 0.0, %v4052
        %4054 = vdwg.mxu0
        %v4055 = vsel %vm893, %v4050, -inf
        %4056 = vmax.xlane.f32.xlu0 %v4055
        %v4057 = vpop.xlane.xlu0 %4056
        %v4058 = vsel %vm893, %v4053, -inf
        %4059 = vmax.xlane.f32.xlu0 %v4058
        %v4060 = vpop.xlane.xlu0 %4059
        %v4061 = vsub.f32 %v4050, %v4057
        %v4062 = vsub.f32 %v4053, %v4060
        %v4063 = vmul.f32 %v4061, 1.442695
        %v4064 = vpow.pop %v4063
        %v4065 = vmul.f32 %v4062, 1.442695
        %v4066 = vpow.pop %v4065
        %v4067 = vsel %vm893, %v4064, 0.0
        %4068 = vadd.xlane.f32.xlu0 %v4067
        %v4069 = vpop.xlane.xlu0 %4068
        %v4070 = vsel %vm893, %v4066, 0.0
        %4071 = vadd.xlane.f32.xlu0 %v4070
        %v4072 = vpop.xlane.xlu0 %4071
        %v4073 = vrcp.pop %v4069
        %v4074 = vrcp.pop %v4072
        %v4075 = vmul.f32 %v4064, %v4073
        %v4076 = vmul.f32 %v4066, %v4074
        %4077 = vrot.lane.b32.xlu0 %v3915, 88
        %v4078 = vpop.permute.xlu0 %4077
        %4079 = vrot.lane.b32.xlu0 %v3917, 88
        %v4080 = vpop.permute.xlu0 %4079
        %v4084 = vsel %vm893, %v4075, 0
        %v4087 = vsel %vm893, %v4076, 0
        %4089 = vmatpush.msra.mxu0 0.0
        %4090 = vmatpush.msra.mxu0 0.0
        %4091 = vmatpush.msra.mxu0 0.0
        %4092 = vmatpush.msra.mxu0 0.0
        %4093 = vmatpush.msra.mxu0 0.0
        %4094 = vmatpush.msra.mxu0 0.0
        %4095 = vmatpush.msra.mxu0 0.0
        %4096 = vmatpush.msra.mxu0 0.0
        %4097 = vmatpush.msra.mxu0 0.0
        %4098 = vmatpush.msra.mxu0 0.0
        %4099 = vmatpush.msra.mxu0 0.0
        %4100 = vmatpush.msra.mxu0 0.0
        %4101 = vmatpush.msra.mxu0 0.0
        %4102 = vmatpush.msra.mxu0 0.0
        %4103 = vmatpush.msra.mxu0 %v4080
        %4104 = vmatpush.msra.mxu0 %v4078
        %4105 = vmatmul.f32.gmra.mxu0 %v4084
        %v4106 = vpop.f32.mrf.mxu0
        %v4107 = vadd.f32 0.0, %v4106
        %4108 = vmatmul.f32.gmra.mxu0 %v4087
        %v4109 = vpop.f32.mrf.mxu0
        %v4110 = vadd.f32 0.0, %v4109
        %4111 = vdwg.mxu0
        %v4112 = vpack.c.bf16 %v4110, %v4107
        %v4113 = vld [vmem:[%s4014 + $0x4] sm:$0xf]
        %v4115 = vsel %vm857, %v4112, 0
        %v4118 = vsel %vm1054, %v4113, 0
        %4120 = vmatpush.bf16.msra.mxu0 0
        %4121 = vmatpush.bf16.msra.mxu0 0
        %4122 = vmatpush.bf16.msra.mxu0 0
        %4123 = vmatpush.bf16.msra.mxu0 0
        %4124 = vmatpush.bf16.msra.mxu0 0
        %4125 = vmatpush.bf16.msra.mxu0 0
        %4126 = vmatpush.bf16.msra.mxu0 0
        %4127 = vmatpush.bf16.msra.mxu0 %v4118
        %4128 = vmatmul.bf16.gmra.mxu0 %v4115
        %v4129 = vpop.f32.mrf.mxu0
        %v4130 = vadd.f32 0.0, %v4129
        %v4131 = vpop.f32.mrf.mxu0
        %v4132 = vadd.f32 0.0, %v4131
        %4133 = vdwg.mxu0
        %v4135 = vsel %vm857, %v4013, 0
        %v4138 = vsel %vm1054, %v4015, 0
        %4140 = vmatpush.bf16.msra.mxu0 0
        %4141 = vmatpush.bf16.msra.mxu0 0
        %4142 = vmatpush.bf16.msra.mxu0 0
        %4143 = vmatpush.bf16.msra.mxu0 0
        %4144 = vmatpush.bf16.msra.mxu0 0
        %4145 = vmatpush.bf16.msra.mxu0 0
        %4146 = vmatpush.bf16.msra.mxu0 0
        %4147 = vmatpush.bf16.msra.mxu0 %v4138
        %4148 = vmatmul.bf16.gmra.mxu0 %v4135
        %v4149 = vpop.f32.mrf.mxu0
        %v4150 = vadd.f32 %v4130, %v4149
        %v4151 = vpop.f32.mrf.mxu0
        %v4152 = vadd.f32 %v4132, %v4151
        %4153 = vdwg.mxu0
        %4154 = vrot.lane.b32.xlu0 %v3919, 112
        %v4155 = vpop.permute.xlu0 %4154
        %4156 = vrot.lane.b32.xlu0 %v3920, 112
        %v4157 = vpop.permute.xlu0 %4156
        %4158 = vrot.lane.b32.xlu0 %v3915, 112
        %v4159 = vpop.permute.xlu0 %4158
        %4160 = vrot.lane.b32.xlu0 %v3917, 112
        %v4161 = vpop.permute.xlu0 %4160
        %v4162 = vsel %vm857, %v4155, 0
        %v4164 = vsel %vm857, %v4157, 0
        %v4166 = vsel %vm857, %v4159, 0
        %v4168 = vsel %vm857, %v4161, 0
        %4170 = vmatpush.xpose.msra.mxu0 0.0
        %4171 = vmatpush.xpose.msra.mxu0 0.0
        %4172 = vmatpush.xpose.msra.mxu0 0.0
        %4173 = vmatpush.xpose.msra.mxu0 0.0
        %4174 = vmatpush.xpose.msra.mxu0 0.0
        %4175 = vmatpush.xpose.msra.mxu0 0.0
        %4176 = vmatpush.xpose.msra.mxu0 0.0
        %4177 = vmatpush.xpose.msra.mxu0 0.0
        %4178 = vmatpush.xpose.msra.mxu0 0.0
        %4179 = vmatpush.xpose.msra.mxu0 0.0
        %4180 = vmatpush.xpose.msra.mxu0 0.0
        %4181 = vmatpush.xpose.msra.mxu0 0.0
        %4182 = vmatpush.xpose.msra.mxu0 0.0
        %4183 = vmatpush.xpose.msra.mxu0 0.0
        %4184 = vmatpush.xpose.msra.mxu0 %v4168
        %4185 = vmatpush.xpose.msra.mxu0 %v4166
        %4186 = vmatmul.f32.gmra.mxu0 %v4162
        %v4187 = vpop.f32.mrf.mxu0
        %v4188 = vadd.f32 0.0, %v4187
        %4189 = vmatmul.f32.gmra.mxu0 %v4164
        %v4190 = vpop.f32.mrf.mxu0
        %v4191 = vadd.f32 0.0, %v4190
        %4192 = vdwg.mxu0
        %v4193 = vsel %vm893, %v4188, -inf
        %4194 = vmax.xlane.f32.xlu0 %v4193
        %v4195 = vpop.xlane.xlu0 %4194
        %v4196 = vsel %vm893, %v4191, -inf
        %4197 = vmax.xlane.f32.xlu0 %v4196
        %v4198 = vpop.xlane.xlu0 %4197
        %v4199 = vsub.f32 %v4188, %v4195
        %v4200 = vsub.f32 %v4191, %v4198
        %v4201 = vmul.f32 %v4199, 1.442695
        %v4202 = vpow.pop %v4201
        %v4203 = vmul.f32 %v4200, 1.442695
        %v4204 = vpow.pop %v4203
        %v4205 = vsel %vm893, %v4202, 0.0
        %4206 = vadd.xlane.f32.xlu0 %v4205
        %v4207 = vpop.xlane.xlu0 %4206
        %v4208 = vsel %vm893, %v4204, 0.0
        %4209 = vadd.xlane.f32.xlu0 %v4208
        %v4210 = vpop.xlane.xlu0 %4209
        %v4211 = vrcp.pop %v4207
        %v4212 = vrcp.pop %v4210
        %v4213 = vmul.f32 %v4202, %v4211
        %v4214 = vmul.f32 %v4204, %v4212
        %4215 = vrot.lane.b32.xlu0 %v3915, 80
        %v4216 = vpop.permute.xlu0 %4215
        %4217 = vrot.lane.b32.xlu0 %v3917, 80
        %v4218 = vpop.permute.xlu0 %4217
        %v4222 = vsel %vm893, %v4213, 0
        %v4225 = vsel %vm893, %v4214, 0
        %4227 = vmatpush.msra.mxu0 0.0
        %4228 = vmatpush.msra.mxu0 0.0
        %4229 = vmatpush.msra.mxu0 0.0
        %4230 = vmatpush.msra.mxu0 0.0
        %4231 = vmatpush.msra.mxu0 0.0
        %4232 = vmatpush.msra.mxu0 0.0
        %4233 = vmatpush.msra.mxu0 0.0
        %4234 = vmatpush.msra.mxu0 0.0
        %4235 = vmatpush.msra.mxu0 0.0
        %4236 = vmatpush.msra.mxu0 0.0
        %4237 = vmatpush.msra.mxu0 0.0
        %4238 = vmatpush.msra.mxu0 0.0
        %4239 = vmatpush.msra.mxu0 0.0
        %4240 = vmatpush.msra.mxu0 0.0
        %4241 = vmatpush.msra.mxu0 %v4218
        %4242 = vmatpush.msra.mxu0 %v4216
        %4243 = vmatmul.f32.gmra.mxu0 %v4222
        %v4244 = vpop.f32.mrf.mxu0
        %v4245 = vadd.f32 0.0, %v4244
        %4246 = vmatmul.f32.gmra.mxu0 %v4225
        %v4247 = vpop.f32.mrf.mxu0
        %v4248 = vadd.f32 0.0, %v4247
        %4249 = vdwg.mxu0
        %v4250 = vpack.c.bf16 %v4248, %v4245
        %v4251 = vld [vmem:[%s4014 + $0x8] sm:$0xf]
        %v4253 = vsel %vm857, %v4250, 0
        %v4256 = vsel %vm1054, %v4251, 0
        %4258 = vmatpush.bf16.msra.mxu0 0
        %4259 = vmatpush.bf16.msra.mxu0 0
        %4260 = vmatpush.bf16.msra.mxu0 0
        %4261 = vmatpush.bf16.msra.mxu0 0
        %4262 = vmatpush.bf16.msra.mxu0 0
        %4263 = vmatpush.bf16.msra.mxu0 0
        %4264 = vmatpush.bf16.msra.mxu0 0
        %4265 = vmatpush.bf16.msra.mxu0 %v4256
        %4266 = vmatmul.bf16.gmra.mxu0 %v4253
        %v4267 = vpop.f32.mrf.mxu0
        %v4268 = vadd.f32 0.0, %v4267
        %v4269 = vpop.f32.mrf.mxu0
        %v4270 = vadd.f32 0.0, %v4269
        %4271 = vdwg.mxu0
        %v4272 = vadd.f32 %v4150, %v4268
        %v4273 = vadd.f32 %v4152, %v4270
        %4274 = vrot.lane.b32.xlu0 %v3919, 104
        %v4275 = vpop.permute.xlu0 %4274
        %4276 = vrot.lane.b32.xlu0 %v3920, 104
        %v4277 = vpop.permute.xlu0 %4276
        %4278 = vrot.lane.b32.xlu0 %v3915, 104
        %v4279 = vpop.permute.xlu0 %4278
        %4280 = vrot.lane.b32.xlu0 %v3917, 104
        %v4281 = vpop.permute.xlu0 %4280
        %v4282 = vsel %vm857, %v4275, 0
        %v4284 = vsel %vm857, %v4277, 0
        %v4286 = vsel %vm857, %v4279, 0
        %v4288 = vsel %vm857, %v4281, 0
        %4290 = vmatpush.xpose.msra.mxu0 0.0
        %4291 = vmatpush.xpose.msra.mxu0 0.0
        %4292 = vmatpush.xpose.msra.mxu0 0.0
        %4293 = vmatpush.xpose.msra.mxu0 0.0
        %4294 = vmatpush.xpose.msra.mxu0 0.0
        %4295 = vmatpush.xpose.msra.mxu0 0.0
        %4296 = vmatpush.xpose.msra.mxu0 0.0
        %4297 = vmatpush.xpose.msra.mxu0 0.0
        %4298 = vmatpush.xpose.msra.mxu0 0.0
        %4299 = vmatpush.xpose.msra.mxu0 0.0
        %4300 = vmatpush.xpose.msra.mxu0 0.0
        %4301 = vmatpush.xpose.msra.mxu0 0.0
        %4302 = vmatpush.xpose.msra.mxu0 0.0
        %4303 = vmatpush.xpose.msra.mxu0 0.0
        %4304 = vmatpush.xpose.msra.mxu0 %v4288
        %4305 = vmatpush.xpose.msra.mxu0 %v4286
        %4306 = vmatmul.f32.gmra.mxu0 %v4282
        %v4307 = vpop.f32.mrf.mxu0
        %v4308 = vadd.f32 0.0, %v4307
        %4309 = vmatmul.f32.gmra.mxu0 %v4284
        %v4310 = vpop.f32.mrf.mxu0
        %v4311 = vadd.f32 0.0, %v4310
        %4312 = vdwg.mxu0
        %v4313 = vsel %vm893, %v4308, -inf
        %4314 = vmax.xlane.f32.xlu0 %v4313
        %v4315 = vpop.xlane.xlu0 %4314
        %v4316 = vsel %vm893, %v4311, -inf
        %4317 = vmax.xlane.f32.xlu0 %v4316
        %v4318 = vpop.xlane.xlu0 %4317
        %v4319 = vsub.f32 %v4308, %v4315
        %v4320 = vsub.f32 %v4311, %v4318
        %v4321 = vmul.f32 %v4319, 1.442695
        %v4322 = vpow.pop %v4321
        %v4323 = vmul.f32 %v4320, 1.442695
        %v4324 = vpow.pop %v4323
        %v4325 = vsel %vm893, %v4322, 0.0
        %4326 = vadd.xlane.f32.xlu0 %v4325
        %v4327 = vpop.xlane.xlu0 %4326
        %v4328 = vsel %vm893, %v4324, 0.0
        %4329 = vadd.xlane.f32.xlu0 %v4328
        %v4330 = vpop.xlane.xlu0 %4329
        %v4331 = vrcp.pop %v4327
        %v4332 = vrcp.pop %v4330
        %v4333 = vmul.f32 %v4322, %v4331
        %v4334 = vmul.f32 %v4324, %v4332
        %4335 = vrot.lane.b32.xlu0 %v3915, 72
        %v4336 = vpop.permute.xlu0 %4335
        %4337 = vrot.lane.b32.xlu0 %v3917, 72
        %v4338 = vpop.permute.xlu0 %4337
        %v4342 = vsel %vm893, %v4333, 0
        %v4345 = vsel %vm893, %v4334, 0
        %4347 = vmatpush.msra.mxu0 0.0
        %4348 = vmatpush.msra.mxu0 0.0
        %4349 = vmatpush.msra.mxu0 0.0
        %4350 = vmatpush.msra.mxu0 0.0
        %4351 = vmatpush.msra.mxu0 0.0
        %4352 = vmatpush.msra.mxu0 0.0
        %4353 = vmatpush.msra.mxu0 0.0
        %4354 = vmatpush.msra.mxu0 0.0
        %4355 = vmatpush.msra.mxu0 0.0
        %4356 = vmatpush.msra.mxu0 0.0
        %4357 = vmatpush.msra.mxu0 0.0
        %4358 = vmatpush.msra.mxu0 0.0
        %4359 = vmatpush.msra.mxu0 0.0
        %4360 = vmatpush.msra.mxu0 0.0
        %4361 = vmatpush.msra.mxu0 %v4338
        %4362 = vmatpush.msra.mxu0 %v4336
        %4363 = vmatmul.f32.gmra.mxu0 %v4342
        %v4364 = vpop.f32.mrf.mxu0
        %v4365 = vadd.f32 0.0, %v4364
        %4366 = vmatmul.f32.gmra.mxu0 %v4345
        %v4367 = vpop.f32.mrf.mxu0
        %v4368 = vadd.f32 0.0, %v4367
        %4369 = vdwg.mxu0
        %v4370 = vpack.c.bf16 %v4368, %v4365
        %v4371 = vld [vmem:[%s4014 + $0xc] sm:$0xf]
        %v4373 = vsel %vm857, %v4370, 0
        %v4376 = vsel %vm1054, %v4371, 0
        %4378 = vmatpush.bf16.msra.mxu0 0
        %4379 = vmatpush.bf16.msra.mxu0 0
        %4380 = vmatpush.bf16.msra.mxu0 0
        %4381 = vmatpush.bf16.msra.mxu0 0
        %4382 = vmatpush.bf16.msra.mxu0 0
        %4383 = vmatpush.bf16.msra.mxu0 0
        %4384 = vmatpush.bf16.msra.mxu0 0
        %4385 = vmatpush.bf16.msra.mxu0 %v4376
        %4386 = vmatmul.bf16.gmra.mxu0 %v4373
        %v4387 = vpop.f32.mrf.mxu0
        %v4388 = vadd.f32 0.0, %v4387
        %v4389 = vpop.f32.mrf.mxu0
        %v4390 = vadd.f32 0.0, %v4389
        %4391 = vdwg.mxu0
        %v4392 = vadd.f32 %v4272, %v4388
        %v4393 = vadd.f32 %v4273, %v4390
        %s4394 = scalar_lea.vmem %s6, 1
        %v4395 = vld [vmem:[%s4394] sm:$0x1]
        %v4397 = vperm.slane %v4395, 0
        %v4399 = vadd.f32 %v4392, %v4397
        %v4400 = vadd.f32 %v4393, %v4397
        %v4401 = vadd.f32 %v3854, %v4399
        %v4402 = vadd.f32 %v3855, %v4400
        %s4403 = scalar_lea.vmem %s15, 1
        %v4404 = vld [vmem:[%s4403] sm:$0x1]
        %s4405 = scalar_lea.vmem %s16, 1
        %v4406 = vld [vmem:[%s4405] sm:$0x1]
        %v4407 = vsel %vm814, %v4401, 0.0
        %4408 = vadd.xlane.f32.xlu0 %v4407
        %v4409 = vpop.xlane.xlu0 %4408
        %v4410 = vsel %vm814, %v4402, 0.0
        %4411 = vadd.xlane.f32.xlu0 %v4410
        %v4412 = vpop.xlane.xlu0 %4411
        %v4413 = vmul.f32 %v4409, %v1354
        %v4414 = vmul.f32 %v4412, %v1354
        %v4415 = vsub.f32 %v4401, %v4413
        %v4416 = vsub.f32 %v4402, %v4414
        %v4417 = vmul.f32 %v4415, %v4415
        %v4418 = vmul.f32 %v4416, %v4416
        %v4419 = vsel %vm814, %v4417, 0.0
        %4420 = vadd.xlane.f32.xlu0 %v4419
        %v4421 = vpop.xlane.xlu0 %4420
        %v4422 = vsel %vm814, %v4418, 0.0
        %4423 = vadd.xlane.f32.xlu0 %v4422
        %v4424 = vpop.xlane.xlu0 %4423
        %v4425 = vmul.f32 %v4421, %v1354
        %v4426 = vmul.f32 %v4424, %v1354
        %v4427 = vadd.f32 %v4425, 1e-05
        %v4428 = vadd.f32 %v4426, 1e-05
        %v4429 = vrsqrt.pop %v4427
        %v4430 = vmul.f32 %v4429, %v4427
        %v4431 = vmul.f32 %v4430, %v4429
        %v4432 = vmul.f32 0.5, %v4431
        %v4433 = vsub.f32 1.5, %v4432
        %v4434 = vmul.f32 %v4429, %v4433
        %vm4435 = vweird.f32 %v4427
        %vm4436 = vweird.f32 %v4429
        %vm4437 = vmor %vm4435, %vm4436
        %v4438 = vsel %vm4437, %v4429, %v4434
        %v4439 = vrsqrt.pop %v4428
        %v4440 = vmul.f32 %v4439, %v4428
        %v4441 = vmul.f32 %v4440, %v4439
        %v4442 = vmul.f32 0.5, %v4441
        %v4443 = vsub.f32 1.5, %v4442
        %v4444 = vmul.f32 %v4439, %v4443
        %vm4445 = vweird.f32 %v4428
        %vm4446 = vweird.f32 %v4439
        %vm4447 = vmor %vm4445, %vm4446
        %v4448 = vsel %vm4447, %v4439, %v4444
        %v4449 = vmul.f32 %v4415, %v4438
        %v4450 = vmul.f32 %v4416, %v4448
        %v4452 = vperm.slane %v4404, 0
        %v4454 = vmul.f32 %v4449, %v4452
        %v4455 = vmul.f32 %v4450, %v4452
        %v4457 = vperm.slane %v4406, 0
        %v4459 = vadd.f32 %v4454, %v4457
        %v4460 = vadd.f32 %v4455, %v4457
        %v4461 = vpack.c.bf16 %v4460, %v4459
        %s4462 = scalar_lea.vmem %s7, 16
        %v4463 = vld [vmem:[%s4462] sm:$0xf]
        %v4464 = vld [vmem:[%s4462 + $0x4] sm:$0xf]
        %v4465 = vld [vmem:[%s4462 + $0x8] sm:$0xf]
        %v4466 = vld [vmem:[%s4462 + $0xc] sm:$0xf]
        %s4467 = scalar_lea.vmem %s8, 1
        %v4468 = vld [vmem:[%s4467] sm:$0x1]
        %v4470 = vperm.slane %v4468, 0
        %v4476 = vunpack.c.l.b16 %v4463
        %v4477 = vunpack.c.l.b16 %v4464
        %v4478 = vunpack.c.l.b16 %v4465
        %v4479 = vunpack.c.l.b16 %v4466
        %v4480 = vpack.c.b16 %v4477, %v4476
        %v4481 = vpack.c.b16 %v4479, %v4478
        %v4485 = vsel %vm814, %v4461, 0
        %4487 = vmatpush.bf16.msra.mxu0 0
        %4488 = vmatpush.bf16.msra.mxu0 0
        %4489 = vmatpush.bf16.msra.mxu0 0
        %4490 = vmatpush.bf16.msra.mxu0 0
        %4491 = vmatpush.bf16.msra.mxu0 0
        %4492 = vmatpush.bf16.msra.mxu0 0
        %4493 = vmatpush.bf16.msra.mxu0 %v4481
        %4494 = vmatpush.bf16.msra.mxu0 %v4480
        %4495 = vmatmul.bf16.gmra.mxu0 %v4485
        %v4496 = vpop.f32.mrf.mxu0
        %v4497 = vadd.f32 %v4470, %v4496
        %v4498 = vpop.f32.mrf.mxu0
        %v4499 = vadd.f32 %v4470, %v4498
        %4500 = vdwg.mxu0
        %4501 = vrot.lane.b32.xlu0 %v4480, 96
        %v4502 = vpop.permute.xlu0 %4501
        %4503 = vrot.lane.b32.xlu0 %v4481, 96
        %v4504 = vpop.permute.xlu0 %4503
        %4507 = vrot.lane.b32.xlu0 %v4470, 96
        %v4508 = vpop.permute.xlu0 %4507
        %4510 = vmatpush.bf16.msra.mxu0 0
        %4511 = vmatpush.bf16.msra.mxu0 0
        %4512 = vmatpush.bf16.msra.mxu0 0
        %4513 = vmatpush.bf16.msra.mxu0 0
        %4514 = vmatpush.bf16.msra.mxu0 0
        %4515 = vmatpush.bf16.msra.mxu0 0
        %4516 = vmatpush.bf16.msra.mxu0 %v4504
        %4517 = vmatpush.bf16.msra.mxu0 %v4502
        %4518 = vmatmul.bf16.gmra.mxu0 %v1453
        %v4519 = vpop.f32.mrf.mxu0
        %v4520 = vadd.f32 %v4508, %v4519
        %v4521 = vpop.f32.mrf.mxu0
        %v4522 = vadd.f32 %v4508, %v4521
        %4523 = vmatmul.bf16.gmra.mxu0 %v1456
        %v4524 = vpop.f32.mrf.mxu0
        %v4525 = vadd.f32 %v4508, %v4524
        %v4526 = vpop.f32.mrf.mxu0
        %4527 = vdwg.mxu0
        %v4528 = vmul.f32 %v4497, 0.35355338
        %v4529 = vmul.f32 %v4499, 0.35355338
        %v4531 = vsel %vm857, %v4528, 0
        %v4534 = vsel %vm857, %v4529, 0
        %v4537 = vsel %vm857, %v4520, 0
        %v4540 = vsel %vm857, %v4522, 0
        %v4543 = vsel %vm857, %v4525, 0
        %4545 = vmatpush.xpose.msra.mxu0 0.0
        %4546 = vmatpush.xpose.msra.mxu0 0.0
        %4547 = vmatpush.xpose.msra.mxu0 0.0
        %4548 = vmatpush.xpose.msra.mxu0 0.0
        %4549 = vmatpush.xpose.msra.mxu0 0.0
        %4550 = vmatpush.xpose.msra.mxu0 0.0
        %4551 = vmatpush.xpose.msra.mxu0 0.0
        %4552 = vmatpush.xpose.msra.mxu0 0.0
        %4553 = vmatpush.xpose.msra.mxu0 0.0
        %4554 = vmatpush.xpose.msra.mxu0 0.0
        %4555 = vmatpush.xpose.msra.mxu0 0.0
        %4556 = vmatpush.xpose.msra.mxu0 0.0
        %4557 = vmatpush.xpose.msra.mxu0 0.0
        %4558 = vmatpush.xpose.msra.mxu0 %v4543
        %4559 = vmatpush.xpose.msra.mxu0 %v4540
        %4560 = vmatpush.xpose.msra.mxu0 %v4537
        %4561 = vmatmul.f32.gmra.mxu0 %v4531
        %v4562 = vpop.f32.mrf.mxu0
        %v4563 = vadd.f32 0.0, %v4562
        %4564 = vmatmul.f32.gmra.mxu0 %v4534
        %v4565 = vpop.f32.mrf.mxu0
        %v4566 = vadd.f32 0.0, %v4565
        %4567 = vdwg.mxu0
        %v4568 = vsel %vm1516, %v4563, -inf
        %4569 = vmax.xlane.f32.xlu0 %v4568
        %v4570 = vpop.xlane.xlu0 %4569
        %v4571 = vsel %vm1516, %v4566, -inf
        %4572 = vmax.xlane.f32.xlu0 %v4571
        %v4573 = vpop.xlane.xlu0 %4572
        %v4574 = vsub.f32 %v4563, %v4570
        %v4575 = vsub.f32 %v4566, %v4573
        %v4576 = vmul.f32 %v4574, 1.442695
        %v4577 = vpow.pop %v4576
        %v4578 = vmul.f32 %v4575, 1.442695
        %v4579 = vpow.pop %v4578
        %v4580 = vsel %vm1516, %v4577, 0.0
        %4581 = vadd.xlane.f32.xlu0 %v4580
        %v4582 = vpop.xlane.xlu0 %4581
        %v4583 = vsel %vm1516, %v4579, 0.0
        %4584 = vadd.xlane.f32.xlu0 %v4583
        %v4585 = vpop.xlane.xlu0 %4584
        %v4586 = vrcp.pop %v4582
        %v4587 = vrcp.pop %v4585
        %v4588 = vmul.f32 %v4577, %v4586
        %v4589 = vmul.f32 %v4579, %v4587
        %4590 = vrot.lane.b32.xlu0 %v4520, 96
        %v4591 = vpop.permute.xlu0 %4590
        %4592 = vrot.lane.b32.xlu0 %v4522, 96
        %v4593 = vpop.permute.xlu0 %4592
        %4594 = vrot.lane.b32.xlu0 %v4525, 96
        %v4595 = vpop.permute.xlu0 %4594
        %v4600 = vsel %vm1516, %v4588, 0
        %v4603 = vsel %vm1516, %v4589, 0
        %4605 = vmatpush.msra.mxu0 0.0
        %4606 = vmatpush.msra.mxu0 0.0
        %4607 = vmatpush.msra.mxu0 0.0
        %4608 = vmatpush.msra.mxu0 0.0
        %4609 = vmatpush.msra.mxu0 0.0
        %4610 = vmatpush.msra.mxu0 0.0
        %4611 = vmatpush.msra.mxu0 0.0
        %4612 = vmatpush.msra.mxu0 0.0
        %4613 = vmatpush.msra.mxu0 0.0
        %4614 = vmatpush.msra.mxu0 0.0
        %4615 = vmatpush.msra.mxu0 0.0
        %4616 = vmatpush.msra.mxu0 0.0
        %4617 = vmatpush.msra.mxu0 0.0
        %4618 = vmatpush.msra.mxu0 %v4595
        %4619 = vmatpush.msra.mxu0 %v4593
        %4620 = vmatpush.msra.mxu0 %v4591
        %4621 = vmatmul.f32.gmra.mxu0 %v4600
        %v4622 = vpop.f32.mrf.mxu0
        %v4623 = vadd.f32 0.0, %v4622
        %4624 = vmatmul.f32.gmra.mxu0 %v4603
        %v4625 = vpop.f32.mrf.mxu0
        %v4626 = vadd.f32 0.0, %v4625
        %4627 = vdwg.mxu0
        %v4628 = vpack.c.bf16 %v4626, %v4623
        %s4629 = scalar_lea.vmem %s9, 16
        %v4630 = vld [vmem:[%s4629] sm:$0xf]
        %4631 = vrot.lane.b32.xlu0 %v4528, 120
        %v4632 = vpop.permute.xlu0 %4631
        %4633 = vrot.lane.b32.xlu0 %v4529, 120
        %v4634 = vpop.permute.xlu0 %4633
        %4635 = vrot.lane.b32.xlu0 %v4520, 120
        %v4636 = vpop.permute.xlu0 %4635
        %4637 = vrot.lane.b32.xlu0 %v4522, 120
        %v4638 = vpop.permute.xlu0 %4637
        %4639 = vrot.lane.b32.xlu0 %v4525, 120
        %v4640 = vpop.permute.xlu0 %4639
        %v4641 = vsel %vm857, %v4632, 0
        %v4643 = vsel %vm857, %v4634, 0
        %v4645 = vsel %vm857, %v4636, 0
        %v4647 = vsel %vm857, %v4638, 0
        %v4649 = vsel %vm857, %v4640, 0
        %4651 = vmatpush.xpose.msra.mxu0 0.0
        %4652 = vmatpush.xpose.msra.mxu0 0.0
        %4653 = vmatpush.xpose.msra.mxu0 0.0
        %4654 = vmatpush.xpose.msra.mxu0 0.0
        %4655 = vmatpush.xpose.msra.mxu0 0.0
        %4656 = vmatpush.xpose.msra.mxu0 0.0
        %4657 = vmatpush.xpose.msra.mxu0 0.0
        %4658 = vmatpush.xpose.msra.mxu0 0.0
        %4659 = vmatpush.xpose.msra.mxu0 0.0
        %4660 = vmatpush.xpose.msra.mxu0 0.0
        %4661 = vmatpush.xpose.msra.mxu0 0.0
        %4662 = vmatpush.xpose.msra.mxu0 0.0
        %4663 = vmatpush.xpose.msra.mxu0 0.0
        %4664 = vmatpush.xpose.msra.mxu0 %v4649
        %4665 = vmatpush.xpose.msra.mxu0 %v4647
        %4666 = vmatpush.xpose.msra.mxu0 %v4645
        %4667 = vmatmul.f32.gmra.mxu0 %v4641
        %v4668 = vpop.f32.mrf.mxu0
        %v4669 = vadd.f32 0.0, %v4668
        %4670 = vmatmul.f32.gmra.mxu0 %v4643
        %v4671 = vpop.f32.mrf.mxu0
        %v4672 = vadd.f32 0.0, %v4671
        %4673 = vdwg.mxu0
        %v4674 = vsel %vm1516, %v4669, -inf
        %4675 = vmax.xlane.f32.xlu0 %v4674
        %v4676 = vpop.xlane.xlu0 %4675
        %v4677 = vsel %vm1516, %v4672, -inf
        %4678 = vmax.xlane.f32.xlu0 %v4677
        %v4679 = vpop.xlane.xlu0 %4678
        %v4680 = vsub.f32 %v4669, %v4676
        %v4681 = vsub.f32 %v4672, %v4679
        %v4682 = vmul.f32 %v4680, 1.442695
        %v4683 = vpow.pop %v4682
        %v4684 = vmul.f32 %v4681, 1.442695
        %v4685 = vpow.pop %v4684
        %v4686 = vsel %vm1516, %v4683, 0.0
        %4687 = vadd.xlane.f32.xlu0 %v4686
        %v4688 = vpop.xlane.xlu0 %4687
        %v4689 = vsel %vm1516, %v4685, 0.0
        %4690 = vadd.xlane.f32.xlu0 %v4689
        %v4691 = vpop.xlane.xlu0 %4690
        %v4692 = vrcp.pop %v4688
        %v4693 = vrcp.pop %v4691
        %v4694 = vmul.f32 %v4683, %v4692
        %v4695 = vmul.f32 %v4685, %v4693
        %4696 = vrot.lane.b32.xlu0 %v4520, 88
        %v4697 = vpop.permute.xlu0 %4696
        %4698 = vrot.lane.b32.xlu0 %v4522, 88
        %v4699 = vpop.permute.xlu0 %4698
        %4700 = vrot.lane.b32.xlu0 %v4525, 88
        %v4701 = vpop.permute.xlu0 %4700
        %v4706 = vsel %vm1516, %v4694, 0
        %v4709 = vsel %vm1516, %v4695, 0
        %4711 = vmatpush.msra.mxu0 0.0
        %4712 = vmatpush.msra.mxu0 0.0
        %4713 = vmatpush.msra.mxu0 0.0
        %4714 = vmatpush.msra.mxu0 0.0
        %4715 = vmatpush.msra.mxu0 0.0
        %4716 = vmatpush.msra.mxu0 0.0
        %4717 = vmatpush.msra.mxu0 0.0
        %4718 = vmatpush.msra.mxu0 0.0
        %4719 = vmatpush.msra.mxu0 0.0
        %4720 = vmatpush.msra.mxu0 0.0
        %4721 = vmatpush.msra.mxu0 0.0
        %4722 = vmatpush.msra.mxu0 0.0
        %4723 = vmatpush.msra.mxu0 0.0
        %4724 = vmatpush.msra.mxu0 %v4701
        %4725 = vmatpush.msra.mxu0 %v4699
        %4726 = vmatpush.msra.mxu0 %v4697
        %4727 = vmatmul.f32.gmra.mxu0 %v4706
        %v4728 = vpop.f32.mrf.mxu0
        %v4729 = vadd.f32 0.0, %v4728
        %4730 = vmatmul.f32.gmra.mxu0 %v4709
        %v4731 = vpop.f32.mrf.mxu0
        %v4732 = vadd.f32 0.0, %v4731
        %4733 = vdwg.mxu0
        %v4734 = vpack.c.bf16 %v4732, %v4729
        %v4735 = vld [vmem:[%s4629 + $0x4] sm:$0xf]
        %v4737 = vsel %vm857, %v4734, 0
        %v4740 = vsel %vm1054, %v4735, 0
        %4742 = vmatpush.bf16.msra.mxu0 0
        %4743 = vmatpush.bf16.msra.mxu0 0
        %4744 = vmatpush.bf16.msra.mxu0 0
        %4745 = vmatpush.bf16.msra.mxu0 0
        %4746 = vmatpush.bf16.msra.mxu0 0
        %4747 = vmatpush.bf16.msra.mxu0 0
        %4748 = vmatpush.bf16.msra.mxu0 0
        %4749 = vmatpush.bf16.msra.mxu0 %v4740
        %4750 = vmatmul.bf16.gmra.mxu0 %v4737
        %v4751 = vpop.f32.mrf.mxu0
        %v4752 = vadd.f32 0.0, %v4751
        %v4753 = vpop.f32.mrf.mxu0
        %v4754 = vadd.f32 0.0, %v4753
        %4755 = vdwg.mxu0
        %v4757 = vsel %vm857, %v4628, 0
        %v4760 = vsel %vm1054, %v4630, 0
        %4762 = vmatpush.bf16.msra.mxu0 0
        %4763 = vmatpush.bf16.msra.mxu0 0
        %4764 = vmatpush.bf16.msra.mxu0 0
        %4765 = vmatpush.bf16.msra.mxu0 0
        %4766 = vmatpush.bf16.msra.mxu0 0
        %4767 = vmatpush.bf16.msra.mxu0 0
        %4768 = vmatpush.bf16.msra.mxu0 0
        %4769 = vmatpush.bf16.msra.mxu0 %v4760
        %4770 = vmatmul.bf16.gmra.mxu0 %v4757
        %v4771 = vpop.f32.mrf.mxu0
        %v4772 = vadd.f32 %v4752, %v4771
        %v4773 = vpop.f32.mrf.mxu0
        %v4774 = vadd.f32 %v4754, %v4773
        %4775 = vdwg.mxu0
        %4776 = vrot.lane.b32.xlu0 %v4528, 112
        %v4777 = vpop.permute.xlu0 %4776
        %4778 = vrot.lane.b32.xlu0 %v4529, 112
        %v4779 = vpop.permute.xlu0 %4778
        %4780 = vrot.lane.b32.xlu0 %v4520, 112
        %v4781 = vpop.permute.xlu0 %4780
        %4782 = vrot.lane.b32.xlu0 %v4522, 112
        %v4783 = vpop.permute.xlu0 %4782
        %4784 = vrot.lane.b32.xlu0 %v4525, 112
        %v4785 = vpop.permute.xlu0 %4784
        %v4786 = vsel %vm857, %v4777, 0
        %v4788 = vsel %vm857, %v4779, 0
        %v4790 = vsel %vm857, %v4781, 0
        %v4792 = vsel %vm857, %v4783, 0
        %v4794 = vsel %vm857, %v4785, 0
        %4796 = vmatpush.xpose.msra.mxu0 0.0
        %4797 = vmatpush.xpose.msra.mxu0 0.0
        %4798 = vmatpush.xpose.msra.mxu0 0.0
        %4799 = vmatpush.xpose.msra.mxu0 0.0
        %4800 = vmatpush.xpose.msra.mxu0 0.0
        %4801 = vmatpush.xpose.msra.mxu0 0.0
        %4802 = vmatpush.xpose.msra.mxu0 0.0
        %4803 = vmatpush.xpose.msra.mxu0 0.0
        %4804 = vmatpush.xpose.msra.mxu0 0.0
        %4805 = vmatpush.xpose.msra.mxu0 0.0
        %4806 = vmatpush.xpose.msra.mxu0 0.0
        %4807 = vmatpush.xpose.msra.mxu0 0.0
        %4808 = vmatpush.xpose.msra.mxu0 0.0
        %4809 = vmatpush.xpose.msra.mxu0 %v4794
        %4810 = vmatpush.xpose.msra.mxu0 %v4792
        %4811 = vmatpush.xpose.msra.mxu0 %v4790
        %4812 = vmatmul.f32.gmra.mxu0 %v4786
        %v4813 = vpop.f32.mrf.mxu0
        %v4814 = vadd.f32 0.0, %v4813
        %4815 = vmatmul.f32.gmra.mxu0 %v4788
        %v4816 = vpop.f32.mrf.mxu0
        %v4817 = vadd.f32 0.0, %v4816
        %4818 = vdwg.mxu0
        %v4819 = vsel %vm1516, %v4814, -inf
        %4820 = vmax.xlane.f32.xlu0 %v4819
        %v4821 = vpop.xlane.xlu0 %4820
        %v4822 = vsel %vm1516, %v4817, -inf
        %4823 = vmax.xlane.f32.xlu0 %v4822
        %v4824 = vpop.xlane.xlu0 %4823
        %v4825 = vsub.f32 %v4814, %v4821
        %v4826 = vsub.f32 %v4817, %v4824
        %v4827 = vmul.f32 %v4825, 1.442695
        %v4828 = vpow.pop %v4827
        %v4829 = vmul.f32 %v4826, 1.442695
        %v4830 = vpow.pop %v4829
        %v4831 = vsel %vm1516, %v4828, 0.0
        %4832 = vadd.xlane.f32.xlu0 %v4831
        %v4833 = vpop.xlane.xlu0 %4832
        %v4834 = vsel %vm1516, %v4830, 0.0
        %4835 = vadd.xlane.f32.xlu0 %v4834
        %v4836 = vpop.xlane.xlu0 %4835
        %v4837 = vrcp.pop %v4833
        %v4838 = vrcp.pop %v4836
        %v4839 = vmul.f32 %v4828, %v4837
        %v4840 = vmul.f32 %v4830, %v4838
        %4841 = vrot.lane.b32.xlu0 %v4520, 80
        %v4842 = vpop.permute.xlu0 %4841
        %4843 = vrot.lane.b32.xlu0 %v4522, 80
        %v4844 = vpop.permute.xlu0 %4843
        %4845 = vrot.lane.b32.xlu0 %v4525, 80
        %v4846 = vpop.permute.xlu0 %4845
        %v4851 = vsel %vm1516, %v4839, 0
        %v4854 = vsel %vm1516, %v4840, 0
        %4856 = vmatpush.msra.mxu0 0.0
        %4857 = vmatpush.msra.mxu0 0.0
        %4858 = vmatpush.msra.mxu0 0.0
        %4859 = vmatpush.msra.mxu0 0.0
        %4860 = vmatpush.msra.mxu0 0.0
        %4861 = vmatpush.msra.mxu0 0.0
        %4862 = vmatpush.msra.mxu0 0.0
        %4863 = vmatpush.msra.mxu0 0.0
        %4864 = vmatpush.msra.mxu0 0.0
        %4865 = vmatpush.msra.mxu0 0.0
        %4866 = vmatpush.msra.mxu0 0.0
        %4867 = vmatpush.msra.mxu0 0.0
        %4868 = vmatpush.msra.mxu0 0.0
        %4869 = vmatpush.msra.mxu0 %v4846
        %4870 = vmatpush.msra.mxu0 %v4844
        %4871 = vmatpush.msra.mxu0 %v4842
        %4872 = vmatmul.f32.gmra.mxu0 %v4851
        %v4873 = vpop.f32.mrf.mxu0
        %v4874 = vadd.f32 0.0, %v4873
        %4875 = vmatmul.f32.gmra.mxu0 %v4854
        %v4876 = vpop.f32.mrf.mxu0
        %v4877 = vadd.f32 0.0, %v4876
        %4878 = vdwg.mxu0
        %v4879 = vpack.c.bf16 %v4877, %v4874
        %v4880 = vld [vmem:[%s4629 + $0x8] sm:$0xf]
        %v4882 = vsel %vm857, %v4879, 0
        %v4885 = vsel %vm1054, %v4880, 0
        %4887 = vmatpush.bf16.msra.mxu0 0
        %4888 = vmatpush.bf16.msra.mxu0 0
        %4889 = vmatpush.bf16.msra.mxu0 0
        %4890 = vmatpush.bf16.msra.mxu0 0
        %4891 = vmatpush.bf16.msra.mxu0 0
        %4892 = vmatpush.bf16.msra.mxu0 0
        %4893 = vmatpush.bf16.msra.mxu0 0
        %4894 = vmatpush.bf16.msra.mxu0 %v4885
        %4895 = vmatmul.bf16.gmra.mxu0 %v4882
        %v4896 = vpop.f32.mrf.mxu0
        %v4897 = vadd.f32 0.0, %v4896
        %v4898 = vpop.f32.mrf.mxu0
        %v4899 = vadd.f32 0.0, %v4898
        %4900 = vdwg.mxu0
        %v4901 = vadd.f32 %v4772, %v4897
        %v4902 = vadd.f32 %v4774, %v4899
        %4903 = vrot.lane.b32.xlu0 %v4528, 104
        %v4904 = vpop.permute.xlu0 %4903
        %4905 = vrot.lane.b32.xlu0 %v4529, 104
        %v4906 = vpop.permute.xlu0 %4905
        %4907 = vrot.lane.b32.xlu0 %v4520, 104
        %v4908 = vpop.permute.xlu0 %4907
        %4909 = vrot.lane.b32.xlu0 %v4522, 104
        %v4910 = vpop.permute.xlu0 %4909
        %4911 = vrot.lane.b32.xlu0 %v4525, 104
        %v4912 = vpop.permute.xlu0 %4911
        %v4913 = vsel %vm857, %v4904, 0
        %v4915 = vsel %vm857, %v4906, 0
        %v4917 = vsel %vm857, %v4908, 0
        %v4919 = vsel %vm857, %v4910, 0
        %v4921 = vsel %vm857, %v4912, 0
        %4923 = vmatpush.xpose.msra.mxu0 0.0
        %4924 = vmatpush.xpose.msra.mxu0 0.0
        %4925 = vmatpush.xpose.msra.mxu0 0.0
        %4926 = vmatpush.xpose.msra.mxu0 0.0
        %4927 = vmatpush.xpose.msra.mxu0 0.0
        %4928 = vmatpush.xpose.msra.mxu0 0.0
        %4929 = vmatpush.xpose.msra.mxu0 0.0
        %4930 = vmatpush.xpose.msra.mxu0 0.0
        %4931 = vmatpush.xpose.msra.mxu0 0.0
        %4932 = vmatpush.xpose.msra.mxu0 0.0
        %4933 = vmatpush.xpose.msra.mxu0 0.0
        %4934 = vmatpush.xpose.msra.mxu0 0.0
        %4935 = vmatpush.xpose.msra.mxu0 0.0
        %4936 = vmatpush.xpose.msra.mxu0 %v4921
        %4937 = vmatpush.xpose.msra.mxu0 %v4919
        %4938 = vmatpush.xpose.msra.mxu0 %v4917
        %4939 = vmatmul.f32.gmra.mxu0 %v4913
        %v4940 = vpop.f32.mrf.mxu0
        %v4941 = vadd.f32 0.0, %v4940
        %4942 = vmatmul.f32.gmra.mxu0 %v4915
        %v4943 = vpop.f32.mrf.mxu0
        %v4944 = vadd.f32 0.0, %v4943
        %4945 = vdwg.mxu0
        %v4946 = vsel %vm1516, %v4941, -inf
        %4947 = vmax.xlane.f32.xlu0 %v4946
        %v4948 = vpop.xlane.xlu0 %4947
        %v4949 = vsel %vm1516, %v4944, -inf
        %4950 = vmax.xlane.f32.xlu0 %v4949
        %v4951 = vpop.xlane.xlu0 %4950
        %v4952 = vsub.f32 %v4941, %v4948
        %v4953 = vsub.f32 %v4944, %v4951
        %v4954 = vmul.f32 %v4952, 1.442695
        %v4955 = vpow.pop %v4954
        %v4956 = vmul.f32 %v4953, 1.442695
        %v4957 = vpow.pop %v4956
        %v4958 = vsel %vm1516, %v4955, 0.0
        %4959 = vadd.xlane.f32.xlu0 %v4958
        %v4960 = vpop.xlane.xlu0 %4959
        %v4961 = vsel %vm1516, %v4957, 0.0
        %4962 = vadd.xlane.f32.xlu0 %v4961
        %v4963 = vpop.xlane.xlu0 %4962
        %v4964 = vrcp.pop %v4960
        %v4965 = vrcp.pop %v4963
        %v4966 = vmul.f32 %v4955, %v4964
        %v4967 = vmul.f32 %v4957, %v4965
        %4968 = vrot.lane.b32.xlu0 %v4520, 72
        %v4969 = vpop.permute.xlu0 %4968
        %4970 = vrot.lane.b32.xlu0 %v4522, 72
        %v4971 = vpop.permute.xlu0 %4970
        %4972 = vrot.lane.b32.xlu0 %v4525, 72
        %v4973 = vpop.permute.xlu0 %4972
        %v4978 = vsel %vm1516, %v4966, 0
        %v4981 = vsel %vm1516, %v4967, 0
        %4983 = vmatpush.msra.mxu0 0.0
        %4984 = vmatpush.msra.mxu0 0.0
        %4985 = vmatpush.msra.mxu0 0.0
        %4986 = vmatpush.msra.mxu0 0.0
        %4987 = vmatpush.msra.mxu0 0.0
        %4988 = vmatpush.msra.mxu0 0.0
        %4989 = vmatpush.msra.mxu0 0.0
        %4990 = vmatpush.msra.mxu0 0.0
        %4991 = vmatpush.msra.mxu0 0.0
        %4992 = vmatpush.msra.mxu0 0.0
        %4993 = vmatpush.msra.mxu0 0.0
        %4994 = vmatpush.msra.mxu0 0.0
        %4995 = vmatpush.msra.mxu0 0.0
        %4996 = vmatpush.msra.mxu0 %v4973
        %4997 = vmatpush.msra.mxu0 %v4971
        %4998 = vmatpush.msra.mxu0 %v4969
        %4999 = vmatmul.f32.gmra.mxu0 %v4978
        %v5000 = vpop.f32.mrf.mxu0
        %v5001 = vadd.f32 0.0, %v5000
        %5002 = vmatmul.f32.gmra.mxu0 %v4981
        %v5003 = vpop.f32.mrf.mxu0
        %v5004 = vadd.f32 0.0, %v5003
        %5005 = vdwg.mxu0
        %v5006 = vpack.c.bf16 %v5004, %v5001
        %v5007 = vld [vmem:[%s4629 + $0xc] sm:$0xf]
        %v5009 = vsel %vm857, %v5006, 0
        %v5012 = vsel %vm1054, %v5007, 0
        %5014 = vmatpush.bf16.msra.mxu0 0
        %5015 = vmatpush.bf16.msra.mxu0 0
        %5016 = vmatpush.bf16.msra.mxu0 0
        %5017 = vmatpush.bf16.msra.mxu0 0
        %5018 = vmatpush.bf16.msra.mxu0 0
        %5019 = vmatpush.bf16.msra.mxu0 0
        %5020 = vmatpush.bf16.msra.mxu0 0
        %5021 = vmatpush.bf16.msra.mxu0 %v5012
        %5022 = vmatmul.bf16.gmra.mxu0 %v5009
        %v5023 = vpop.f32.mrf.mxu0
        %v5024 = vadd.f32 0.0, %v5023
        %v5025 = vpop.f32.mrf.mxu0
        %v5026 = vadd.f32 0.0, %v5025
        %5027 = vdwg.mxu0
        %v5028 = vadd.f32 %v4901, %v5024
        %v5029 = vadd.f32 %v4902, %v5026
        %s5030 = scalar_lea.vmem %s10, 1
        %v5031 = vld [vmem:[%s5030] sm:$0x1]
        %v5033 = vperm.slane %v5031, 0
        %v5035 = vadd.f32 %v5028, %v5033
        %v5036 = vadd.f32 %v5029, %v5033
        %v5037 = vadd.f32 %v4459, %v5035
        %v5038 = vadd.f32 %v4460, %v5036
        %s5039 = scalar_lea.vmem %s17, 1
        %v5040 = vld [vmem:[%s5039] sm:$0x1]
        %s5041 = scalar_lea.vmem %s18, 1
        %v5042 = vld [vmem:[%s5041] sm:$0x1]
        %v5043 = vsel %vm814, %v5037, 0.0
        %5044 = vadd.xlane.f32.xlu0 %v5043
        %v5045 = vpop.xlane.xlu0 %5044
        %v5046 = vsel %vm814, %v5038, 0.0
        %5047 = vadd.xlane.f32.xlu0 %v5046
        %v5048 = vpop.xlane.xlu0 %5047
        %v5049 = vmul.f32 %v5045, %v1354
        %v5050 = vmul.f32 %v5048, %v1354
        %v5051 = vsub.f32 %v5037, %v5049
        %v5052 = vsub.f32 %v5038, %v5050
        %v5053 = vmul.f32 %v5051, %v5051
        %v5054 = vmul.f32 %v5052, %v5052
        %v5055 = vsel %vm814, %v5053, 0.0
        %5056 = vadd.xlane.f32.xlu0 %v5055
        %v5057 = vpop.xlane.xlu0 %5056
        %v5058 = vsel %vm814, %v5054, 0.0
        %5059 = vadd.xlane.f32.xlu0 %v5058
        %v5060 = vpop.xlane.xlu0 %5059
        %v5061 = vmul.f32 %v5057, %v1354
        %v5062 = vmul.f32 %v5060, %v1354
        %v5063 = vadd.f32 %v5061, 1e-05
        %v5064 = vadd.f32 %v5062, 1e-05
        %v5065 = vrsqrt.pop %v5063
        %v5066 = vmul.f32 %v5065, %v5063
        %v5067 = vmul.f32 %v5066, %v5065
        %v5068 = vmul.f32 0.5, %v5067
        %v5069 = vsub.f32 1.5, %v5068
        %v5070 = vmul.f32 %v5065, %v5069
        %vm5071 = vweird.f32 %v5063
        %vm5072 = vweird.f32 %v5065
        %vm5073 = vmor %vm5071, %vm5072
        %v5074 = vsel %vm5073, %v5065, %v5070
        %v5075 = vrsqrt.pop %v5064
        %v5076 = vmul.f32 %v5075, %v5064
        %v5077 = vmul.f32 %v5076, %v5075
        %v5078 = vmul.f32 0.5, %v5077
        %v5079 = vsub.f32 1.5, %v5078
        %v5080 = vmul.f32 %v5075, %v5079
        %vm5081 = vweird.f32 %v5064
        %vm5082 = vweird.f32 %v5075
        %vm5083 = vmor %vm5081, %vm5082
        %v5084 = vsel %vm5083, %v5075, %v5080
        %v5085 = vmul.f32 %v5051, %v5074
        %v5086 = vmul.f32 %v5052, %v5084
        %v5088 = vperm.slane %v5040, 0
        %v5090 = vmul.f32 %v5085, %v5088
        %v5091 = vmul.f32 %v5086, %v5088
        %v5093 = vperm.slane %v5042, 0
        %v5095 = vadd.f32 %v5090, %v5093
        %v5096 = vadd.f32 %v5091, %v5093
        %v5097 = vpack.c.bf16 %v5096, %v5095
        %s5098 = scalar_lea.vmem %s11, 256
        %v5099 = vld [vmem:[%s5098] sm:$0xff]
        %v5100 = vld [vmem:[%s5098 + $0x8] sm:$0xff]
        %v5101 = vld [vmem:[%s5098 + $0x10] sm:$0xff]
        %v5102 = vld [vmem:[%s5098 + $0x18] sm:$0xff]
        %v5103 = vld [vmem:[%s5098 + $0x20] sm:$0xff]
        %v5104 = vld [vmem:[%s5098 + $0x28] sm:$0xff]
        %v5105 = vld [vmem:[%s5098 + $0x30] sm:$0xff]
        %v5106 = vld [vmem:[%s5098 + $0x38] sm:$0xff]
        %v5107 = vld [vmem:[%s5098 + $0x40] sm:$0xff]
        %v5108 = vld [vmem:[%s5098 + $0x48] sm:$0xff]
        %v5109 = vld [vmem:[%s5098 + $0x50] sm:$0xff]
        %v5110 = vld [vmem:[%s5098 + $0x58] sm:$0xff]
        %v5111 = vld [vmem:[%s5098 + $0x60] sm:$0xff]
        %v5112 = vld [vmem:[%s5098 + $0x68] sm:$0xff]
        %v5113 = vld [vmem:[%s5098 + $0x70] sm:$0xff]
        %v5114 = vld [vmem:[%s5098 + $0x78] sm:$0xff]
        %v5115 = vld [vmem:[%s5098 + $0x80] sm:$0xff]
        %v5116 = vld [vmem:[%s5098 + $0x88] sm:$0xff]
        %v5117 = vld [vmem:[%s5098 + $0x90] sm:$0xff]
        %v5118 = vld [vmem:[%s5098 + $0x98] sm:$0xff]
        %v5119 = vld [vmem:[%s5098 + $0xa0] sm:$0xff]
        %v5120 = vld [vmem:[%s5098 + $0xa8] sm:$0xff]
        %v5121 = vld [vmem:[%s5098 + $0xb0] sm:$0xff]
        %v5122 = vld [vmem:[%s5098 + $0xb8] sm:$0xff]
        %v5123 = vld [vmem:[%s5098 + $0xc0] sm:$0xff]
        %v5124 = vld [vmem:[%s5098 + $0xc8] sm:$0xff]
        %v5125 = vld [vmem:[%s5098 + $0xd0] sm:$0xff]
        %v5126 = vld [vmem:[%s5098 + $0xd8] sm:$0xff]
        %v5127 = vld [vmem:[%s5098 + $0xe0] sm:$0xff]
        %v5128 = vld [vmem:[%s5098 + $0xe8] sm:$0xff]
        %v5129 = vld [vmem:[%s5098 + $0xf0] sm:$0xff]
        %v5130 = vld [vmem:[%s5098 + $0xf8] sm:$0xff]
        %s5131 = scalar_lea.vmem %s12, 16
        %v5132 = vld [vmem:[%s5131] sm:$0xff]
        %v5133 = vld [vmem:[%s5131 + $0x8] sm:$0xff]
        %v5136 = vperm.slane %v5132, 0
        %v5137 = vperm.slane %v5132, 1
        %v5138 = vperm.slane %v5132, 2
        %v5139 = vperm.slane %v5132, 3
        %v5140 = vperm.slane %v5132, 4
        %v5141 = vperm.slane %v5132, 5
        %v5142 = vperm.slane %v5132, 6
        %v5143 = vperm.slane %v5132, 7
        %v5144 = vperm.slane %v5133, 0
        %v5145 = vperm.slane %v5133, 1
        %v5146 = vperm.slane %v5133, 2
        %v5147 = vperm.slane %v5133, 3
        %v5148 = vperm.slane %v5133, 4
        %v5149 = vperm.slane %v5133, 5
        %v5150 = vperm.slane %v5133, 6
        %v5151 = vperm.slane %v5133, 7
        %v5200 = vunpack.c.l.b16 %v5099
        %v5201 = vunpack.c.h.b16 %v5099
        %v5202 = vunpack.c.l.b16 %v5100
        %v5203 = vunpack.c.h.b16 %v5100
        %v5204 = vunpack.c.l.b16 %v5101
        %v5205 = vunpack.c.h.b16 %v5101
        %v5206 = vunpack.c.l.b16 %v5102
        %v5207 = vunpack.c.h.b16 %v5102
        %v5208 = vunpack.c.l.b16 %v5103
        %v5209 = vunpack.c.h.b16 %v5103
        %v5210 = vunpack.c.l.b16 %v5104
        %v5211 = vunpack.c.h.b16 %v5104
        %v5212 = vunpack.c.l.b16 %v5105
        %v5213 = vunpack.c.h.b16 %v5105
        %v5214 = vunpack.c.l.b16 %v5106
        %v5215 = vunpack.c.h.b16 %v5106
        %v5216 = vunpack.c.l.b16 %v5107
        %v5217 = vunpack.c.h.b16 %v5107
        %v5218 = vunpack.c.l.b16 %v5108
        %v5219 = vunpack.c.h.b16 %v5108
        %v5220 = vunpack.c.l.b16 %v5109
        %v5221 = vunpack.c.h.b16 %v5109
        %v5222 = vunpack.c.l.b16 %v5110
        %v5223 = vunpack.c.h.b16 %v5110
        %v5224 = vunpack.c.l.b16 %v5111
        %v5225 = vunpack.c.h.b16 %v5111
        %v5226 = vunpack.c.l.b16 %v5112
        %v5227 = vunpack.c.h.b16 %v5112
        %v5228 = vunpack.c.l.b16 %v5113
        %v5229 = vunpack.c.h.b16 %v5113
        %v5230 = vunpack.c.l.b16 %v5114
        %v5231 = vunpack.c.h.b16 %v5114
        %v5232 = vunpack.c.l.b16 %v5115
        %v5233 = vunpack.c.h.b16 %v5115
        %v5234 = vunpack.c.l.b16 %v5116
        %v5235 = vunpack.c.h.b16 %v5116
        %v5236 = vunpack.c.l.b16 %v5117
        %v5237 = vunpack.c.h.b16 %v5117
        %v5238 = vunpack.c.l.b16 %v5118
        %v5239 = vunpack.c.h.b16 %v5118
        %v5240 = vunpack.c.l.b16 %v5119
        %v5241 = vunpack.c.h.b16 %v5119
        %v5242 = vunpack.c.l.b16 %v5120
        %v5243 = vunpack.c.h.b16 %v5120
        %v5244 = vunpack.c.l.b16 %v5121
        %v5245 = vunpack.c.h.b16 %v5121
        %v5246 = vunpack.c.l.b16 %v5122
        %v5247 = vunpack.c.h.b16 %v5122
        %v5248 = vunpack.c.l.b16 %v5123
        %v5249 = vunpack.c.h.b16 %v5123
        %v5250 = vunpack.c.l.b16 %v5124
        %v5251 = vunpack.c.h.b16 %v5124
        %v5252 = vunpack.c.l.b16 %v5125
        %v5253 = vunpack.c.h.b16 %v5125
        %v5254 = vunpack.c.l.b16 %v5126
        %v5255 = vunpack.c.h.b16 %v5126
        %v5256 = vunpack.c.l.b16 %v5127
        %v5257 = vunpack.c.h.b16 %v5127
        %v5258 = vunpack.c.l.b16 %v5128
        %v5259 = vunpack.c.h.b16 %v5128
        %v5260 = vunpack.c.l.b16 %v5129
        %v5261 = vunpack.c.h.b16 %v5129
        %v5262 = vunpack.c.l.b16 %v5130
        %v5263 = vunpack.c.h.b16 %v5130
        %v5264 = vpack.c.b16 %v5216, %v5200
        %v5265 = vpack.c.b16 %v5217, %v5201
        %v5266 = vpack.c.b16 %v5218, %v5202
        %v5267 = vpack.c.b16 %v5219, %v5203
        %v5268 = vpack.c.b16 %v5220, %v5204
        %v5269 = vpack.c.b16 %v5221, %v5205
        %v5270 = vpack.c.b16 %v5222, %v5206
        %v5271 = vpack.c.b16 %v5223, %v5207
        %v5272 = vpack.c.b16 %v5224, %v5208
        %v5273 = vpack.c.b16 %v5225, %v5209
        %v5274 = vpack.c.b16 %v5226, %v5210
        %v5275 = vpack.c.b16 %v5227, %v5211
        %v5276 = vpack.c.b16 %v5228, %v5212
        %v5277 = vpack.c.b16 %v5229, %v5213
        %v5278 = vpack.c.b16 %v5230, %v5214
        %v5279 = vpack.c.b16 %v5231, %v5215
        %v5280 = vpack.c.b16 %v5248, %v5232
        %v5281 = vpack.c.b16 %v5249, %v5233
        %v5282 = vpack.c.b16 %v5250, %v5234
        %v5283 = vpack.c.b16 %v5251, %v5235
        %v5284 = vpack.c.b16 %v5252, %v5236
        %v5285 = vpack.c.b16 %v5253, %v5237
        %v5286 = vpack.c.b16 %v5254, %v5238
        %v5287 = vpack.c.b16 %v5255, %v5239
        %v5288 = vpack.c.b16 %v5256, %v5240
        %v5289 = vpack.c.b16 %v5257, %v5241
        %v5290 = vpack.c.b16 %v5258, %v5242
        %v5291 = vpack.c.b16 %v5259, %v5243
        %v5292 = vpack.c.b16 %v5260, %v5244
        %v5293 = vpack.c.b16 %v5261, %v5245
        %v5294 = vpack.c.b16 %v5262, %v5246
        %v5295 = vpack.c.b16 %v5263, %v5247
        %v5329 = vsel %vm814, %v5097, 0
        %5331 = vmatpush.bf16.msra.mxu0 0
        %5332 = vmatpush.bf16.msra.mxu0 0
        %5333 = vmatpush.bf16.msra.mxu0 0
        %5334 = vmatpush.bf16.msra.mxu0 0
        %5335 = vmatpush.bf16.msra.mxu0 0
        %5336 = vmatpush.bf16.msra.mxu0 0
        %5337 = vmatpush.bf16.msra.mxu0 %v5280
        %5338 = vmatpush.bf16.msra.mxu0 %v5264
        %5339 = vmatmul.bf16.gmra.mxu0 %v5329
        %v5340 = vpop.f32.mrf.mxu0
        %v5341 = vadd.f32 %v5136, %v5340
        %v5342 = vpop.f32.mrf.mxu0
        %v5343 = vadd.f32 %v5136, %v5342
        %5344 = vdwg.mxu0
        %5345 = vmatpush.bf16.msra.mxu0 0
        %5346 = vmatpush.bf16.msra.mxu0 0
        %5347 = vmatpush.bf16.msra.mxu0 0
        %5348 = vmatpush.bf16.msra.mxu0 0
        %5349 = vmatpush.bf16.msra.mxu0 0
        %5350 = vmatpush.bf16.msra.mxu0 0
        %5351 = vmatpush.bf16.msra.mxu0 %v5281
        %5352 = vmatpush.bf16.msra.mxu0 %v5265
        %5353 = vmatmul.bf16.gmra.mxu0 %v5329
        %v5354 = vpop.f32.mrf.mxu0
        %v5355 = vadd.f32 %v5137, %v5354
        %v5356 = vpop.f32.mrf.mxu0
        %v5357 = vadd.f32 %v5137, %v5356
        %5358 = vdwg.mxu0
        %5359 = vmatpush.bf16.msra.mxu0 0
        %5360 = vmatpush.bf16.msra.mxu0 0
        %5361 = vmatpush.bf16.msra.mxu0 0
        %5362 = vmatpush.bf16.msra.mxu0 0
        %5363 = vmatpush.bf16.msra.mxu0 0
        %5364 = vmatpush.bf16.msra.mxu0 0
        %5365 = vmatpush.bf16.msra.mxu0 %v5282
        %5366 = vmatpush.bf16.msra.mxu0 %v5266
        %5367 = vmatmul.bf16.gmra.mxu0 %v5329
        %v5368 = vpop.f32.mrf.mxu0
        %v5369 = vadd.f32 %v5138, %v5368
        %v5370 = vpop.f32.mrf.mxu0
        %v5371 = vadd.f32 %v5138, %v5370
        %5372 = vdwg.mxu0
        %5373 = vmatpush.bf16.msra.mxu0 0
        %5374 = vmatpush.bf16.msra.mxu0 0
        %5375 = vmatpush.bf16.msra.mxu0 0
        %5376 = vmatpush.bf16.msra.mxu0 0
        %5377 = vmatpush.bf16.msra.mxu0 0
        %5378 = vmatpush.bf16.msra.mxu0 0
        %5379 = vmatpush.bf16.msra.mxu0 %v5283
        %5380 = vmatpush.bf16.msra.mxu0 %v5267
        %5381 = vmatmul.bf16.gmra.mxu0 %v5329
        %v5382 = vpop.f32.mrf.mxu0
        %v5383 = vadd.f32 %v5139, %v5382
        %v5384 = vpop.f32.mrf.mxu0
        %v5385 = vadd.f32 %v5139, %v5384
        %5386 = vdwg.mxu0
        %5387 = vmatpush.bf16.msra.mxu0 0
        %5388 = vmatpush.bf16.msra.mxu0 0
        %5389 = vmatpush.bf16.msra.mxu0 0
        %5390 = vmatpush.bf16.msra.mxu0 0
        %5391 = vmatpush.bf16.msra.mxu0 0
        %5392 = vmatpush.bf16.msra.mxu0 0
        %5393 = vmatpush.bf16.msra.mxu0 %v5284
        %5394 = vmatpush.bf16.msra.mxu0 %v5268
        %5395 = vmatmul.bf16.gmra.mxu0 %v5329
        %v5396 = vpop.f32.mrf.mxu0
        %v5397 = vadd.f32 %v5140, %v5396
        %v5398 = vpop.f32.mrf.mxu0
        %v5399 = vadd.f32 %v5140, %v5398
        %5400 = vdwg.mxu0
        %5401 = vmatpush.bf16.msra.mxu0 0
        %5402 = vmatpush.bf16.msra.mxu0 0
        %5403 = vmatpush.bf16.msra.mxu0 0
        %5404 = vmatpush.bf16.msra.mxu0 0
        %5405 = vmatpush.bf16.msra.mxu0 0
        %5406 = vmatpush.bf16.msra.mxu0 0
        %5407 = vmatpush.bf16.msra.mxu0 %v5285
        %5408 = vmatpush.bf16.msra.mxu0 %v5269
        %5409 = vmatmul.bf16.gmra.mxu0 %v5329
        %v5410 = vpop.f32.mrf.mxu0
        %v5411 = vadd.f32 %v5141, %v5410
        %v5412 = vpop.f32.mrf.mxu0
        %v5413 = vadd.f32 %v5141, %v5412
        %5414 = vdwg.mxu0
        %5415 = vmatpush.bf16.msra.mxu0 0
        %5416 = vmatpush.bf16.msra.mxu0 0
        %5417 = vmatpush.bf16.msra.mxu0 0
        %5418 = vmatpush.bf16.msra.mxu0 0
        %5419 = vmatpush.bf16.msra.mxu0 0
        %5420 = vmatpush.bf16.msra.mxu0 0
        %5421 = vmatpush.bf16.msra.mxu0 %v5286
        %5422 = vmatpush.bf16.msra.mxu0 %v5270
        %5423 = vmatmul.bf16.gmra.mxu0 %v5329
        %v5424 = vpop.f32.mrf.mxu0
        %v5425 = vadd.f32 %v5142, %v5424
        %v5426 = vpop.f32.mrf.mxu0
        %v5427 = vadd.f32 %v5142, %v5426
        %5428 = vdwg.mxu0
        %5429 = vmatpush.bf16.msra.mxu0 0
        %5430 = vmatpush.bf16.msra.mxu0 0
        %5431 = vmatpush.bf16.msra.mxu0 0
        %5432 = vmatpush.bf16.msra.mxu0 0
        %5433 = vmatpush.bf16.msra.mxu0 0
        %5434 = vmatpush.bf16.msra.mxu0 0
        %5435 = vmatpush.bf16.msra.mxu0 %v5287
        %5436 = vmatpush.bf16.msra.mxu0 %v5271
        %5437 = vmatmul.bf16.gmra.mxu0 %v5329
        %v5438 = vpop.f32.mrf.mxu0
        %v5439 = vadd.f32 %v5143, %v5438
        %v5440 = vpop.f32.mrf.mxu0
        %v5441 = vadd.f32 %v5143, %v5440
        %5442 = vdwg.mxu0
        %5443 = vmatpush.bf16.msra.mxu0 0
        %5444 = vmatpush.bf16.msra.mxu0 0
        %5445 = vmatpush.bf16.msra.mxu0 0
        %5446 = vmatpush.bf16.msra.mxu0 0
        %5447 = vmatpush.bf16.msra.mxu0 0
        %5448 = vmatpush.bf16.msra.mxu0 0
        %5449 = vmatpush.bf16.msra.mxu0 %v5288
        %5450 = vmatpush.bf16.msra.mxu0 %v5272
        %5451 = vmatmul.bf16.gmra.mxu0 %v5329
        %v5452 = vpop.f32.mrf.mxu0
        %v5453 = vadd.f32 %v5144, %v5452
        %v5454 = vpop.f32.mrf.mxu0
        %v5455 = vadd.f32 %v5144, %v5454
        %5456 = vdwg.mxu0
        %5457 = vmatpush.bf16.msra.mxu0 0
        %5458 = vmatpush.bf16.msra.mxu0 0
        %5459 = vmatpush.bf16.msra.mxu0 0
        %5460 = vmatpush.bf16.msra.mxu0 0
        %5461 = vmatpush.bf16.msra.mxu0 0
        %5462 = vmatpush.bf16.msra.mxu0 0
        %5463 = vmatpush.bf16.msra.mxu0 %v5289
        %5464 = vmatpush.bf16.msra.mxu0 %v5273
        %5465 = vmatmul.bf16.gmra.mxu0 %v5329
        %v5466 = vpop.f32.mrf.mxu0
        %v5467 = vadd.f32 %v5145, %v5466
        %v5468 = vpop.f32.mrf.mxu0
        %v5469 = vadd.f32 %v5145, %v5468
        %5470 = vdwg.mxu0
        %5471 = vmatpush.bf16.msra.mxu0 0
        %5472 = vmatpush.bf16.msra.mxu0 0
        %5473 = vmatpush.bf16.msra.mxu0 0
        %5474 = vmatpush.bf16.msra.mxu0 0
        %5475 = vmatpush.bf16.msra.mxu0 0
        %5476 = vmatpush.bf16.msra.mxu0 0
        %5477 = vmatpush.bf16.msra.mxu0 %v5290
        %5478 = vmatpush.bf16.msra.mxu0 %v5274
        %5479 = vmatmul.bf16.gmra.mxu0 %v5329
        %v5480 = vpop.f32.mrf.mxu0
        %v5481 = vadd.f32 %v5146, %v5480
        %v5482 = vpop.f32.mrf.mxu0
        %v5483 = vadd.f32 %v5146, %v5482
        %5484 = vdwg.mxu0
        %5485 = vmatpush.bf16.msra.mxu0 0
        %5486 = vmatpush.bf16.msra.mxu0 0
        %5487 = vmatpush.bf16.msra.mxu0 0
        %5488 = vmatpush.bf16.msra.mxu0 0
        %5489 = vmatpush.bf16.msra.mxu0 0
        %5490 = vmatpush.bf16.msra.mxu0 0
        %5491 = vmatpush.bf16.msra.mxu0 %v5291
        %5492 = vmatpush.bf16.msra.mxu0 %v5275
        %5493 = vmatmul.bf16.gmra.mxu0 %v5329
        %v5494 = vpop.f32.mrf.mxu0
        %v5495 = vadd.f32 %v5147, %v5494
        %v5496 = vpop.f32.mrf.mxu0
        %v5497 = vadd.f32 %v5147, %v5496
        %5498 = vdwg.mxu0
        %5499 = vmatpush.bf16.msra.mxu0 0
        %5500 = vmatpush.bf16.msra.mxu0 0
        %5501 = vmatpush.bf16.msra.mxu0 0
        %5502 = vmatpush.bf16.msra.mxu0 0
        %5503 = vmatpush.bf16.msra.mxu0 0
        %5504 = vmatpush.bf16.msra.mxu0 0
        %5505 = vmatpush.bf16.msra.mxu0 %v5292
        %5506 = vmatpush.bf16.msra.mxu0 %v5276
        %5507 = vmatmul.bf16.gmra.mxu0 %v5329
        %v5508 = vpop.f32.mrf.mxu0
        %v5509 = vadd.f32 %v5148, %v5508
        %v5510 = vpop.f32.mrf.mxu0
        %v5511 = vadd.f32 %v5148, %v5510
        %5512 = vdwg.mxu0
        %5513 = vmatpush.bf16.msra.mxu0 0
        %5514 = vmatpush.bf16.msra.mxu0 0
        %5515 = vmatpush.bf16.msra.mxu0 0
        %5516 = vmatpush.bf16.msra.mxu0 0
        %5517 = vmatpush.bf16.msra.mxu0 0
        %5518 = vmatpush.bf16.msra.mxu0 0
        %5519 = vmatpush.bf16.msra.mxu0 %v5293
        %5520 = vmatpush.bf16.msra.mxu0 %v5277
        %5521 = vmatmul.bf16.gmra.mxu0 %v5329
        %v5522 = vpop.f32.mrf.mxu0
        %v5523 = vadd.f32 %v5149, %v5522
        %v5524 = vpop.f32.mrf.mxu0
        %v5525 = vadd.f32 %v5149, %v5524
        %5526 = vdwg.mxu0
        %5527 = vmatpush.bf16.msra.mxu0 0
        %5528 = vmatpush.bf16.msra.mxu0 0
        %5529 = vmatpush.bf16.msra.mxu0 0
        %5530 = vmatpush.bf16.msra.mxu0 0
        %5531 = vmatpush.bf16.msra.mxu0 0
        %5532 = vmatpush.bf16.msra.mxu0 0
        %5533 = vmatpush.bf16.msra.mxu0 %v5294
        %5534 = vmatpush.bf16.msra.mxu0 %v5278
        %5535 = vmatmul.bf16.gmra.mxu0 %v5329
        %v5536 = vpop.f32.mrf.mxu0
        %v5537 = vadd.f32 %v5150, %v5536
        %v5538 = vpop.f32.mrf.mxu0
        %v5539 = vadd.f32 %v5150, %v5538
        %5540 = vdwg.mxu0
        %5541 = vmatpush.bf16.msra.mxu0 0
        %5542 = vmatpush.bf16.msra.mxu0 0
        %5543 = vmatpush.bf16.msra.mxu0 0
        %5544 = vmatpush.bf16.msra.mxu0 0
        %5545 = vmatpush.bf16.msra.mxu0 0
        %5546 = vmatpush.bf16.msra.mxu0 0
        %5547 = vmatpush.bf16.msra.mxu0 %v5295
        %5548 = vmatpush.bf16.msra.mxu0 %v5279
        %5549 = vmatmul.bf16.gmra.mxu0 %v5329
        %v5550 = vpop.f32.mrf.mxu0
        %v5551 = vadd.f32 %v5151, %v5550
        %v5552 = vpop.f32.mrf.mxu0
        %v5553 = vadd.f32 %v5151, %v5552
        %5554 = vdwg.mxu0
        %v5555 = vmax.f32 %v5341, 0.0
        %v5556 = vmax.f32 %v5355, 0.0
        %v5557 = vmax.f32 %v5369, 0.0
        %v5558 = vmax.f32 %v5383, 0.0
        %v5559 = vmax.f32 %v5397, 0.0
        %v5560 = vmax.f32 %v5411, 0.0
        %v5561 = vmax.f32 %v5425, 0.0
        %v5562 = vmax.f32 %v5439, 0.0
        %v5563 = vmax.f32 %v5453, 0.0
        %v5564 = vmax.f32 %v5467, 0.0
        %v5565 = vmax.f32 %v5481, 0.0
        %v5566 = vmax.f32 %v5495, 0.0
        %v5567 = vmax.f32 %v5509, 0.0
        %v5568 = vmax.f32 %v5523, 0.0
        %v5569 = vmax.f32 %v5537, 0.0
        %v5570 = vmax.f32 %v5551, 0.0
        %v5571 = vmax.f32 %v5343, 0.0
        %v5572 = vmax.f32 %v5357, 0.0
        %v5573 = vmax.f32 %v5371, 0.0
        %v5574 = vmax.f32 %v5385, 0.0
        %v5575 = vmax.f32 %v5399, 0.0
        %v5576 = vmax.f32 %v5413, 0.0
        %v5577 = vmax.f32 %v5427, 0.0
        %v5578 = vmax.f32 %v5441, 0.0
        %v5579 = vmax.f32 %v5455, 0.0
        %v5580 = vmax.f32 %v5469, 0.0
        %v5581 = vmax.f32 %v5483, 0.0
        %v5582 = vmax.f32 %v5497, 0.0
        %v5583 = vmax.f32 %v5511, 0.0
        %v5584 = vmax.f32 %v5525, 0.0
        %v5585 = vmax.f32 %v5539, 0.0
        %v5586 = vmax.f32 %v5553, 0.0
        %v5587 = vpack.c.bf16 %v5571, %v5555
        %v5588 = vpack.c.bf16 %v5572, %v5556
        %v5589 = vpack.c.bf16 %v5573, %v5557
        %v5590 = vpack.c.bf16 %v5574, %v5558
        %v5591 = vpack.c.bf16 %v5575, %v5559
        %v5592 = vpack.c.bf16 %v5576, %v5560
        %v5593 = vpack.c.bf16 %v5577, %v5561
        %v5594 = vpack.c.bf16 %v5578, %v5562
        %v5595 = vpack.c.bf16 %v5579, %v5563
        %v5596 = vpack.c.bf16 %v5580, %v5564
        %v5597 = vpack.c.bf16 %v5581, %v5565
        %v5598 = vpack.c.bf16 %v5582, %v5566
        %v5599 = vpack.c.bf16 %v5583, %v5567
        %v5600 = vpack.c.bf16 %v5584, %v5568
        %v5601 = vpack.c.bf16 %v5585, %v5569
        %v5602 = vpack.c.bf16 %v5586, %v5570
        %s5603 = scalar_lea.vmem %s13, 1024
        %v5604 = vld [vmem:[%s5603] sm:$0xf]
        %v5605 = vld [vmem:[%s5603 + $0x4] sm:$0xf]
        %v5606 = vld [vmem:[%s5603 + $0x8] sm:$0xf]
        %v5607 = vld [vmem:[%s5603 + $0xc] sm:$0xf]
        %v5608 = vld [vmem:[%s5603 + $0x10] sm:$0xf]
        %v5609 = vld [vmem:[%s5603 + $0x14] sm:$0xf]
        %v5610 = vld [vmem:[%s5603 + $0x18] sm:$0xf]
        %v5611 = vld [vmem:[%s5603 + $0x1c] sm:$0xf]
        %v5612 = vld [vmem:[%s5603 + $0x20] sm:$0xf]
        %v5613 = vld [vmem:[%s5603 + $0x24] sm:$0xf]
        %v5614 = vld [vmem:[%s5603 + $0x28] sm:$0xf]
        %v5615 = vld [vmem:[%s5603 + $0x2c] sm:$0xf]
        %v5616 = vld [vmem:[%s5603 + $0x30] sm:$0xf]
        %v5617 = vld [vmem:[%s5603 + $0x34] sm:$0xf]
        %v5618 = vld [vmem:[%s5603 + $0x38] sm:$0xf]
        %v5619 = vld [vmem:[%s5603 + $0x3c] sm:$0xf]
        %v5620 = vld [vmem:[%s5603 + $0x40] sm:$0xf]
        %v5621 = vld [vmem:[%s5603 + $0x44] sm:$0xf]
        %v5622 = vld [vmem:[%s5603 + $0x48] sm:$0xf]
        %v5623 = vld [vmem:[%s5603 + $0x4c] sm:$0xf]
        %v5624 = vld [vmem:[%s5603 + $0x50] sm:$0xf]
        %v5625 = vld [vmem:[%s5603 + $0x54] sm:$0xf]
        %v5626 = vld [vmem:[%s5603 + $0x58] sm:$0xf]
        %v5627 = vld [vmem:[%s5603 + $0x5c] sm:$0xf]
        %v5628 = vld [vmem:[%s5603 + $0x60] sm:$0xf]
        %v5629 = vld [vmem:[%s5603 + $0x64] sm:$0xf]
        %v5630 = vld [vmem:[%s5603 + $0x68] sm:$0xf]
        %v5631 = vld [vmem:[%s5603 + $0x6c] sm:$0xf]
        %v5632 = vld [vmem:[%s5603 + $0x70] sm:$0xf]
        %v5633 = vld [vmem:[%s5603 + $0x74] sm:$0xf]
        %v5634 = vld [vmem:[%s5603 + $0x78] sm:$0xf]
        %v5635 = vld [vmem:[%s5603 + $0x7c] sm:$0xf]
        %v5636 = vld [vmem:[%s5603 + $0x80] sm:$0xf]
        %v5637 = vld [vmem:[%s5603 + $0x84] sm:$0xf]
        %v5638 = vld [vmem:[%s5603 + $0x88] sm:$0xf]
        %v5639 = vld [vmem:[%s5603 + $0x8c] sm:$0xf]
        %v5640 = vld [vmem:[%s5603 + $0x90] sm:$0xf]
        %v5641 = vld [vmem:[%s5603 + $0x94] sm:$0xf]
        %v5642 = vld [vmem:[%s5603 + $0x98] sm:$0xf]
        %v5643 = vld [vmem:[%s5603 + $0x9c] sm:$0xf]
        %v5644 = vld [vmem:[%s5603 + $0xa0] sm:$0xf]
        %v5645 = vld [vmem:[%s5603 + $0xa4] sm:$0xf]
        %v5646 = vld [vmem:[%s5603 + $0xa8] sm:$0xf]
        %v5647 = vld [vmem:[%s5603 + $0xac] sm:$0xf]
        %v5648 = vld [vmem:[%s5603 + $0xb0] sm:$0xf]
        %v5649 = vld [vmem:[%s5603 + $0xb4] sm:$0xf]
        %v5650 = vld [vmem:[%s5603 + $0xb8] sm:$0xf]
        %v5651 = vld [vmem:[%s5603 + $0xbc] sm:$0xf]
        %v5652 = vld [vmem:[%s5603 + $0xc0] sm:$0xf]
        %v5653 = vld [vmem:[%s5603 + $0xc4] sm:$0xf]
        %v5654 = vld [vmem:[%s5603 + $0xc8] sm:$0xf]
        %v5655 = vld [vmem:[%s5603 + $0xcc] sm:$0xf]
        %v5656 = vld [vmem:[%s5603 + $0xd0] sm:$0xf]
        %v5657 = vld [vmem:[%s5603 + $0xd4] sm:$0xf]
        %v5658 = vld [vmem:[%s5603 + $0xd8] sm:$0xf]
        %v5659 = vld [vmem:[%s5603 + $0xdc] sm:$0xf]
        %v5660 = vld [vmem:[%s5603 + $0xe0] sm:$0xf]
        %v5661 = vld [vmem:[%s5603 + $0xe4] sm:$0xf]
        %v5662 = vld [vmem:[%s5603 + $0xe8] sm:$0xf]
        %v5663 = vld [vmem:[%s5603 + $0xec] sm:$0xf]
        %v5664 = vld [vmem:[%s5603 + $0xf0] sm:$0xf]
        %v5665 = vld [vmem:[%s5603 + $0xf4] sm:$0xf]
        %v5666 = vld [vmem:[%s5603 + $0xf8] sm:$0xf]
        %v5667 = vld [vmem:[%s5603 + $0xfc] sm:$0xf]
        %v5668 = vld [vmem:[%s5603 + $0x100] sm:$0xf]
        %v5669 = vld [vmem:[%s5603 + $0x104] sm:$0xf]
        %v5670 = vld [vmem:[%s5603 + $0x108] sm:$0xf]
        %v5671 = vld [vmem:[%s5603 + $0x10c] sm:$0xf]
        %v5672 = vld [vmem:[%s5603 + $0x110] sm:$0xf]
        %v5673 = vld [vmem:[%s5603 + $0x114] sm:$0xf]
        %v5674 = vld [vmem:[%s5603 + $0x118] sm:$0xf]
        %v5675 = vld [vmem:[%s5603 + $0x11c] sm:$0xf]
        %v5676 = vld [vmem:[%s5603 + $0x120] sm:$0xf]
        %v5677 = vld [vmem:[%s5603 + $0x124] sm:$0xf]
        %v5678 = vld [vmem:[%s5603 + $0x128] sm:$0xf]
        %v5679 = vld [vmem:[%s5603 + $0x12c] sm:$0xf]
        %v5680 = vld [vmem:[%s5603 + $0x130] sm:$0xf]
        %v5681 = vld [vmem:[%s5603 + $0x134] sm:$0xf]
        %v5682 = vld [vmem:[%s5603 + $0x138] sm:$0xf]
        %v5683 = vld [vmem:[%s5603 + $0x13c] sm:$0xf]
        %v5684 = vld [vmem:[%s5603 + $0x140] sm:$0xf]
        %v5685 = vld [vmem:[%s5603 + $0x144] sm:$0xf]
        %v5686 = vld [vmem:[%s5603 + $0x148] sm:$0xf]
        %v5687 = vld [vmem:[%s5603 + $0x14c] sm:$0xf]
        %v5688 = vld [vmem:[%s5603 + $0x150] sm:$0xf]
        %v5689 = vld [vmem:[%s5603 + $0x154] sm:$0xf]
        %v5690 = vld [vmem:[%s5603 + $0x158] sm:$0xf]
        %v5691 = vld [vmem:[%s5603 + $0x15c] sm:$0xf]
        %v5692 = vld [vmem:[%s5603 + $0x160] sm:$0xf]
        %v5693 = vld [vmem:[%s5603 + $0x164] sm:$0xf]
        %v5694 = vld [vmem:[%s5603 + $0x168] sm:$0xf]
        %v5695 = vld [vmem:[%s5603 + $0x16c] sm:$0xf]
        %v5696 = vld [vmem:[%s5603 + $0x170] sm:$0xf]
        %v5697 = vld [vmem:[%s5603 + $0x174] sm:$0xf]
        %v5698 = vld [vmem:[%s5603 + $0x178] sm:$0xf]
        %v5699 = vld [vmem:[%s5603 + $0x17c] sm:$0xf]
        %v5700 = vld [vmem:[%s5603 + $0x180] sm:$0xf]
        %v5701 = vld [vmem:[%s5603 + $0x184] sm:$0xf]
        %v5702 = vld [vmem:[%s5603 + $0x188] sm:$0xf]
        %v5703 = vld [vmem:[%s5603 + $0x18c] sm:$0xf]
        %v5704 = vld [vmem:[%s5603 + $0x190] sm:$0xf]
        %v5705 = vld [vmem:[%s5603 + $0x194] sm:$0xf]
        %v5706 = vld [vmem:[%s5603 + $0x198] sm:$0xf]
        %v5707 = vld [vmem:[%s5603 + $0x19c] sm:$0xf]
        %v5708 = vld [vmem:[%s5603 + $0x1a0] sm:$0xf]
        %v5709 = vld [vmem:[%s5603 + $0x1a4] sm:$0xf]
        %v5710 = vld [vmem:[%s5603 + $0x1a8] sm:$0xf]
        %v5711 = vld [vmem:[%s5603 + $0x1ac] sm:$0xf]
        %v5712 = vld [vmem:[%s5603 + $0x1b0] sm:$0xf]
        %v5713 = vld [vmem:[%s5603 + $0x1b4] sm:$0xf]
        %v5714 = vld [vmem:[%s5603 + $0x1b8] sm:$0xf]
        %v5715 = vld [vmem:[%s5603 + $0x1bc] sm:$0xf]
        %v5716 = vld [vmem:[%s5603 + $0x1c0] sm:$0xf]
        %v5717 = vld [vmem:[%s5603 + $0x1c4] sm:$0xf]
        %v5718 = vld [vmem:[%s5603 + $0x1c8] sm:$0xf]
        %v5719 = vld [vmem:[%s5603 + $0x1cc] sm:$0xf]
        %v5720 = vld [vmem:[%s5603 + $0x1d0] sm:$0xf]
        %v5721 = vld [vmem:[%s5603 + $0x1d4] sm:$0xf]
        %v5722 = vld [vmem:[%s5603 + $0x1d8] sm:$0xf]
        %v5723 = vld [vmem:[%s5603 + $0x1dc] sm:$0xf]
        %v5724 = vld [vmem:[%s5603 + $0x1e0] sm:$0xf]
        %v5725 = vld [vmem:[%s5603 + $0x1e4] sm:$0xf]
        %v5726 = vld [vmem:[%s5603 + $0x1e8] sm:$0xf]
        %v5727 = vld [vmem:[%s5603 + $0x1ec] sm:$0xf]
        %v5728 = vld [vmem:[%s5603 + $0x1f0] sm:$0xf]
        %v5729 = vld [vmem:[%s5603 + $0x1f4] sm:$0xf]
        %v5730 = vld [vmem:[%s5603 + $0x1f8] sm:$0xf]
        %v5731 = vld [vmem:[%s5603 + $0x1fc] sm:$0xf]
        %v5732 = vld [vmem:[%s5603 + $0x200] sm:$0xf]
        %v5733 = vld [vmem:[%s5603 + $0x204] sm:$0xf]
        %v5734 = vld [vmem:[%s5603 + $0x208] sm:$0xf]
        %v5735 = vld [vmem:[%s5603 + $0x20c] sm:$0xf]
        %v5736 = vld [vmem:[%s5603 + $0x210] sm:$0xf]
        %v5737 = vld [vmem:[%s5603 + $0x214] sm:$0xf]
        %v5738 = vld [vmem:[%s5603 + $0x218] sm:$0xf]
        %v5739 = vld [vmem:[%s5603 + $0x21c] sm:$0xf]
        %v5740 = vld [vmem:[%s5603 + $0x220] sm:$0xf]
        %v5741 = vld [vmem:[%s5603 + $0x224] sm:$0xf]
        %v5742 = vld [vmem:[%s5603 + $0x228] sm:$0xf]
        %v5743 = vld [vmem:[%s5603 + $0x22c] sm:$0xf]
        %v5744 = vld [vmem:[%s5603 + $0x230] sm:$0xf]
        %v5745 = vld [vmem:[%s5603 + $0x234] sm:$0xf]
        %v5746 = vld [vmem:[%s5603 + $0x238] sm:$0xf]
        %v5747 = vld [vmem:[%s5603 + $0x23c] sm:$0xf]
        %v5748 = vld [vmem:[%s5603 + $0x240] sm:$0xf]
        %v5749 = vld [vmem:[%s5603 + $0x244] sm:$0xf]
        %v5750 = vld [vmem:[%s5603 + $0x248] sm:$0xf]
        %v5751 = vld [vmem:[%s5603 + $0x24c] sm:$0xf]
        %v5752 = vld [vmem:[%s5603 + $0x250] sm:$0xf]
        %v5753 = vld [vmem:[%s5603 + $0x254] sm:$0xf]
        %v5754 = vld [vmem:[%s5603 + $0x258] sm:$0xf]
        %v5755 = vld [vmem:[%s5603 + $0x25c] sm:$0xf]
        %v5756 = vld [vmem:[%s5603 + $0x260] sm:$0xf]
        %v5757 = vld [vmem:[%s5603 + $0x264] sm:$0xf]
        %v5758 = vld [vmem:[%s5603 + $0x268] sm:$0xf]
        %v5759 = vld [vmem:[%s5603 + $0x26c] sm:$0xf]
        %v5760 = vld [vmem:[%s5603 + $0x270] sm:$0xf]
        %v5761 = vld [vmem:[%s5603 + $0x274] sm:$0xf]
        %v5762 = vld [vmem:[%s5603 + $0x278] sm:$0xf]
        %v5763 = vld [vmem:[%s5603 + $0x27c] sm:$0xf]
        %v5764 = vld [vmem:[%s5603 + $0x280] sm:$0xf]
        %v5765 = vld [vmem:[%s5603 + $0x284] sm:$0xf]
        %v5766 = vld [vmem:[%s5603 + $0x288] sm:$0xf]
        %v5767 = vld [vmem:[%s5603 + $0x28c] sm:$0xf]
        %v5768 = vld [vmem:[%s5603 + $0x290] sm:$0xf]
        %v5769 = vld [vmem:[%s5603 + $0x294] sm:$0xf]
        %v5770 = vld [vmem:[%s5603 + $0x298] sm:$0xf]
        %v5771 = vld [vmem:[%s5603 + $0x29c] sm:$0xf]
        %v5772 = vld [vmem:[%s5603 + $0x2a0] sm:$0xf]
        %v5773 = vld [vmem:[%s5603 + $0x2a4] sm:$0xf]
        %v5774 = vld [vmem:[%s5603 + $0x2a8] sm:$0xf]
        %v5775 = vld [vmem:[%s5603 + $0x2ac] sm:$0xf]
        %v5776 = vld [vmem:[%s5603 + $0x2b0] sm:$0xf]
        %v5777 = vld [vmem:[%s5603 + $0x2b4] sm:$0xf]
        %v5778 = vld [vmem:[%s5603 + $0x2b8] sm:$0xf]
        %v5779 = vld [vmem:[%s5603 + $0x2bc] sm:$0xf]
        %v5780 = vld [vmem:[%s5603 + $0x2c0] sm:$0xf]
        %v5781 = vld [vmem:[%s5603 + $0x2c4] sm:$0xf]
        %v5782 = vld [vmem:[%s5603 + $0x2c8] sm:$0xf]
        %v5783 = vld [vmem:[%s5603 + $0x2cc] sm:$0xf]
        %v5784 = vld [vmem:[%s5603 + $0x2d0] sm:$0xf]
        %v5785 = vld [vmem:[%s5603 + $0x2d4] sm:$0xf]
        %v5786 = vld [vmem:[%s5603 + $0x2d8] sm:$0xf]
        %v5787 = vld [vmem:[%s5603 + $0x2dc] sm:$0xf]
        %v5788 = vld [vmem:[%s5603 + $0x2e0] sm:$0xf]
        %v5789 = vld [vmem:[%s5603 + $0x2e4] sm:$0xf]
        %v5790 = vld [vmem:[%s5603 + $0x2e8] sm:$0xf]
        %v5791 = vld [vmem:[%s5603 + $0x2ec] sm:$0xf]
        %v5792 = vld [vmem:[%s5603 + $0x2f0] sm:$0xf]
        %v5793 = vld [vmem:[%s5603 + $0x2f4] sm:$0xf]
        %v5794 = vld [vmem:[%s5603 + $0x2f8] sm:$0xf]
        %v5795 = vld [vmem:[%s5603 + $0x2fc] sm:$0xf]
        %v5796 = vld [vmem:[%s5603 + $0x300] sm:$0xf]
        %v5797 = vld [vmem:[%s5603 + $0x304] sm:$0xf]
        %v5798 = vld [vmem:[%s5603 + $0x308] sm:$0xf]
        %v5799 = vld [vmem:[%s5603 + $0x30c] sm:$0xf]
        %v5800 = vld [vmem:[%s5603 + $0x310] sm:$0xf]
        %v5801 = vld [vmem:[%s5603 + $0x314] sm:$0xf]
        %v5802 = vld [vmem:[%s5603 + $0x318] sm:$0xf]
        %v5803 = vld [vmem:[%s5603 + $0x31c] sm:$0xf]
        %v5804 = vld [vmem:[%s5603 + $0x320] sm:$0xf]
        %v5805 = vld [vmem:[%s5603 + $0x324] sm:$0xf]
        %v5806 = vld [vmem:[%s5603 + $0x328] sm:$0xf]
        %v5807 = vld [vmem:[%s5603 + $0x32c] sm:$0xf]
        %v5808 = vld [vmem:[%s5603 + $0x330] sm:$0xf]
        %v5809 = vld [vmem:[%s5603 + $0x334] sm:$0xf]
        %v5810 = vld [vmem:[%s5603 + $0x338] sm:$0xf]
        %v5811 = vld [vmem:[%s5603 + $0x33c] sm:$0xf]
        %v5812 = vld [vmem:[%s5603 + $0x340] sm:$0xf]
        %v5813 = vld [vmem:[%s5603 + $0x344] sm:$0xf]
        %v5814 = vld [vmem:[%s5603 + $0x348] sm:$0xf]
        %v5815 = vld [vmem:[%s5603 + $0x34c] sm:$0xf]
        %v5816 = vld [vmem:[%s5603 + $0x350] sm:$0xf]
        %v5817 = vld [vmem:[%s5603 + $0x354] sm:$0xf]
        %v5818 = vld [vmem:[%s5603 + $0x358] sm:$0xf]
        %v5819 = vld [vmem:[%s5603 + $0x35c] sm:$0xf]
        %v5820 = vld [vmem:[%s5603 + $0x360] sm:$0xf]
        %v5821 = vld [vmem:[%s5603 + $0x364] sm:$0xf]
        %v5822 = vld [vmem:[%s5603 + $0x368] sm:$0xf]
        %v5823 = vld [vmem:[%s5603 + $0x36c] sm:$0xf]
        %v5824 = vld [vmem:[%s5603 + $0x370] sm:$0xf]
        %v5825 = vld [vmem:[%s5603 + $0x374] sm:$0xf]
        %v5826 = vld [vmem:[%s5603 + $0x378] sm:$0xf]
        %v5827 = vld [vmem:[%s5603 + $0x37c] sm:$0xf]
        %v5828 = vld [vmem:[%s5603 + $0x380] sm:$0xf]
        %v5829 = vld [vmem:[%s5603 + $0x384] sm:$0xf]
        %v5830 = vld [vmem:[%s5603 + $0x388] sm:$0xf]
        %v5831 = vld [vmem:[%s5603 + $0x38c] sm:$0xf]
        %v5832 = vld [vmem:[%s5603 + $0x390] sm:$0xf]
        %v5833 = vld [vmem:[%s5603 + $0x394] sm:$0xf]
        %v5834 = vld [vmem:[%s5603 + $0x398] sm:$0xf]
        %v5835 = vld [vmem:[%s5603 + $0x39c] sm:$0xf]
        %v5836 = vld [vmem:[%s5603 + $0x3a0] sm:$0xf]
        %v5837 = vld [vmem:[%s5603 + $0x3a4] sm:$0xf]
        %v5838 = vld [vmem:[%s5603 + $0x3a8] sm:$0xf]
        %v5839 = vld [vmem:[%s5603 + $0x3ac] sm:$0xf]
        %v5840 = vld [vmem:[%s5603 + $0x3b0] sm:$0xf]
        %v5841 = vld [vmem:[%s5603 + $0x3b4] sm:$0xf]
        %v5842 = vld [vmem:[%s5603 + $0x3b8] sm:$0xf]
        %v5843 = vld [vmem:[%s5603 + $0x3bc] sm:$0xf]
        %v5844 = vld [vmem:[%s5603 + $0x3c0] sm:$0xf]
        %v5845 = vld [vmem:[%s5603 + $0x3c4] sm:$0xf]
        %v5846 = vld [vmem:[%s5603 + $0x3c8] sm:$0xf]
        %v5847 = vld [vmem:[%s5603 + $0x3cc] sm:$0xf]
        %v5848 = vld [vmem:[%s5603 + $0x3d0] sm:$0xf]
        %v5849 = vld [vmem:[%s5603 + $0x3d4] sm:$0xf]
        %v5850 = vld [vmem:[%s5603 + $0x3d8] sm:$0xf]
        %v5851 = vld [vmem:[%s5603 + $0x3dc] sm:$0xf]
        %v5852 = vld [vmem:[%s5603 + $0x3e0] sm:$0xf]
        %v5853 = vld [vmem:[%s5603 + $0x3e4] sm:$0xf]
        %v5854 = vld [vmem:[%s5603 + $0x3e8] sm:$0xf]
        %v5855 = vld [vmem:[%s5603 + $0x3ec] sm:$0xf]
        %v5856 = vld [vmem:[%s5603 + $0x3f0] sm:$0xf]
        %v5857 = vld [vmem:[%s5603 + $0x3f4] sm:$0xf]
        %v5858 = vld [vmem:[%s5603 + $0x3f8] sm:$0xf]
        %v5859 = vld [vmem:[%s5603 + $0x3fc] sm:$0xf]
        %s5860 = scalar_lea.vmem %s14, 1
        %v5861 = vld [vmem:[%s5860] sm:$0x1]
        %v5863 = vperm.slane %v5861, 0
        %v6121 = vunpack.c.l.b16 %v5604
        %v6122 = vunpack.c.l.b16 %v5605
        %v6123 = vunpack.c.l.b16 %v5606
        %v6124 = vunpack.c.l.b16 %v5607
        %v6125 = vunpack.c.l.b16 %v5608
        %v6126 = vunpack.c.l.b16 %v5609
        %v6127 = vunpack.c.l.b16 %v5610
        %v6128 = vunpack.c.l.b16 %v5611
        %v6129 = vunpack.c.l.b16 %v5612
        %v6130 = vunpack.c.l.b16 %v5613
        %v6131 = vunpack.c.l.b16 %v5614
        %v6132 = vunpack.c.l.b16 %v5615
        %v6133 = vunpack.c.l.b16 %v5616
        %v6134 = vunpack.c.l.b16 %v5617
        %v6135 = vunpack.c.l.b16 %v5618
        %v6136 = vunpack.c.l.b16 %v5619
        %v6137 = vunpack.c.l.b16 %v5620
        %v6138 = vunpack.c.l.b16 %v5621
        %v6139 = vunpack.c.l.b16 %v5622
        %v6140 = vunpack.c.l.b16 %v5623
        %v6141 = vunpack.c.l.b16 %v5624
        %v6142 = vunpack.c.l.b16 %v5625
        %v6143 = vunpack.c.l.b16 %v5626
        %v6144 = vunpack.c.l.b16 %v5627
        %v6145 = vunpack.c.l.b16 %v5628
        %v6146 = vunpack.c.l.b16 %v5629
        %v6147 = vunpack.c.l.b16 %v5630
        %v6148 = vunpack.c.l.b16 %v5631
        %v6149 = vunpack.c.l.b16 %v5632
        %v6150 = vunpack.c.l.b16 %v5633
        %v6151 = vunpack.c.l.b16 %v5634
        %v6152 = vunpack.c.l.b16 %v5635
        %v6153 = vunpack.c.l.b16 %v5636
        %v6154 = vunpack.c.l.b16 %v5637
        %v6155 = vunpack.c.l.b16 %v5638
        %v6156 = vunpack.c.l.b16 %v5639
        %v6157 = vunpack.c.l.b16 %v5640
        %v6158 = vunpack.c.l.b16 %v5641
        %v6159 = vunpack.c.l.b16 %v5642
        %v6160 = vunpack.c.l.b16 %v5643
        %v6161 = vunpack.c.l.b16 %v5644
        %v6162 = vunpack.c.l.b16 %v5645
        %v6163 = vunpack.c.l.b16 %v5646
        %v6164 = vunpack.c.l.b16 %v5647
        %v6165 = vunpack.c.l.b16 %v5648
        %v6166 = vunpack.c.l.b16 %v5649
        %v6167 = vunpack.c.l.b16 %v5650
        %v6168 = vunpack.c.l.b16 %v5651
        %v6169 = vunpack.c.l.b16 %v5652
        %v6170 = vunpack.c.l.b16 %v5653
        %v6171 = vunpack.c.l.b16 %v5654
        %v6172 = vunpack.c.l.b16 %v5655
        %v6173 = vunpack.c.l.b16 %v5656
        %v6174 = vunpack.c.l.b16 %v5657
        %v6175 = vunpack.c.l.b16 %v5658
        %v6176 = vunpack.c.l.b16 %v5659
        %v6177 = vunpack.c.l.b16 %v5660
        %v6178 = vunpack.c.l.b16 %v5661
        %v6179 = vunpack.c.l.b16 %v5662
        %v6180 = vunpack.c.l.b16 %v5663
        %v6181 = vunpack.c.l.b16 %v5664
        %v6182 = vunpack.c.l.b16 %v5665
        %v6183 = vunpack.c.l.b16 %v5666
        %v6184 = vunpack.c.l.b16 %v5667
        %v6185 = vunpack.c.l.b16 %v5668
        %v6186 = vunpack.c.l.b16 %v5669
        %v6187 = vunpack.c.l.b16 %v5670
        %v6188 = vunpack.c.l.b16 %v5671
        %v6189 = vunpack.c.l.b16 %v5672
        %v6190 = vunpack.c.l.b16 %v5673
        %v6191 = vunpack.c.l.b16 %v5674
        %v6192 = vunpack.c.l.b16 %v5675
        %v6193 = vunpack.c.l.b16 %v5676
        %v6194 = vunpack.c.l.b16 %v5677
        %v6195 = vunpack.c.l.b16 %v5678
        %v6196 = vunpack.c.l.b16 %v5679
        %v6197 = vunpack.c.l.b16 %v5680
        %v6198 = vunpack.c.l.b16 %v5681
        %v6199 = vunpack.c.l.b16 %v5682
        %v6200 = vunpack.c.l.b16 %v5683
        %v6201 = vunpack.c.l.b16 %v5684
        %v6202 = vunpack.c.l.b16 %v5685
        %v6203 = vunpack.c.l.b16 %v5686
        %v6204 = vunpack.c.l.b16 %v5687
        %v6205 = vunpack.c.l.b16 %v5688
        %v6206 = vunpack.c.l.b16 %v5689
        %v6207 = vunpack.c.l.b16 %v5690
        %v6208 = vunpack.c.l.b16 %v5691
        %v6209 = vunpack.c.l.b16 %v5692
        %v6210 = vunpack.c.l.b16 %v5693
        %v6211 = vunpack.c.l.b16 %v5694
        %v6212 = vunpack.c.l.b16 %v5695
        %v6213 = vunpack.c.l.b16 %v5696
        %v6214 = vunpack.c.l.b16 %v5697
        %v6215 = vunpack.c.l.b16 %v5698
        %v6216 = vunpack.c.l.b16 %v5699
        %v6217 = vunpack.c.l.b16 %v5700
        %v6218 = vunpack.c.l.b16 %v5701
        %v6219 = vunpack.c.l.b16 %v5702
        %v6220 = vunpack.c.l.b16 %v5703
        %v6221 = vunpack.c.l.b16 %v5704
        %v6222 = vunpack.c.l.b16 %v5705
        %v6223 = vunpack.c.l.b16 %v5706
        %v6224 = vunpack.c.l.b16 %v5707
        %v6225 = vunpack.c.l.b16 %v5708
        %v6226 = vunpack.c.l.b16 %v5709
        %v6227 = vunpack.c.l.b16 %v5710
        %v6228 = vunpack.c.l.b16 %v5711
        %v6229 = vunpack.c.l.b16 %v5712
        %v6230 = vunpack.c.l.b16 %v5713
        %v6231 = vunpack.c.l.b16 %v5714
        %v6232 = vunpack.c.l.b16 %v5715
        %v6233 = vunpack.c.l.b16 %v5716
        %v6234 = vunpack.c.l.b16 %v5717
        %v6235 = vunpack.c.l.b16 %v5718
        %v6236 = vunpack.c.l.b16 %v5719
        %v6237 = vunpack.c.l.b16 %v5720
        %v6238 = vunpack.c.l.b16 %v5721
        %v6239 = vunpack.c.l.b16 %v5722
        %v6240 = vunpack.c.l.b16 %v5723
        %v6241 = vunpack.c.l.b16 %v5724
        %v6242 = vunpack.c.l.b16 %v5725
        %v6243 = vunpack.c.l.b16 %v5726
        %v6244 = vunpack.c.l.b16 %v5727
        %v6245 = vunpack.c.l.b16 %v5728
        %v6246 = vunpack.c.l.b16 %v5729
        %v6247 = vunpack.c.l.b16 %v5730
        %v6248 = vunpack.c.l.b16 %v5731
        %v6249 = vunpack.c.l.b16 %v5732
        %v6250 = vunpack.c.l.b16 %v5733
        %v6251 = vunpack.c.l.b16 %v5734
        %v6252 = vunpack.c.l.b16 %v5735
        %v6253 = vunpack.c.l.b16 %v5736
        %v6254 = vunpack.c.l.b16 %v5737
        %v6255 = vunpack.c.l.b16 %v5738
        %v6256 = vunpack.c.l.b16 %v5739
        %v6257 = vunpack.c.l.b16 %v5740
        %v6258 = vunpack.c.l.b16 %v5741
        %v6259 = vunpack.c.l.b16 %v5742
        %v6260 = vunpack.c.l.b16 %v5743
        %v6261 = vunpack.c.l.b16 %v5744
        %v6262 = vunpack.c.l.b16 %v5745
        %v6263 = vunpack.c.l.b16 %v5746
        %v6264 = vunpack.c.l.b16 %v5747
        %v6265 = vunpack.c.l.b16 %v5748
        %v6266 = vunpack.c.l.b16 %v5749
        %v6267 = vunpack.c.l.b16 %v5750
        %v6268 = vunpack.c.l.b16 %v5751
        %v6269 = vunpack.c.l.b16 %v5752
        %v6270 = vunpack.c.l.b16 %v5753
        %v6271 = vunpack.c.l.b16 %v5754
        %v6272 = vunpack.c.l.b16 %v5755
        %v6273 = vunpack.c.l.b16 %v5756
        %v6274 = vunpack.c.l.b16 %v5757
        %v6275 = vunpack.c.l.b16 %v5758
        %v6276 = vunpack.c.l.b16 %v5759
        %v6277 = vunpack.c.l.b16 %v5760
        %v6278 = vunpack.c.l.b16 %v5761
        %v6279 = vunpack.c.l.b16 %v5762
        %v6280 = vunpack.c.l.b16 %v5763
        %v6281 = vunpack.c.l.b16 %v5764
        %v6282 = vunpack.c.l.b16 %v5765
        %v6283 = vunpack.c.l.b16 %v5766
        %v6284 = vunpack.c.l.b16 %v5767
        %v6285 = vunpack.c.l.b16 %v5768
        %v6286 = vunpack.c.l.b16 %v5769
        %v6287 = vunpack.c.l.b16 %v5770
        %v6288 = vunpack.c.l.b16 %v5771
        %v6289 = vunpack.c.l.b16 %v5772
        %v6290 = vunpack.c.l.b16 %v5773
        %v6291 = vunpack.c.l.b16 %v5774
        %v6292 = vunpack.c.l.b16 %v5775
        %v6293 = vunpack.c.l.b16 %v5776
        %v6294 = vunpack.c.l.b16 %v5777
        %v6295 = vunpack.c.l.b16 %v5778
        %v6296 = vunpack.c.l.b16 %v5779
        %v6297 = vunpack.c.l.b16 %v5780
        %v6298 = vunpack.c.l.b16 %v5781
        %v6299 = vunpack.c.l.b16 %v5782
        %v6300 = vunpack.c.l.b16 %v5783
        %v6301 = vunpack.c.l.b16 %v5784
        %v6302 = vunpack.c.l.b16 %v5785
        %v6303 = vunpack.c.l.b16 %v5786
        %v6304 = vunpack.c.l.b16 %v5787
        %v6305 = vunpack.c.l.b16 %v5788
        %v6306 = vunpack.c.l.b16 %v5789
        %v6307 = vunpack.c.l.b16 %v5790
        %v6308 = vunpack.c.l.b16 %v5791
        %v6309 = vunpack.c.l.b16 %v5792
        %v6310 = vunpack.c.l.b16 %v5793
        %v6311 = vunpack.c.l.b16 %v5794
        %v6312 = vunpack.c.l.b16 %v5795
        %v6313 = vunpack.c.l.b16 %v5796
        %v6314 = vunpack.c.l.b16 %v5797
        %v6315 = vunpack.c.l.b16 %v5798
        %v6316 = vunpack.c.l.b16 %v5799
        %v6317 = vunpack.c.l.b16 %v5800
        %v6318 = vunpack.c.l.b16 %v5801
        %v6319 = vunpack.c.l.b16 %v5802
        %v6320 = vunpack.c.l.b16 %v5803
        %v6321 = vunpack.c.l.b16 %v5804
        %v6322 = vunpack.c.l.b16 %v5805
        %v6323 = vunpack.c.l.b16 %v5806
        %v6324 = vunpack.c.l.b16 %v5807
        %v6325 = vunpack.c.l.b16 %v5808
        %v6326 = vunpack.c.l.b16 %v5809
        %v6327 = vunpack.c.l.b16 %v5810
        %v6328 = vunpack.c.l.b16 %v5811
        %v6329 = vunpack.c.l.b16 %v5812
        %v6330 = vunpack.c.l.b16 %v5813
        %v6331 = vunpack.c.l.b16 %v5814
        %v6332 = vunpack.c.l.b16 %v5815
        %v6333 = vunpack.c.l.b16 %v5816
        %v6334 = vunpack.c.l.b16 %v5817
        %v6335 = vunpack.c.l.b16 %v5818
        %v6336 = vunpack.c.l.b16 %v5819
        %v6337 = vunpack.c.l.b16 %v5820
        %v6338 = vunpack.c.l.b16 %v5821
        %v6339 = vunpack.c.l.b16 %v5822
        %v6340 = vunpack.c.l.b16 %v5823
        %v6341 = vunpack.c.l.b16 %v5824
        %v6342 = vunpack.c.l.b16 %v5825
        %v6343 = vunpack.c.l.b16 %v5826
        %v6344 = vunpack.c.l.b16 %v5827
        %v6345 = vunpack.c.l.b16 %v5828
        %v6346 = vunpack.c.l.b16 %v5829
        %v6347 = vunpack.c.l.b16 %v5830
        %v6348 = vunpack.c.l.b16 %v5831
        %v6349 = vunpack.c.l.b16 %v5832
        %v6350 = vunpack.c.l.b16 %v5833
        %v6351 = vunpack.c.l.b16 %v5834
        %v6352 = vunpack.c.l.b16 %v5835
        %v6353 = vunpack.c.l.b16 %v5836
        %v6354 = vunpack.c.l.b16 %v5837
        %v6355 = vunpack.c.l.b16 %v5838
        %v6356 = vunpack.c.l.b16 %v5839
        %v6357 = vunpack.c.l.b16 %v5840
        %v6358 = vunpack.c.l.b16 %v5841
        %v6359 = vunpack.c.l.b16 %v5842
        %v6360 = vunpack.c.l.b16 %v5843
        %v6361 = vunpack.c.l.b16 %v5844
        %v6362 = vunpack.c.l.b16 %v5845
        %v6363 = vunpack.c.l.b16 %v5846
        %v6364 = vunpack.c.l.b16 %v5847
        %v6365 = vunpack.c.l.b16 %v5848
        %v6366 = vunpack.c.l.b16 %v5849
        %v6367 = vunpack.c.l.b16 %v5850
        %v6368 = vunpack.c.l.b16 %v5851
        %v6369 = vunpack.c.l.b16 %v5852
        %v6370 = vunpack.c.l.b16 %v5853
        %v6371 = vunpack.c.l.b16 %v5854
        %v6372 = vunpack.c.l.b16 %v5855
        %v6373 = vunpack.c.l.b16 %v5856
        %v6374 = vunpack.c.l.b16 %v5857
        %v6375 = vunpack.c.l.b16 %v5858
        %v6376 = vunpack.c.l.b16 %v5859
        %v6377 = vpack.c.b16 %v6122, %v6121
        %v6378 = vpack.c.b16 %v6124, %v6123
        %v6379 = vpack.c.b16 %v6126, %v6125
        %v6380 = vpack.c.b16 %v6128, %v6127
        %v6381 = vpack.c.b16 %v6130, %v6129
        %v6382 = vpack.c.b16 %v6132, %v6131
        %v6383 = vpack.c.b16 %v6134, %v6133
        %v6384 = vpack.c.b16 %v6136, %v6135
        %v6385 = vpack.c.b16 %v6138, %v6137
        %v6386 = vpack.c.b16 %v6140, %v6139
        %v6387 = vpack.c.b16 %v6142, %v6141
        %v6388 = vpack.c.b16 %v6144, %v6143
        %v6389 = vpack.c.b16 %v6146, %v6145
        %v6390 = vpack.c.b16 %v6148, %v6147
        %v6391 = vpack.c.b16 %v6150, %v6149
        %v6392 = vpack.c.b16 %v6152, %v6151
        %v6393 = vpack.c.b16 %v6154, %v6153
        %v6394 = vpack.c.b16 %v6156, %v6155
        %v6395 = vpack.c.b16 %v6158, %v6157
        %v6396 = vpack.c.b16 %v6160, %v6159
        %v6397 = vpack.c.b16 %v6162, %v6161
        %v6398 = vpack.c.b16 %v6164, %v6163
        %v6399 = vpack.c.b16 %v6166, %v6165
        %v6400 = vpack.c.b16 %v6168, %v6167
        %v6401 = vpack.c.b16 %v6170, %v6169
        %v6402 = vpack.c.b16 %v6172, %v6171
        %v6403 = vpack.c.b16 %v6174, %v6173
        %v6404 = vpack.c.b16 %v6176, %v6175
        %v6405 = vpack.c.b16 %v6178, %v6177
        %v6406 = vpack.c.b16 %v6180, %v6179
        %v6407 = vpack.c.b16 %v6182, %v6181
        %v6408 = vpack.c.b16 %v6184, %v6183
        %v6409 = vpack.c.b16 %v6186, %v6185
        %v6410 = vpack.c.b16 %v6188, %v6187
        %v6411 = vpack.c.b16 %v6190, %v6189
        %v6412 = vpack.c.b16 %v6192, %v6191
        %v6413 = vpack.c.b16 %v6194, %v6193
        %v6414 = vpack.c.b16 %v6196, %v6195
        %v6415 = vpack.c.b16 %v6198, %v6197
        %v6416 = vpack.c.b16 %v6200, %v6199
        %v6417 = vpack.c.b16 %v6202, %v6201
        %v6418 = vpack.c.b16 %v6204, %v6203
        %v6419 = vpack.c.b16 %v6206, %v6205
        %v6420 = vpack.c.b16 %v6208, %v6207
        %v6421 = vpack.c.b16 %v6210, %v6209
        %v6422 = vpack.c.b16 %v6212, %v6211
        %v6423 = vpack.c.b16 %v6214, %v6213
        %v6424 = vpack.c.b16 %v6216, %v6215
        %v6425 = vpack.c.b16 %v6218, %v6217
        %v6426 = vpack.c.b16 %v6220, %v6219
        %v6427 = vpack.c.b16 %v6222, %v6221
        %v6428 = vpack.c.b16 %v6224, %v6223
        %v6429 = vpack.c.b16 %v6226, %v6225
        %v6430 = vpack.c.b16 %v6228, %v6227
        %v6431 = vpack.c.b16 %v6230, %v6229
        %v6432 = vpack.c.b16 %v6232, %v6231
        %v6433 = vpack.c.b16 %v6234, %v6233
        %v6434 = vpack.c.b16 %v6236, %v6235
        %v6435 = vpack.c.b16 %v6238, %v6237
        %v6436 = vpack.c.b16 %v6240, %v6239
        %v6437 = vpack.c.b16 %v6242, %v6241
        %v6438 = vpack.c.b16 %v6244, %v6243
        %v6439 = vpack.c.b16 %v6246, %v6245
        %v6440 = vpack.c.b16 %v6248, %v6247
        %v6441 = vpack.c.b16 %v6250, %v6249
        %v6442 = vpack.c.b16 %v6252, %v6251
        %v6443 = vpack.c.b16 %v6254, %v6253
        %v6444 = vpack.c.b16 %v6256, %v6255
        %v6445 = vpack.c.b16 %v6258, %v6257
        %v6446 = vpack.c.b16 %v6260, %v6259
        %v6447 = vpack.c.b16 %v6262, %v6261
        %v6448 = vpack.c.b16 %v6264, %v6263
        %v6449 = vpack.c.b16 %v6266, %v6265
        %v6450 = vpack.c.b16 %v6268, %v6267
        %v6451 = vpack.c.b16 %v6270, %v6269
        %v6452 = vpack.c.b16 %v6272, %v6271
        %v6453 = vpack.c.b16 %v6274, %v6273
        %v6454 = vpack.c.b16 %v6276, %v6275
        %v6455 = vpack.c.b16 %v6278, %v6277
        %v6456 = vpack.c.b16 %v6280, %v6279
        %v6457 = vpack.c.b16 %v6282, %v6281
        %v6458 = vpack.c.b16 %v6284, %v6283
        %v6459 = vpack.c.b16 %v6286, %v6285
        %v6460 = vpack.c.b16 %v6288, %v6287
        %v6461 = vpack.c.b16 %v6290, %v6289
        %v6462 = vpack.c.b16 %v6292, %v6291
        %v6463 = vpack.c.b16 %v6294, %v6293
        %v6464 = vpack.c.b16 %v6296, %v6295
        %v6465 = vpack.c.b16 %v6298, %v6297
        %v6466 = vpack.c.b16 %v6300, %v6299
        %v6467 = vpack.c.b16 %v6302, %v6301
        %v6468 = vpack.c.b16 %v6304, %v6303
        %v6469 = vpack.c.b16 %v6306, %v6305
        %v6470 = vpack.c.b16 %v6308, %v6307
        %v6471 = vpack.c.b16 %v6310, %v6309
        %v6472 = vpack.c.b16 %v6312, %v6311
        %v6473 = vpack.c.b16 %v6314, %v6313
        %v6474 = vpack.c.b16 %v6316, %v6315
        %v6475 = vpack.c.b16 %v6318, %v6317
        %v6476 = vpack.c.b16 %v6320, %v6319
        %v6477 = vpack.c.b16 %v6322, %v6321
        %v6478 = vpack.c.b16 %v6324, %v6323
        %v6479 = vpack.c.b16 %v6326, %v6325
        %v6480 = vpack.c.b16 %v6328, %v6327
        %v6481 = vpack.c.b16 %v6330, %v6329
        %v6482 = vpack.c.b16 %v6332, %v6331
        %v6483 = vpack.c.b16 %v6334, %v6333
        %v6484 = vpack.c.b16 %v6336, %v6335
        %v6485 = vpack.c.b16 %v6338, %v6337
        %v6486 = vpack.c.b16 %v6340, %v6339
        %v6487 = vpack.c.b16 %v6342, %v6341
        %v6488 = vpack.c.b16 %v6344, %v6343
        %v6489 = vpack.c.b16 %v6346, %v6345
        %v6490 = vpack.c.b16 %v6348, %v6347
        %v6491 = vpack.c.b16 %v6350, %v6349
        %v6492 = vpack.c.b16 %v6352, %v6351
        %v6493 = vpack.c.b16 %v6354, %v6353
        %v6494 = vpack.c.b16 %v6356, %v6355
        %v6495 = vpack.c.b16 %v6358, %v6357
        %v6496 = vpack.c.b16 %v6360, %v6359
        %v6497 = vpack.c.b16 %v6362, %v6361
        %v6498 = vpack.c.b16 %v6364, %v6363
        %v6499 = vpack.c.b16 %v6366, %v6365
        %v6500 = vpack.c.b16 %v6368, %v6367
        %v6501 = vpack.c.b16 %v6370, %v6369
        %v6502 = vpack.c.b16 %v6372, %v6371
        %v6503 = vpack.c.b16 %v6374, %v6373
        %v6504 = vpack.c.b16 %v6376, %v6375
        %6633 = vmatpush.bf16.msra.mxu0 %v6384
        %6634 = vmatpush.bf16.msra.mxu0 %v6383
        %6635 = vmatpush.bf16.msra.mxu0 %v6382
        %6636 = vmatpush.bf16.msra.mxu0 %v6381
        %6637 = vmatpush.bf16.msra.mxu0 %v6380
        %6638 = vmatpush.bf16.msra.mxu0 %v6379
        %6639 = vmatpush.bf16.msra.mxu0 %v6378
        %6640 = vmatpush.bf16.msra.mxu0 %v6377
        %6641 = vmatmul.bf16.gmra.mxu0 %v5587
        %v6642 = vpop.f32.mrf.mxu0
        %v6643 = vadd.f32 %v5863, %v6642
        %v6644 = vpop.f32.mrf.mxu0
        %v6645 = vadd.f32 %v5863, %v6644
        %6646 = vdwg.mxu0
        %6647 = vmatpush.bf16.msra.mxu0 %v6392
        %6648 = vmatpush.bf16.msra.mxu0 %v6391
        %6649 = vmatpush.bf16.msra.mxu0 %v6390
        %6650 = vmatpush.bf16.msra.mxu0 %v6389
        %6651 = vmatpush.bf16.msra.mxu0 %v6388
        %6652 = vmatpush.bf16.msra.mxu0 %v6387
        %6653 = vmatpush.bf16.msra.mxu0 %v6386
        %6654 = vmatpush.bf16.msra.mxu0 %v6385
        %6655 = vmatmul.bf16.gmra.mxu0 %v5588
        %v6656 = vpop.f32.mrf.mxu0
        %v6657 = vadd.f32 %v6643, %v6656
        %v6658 = vpop.f32.mrf.mxu0
        %v6659 = vadd.f32 %v6645, %v6658
        %6660 = vdwg.mxu0
        %6661 = vmatpush.bf16.msra.mxu0 %v6400
        %6662 = vmatpush.bf16.msra.mxu0 %v6399
        %6663 = vmatpush.bf16.msra.mxu0 %v6398
        %6664 = vmatpush.bf16.msra.mxu0 %v6397
        %6665 = vmatpush.bf16.msra.mxu0 %v6396
        %6666 = vmatpush.bf16.msra.mxu0 %v6395
        %6667 = vmatpush.bf16.msra.mxu0 %v6394
        %6668 = vmatpush.bf16.msra.mxu0 %v6393
        %6669 = vmatmul.bf16.gmra.mxu0 %v5589
        %v6670 = vpop.f32.mrf.mxu0
        %v6671 = vadd.f32 %v6657, %v6670
        %v6672 = vpop.f32.mrf.mxu0
        %v6673 = vadd.f32 %v6659, %v6672
        %6674 = vdwg.mxu0
        %6675 = vmatpush.bf16.msra.mxu0 %v6408
        %6676 = vmatpush.bf16.msra.mxu0 %v6407
        %6677 = vmatpush.bf16.msra.mxu0 %v6406
        %6678 = vmatpush.bf16.msra.mxu0 %v6405
        %6679 = vmatpush.bf16.msra.mxu0 %v6404
        %6680 = vmatpush.bf16.msra.mxu0 %v6403
        %6681 = vmatpush.bf16.msra.mxu0 %v6402
        %6682 = vmatpush.bf16.msra.mxu0 %v6401
        %6683 = vmatmul.bf16.gmra.mxu0 %v5590
        %v6684 = vpop.f32.mrf.mxu0
        %v6685 = vadd.f32 %v6671, %v6684
        %v6686 = vpop.f32.mrf.mxu0
        %v6687 = vadd.f32 %v6673, %v6686
        %6688 = vdwg.mxu0
        %6689 = vmatpush.bf16.msra.mxu0 %v6416
        %6690 = vmatpush.bf16.msra.mxu0 %v6415
        %6691 = vmatpush.bf16.msra.mxu0 %v6414
        %6692 = vmatpush.bf16.msra.mxu0 %v6413
        %6693 = vmatpush.bf16.msra.mxu0 %v6412
        %6694 = vmatpush.bf16.msra.mxu0 %v6411
        %6695 = vmatpush.bf16.msra.mxu0 %v6410
        %6696 = vmatpush.bf16.msra.mxu0 %v6409
        %6697 = vmatmul.bf16.gmra.mxu0 %v5591
        %v6698 = vpop.f32.mrf.mxu0
        %v6699 = vadd.f32 %v6685, %v6698
        %v6700 = vpop.f32.mrf.mxu0
        %v6701 = vadd.f32 %v6687, %v6700
        %6702 = vdwg.mxu0
        %6703 = vmatpush.bf16.msra.mxu0 %v6424
        %6704 = vmatpush.bf16.msra.mxu0 %v6423
        %6705 = vmatpush.bf16.msra.mxu0 %v6422
        %6706 = vmatpush.bf16.msra.mxu0 %v6421
        %6707 = vmatpush.bf16.msra.mxu0 %v6420
        %6708 = vmatpush.bf16.msra.mxu0 %v6419
        %6709 = vmatpush.bf16.msra.mxu0 %v6418
        %6710 = vmatpush.bf16.msra.mxu0 %v6417
        %6711 = vmatmul.bf16.gmra.mxu0 %v5592
        %v6712 = vpop.f32.mrf.mxu0
        %v6713 = vadd.f32 %v6699, %v6712
        %v6714 = vpop.f32.mrf.mxu0
        %v6715 = vadd.f32 %v6701, %v6714
        %6716 = vdwg.mxu0
        %6717 = vmatpush.bf16.msra.mxu0 %v6432
        %6718 = vmatpush.bf16.msra.mxu0 %v6431
        %6719 = vmatpush.bf16.msra.mxu0 %v6430
        %6720 = vmatpush.bf16.msra.mxu0 %v6429
        %6721 = vmatpush.bf16.msra.mxu0 %v6428
        %6722 = vmatpush.bf16.msra.mxu0 %v6427
        %6723 = vmatpush.bf16.msra.mxu0 %v6426
        %6724 = vmatpush.bf16.msra.mxu0 %v6425
        %6725 = vmatmul.bf16.gmra.mxu0 %v5593
        %v6726 = vpop.f32.mrf.mxu0
        %v6727 = vadd.f32 %v6713, %v6726
        %v6728 = vpop.f32.mrf.mxu0
        %v6729 = vadd.f32 %v6715, %v6728
        %6730 = vdwg.mxu0
        %6731 = vmatpush.bf16.msra.mxu0 %v6440
        %6732 = vmatpush.bf16.msra.mxu0 %v6439
        %6733 = vmatpush.bf16.msra.mxu0 %v6438
        %6734 = vmatpush.bf16.msra.mxu0 %v6437
        %6735 = vmatpush.bf16.msra.mxu0 %v6436
        %6736 = vmatpush.bf16.msra.mxu0 %v6435
        %6737 = vmatpush.bf16.msra.mxu0 %v6434
        %6738 = vmatpush.bf16.msra.mxu0 %v6433
        %6739 = vmatmul.bf16.gmra.mxu0 %v5594
        %v6740 = vpop.f32.mrf.mxu0
        %v6741 = vadd.f32 %v6727, %v6740
        %v6742 = vpop.f32.mrf.mxu0
        %v6743 = vadd.f32 %v6729, %v6742
        %6744 = vdwg.mxu0
        %6745 = vmatpush.bf16.msra.mxu0 %v6448
        %6746 = vmatpush.bf16.msra.mxu0 %v6447
        %6747 = vmatpush.bf16.msra.mxu0 %v6446
        %6748 = vmatpush.bf16.msra.mxu0 %v6445
        %6749 = vmatpush.bf16.msra.mxu0 %v6444
        %6750 = vmatpush.bf16.msra.mxu0 %v6443
        %6751 = vmatpush.bf16.msra.mxu0 %v6442
        %6752 = vmatpush.bf16.msra.mxu0 %v6441
        %6753 = vmatmul.bf16.gmra.mxu0 %v5595
        %v6754 = vpop.f32.mrf.mxu0
        %v6755 = vadd.f32 %v6741, %v6754
        %v6756 = vpop.f32.mrf.mxu0
        %v6757 = vadd.f32 %v6743, %v6756
        %6758 = vdwg.mxu0
        %6759 = vmatpush.bf16.msra.mxu0 %v6456
        %6760 = vmatpush.bf16.msra.mxu0 %v6455
        %6761 = vmatpush.bf16.msra.mxu0 %v6454
        %6762 = vmatpush.bf16.msra.mxu0 %v6453
        %6763 = vmatpush.bf16.msra.mxu0 %v6452
        %6764 = vmatpush.bf16.msra.mxu0 %v6451
        %6765 = vmatpush.bf16.msra.mxu0 %v6450
        %6766 = vmatpush.bf16.msra.mxu0 %v6449
        %6767 = vmatmul.bf16.gmra.mxu0 %v5596
        %v6768 = vpop.f32.mrf.mxu0
        %v6769 = vadd.f32 %v6755, %v6768
        %v6770 = vpop.f32.mrf.mxu0
        %v6771 = vadd.f32 %v6757, %v6770
        %6772 = vdwg.mxu0
        %6773 = vmatpush.bf16.msra.mxu0 %v6464
        %6774 = vmatpush.bf16.msra.mxu0 %v6463
        %6775 = vmatpush.bf16.msra.mxu0 %v6462
        %6776 = vmatpush.bf16.msra.mxu0 %v6461
        %6777 = vmatpush.bf16.msra.mxu0 %v6460
        %6778 = vmatpush.bf16.msra.mxu0 %v6459
        %6779 = vmatpush.bf16.msra.mxu0 %v6458
        %6780 = vmatpush.bf16.msra.mxu0 %v6457
        %6781 = vmatmul.bf16.gmra.mxu0 %v5597
        %v6782 = vpop.f32.mrf.mxu0
        %v6783 = vadd.f32 %v6769, %v6782
        %v6784 = vpop.f32.mrf.mxu0
        %v6785 = vadd.f32 %v6771, %v6784
        %6786 = vdwg.mxu0
        %6787 = vmatpush.bf16.msra.mxu0 %v6472
        %6788 = vmatpush.bf16.msra.mxu0 %v6471
        %6789 = vmatpush.bf16.msra.mxu0 %v6470
        %6790 = vmatpush.bf16.msra.mxu0 %v6469
        %6791 = vmatpush.bf16.msra.mxu0 %v6468
        %6792 = vmatpush.bf16.msra.mxu0 %v6467
        %6793 = vmatpush.bf16.msra.mxu0 %v6466
        %6794 = vmatpush.bf16.msra.mxu0 %v6465
        %6795 = vmatmul.bf16.gmra.mxu0 %v5598
        %v6796 = vpop.f32.mrf.mxu0
        %v6797 = vadd.f32 %v6783, %v6796
        %v6798 = vpop.f32.mrf.mxu0
        %v6799 = vadd.f32 %v6785, %v6798
        %6800 = vdwg.mxu0
        %6801 = vmatpush.bf16.msra.mxu0 %v6480
        %6802 = vmatpush.bf16.msra.mxu0 %v6479
        %6803 = vmatpush.bf16.msra.mxu0 %v6478
        %6804 = vmatpush.bf16.msra.mxu0 %v6477
        %6805 = vmatpush.bf16.msra.mxu0 %v6476
        %6806 = vmatpush.bf16.msra.mxu0 %v6475
        %6807 = vmatpush.bf16.msra.mxu0 %v6474
        %6808 = vmatpush.bf16.msra.mxu0 %v6473
        %6809 = vmatmul.bf16.gmra.mxu0 %v5599
        %v6810 = vpop.f32.mrf.mxu0
        %v6811 = vadd.f32 %v6797, %v6810
        %v6812 = vpop.f32.mrf.mxu0
        %v6813 = vadd.f32 %v6799, %v6812
        %6814 = vdwg.mxu0
        %6815 = vmatpush.bf16.msra.mxu0 %v6488
        %6816 = vmatpush.bf16.msra.mxu0 %v6487
        %6817 = vmatpush.bf16.msra.mxu0 %v6486
        %6818 = vmatpush.bf16.msra.mxu0 %v6485
        %6819 = vmatpush.bf16.msra.mxu0 %v6484
        %6820 = vmatpush.bf16.msra.mxu0 %v6483
        %6821 = vmatpush.bf16.msra.mxu0 %v6482
        %6822 = vmatpush.bf16.msra.mxu0 %v6481
        %6823 = vmatmul.bf16.gmra.mxu0 %v5600
        %v6824 = vpop.f32.mrf.mxu0
        %v6825 = vadd.f32 %v6811, %v6824
        %v6826 = vpop.f32.mrf.mxu0
        %v6827 = vadd.f32 %v6813, %v6826
        %6828 = vdwg.mxu0
        %6829 = vmatpush.bf16.msra.mxu0 %v6496
        %6830 = vmatpush.bf16.msra.mxu0 %v6495
        %6831 = vmatpush.bf16.msra.mxu0 %v6494
        %6832 = vmatpush.bf16.msra.mxu0 %v6493
        %6833 = vmatpush.bf16.msra.mxu0 %v6492
        %6834 = vmatpush.bf16.msra.mxu0 %v6491
        %6835 = vmatpush.bf16.msra.mxu0 %v6490
        %6836 = vmatpush.bf16.msra.mxu0 %v6489
        %6837 = vmatmul.bf16.gmra.mxu0 %v5601
        %v6838 = vpop.f32.mrf.mxu0
        %v6839 = vadd.f32 %v6825, %v6838
        %v6840 = vpop.f32.mrf.mxu0
        %v6841 = vadd.f32 %v6827, %v6840
        %6842 = vdwg.mxu0
        %6843 = vmatpush.bf16.msra.mxu0 %v6504
        %6844 = vmatpush.bf16.msra.mxu0 %v6503
        %6845 = vmatpush.bf16.msra.mxu0 %v6502
        %6846 = vmatpush.bf16.msra.mxu0 %v6501
        %6847 = vmatpush.bf16.msra.mxu0 %v6500
        %6848 = vmatpush.bf16.msra.mxu0 %v6499
        %6849 = vmatpush.bf16.msra.mxu0 %v6498
        %6850 = vmatpush.bf16.msra.mxu0 %v6497
        %6851 = vmatmul.bf16.gmra.mxu0 %v5602
        %v6852 = vpop.f32.mrf.mxu0
        %v6853 = vadd.f32 %v6839, %v6852
        %v6854 = vpop.f32.mrf.mxu0
        %v6855 = vadd.f32 %v6841, %v6854
        %6856 = vdwg.mxu0
        %v6857 = vadd.f32 %v5095, %v6853
        %v6858 = vadd.f32 %v5096, %v6855
        %s6859 = scalar_lea.vmem %s19, 1
        %v6860 = vld [vmem:[%s6859] sm:$0x1]
        %s6861 = scalar_lea.vmem %s20, 1
        %v6862 = vld [vmem:[%s6861] sm:$0x1]
        %v6863 = vsel %vm814, %v6857, 0.0
        %6864 = vadd.xlane.f32.xlu0 %v6863
        %v6865 = vpop.xlane.xlu0 %6864
        %v6866 = vsel %vm814, %v6858, 0.0
        %6867 = vadd.xlane.f32.xlu0 %v6866
        %v6868 = vpop.xlane.xlu0 %6867
        %v6869 = vmul.f32 %v6865, %v1354
        %v6870 = vmul.f32 %v6868, %v1354
        %v6871 = vsub.f32 %v6857, %v6869
        %v6872 = vsub.f32 %v6858, %v6870
        %v6873 = vmul.f32 %v6871, %v6871
        %v6874 = vmul.f32 %v6872, %v6872
        %v6875 = vsel %vm814, %v6873, 0.0
        %6876 = vadd.xlane.f32.xlu0 %v6875
        %v6877 = vpop.xlane.xlu0 %6876
        %v6878 = vsel %vm814, %v6874, 0.0
        %6879 = vadd.xlane.f32.xlu0 %v6878
        %v6880 = vpop.xlane.xlu0 %6879
        %v6881 = vmul.f32 %v6877, %v1354
        %v6882 = vmul.f32 %v6880, %v1354
        %v6883 = vadd.f32 %v6881, 1e-05
        %v6884 = vadd.f32 %v6882, 1e-05
        %v6885 = vrsqrt.pop %v6883
        %v6886 = vmul.f32 %v6885, %v6883
        %v6887 = vmul.f32 %v6886, %v6885
        %v6888 = vmul.f32 0.5, %v6887
        %v6889 = vsub.f32 1.5, %v6888
        %v6890 = vmul.f32 %v6885, %v6889
        %vm6891 = vweird.f32 %v6883
        %vm6892 = vweird.f32 %v6885
        %vm6893 = vmor %vm6891, %vm6892
        %v6894 = vsel %vm6893, %v6885, %v6890
        %v6895 = vrsqrt.pop %v6884
        %v6896 = vmul.f32 %v6895, %v6884
        %v6897 = vmul.f32 %v6896, %v6895
        %v6898 = vmul.f32 0.5, %v6897
        %v6899 = vsub.f32 1.5, %v6898
        %v6900 = vmul.f32 %v6895, %v6899
        %vm6901 = vweird.f32 %v6884
        %vm6902 = vweird.f32 %v6895
        %vm6903 = vmor %vm6901, %vm6902
        %v6904 = vsel %vm6903, %v6895, %v6900
        %v6905 = vmul.f32 %v6871, %v6894
        %v6906 = vmul.f32 %v6872, %v6904
        %v6908 = vperm.slane %v6860, 0
        %v6910 = vmul.f32 %v6905, %v6908
        %v6911 = vmul.f32 %v6906, %v6908
        %v6913 = vperm.slane %v6862, 0
        %v6915 = vadd.f32 %v6910, %v6913
        %v6916 = vadd.f32 %v6911, %v6913
        %v6917 = vpack.c.bf16 %v6916, %v6915
        %s6918 = scalar_lea.vmem %s3, 32
        %v6919 = vld [vmem:[%s6918] sm:$0xf]
        %v6920 = vld [vmem:[%s6918 + $0x4] sm:$0xf]
        %v6921 = vld [vmem:[%s6918 + $0x8] sm:$0xf]
        %v6922 = vld [vmem:[%s6918 + $0xc] sm:$0xf]
        %s6923 = scalar_lea.vmem %s4, 2
        %v6924 = vld [vmem:[%s6923] sm:$0x1]
        %v6926 = vperm.slane %v6924, 0
        %v6932 = vunpack.c.l.b16 %v6919
        %v6933 = vunpack.c.l.b16 %v6920
        %v6934 = vunpack.c.l.b16 %v6921
        %v6935 = vunpack.c.l.b16 %v6922
        %v6936 = vpack.c.b16 %v6933, %v6932
        %v6937 = vpack.c.b16 %v6935, %v6934
        %v6941 = vsel %vm814, %v6917, 0
        %6943 = vmatpush.bf16.msra.mxu0 0
        %6944 = vmatpush.bf16.msra.mxu0 0
        %6945 = vmatpush.bf16.msra.mxu0 0
        %6946 = vmatpush.bf16.msra.mxu0 0
        %6947 = vmatpush.bf16.msra.mxu0 0
        %6948 = vmatpush.bf16.msra.mxu0 0
        %6949 = vmatpush.bf16.msra.mxu0 %v6937
        %6950 = vmatpush.bf16.msra.mxu0 %v6936
        %6951 = vmatmul.bf16.gmra.mxu0 %v6941
        %v6952 = vpop.f32.mrf.mxu0
        %v6953 = vadd.f32 %v6926, %v6952
        %v6954 = vpop.f32.mrf.mxu0
        %v6955 = vadd.f32 %v6926, %v6954
        %6956 = vdwg.mxu0
        %6957 = vrot.lane.b32.xlu0 %v6936, 96
        %v6958 = vpop.permute.xlu0 %6957
        %6959 = vrot.lane.b32.xlu0 %v6937, 96
        %v6960 = vpop.permute.xlu0 %6959
        %6963 = vrot.lane.b32.xlu0 %v6926, 96
        %v6964 = vpop.permute.xlu0 %6963
        %6966 = vmatpush.bf16.msra.mxu0 0
        %6967 = vmatpush.bf16.msra.mxu0 0
        %6968 = vmatpush.bf16.msra.mxu0 0
        %6969 = vmatpush.bf16.msra.mxu0 0
        %6970 = vmatpush.bf16.msra.mxu0 0
        %6971 = vmatpush.bf16.msra.mxu0 0
        %6972 = vmatpush.bf16.msra.mxu0 %v6960
        %6973 = vmatpush.bf16.msra.mxu0 %v6958
        %6974 = vmatmul.bf16.gmra.mxu0 %v6941
        %v6975 = vpop.f32.mrf.mxu0
        %v6976 = vadd.f32 %v6964, %v6975
        %v6977 = vpop.f32.mrf.mxu0
        %v6978 = vadd.f32 %v6964, %v6977
        %6979 = vdwg.mxu0
        %v6980 = vmul.f32 %v6953, 0.35355338
        %v6981 = vmul.f32 %v6955, 0.35355338
        %v6983 = vsel %vm857, %v6980, 0
        %v6986 = vsel %vm857, %v6981, 0
        %v6989 = vsel %vm857, %v6976, 0
        %v6992 = vsel %vm857, %v6978, 0
        %6994 = vmatpush.xpose.msra.mxu0 0.0
        %6995 = vmatpush.xpose.msra.mxu0 0.0
        %6996 = vmatpush.xpose.msra.mxu0 0.0
        %6997 = vmatpush.xpose.msra.mxu0 0.0
        %6998 = vmatpush.xpose.msra.mxu0 0.0
        %6999 = vmatpush.xpose.msra.mxu0 0.0
        %7000 = vmatpush.xpose.msra.mxu0 0.0
        %7001 = vmatpush.xpose.msra.mxu0 0.0
        %7002 = vmatpush.xpose.msra.mxu0 0.0
        %7003 = vmatpush.xpose.msra.mxu0 0.0
        %7004 = vmatpush.xpose.msra.mxu0 0.0
        %7005 = vmatpush.xpose.msra.mxu0 0.0
        %7006 = vmatpush.xpose.msra.mxu0 0.0
        %7007 = vmatpush.xpose.msra.mxu0 0.0
        %7008 = vmatpush.xpose.msra.mxu0 %v6992
        %7009 = vmatpush.xpose.msra.mxu0 %v6989
        %7010 = vmatmul.f32.gmra.mxu0 %v6983
        %v7011 = vpop.f32.mrf.mxu0
        %v7012 = vadd.f32 0.0, %v7011
        %7013 = vmatmul.f32.gmra.mxu0 %v6986
        %v7014 = vpop.f32.mrf.mxu0
        %v7015 = vadd.f32 0.0, %v7014
        %7016 = vdwg.mxu0
        %v7017 = vsel %vm893, %v7012, -inf
        %7018 = vmax.xlane.f32.xlu0 %v7017
        %v7019 = vpop.xlane.xlu0 %7018
        %v7020 = vsel %vm893, %v7015, -inf
        %7021 = vmax.xlane.f32.xlu0 %v7020
        %v7022 = vpop.xlane.xlu0 %7021
        %v7023 = vsub.f32 %v7012, %v7019
        %v7024 = vsub.f32 %v7015, %v7022
        %v7025 = vmul.f32 %v7023, 1.442695
        %v7026 = vpow.pop %v7025
        %v7027 = vmul.f32 %v7024, 1.442695
        %v7028 = vpow.pop %v7027
        %v7029 = vsel %vm893, %v7026, 0.0
        %7030 = vadd.xlane.f32.xlu0 %v7029
        %v7031 = vpop.xlane.xlu0 %7030
        %v7032 = vsel %vm893, %v7028, 0.0
        %7033 = vadd.xlane.f32.xlu0 %v7032
        %v7034 = vpop.xlane.xlu0 %7033
        %v7035 = vrcp.pop %v7031
        %v7036 = vrcp.pop %v7034
        %v7037 = vmul.f32 %v7026, %v7035
        %v7038 = vmul.f32 %v7028, %v7036
        %7039 = vrot.lane.b32.xlu0 %v6976, 96
        %v7040 = vpop.permute.xlu0 %7039
        %7041 = vrot.lane.b32.xlu0 %v6978, 96
        %v7042 = vpop.permute.xlu0 %7041
        %v7046 = vsel %vm893, %v7037, 0
        %v7049 = vsel %vm893, %v7038, 0
        %7051 = vmatpush.msra.mxu0 0.0
        %7052 = vmatpush.msra.mxu0 0.0
        %7053 = vmatpush.msra.mxu0 0.0
        %7054 = vmatpush.msra.mxu0 0.0
        %7055 = vmatpush.msra.mxu0 0.0
        %7056 = vmatpush.msra.mxu0 0.0
        %7057 = vmatpush.msra.mxu0 0.0
        %7058 = vmatpush.msra.mxu0 0.0
        %7059 = vmatpush.msra.mxu0 0.0
        %7060 = vmatpush.msra.mxu0 0.0
        %7061 = vmatpush.msra.mxu0 0.0
        %7062 = vmatpush.msra.mxu0 0.0
        %7063 = vmatpush.msra.mxu0 0.0
        %7064 = vmatpush.msra.mxu0 0.0
        %7065 = vmatpush.msra.mxu0 %v7042
        %7066 = vmatpush.msra.mxu0 %v7040
        %7067 = vmatmul.f32.gmra.mxu0 %v7046
        %v7068 = vpop.f32.mrf.mxu0
        %v7069 = vadd.f32 0.0, %v7068
        %7070 = vmatmul.f32.gmra.mxu0 %v7049
        %v7071 = vpop.f32.mrf.mxu0
        %v7072 = vadd.f32 0.0, %v7071
        %7073 = vdwg.mxu0
        %v7074 = vpack.c.bf16 %v7072, %v7069
        %s7075 = scalar_lea.vmem %s5, 32
        %v7076 = vld [vmem:[%s7075] sm:$0xf]
        %7077 = vrot.lane.b32.xlu0 %v6980, 120
        %v7078 = vpop.permute.xlu0 %7077
        %7079 = vrot.lane.b32.xlu0 %v6981, 120
        %v7080 = vpop.permute.xlu0 %7079
        %7081 = vrot.lane.b32.xlu0 %v6976, 120
        %v7082 = vpop.permute.xlu0 %7081
        %7083 = vrot.lane.b32.xlu0 %v6978, 120
        %v7084 = vpop.permute.xlu0 %7083
        %v7085 = vsel %vm857, %v7078, 0
        %v7087 = vsel %vm857, %v7080, 0
        %v7089 = vsel %vm857, %v7082, 0
        %v7091 = vsel %vm857, %v7084, 0
        %7093 = vmatpush.xpose.msra.mxu0 0.0
        %7094 = vmatpush.xpose.msra.mxu0 0.0
        %7095 = vmatpush.xpose.msra.mxu0 0.0
        %7096 = vmatpush.xpose.msra.mxu0 0.0
        %7097 = vmatpush.xpose.msra.mxu0 0.0
        %7098 = vmatpush.xpose.msra.mxu0 0.0
        %7099 = vmatpush.xpose.msra.mxu0 0.0
        %7100 = vmatpush.xpose.msra.mxu0 0.0
        %7101 = vmatpush.xpose.msra.mxu0 0.0
        %7102 = vmatpush.xpose.msra.mxu0 0.0
        %7103 = vmatpush.xpose.msra.mxu0 0.0
        %7104 = vmatpush.xpose.msra.mxu0 0.0
        %7105 = vmatpush.xpose.msra.mxu0 0.0
        %7106 = vmatpush.xpose.msra.mxu0 0.0
        %7107 = vmatpush.xpose.msra.mxu0 %v7091
        %7108 = vmatpush.xpose.msra.mxu0 %v7089
        %7109 = vmatmul.f32.gmra.mxu0 %v7085
        %v7110 = vpop.f32.mrf.mxu0
        %v7111 = vadd.f32 0.0, %v7110
        %7112 = vmatmul.f32.gmra.mxu0 %v7087
        %v7113 = vpop.f32.mrf.mxu0
        %v7114 = vadd.f32 0.0, %v7113
        %7115 = vdwg.mxu0
        %v7116 = vsel %vm893, %v7111, -inf
        %7117 = vmax.xlane.f32.xlu0 %v7116
        %v7118 = vpop.xlane.xlu0 %7117
        %v7119 = vsel %vm893, %v7114, -inf
        %7120 = vmax.xlane.f32.xlu0 %v7119
        %v7121 = vpop.xlane.xlu0 %7120
        %v7122 = vsub.f32 %v7111, %v7118
        %v7123 = vsub.f32 %v7114, %v7121
        %v7124 = vmul.f32 %v7122, 1.442695
        %v7125 = vpow.pop %v7124
        %v7126 = vmul.f32 %v7123, 1.442695
        %v7127 = vpow.pop %v7126
        %v7128 = vsel %vm893, %v7125, 0.0
        %7129 = vadd.xlane.f32.xlu0 %v7128
        %v7130 = vpop.xlane.xlu0 %7129
        %v7131 = vsel %vm893, %v7127, 0.0
        %7132 = vadd.xlane.f32.xlu0 %v7131
        %v7133 = vpop.xlane.xlu0 %7132
        %v7134 = vrcp.pop %v7130
        %v7135 = vrcp.pop %v7133
        %v7136 = vmul.f32 %v7125, %v7134
        %v7137 = vmul.f32 %v7127, %v7135
        %7138 = vrot.lane.b32.xlu0 %v6976, 88
        %v7139 = vpop.permute.xlu0 %7138
        %7140 = vrot.lane.b32.xlu0 %v6978, 88
        %v7141 = vpop.permute.xlu0 %7140
        %v7145 = vsel %vm893, %v7136, 0
        %v7148 = vsel %vm893, %v7137, 0
        %7150 = vmatpush.msra.mxu0 0.0
        %7151 = vmatpush.msra.mxu0 0.0
        %7152 = vmatpush.msra.mxu0 0.0
        %7153 = vmatpush.msra.mxu0 0.0
        %7154 = vmatpush.msra.mxu0 0.0
        %7155 = vmatpush.msra.mxu0 0.0
        %7156 = vmatpush.msra.mxu0 0.0
        %7157 = vmatpush.msra.mxu0 0.0
        %7158 = vmatpush.msra.mxu0 0.0
        %7159 = vmatpush.msra.mxu0 0.0
        %7160 = vmatpush.msra.mxu0 0.0
        %7161 = vmatpush.msra.mxu0 0.0
        %7162 = vmatpush.msra.mxu0 0.0
        %7163 = vmatpush.msra.mxu0 0.0
        %7164 = vmatpush.msra.mxu0 %v7141
        %7165 = vmatpush.msra.mxu0 %v7139
        %7166 = vmatmul.f32.gmra.mxu0 %v7145
        %v7167 = vpop.f32.mrf.mxu0
        %v7168 = vadd.f32 0.0, %v7167
        %7169 = vmatmul.f32.gmra.mxu0 %v7148
        %v7170 = vpop.f32.mrf.mxu0
        %v7171 = vadd.f32 0.0, %v7170
        %7172 = vdwg.mxu0
        %v7173 = vpack.c.bf16 %v7171, %v7168
        %v7174 = vld [vmem:[%s7075 + $0x4] sm:$0xf]
        %v7176 = vsel %vm857, %v7173, 0
        %v7179 = vsel %vm1054, %v7174, 0
        %7181 = vmatpush.bf16.msra.mxu0 0
        %7182 = vmatpush.bf16.msra.mxu0 0
        %7183 = vmatpush.bf16.msra.mxu0 0
        %7184 = vmatpush.bf16.msra.mxu0 0
        %7185 = vmatpush.bf16.msra.mxu0 0
        %7186 = vmatpush.bf16.msra.mxu0 0
        %7187 = vmatpush.bf16.msra.mxu0 0
        %7188 = vmatpush.bf16.msra.mxu0 %v7179
        %7189 = vmatmul.bf16.gmra.mxu0 %v7176
        %v7190 = vpop.f32.mrf.mxu0
        %v7191 = vadd.f32 0.0, %v7190
        %v7192 = vpop.f32.mrf.mxu0
        %v7193 = vadd.f32 0.0, %v7192
        %7194 = vdwg.mxu0
        %v7196 = vsel %vm857, %v7074, 0
        %v7199 = vsel %vm1054, %v7076, 0
        %7201 = vmatpush.bf16.msra.mxu0 0
        %7202 = vmatpush.bf16.msra.mxu0 0
        %7203 = vmatpush.bf16.msra.mxu0 0
        %7204 = vmatpush.bf16.msra.mxu0 0
        %7205 = vmatpush.bf16.msra.mxu0 0
        %7206 = vmatpush.bf16.msra.mxu0 0
        %7207 = vmatpush.bf16.msra.mxu0 0
        %7208 = vmatpush.bf16.msra.mxu0 %v7199
        %7209 = vmatmul.bf16.gmra.mxu0 %v7196
        %v7210 = vpop.f32.mrf.mxu0
        %v7211 = vadd.f32 %v7191, %v7210
        %v7212 = vpop.f32.mrf.mxu0
        %v7213 = vadd.f32 %v7193, %v7212
        %7214 = vdwg.mxu0
        %7215 = vrot.lane.b32.xlu0 %v6980, 112
        %v7216 = vpop.permute.xlu0 %7215
        %7217 = vrot.lane.b32.xlu0 %v6981, 112
        %v7218 = vpop.permute.xlu0 %7217
        %7219 = vrot.lane.b32.xlu0 %v6976, 112
        %v7220 = vpop.permute.xlu0 %7219
        %7221 = vrot.lane.b32.xlu0 %v6978, 112
        %v7222 = vpop.permute.xlu0 %7221
        %v7223 = vsel %vm857, %v7216, 0
        %v7225 = vsel %vm857, %v7218, 0
        %v7227 = vsel %vm857, %v7220, 0
        %v7229 = vsel %vm857, %v7222, 0
        %7231 = vmatpush.xpose.msra.mxu0 0.0
        %7232 = vmatpush.xpose.msra.mxu0 0.0
        %7233 = vmatpush.xpose.msra.mxu0 0.0
        %7234 = vmatpush.xpose.msra.mxu0 0.0
        %7235 = vmatpush.xpose.msra.mxu0 0.0
        %7236 = vmatpush.xpose.msra.mxu0 0.0
        %7237 = vmatpush.xpose.msra.mxu0 0.0
        %7238 = vmatpush.xpose.msra.mxu0 0.0
        %7239 = vmatpush.xpose.msra.mxu0 0.0
        %7240 = vmatpush.xpose.msra.mxu0 0.0
        %7241 = vmatpush.xpose.msra.mxu0 0.0
        %7242 = vmatpush.xpose.msra.mxu0 0.0
        %7243 = vmatpush.xpose.msra.mxu0 0.0
        %7244 = vmatpush.xpose.msra.mxu0 0.0
        %7245 = vmatpush.xpose.msra.mxu0 %v7229
        %7246 = vmatpush.xpose.msra.mxu0 %v7227
        %7247 = vmatmul.f32.gmra.mxu0 %v7223
        %v7248 = vpop.f32.mrf.mxu0
        %v7249 = vadd.f32 0.0, %v7248
        %7250 = vmatmul.f32.gmra.mxu0 %v7225
        %v7251 = vpop.f32.mrf.mxu0
        %v7252 = vadd.f32 0.0, %v7251
        %7253 = vdwg.mxu0
        %v7254 = vsel %vm893, %v7249, -inf
        %7255 = vmax.xlane.f32.xlu0 %v7254
        %v7256 = vpop.xlane.xlu0 %7255
        %v7257 = vsel %vm893, %v7252, -inf
        %7258 = vmax.xlane.f32.xlu0 %v7257
        %v7259 = vpop.xlane.xlu0 %7258
        %v7260 = vsub.f32 %v7249, %v7256
        %v7261 = vsub.f32 %v7252, %v7259
        %v7262 = vmul.f32 %v7260, 1.442695
        %v7263 = vpow.pop %v7262
        %v7264 = vmul.f32 %v7261, 1.442695
        %v7265 = vpow.pop %v7264
        %v7266 = vsel %vm893, %v7263, 0.0
        %7267 = vadd.xlane.f32.xlu0 %v7266
        %v7268 = vpop.xlane.xlu0 %7267
        %v7269 = vsel %vm893, %v7265, 0.0
        %7270 = vadd.xlane.f32.xlu0 %v7269
        %v7271 = vpop.xlane.xlu0 %7270
        %v7272 = vrcp.pop %v7268
        %v7273 = vrcp.pop %v7271
        %v7274 = vmul.f32 %v7263, %v7272
        %v7275 = vmul.f32 %v7265, %v7273
        %7276 = vrot.lane.b32.xlu0 %v6976, 80
        %v7277 = vpop.permute.xlu0 %7276
        %7278 = vrot.lane.b32.xlu0 %v6978, 80
        %v7279 = vpop.permute.xlu0 %7278
        %v7283 = vsel %vm893, %v7274, 0
        %v7286 = vsel %vm893, %v7275, 0
        %7288 = vmatpush.msra.mxu0 0.0
        %7289 = vmatpush.msra.mxu0 0.0
        %7290 = vmatpush.msra.mxu0 0.0
        %7291 = vmatpush.msra.mxu0 0.0
        %7292 = vmatpush.msra.mxu0 0.0
        %7293 = vmatpush.msra.mxu0 0.0
        %7294 = vmatpush.msra.mxu0 0.0
        %7295 = vmatpush.msra.mxu0 0.0
        %7296 = vmatpush.msra.mxu0 0.0
        %7297 = vmatpush.msra.mxu0 0.0
        %7298 = vmatpush.msra.mxu0 0.0
        %7299 = vmatpush.msra.mxu0 0.0
        %7300 = vmatpush.msra.mxu0 0.0
        %7301 = vmatpush.msra.mxu0 0.0
        %7302 = vmatpush.msra.mxu0 %v7279
        %7303 = vmatpush.msra.mxu0 %v7277
        %7304 = vmatmul.f32.gmra.mxu0 %v7283
        %v7305 = vpop.f32.mrf.mxu0
        %v7306 = vadd.f32 0.0, %v7305
        %7307 = vmatmul.f32.gmra.mxu0 %v7286
        %v7308 = vpop.f32.mrf.mxu0
        %v7309 = vadd.f32 0.0, %v7308
        %7310 = vdwg.mxu0
        %v7311 = vpack.c.bf16 %v7309, %v7306
        %v7312 = vld [vmem:[%s7075 + $0x8] sm:$0xf]
        %v7314 = vsel %vm857, %v7311, 0
        %v7317 = vsel %vm1054, %v7312, 0
        %7319 = vmatpush.bf16.msra.mxu0 0
        %7320 = vmatpush.bf16.msra.mxu0 0
        %7321 = vmatpush.bf16.msra.mxu0 0
        %7322 = vmatpush.bf16.msra.mxu0 0
        %7323 = vmatpush.bf16.msra.mxu0 0
        %7324 = vmatpush.bf16.msra.mxu0 0
        %7325 = vmatpush.bf16.msra.mxu0 0
        %7326 = vmatpush.bf16.msra.mxu0 %v7317
        %7327 = vmatmul.bf16.gmra.mxu0 %v7314
        %v7328 = vpop.f32.mrf.mxu0
        %v7329 = vadd.f32 0.0, %v7328
        %v7330 = vpop.f32.mrf.mxu0
        %v7331 = vadd.f32 0.0, %v7330
        %7332 = vdwg.mxu0
        %v7333 = vadd.f32 %v7211, %v7329
        %v7334 = vadd.f32 %v7213, %v7331
        %7335 = vrot.lane.b32.xlu0 %v6980, 104
        %v7336 = vpop.permute.xlu0 %7335
        %7337 = vrot.lane.b32.xlu0 %v6981, 104
        %v7338 = vpop.permute.xlu0 %7337
        %7339 = vrot.lane.b32.xlu0 %v6976, 104
        %v7340 = vpop.permute.xlu0 %7339
        %7341 = vrot.lane.b32.xlu0 %v6978, 104
        %v7342 = vpop.permute.xlu0 %7341
        %v7343 = vsel %vm857, %v7336, 0
        %v7345 = vsel %vm857, %v7338, 0
        %v7347 = vsel %vm857, %v7340, 0
        %v7349 = vsel %vm857, %v7342, 0
        %7351 = vmatpush.xpose.msra.mxu0 0.0
        %7352 = vmatpush.xpose.msra.mxu0 0.0
        %7353 = vmatpush.xpose.msra.mxu0 0.0
        %7354 = vmatpush.xpose.msra.mxu0 0.0
        %7355 = vmatpush.xpose.msra.mxu0 0.0
        %7356 = vmatpush.xpose.msra.mxu0 0.0
        %7357 = vmatpush.xpose.msra.mxu0 0.0
        %7358 = vmatpush.xpose.msra.mxu0 0.0
        %7359 = vmatpush.xpose.msra.mxu0 0.0
        %7360 = vmatpush.xpose.msra.mxu0 0.0
        %7361 = vmatpush.xpose.msra.mxu0 0.0
        %7362 = vmatpush.xpose.msra.mxu0 0.0
        %7363 = vmatpush.xpose.msra.mxu0 0.0
        %7364 = vmatpush.xpose.msra.mxu0 0.0
        %7365 = vmatpush.xpose.msra.mxu0 %v7349
        %7366 = vmatpush.xpose.msra.mxu0 %v7347
        %7367 = vmatmul.f32.gmra.mxu0 %v7343
        %v7368 = vpop.f32.mrf.mxu0
        %v7369 = vadd.f32 0.0, %v7368
        %7370 = vmatmul.f32.gmra.mxu0 %v7345
        %v7371 = vpop.f32.mrf.mxu0
        %v7372 = vadd.f32 0.0, %v7371
        %7373 = vdwg.mxu0
        %v7374 = vsel %vm893, %v7369, -inf
        %7375 = vmax.xlane.f32.xlu0 %v7374
        %v7376 = vpop.xlane.xlu0 %7375
        %v7377 = vsel %vm893, %v7372, -inf
        %7378 = vmax.xlane.f32.xlu0 %v7377
        %v7379 = vpop.xlane.xlu0 %7378
        %v7380 = vsub.f32 %v7369, %v7376
        %v7381 = vsub.f32 %v7372, %v7379
        %v7382 = vmul.f32 %v7380, 1.442695
        %v7383 = vpow.pop %v7382
        %v7384 = vmul.f32 %v7381, 1.442695
        %v7385 = vpow.pop %v7384
        %v7386 = vsel %vm893, %v7383, 0.0
        %7387 = vadd.xlane.f32.xlu0 %v7386
        %v7388 = vpop.xlane.xlu0 %7387
        %v7389 = vsel %vm893, %v7385, 0.0
        %7390 = vadd.xlane.f32.xlu0 %v7389
        %v7391 = vpop.xlane.xlu0 %7390
        %v7392 = vrcp.pop %v7388
        %v7393 = vrcp.pop %v7391
        %v7394 = vmul.f32 %v7383, %v7392
        %v7395 = vmul.f32 %v7385, %v7393
        %7396 = vrot.lane.b32.xlu0 %v6976, 72
        %v7397 = vpop.permute.xlu0 %7396
        %7398 = vrot.lane.b32.xlu0 %v6978, 72
        %v7399 = vpop.permute.xlu0 %7398
        %v7403 = vsel %vm893, %v7394, 0
        %v7406 = vsel %vm893, %v7395, 0
        %7408 = vmatpush.msra.mxu0 0.0
        %7409 = vmatpush.msra.mxu0 0.0
        %7410 = vmatpush.msra.mxu0 0.0
        %7411 = vmatpush.msra.mxu0 0.0
        %7412 = vmatpush.msra.mxu0 0.0
        %7413 = vmatpush.msra.mxu0 0.0
        %7414 = vmatpush.msra.mxu0 0.0
        %7415 = vmatpush.msra.mxu0 0.0
        %7416 = vmatpush.msra.mxu0 0.0
        %7417 = vmatpush.msra.mxu0 0.0
        %7418 = vmatpush.msra.mxu0 0.0
        %7419 = vmatpush.msra.mxu0 0.0
        %7420 = vmatpush.msra.mxu0 0.0
        %7421 = vmatpush.msra.mxu0 0.0
        %7422 = vmatpush.msra.mxu0 %v7399
        %7423 = vmatpush.msra.mxu0 %v7397
        %7424 = vmatmul.f32.gmra.mxu0 %v7403
        %v7425 = vpop.f32.mrf.mxu0
        %v7426 = vadd.f32 0.0, %v7425
        %7427 = vmatmul.f32.gmra.mxu0 %v7406
        %v7428 = vpop.f32.mrf.mxu0
        %v7429 = vadd.f32 0.0, %v7428
        %7430 = vdwg.mxu0
        %v7431 = vpack.c.bf16 %v7429, %v7426
        %v7432 = vld [vmem:[%s7075 + $0xc] sm:$0xf]
        %v7434 = vsel %vm857, %v7431, 0
        %v7437 = vsel %vm1054, %v7432, 0
        %7439 = vmatpush.bf16.msra.mxu0 0
        %7440 = vmatpush.bf16.msra.mxu0 0
        %7441 = vmatpush.bf16.msra.mxu0 0
        %7442 = vmatpush.bf16.msra.mxu0 0
        %7443 = vmatpush.bf16.msra.mxu0 0
        %7444 = vmatpush.bf16.msra.mxu0 0
        %7445 = vmatpush.bf16.msra.mxu0 0
        %7446 = vmatpush.bf16.msra.mxu0 %v7437
        %7447 = vmatmul.bf16.gmra.mxu0 %v7434
        %v7448 = vpop.f32.mrf.mxu0
        %v7449 = vadd.f32 0.0, %v7448
        %v7450 = vpop.f32.mrf.mxu0
        %v7451 = vadd.f32 0.0, %v7450
        %7452 = vdwg.mxu0
        %v7453 = vadd.f32 %v7333, %v7449
        %v7454 = vadd.f32 %v7334, %v7451
        %s7455 = scalar_lea.vmem %s6, 2
        %v7456 = vld [vmem:[%s7455] sm:$0x1]
        %v7458 = vperm.slane %v7456, 0
        %v7460 = vadd.f32 %v7453, %v7458
        %v7461 = vadd.f32 %v7454, %v7458
        %v7462 = vadd.f32 %v6915, %v7460
        %v7463 = vadd.f32 %v6916, %v7461
        %s7464 = scalar_lea.vmem %s15, 2
        %v7465 = vld [vmem:[%s7464] sm:$0x1]
        %s7466 = scalar_lea.vmem %s16, 2
        %v7467 = vld [vmem:[%s7466] sm:$0x1]
        %v7468 = vsel %vm814, %v7462, 0.0
        %7469 = vadd.xlane.f32.xlu0 %v7468
        %v7470 = vpop.xlane.xlu0 %7469
        %v7471 = vsel %vm814, %v7463, 0.0
        %7472 = vadd.xlane.f32.xlu0 %v7471
        %v7473 = vpop.xlane.xlu0 %7472
        %v7474 = vmul.f32 %v7470, %v1354
        %v7475 = vmul.f32 %v7473, %v1354
        %v7476 = vsub.f32 %v7462, %v7474
        %v7477 = vsub.f32 %v7463, %v7475
        %v7478 = vmul.f32 %v7476, %v7476
        %v7479 = vmul.f32 %v7477, %v7477
        %v7480 = vsel %vm814, %v7478, 0.0
        %7481 = vadd.xlane.f32.xlu0 %v7480
        %v7482 = vpop.xlane.xlu0 %7481
        %v7483 = vsel %vm814, %v7479, 0.0
        %7484 = vadd.xlane.f32.xlu0 %v7483
        %v7485 = vpop.xlane.xlu0 %7484
        %v7486 = vmul.f32 %v7482, %v1354
        %v7487 = vmul.f32 %v7485, %v1354
        %v7488 = vadd.f32 %v7486, 1e-05
        %v7489 = vadd.f32 %v7487, 1e-05
        %v7490 = vrsqrt.pop %v7488
        %v7491 = vmul.f32 %v7490, %v7488
        %v7492 = vmul.f32 %v7491, %v7490
        %v7493 = vmul.f32 0.5, %v7492
        %v7494 = vsub.f32 1.5, %v7493
        %v7495 = vmul.f32 %v7490, %v7494
        %vm7496 = vweird.f32 %v7488
        %vm7497 = vweird.f32 %v7490
        %vm7498 = vmor %vm7496, %vm7497
        %v7499 = vsel %vm7498, %v7490, %v7495
        %v7500 = vrsqrt.pop %v7489
        %v7501 = vmul.f32 %v7500, %v7489
        %v7502 = vmul.f32 %v7501, %v7500
        %v7503 = vmul.f32 0.5, %v7502
        %v7504 = vsub.f32 1.5, %v7503
        %v7505 = vmul.f32 %v7500, %v7504
        %vm7506 = vweird.f32 %v7489
        %vm7507 = vweird.f32 %v7500
        %vm7508 = vmor %vm7506, %vm7507
        %v7509 = vsel %vm7508, %v7500, %v7505
        %v7510 = vmul.f32 %v7476, %v7499
        %v7511 = vmul.f32 %v7477, %v7509
        %v7513 = vperm.slane %v7465, 0
        %v7515 = vmul.f32 %v7510, %v7513
        %v7516 = vmul.f32 %v7511, %v7513
        %v7518 = vperm.slane %v7467, 0
        %v7520 = vadd.f32 %v7515, %v7518
        %v7521 = vadd.f32 %v7516, %v7518
        %v7522 = vpack.c.bf16 %v7521, %v7520
        %s7523 = scalar_lea.vmem %s7, 32
        %v7524 = vld [vmem:[%s7523] sm:$0xf]
        %v7525 = vld [vmem:[%s7523 + $0x4] sm:$0xf]
        %v7526 = vld [vmem:[%s7523 + $0x8] sm:$0xf]
        %v7527 = vld [vmem:[%s7523 + $0xc] sm:$0xf]
        %s7528 = scalar_lea.vmem %s8, 2
        %v7529 = vld [vmem:[%s7528] sm:$0x1]
        %v7531 = vperm.slane %v7529, 0
        %v7537 = vunpack.c.l.b16 %v7524
        %v7538 = vunpack.c.l.b16 %v7525
        %v7539 = vunpack.c.l.b16 %v7526
        %v7540 = vunpack.c.l.b16 %v7527
        %v7541 = vpack.c.b16 %v7538, %v7537
        %v7542 = vpack.c.b16 %v7540, %v7539
        %v7546 = vsel %vm814, %v7522, 0
        %7548 = vmatpush.bf16.msra.mxu0 0
        %7549 = vmatpush.bf16.msra.mxu0 0
        %7550 = vmatpush.bf16.msra.mxu0 0
        %7551 = vmatpush.bf16.msra.mxu0 0
        %7552 = vmatpush.bf16.msra.mxu0 0
        %7553 = vmatpush.bf16.msra.mxu0 0
        %7554 = vmatpush.bf16.msra.mxu0 %v7542
        %7555 = vmatpush.bf16.msra.mxu0 %v7541
        %7556 = vmatmul.bf16.gmra.mxu0 %v7546
        %v7557 = vpop.f32.mrf.mxu0
        %v7558 = vadd.f32 %v7531, %v7557
        %v7559 = vpop.f32.mrf.mxu0
        %v7560 = vadd.f32 %v7531, %v7559
        %7561 = vdwg.mxu0
        %7562 = vrot.lane.b32.xlu0 %v7541, 96
        %v7563 = vpop.permute.xlu0 %7562
        %7564 = vrot.lane.b32.xlu0 %v7542, 96
        %v7565 = vpop.permute.xlu0 %7564
        %7568 = vrot.lane.b32.xlu0 %v7531, 96
        %v7569 = vpop.permute.xlu0 %7568
        %7571 = vmatpush.bf16.msra.mxu0 0
        %7572 = vmatpush.bf16.msra.mxu0 0
        %7573 = vmatpush.bf16.msra.mxu0 0
        %7574 = vmatpush.bf16.msra.mxu0 0
        %7575 = vmatpush.bf16.msra.mxu0 0
        %7576 = vmatpush.bf16.msra.mxu0 0
        %7577 = vmatpush.bf16.msra.mxu0 %v7565
        %7578 = vmatpush.bf16.msra.mxu0 %v7563
        %7579 = vmatmul.bf16.gmra.mxu0 %v1453
        %v7580 = vpop.f32.mrf.mxu0
        %v7581 = vadd.f32 %v7569, %v7580
        %v7582 = vpop.f32.mrf.mxu0
        %v7583 = vadd.f32 %v7569, %v7582
        %7584 = vmatmul.bf16.gmra.mxu0 %v1456
        %v7585 = vpop.f32.mrf.mxu0
        %v7586 = vadd.f32 %v7569, %v7585
        %v7587 = vpop.f32.mrf.mxu0
        %7588 = vdwg.mxu0
        %v7589 = vmul.f32 %v7558, 0.35355338
        %v7590 = vmul.f32 %v7560, 0.35355338
        %v7592 = vsel %vm857, %v7589, 0
        %v7595 = vsel %vm857, %v7590, 0
        %v7598 = vsel %vm857, %v7581, 0
        %v7601 = vsel %vm857, %v7583, 0
        %v7604 = vsel %vm857, %v7586, 0
        %7606 = vmatpush.xpose.msra.mxu0 0.0
        %7607 = vmatpush.xpose.msra.mxu0 0.0
        %7608 = vmatpush.xpose.msra.mxu0 0.0
        %7609 = vmatpush.xpose.msra.mxu0 0.0
        %7610 = vmatpush.xpose.msra.mxu0 0.0
        %7611 = vmatpush.xpose.msra.mxu0 0.0
        %7612 = vmatpush.xpose.msra.mxu0 0.0
        %7613 = vmatpush.xpose.msra.mxu0 0.0
        %7614 = vmatpush.xpose.msra.mxu0 0.0
        %7615 = vmatpush.xpose.msra.mxu0 0.0
        %7616 = vmatpush.xpose.msra.mxu0 0.0
        %7617 = vmatpush.xpose.msra.mxu0 0.0
        %7618 = vmatpush.xpose.msra.mxu0 0.0
        %7619 = vmatpush.xpose.msra.mxu0 %v7604
        %7620 = vmatpush.xpose.msra.mxu0 %v7601
        %7621 = vmatpush.xpose.msra.mxu0 %v7598
        %7622 = vmatmul.f32.gmra.mxu0 %v7592
        %v7623 = vpop.f32.mrf.mxu0
        %v7624 = vadd.f32 0.0, %v7623
        %7625 = vmatmul.f32.gmra.mxu0 %v7595
        %v7626 = vpop.f32.mrf.mxu0
        %v7627 = vadd.f32 0.0, %v7626
        %7628 = vdwg.mxu0
        %v7629 = vsel %vm1516, %v7624, -inf
        %7630 = vmax.xlane.f32.xlu0 %v7629
        %v7631 = vpop.xlane.xlu0 %7630
        %v7632 = vsel %vm1516, %v7627, -inf
        %7633 = vmax.xlane.f32.xlu0 %v7632
        %v7634 = vpop.xlane.xlu0 %7633
        %v7635 = vsub.f32 %v7624, %v7631
        %v7636 = vsub.f32 %v7627, %v7634
        %v7637 = vmul.f32 %v7635, 1.442695
        %v7638 = vpow.pop %v7637
        %v7639 = vmul.f32 %v7636, 1.442695
        %v7640 = vpow.pop %v7639
        %v7641 = vsel %vm1516, %v7638, 0.0
        %7642 = vadd.xlane.f32.xlu0 %v7641
        %v7643 = vpop.xlane.xlu0 %7642
        %v7644 = vsel %vm1516, %v7640, 0.0
        %7645 = vadd.xlane.f32.xlu0 %v7644
        %v7646 = vpop.xlane.xlu0 %7645
        %v7647 = vrcp.pop %v7643
        %v7648 = vrcp.pop %v7646
        %v7649 = vmul.f32 %v7638, %v7647
        %v7650 = vmul.f32 %v7640, %v7648
        %7651 = vrot.lane.b32.xlu0 %v7581, 96
        %v7652 = vpop.permute.xlu0 %7651
        %7653 = vrot.lane.b32.xlu0 %v7583, 96
        %v7654 = vpop.permute.xlu0 %7653
        %7655 = vrot.lane.b32.xlu0 %v7586, 96
        %v7656 = vpop.permute.xlu0 %7655
        %v7661 = vsel %vm1516, %v7649, 0
        %v7664 = vsel %vm1516, %v7650, 0
        %7666 = vmatpush.msra.mxu0 0.0
        %7667 = vmatpush.msra.mxu0 0.0
        %7668 = vmatpush.msra.mxu0 0.0
        %7669 = vmatpush.msra.mxu0 0.0
        %7670 = vmatpush.msra.mxu0 0.0
        %7671 = vmatpush.msra.mxu0 0.0
        %7672 = vmatpush.msra.mxu0 0.0
        %7673 = vmatpush.msra.mxu0 0.0
        %7674 = vmatpush.msra.mxu0 0.0
        %7675 = vmatpush.msra.mxu0 0.0
        %7676 = vmatpush.msra.mxu0 0.0
        %7677 = vmatpush.msra.mxu0 0.0
        %7678 = vmatpush.msra.mxu0 0.0
        %7679 = vmatpush.msra.mxu0 %v7656
        %7680 = vmatpush.msra.mxu0 %v7654
        %7681 = vmatpush.msra.mxu0 %v7652
        %7682 = vmatmul.f32.gmra.mxu0 %v7661
        %v7683 = vpop.f32.mrf.mxu0
        %v7684 = vadd.f32 0.0, %v7683
        %7685 = vmatmul.f32.gmra.mxu0 %v7664
        %v7686 = vpop.f32.mrf.mxu0
        %v7687 = vadd.f32 0.0, %v7686
        %7688 = vdwg.mxu0
        %v7689 = vpack.c.bf16 %v7687, %v7684
        %s7690 = scalar_lea.vmem %s9, 32
        %v7691 = vld [vmem:[%s7690] sm:$0xf]
        %7692 = vrot.lane.b32.xlu0 %v7589, 120
        %v7693 = vpop.permute.xlu0 %7692
        %7694 = vrot.lane.b32.xlu0 %v7590, 120
        %v7695 = vpop.permute.xlu0 %7694
        %7696 = vrot.lane.b32.xlu0 %v7581, 120
        %v7697 = vpop.permute.xlu0 %7696
        %7698 = vrot.lane.b32.xlu0 %v7583, 120
        %v7699 = vpop.permute.xlu0 %7698
        %7700 = vrot.lane.b32.xlu0 %v7586, 120
        %v7701 = vpop.permute.xlu0 %7700
        %v7702 = vsel %vm857, %v7693, 0
        %v7704 = vsel %vm857, %v7695, 0
        %v7706 = vsel %vm857, %v7697, 0
        %v7708 = vsel %vm857, %v7699, 0
        %v7710 = vsel %vm857, %v7701, 0
        %7712 = vmatpush.xpose.msra.mxu0 0.0
        %7713 = vmatpush.xpose.msra.mxu0 0.0
        %7714 = vmatpush.xpose.msra.mxu0 0.0
        %7715 = vmatpush.xpose.msra.mxu0 0.0
        %7716 = vmatpush.xpose.msra.mxu0 0.0
        %7717 = vmatpush.xpose.msra.mxu0 0.0
        %7718 = vmatpush.xpose.msra.mxu0 0.0
        %7719 = vmatpush.xpose.msra.mxu0 0.0
        %7720 = vmatpush.xpose.msra.mxu0 0.0
        %7721 = vmatpush.xpose.msra.mxu0 0.0
        %7722 = vmatpush.xpose.msra.mxu0 0.0
        %7723 = vmatpush.xpose.msra.mxu0 0.0
        %7724 = vmatpush.xpose.msra.mxu0 0.0
        %7725 = vmatpush.xpose.msra.mxu0 %v7710
        %7726 = vmatpush.xpose.msra.mxu0 %v7708
        %7727 = vmatpush.xpose.msra.mxu0 %v7706
        %7728 = vmatmul.f32.gmra.mxu0 %v7702
        %v7729 = vpop.f32.mrf.mxu0
        %v7730 = vadd.f32 0.0, %v7729
        %7731 = vmatmul.f32.gmra.mxu0 %v7704
        %v7732 = vpop.f32.mrf.mxu0
        %v7733 = vadd.f32 0.0, %v7732
        %7734 = vdwg.mxu0
        %v7735 = vsel %vm1516, %v7730, -inf
        %7736 = vmax.xlane.f32.xlu0 %v7735
        %v7737 = vpop.xlane.xlu0 %7736
        %v7738 = vsel %vm1516, %v7733, -inf
        %7739 = vmax.xlane.f32.xlu0 %v7738
        %v7740 = vpop.xlane.xlu0 %7739
        %v7741 = vsub.f32 %v7730, %v7737
        %v7742 = vsub.f32 %v7733, %v7740
        %v7743 = vmul.f32 %v7741, 1.442695
        %v7744 = vpow.pop %v7743
        %v7745 = vmul.f32 %v7742, 1.442695
        %v7746 = vpow.pop %v7745
        %v7747 = vsel %vm1516, %v7744, 0.0
        %7748 = vadd.xlane.f32.xlu0 %v7747
        %v7749 = vpop.xlane.xlu0 %7748
        %v7750 = vsel %vm1516, %v7746, 0.0
        %7751 = vadd.xlane.f32.xlu0 %v7750
        %v7752 = vpop.xlane.xlu0 %7751
        %v7753 = vrcp.pop %v7749
        %v7754 = vrcp.pop %v7752
        %v7755 = vmul.f32 %v7744, %v7753
        %v7756 = vmul.f32 %v7746, %v7754
        %7757 = vrot.lane.b32.xlu0 %v7581, 88
        %v7758 = vpop.permute.xlu0 %7757
        %7759 = vrot.lane.b32.xlu0 %v7583, 88
        %v7760 = vpop.permute.xlu0 %7759
        %7761 = vrot.lane.b32.xlu0 %v7586, 88
        %v7762 = vpop.permute.xlu0 %7761
        %v7767 = vsel %vm1516, %v7755, 0
        %v7770 = vsel %vm1516, %v7756, 0
        %7772 = vmatpush.msra.mxu0 0.0
        %7773 = vmatpush.msra.mxu0 0.0
        %7774 = vmatpush.msra.mxu0 0.0
        %7775 = vmatpush.msra.mxu0 0.0
        %7776 = vmatpush.msra.mxu0 0.0
        %7777 = vmatpush.msra.mxu0 0.0
        %7778 = vmatpush.msra.mxu0 0.0
        %7779 = vmatpush.msra.mxu0 0.0
        %7780 = vmatpush.msra.mxu0 0.0
        %7781 = vmatpush.msra.mxu0 0.0
        %7782 = vmatpush.msra.mxu0 0.0
        %7783 = vmatpush.msra.mxu0 0.0
        %7784 = vmatpush.msra.mxu0 0.0
        %7785 = vmatpush.msra.mxu0 %v7762
        %7786 = vmatpush.msra.mxu0 %v7760
        %7787 = vmatpush.msra.mxu0 %v7758
        %7788 = vmatmul.f32.gmra.mxu0 %v7767
        %v7789 = vpop.f32.mrf.mxu0
        %v7790 = vadd.f32 0.0, %v7789
        %7791 = vmatmul.f32.gmra.mxu0 %v7770
        %v7792 = vpop.f32.mrf.mxu0
        %v7793 = vadd.f32 0.0, %v7792
        %7794 = vdwg.mxu0
        %v7795 = vpack.c.bf16 %v7793, %v7790
        %v7796 = vld [vmem:[%s7690 + $0x4] sm:$0xf]
        %v7798 = vsel %vm857, %v7795, 0
        %v7801 = vsel %vm1054, %v7796, 0
        %7803 = vmatpush.bf16.msra.mxu0 0
        %7804 = vmatpush.bf16.msra.mxu0 0
        %7805 = vmatpush.bf16.msra.mxu0 0
        %7806 = vmatpush.bf16.msra.mxu0 0
        %7807 = vmatpush.bf16.msra.mxu0 0
        %7808 = vmatpush.bf16.msra.mxu0 0
        %7809 = vmatpush.bf16.msra.mxu0 0
        %7810 = vmatpush.bf16.msra.mxu0 %v7801
        %7811 = vmatmul.bf16.gmra.mxu0 %v7798
        %v7812 = vpop.f32.mrf.mxu0
        %v7813 = vadd.f32 0.0, %v7812
        %v7814 = vpop.f32.mrf.mxu0
        %v7815 = vadd.f32 0.0, %v7814
        %7816 = vdwg.mxu0
        %v7818 = vsel %vm857, %v7689, 0
        %v7821 = vsel %vm1054, %v7691, 0
        %7823 = vmatpush.bf16.msra.mxu0 0
        %7824 = vmatpush.bf16.msra.mxu0 0
        %7825 = vmatpush.bf16.msra.mxu0 0
        %7826 = vmatpush.bf16.msra.mxu0 0
        %7827 = vmatpush.bf16.msra.mxu0 0
        %7828 = vmatpush.bf16.msra.mxu0 0
        %7829 = vmatpush.bf16.msra.mxu0 0
        %7830 = vmatpush.bf16.msra.mxu0 %v7821
        %7831 = vmatmul.bf16.gmra.mxu0 %v7818
        %v7832 = vpop.f32.mrf.mxu0
        %v7833 = vadd.f32 %v7813, %v7832
        %v7834 = vpop.f32.mrf.mxu0
        %v7835 = vadd.f32 %v7815, %v7834
        %7836 = vdwg.mxu0
        %7837 = vrot.lane.b32.xlu0 %v7589, 112
        %v7838 = vpop.permute.xlu0 %7837
        %7839 = vrot.lane.b32.xlu0 %v7590, 112
        %v7840 = vpop.permute.xlu0 %7839
        %7841 = vrot.lane.b32.xlu0 %v7581, 112
        %v7842 = vpop.permute.xlu0 %7841
        %7843 = vrot.lane.b32.xlu0 %v7583, 112
        %v7844 = vpop.permute.xlu0 %7843
        %7845 = vrot.lane.b32.xlu0 %v7586, 112
        %v7846 = vpop.permute.xlu0 %7845
        %v7847 = vsel %vm857, %v7838, 0
        %v7849 = vsel %vm857, %v7840, 0
        %v7851 = vsel %vm857, %v7842, 0
        %v7853 = vsel %vm857, %v7844, 0
        %v7855 = vsel %vm857, %v7846, 0
        %7857 = vmatpush.xpose.msra.mxu0 0.0
        %7858 = vmatpush.xpose.msra.mxu0 0.0
        %7859 = vmatpush.xpose.msra.mxu0 0.0
        %7860 = vmatpush.xpose.msra.mxu0 0.0
        %7861 = vmatpush.xpose.msra.mxu0 0.0
        %7862 = vmatpush.xpose.msra.mxu0 0.0
        %7863 = vmatpush.xpose.msra.mxu0 0.0
        %7864 = vmatpush.xpose.msra.mxu0 0.0
        %7865 = vmatpush.xpose.msra.mxu0 0.0
        %7866 = vmatpush.xpose.msra.mxu0 0.0
        %7867 = vmatpush.xpose.msra.mxu0 0.0
        %7868 = vmatpush.xpose.msra.mxu0 0.0
        %7869 = vmatpush.xpose.msra.mxu0 0.0
        %7870 = vmatpush.xpose.msra.mxu0 %v7855
        %7871 = vmatpush.xpose.msra.mxu0 %v7853
        %7872 = vmatpush.xpose.msra.mxu0 %v7851
        %7873 = vmatmul.f32.gmra.mxu0 %v7847
        %v7874 = vpop.f32.mrf.mxu0
        %v7875 = vadd.f32 0.0, %v7874
        %7876 = vmatmul.f32.gmra.mxu0 %v7849
        %v7877 = vpop.f32.mrf.mxu0
        %v7878 = vadd.f32 0.0, %v7877
        %7879 = vdwg.mxu0
        %v7880 = vsel %vm1516, %v7875, -inf
        %7881 = vmax.xlane.f32.xlu0 %v7880
        %v7882 = vpop.xlane.xlu0 %7881
        %v7883 = vsel %vm1516, %v7878, -inf
        %7884 = vmax.xlane.f32.xlu0 %v7883
        %v7885 = vpop.xlane.xlu0 %7884
        %v7886 = vsub.f32 %v7875, %v7882
        %v7887 = vsub.f32 %v7878, %v7885
        %v7888 = vmul.f32 %v7886, 1.442695
        %v7889 = vpow.pop %v7888
        %v7890 = vmul.f32 %v7887, 1.442695
        %v7891 = vpow.pop %v7890
        %v7892 = vsel %vm1516, %v7889, 0.0
        %7893 = vadd.xlane.f32.xlu0 %v7892
        %v7894 = vpop.xlane.xlu0 %7893
        %v7895 = vsel %vm1516, %v7891, 0.0
        %7896 = vadd.xlane.f32.xlu0 %v7895
        %v7897 = vpop.xlane.xlu0 %7896
        %v7898 = vrcp.pop %v7894
        %v7899 = vrcp.pop %v7897
        %v7900 = vmul.f32 %v7889, %v7898
        %v7901 = vmul.f32 %v7891, %v7899
        %7902 = vrot.lane.b32.xlu0 %v7581, 80
        %v7903 = vpop.permute.xlu0 %7902
        %7904 = vrot.lane.b32.xlu0 %v7583, 80
        %v7905 = vpop.permute.xlu0 %7904
        %7906 = vrot.lane.b32.xlu0 %v7586, 80
        %v7907 = vpop.permute.xlu0 %7906
        %v7912 = vsel %vm1516, %v7900, 0
        %v7915 = vsel %vm1516, %v7901, 0
        %7917 = vmatpush.msra.mxu0 0.0
        %7918 = vmatpush.msra.mxu0 0.0
        %7919 = vmatpush.msra.mxu0 0.0
        %7920 = vmatpush.msra.mxu0 0.0
        %7921 = vmatpush.msra.mxu0 0.0
        %7922 = vmatpush.msra.mxu0 0.0
        %7923 = vmatpush.msra.mxu0 0.0
        %7924 = vmatpush.msra.mxu0 0.0
        %7925 = vmatpush.msra.mxu0 0.0
        %7926 = vmatpush.msra.mxu0 0.0
        %7927 = vmatpush.msra.mxu0 0.0
        %7928 = vmatpush.msra.mxu0 0.0
        %7929 = vmatpush.msra.mxu0 0.0
        %7930 = vmatpush.msra.mxu0 %v7907
        %7931 = vmatpush.msra.mxu0 %v7905
        %7932 = vmatpush.msra.mxu0 %v7903
        %7933 = vmatmul.f32.gmra.mxu0 %v7912
        %v7934 = vpop.f32.mrf.mxu0
        %v7935 = vadd.f32 0.0, %v7934
        %7936 = vmatmul.f32.gmra.mxu0 %v7915
        %v7937 = vpop.f32.mrf.mxu0
        %v7938 = vadd.f32 0.0, %v7937
        %7939 = vdwg.mxu0
        %v7940 = vpack.c.bf16 %v7938, %v7935
        %v7941 = vld [vmem:[%s7690 + $0x8] sm:$0xf]
        %v7943 = vsel %vm857, %v7940, 0
        %v7946 = vsel %vm1054, %v7941, 0
        %7948 = vmatpush.bf16.msra.mxu0 0
        %7949 = vmatpush.bf16.msra.mxu0 0
        %7950 = vmatpush.bf16.msra.mxu0 0
        %7951 = vmatpush.bf16.msra.mxu0 0
        %7952 = vmatpush.bf16.msra.mxu0 0
        %7953 = vmatpush.bf16.msra.mxu0 0
        %7954 = vmatpush.bf16.msra.mxu0 0
        %7955 = vmatpush.bf16.msra.mxu0 %v7946
        %7956 = vmatmul.bf16.gmra.mxu0 %v7943
        %v7957 = vpop.f32.mrf.mxu0
        %v7958 = vadd.f32 0.0, %v7957
        %v7959 = vpop.f32.mrf.mxu0
        %v7960 = vadd.f32 0.0, %v7959
        %7961 = vdwg.mxu0
        %v7962 = vadd.f32 %v7833, %v7958
        %v7963 = vadd.f32 %v7835, %v7960
        %7964 = vrot.lane.b32.xlu0 %v7589, 104
        %v7965 = vpop.permute.xlu0 %7964
        %7966 = vrot.lane.b32.xlu0 %v7590, 104
        %v7967 = vpop.permute.xlu0 %7966
        %7968 = vrot.lane.b32.xlu0 %v7581, 104
        %v7969 = vpop.permute.xlu0 %7968
        %7970 = vrot.lane.b32.xlu0 %v7583, 104
        %v7971 = vpop.permute.xlu0 %7970
        %7972 = vrot.lane.b32.xlu0 %v7586, 104
        %v7973 = vpop.permute.xlu0 %7972
        %v7974 = vsel %vm857, %v7965, 0
        %v7976 = vsel %vm857, %v7967, 0
        %v7978 = vsel %vm857, %v7969, 0
        %v7980 = vsel %vm857, %v7971, 0
        %v7982 = vsel %vm857, %v7973, 0
        %7984 = vmatpush.xpose.msra.mxu0 0.0
        %7985 = vmatpush.xpose.msra.mxu0 0.0
        %7986 = vmatpush.xpose.msra.mxu0 0.0
        %7987 = vmatpush.xpose.msra.mxu0 0.0
        %7988 = vmatpush.xpose.msra.mxu0 0.0
        %7989 = vmatpush.xpose.msra.mxu0 0.0
        %7990 = vmatpush.xpose.msra.mxu0 0.0
        %7991 = vmatpush.xpose.msra.mxu0 0.0
        %7992 = vmatpush.xpose.msra.mxu0 0.0
        %7993 = vmatpush.xpose.msra.mxu0 0.0
        %7994 = vmatpush.xpose.msra.mxu0 0.0
        %7995 = vmatpush.xpose.msra.mxu0 0.0
        %7996 = vmatpush.xpose.msra.mxu0 0.0
        %7997 = vmatpush.xpose.msra.mxu0 %v7982
        %7998 = vmatpush.xpose.msra.mxu0 %v7980
        %7999 = vmatpush.xpose.msra.mxu0 %v7978
        %8000 = vmatmul.f32.gmra.mxu0 %v7974
        %v8001 = vpop.f32.mrf.mxu0
        %v8002 = vadd.f32 0.0, %v8001
        %8003 = vmatmul.f32.gmra.mxu0 %v7976
        %v8004 = vpop.f32.mrf.mxu0
        %v8005 = vadd.f32 0.0, %v8004
        %8006 = vdwg.mxu0
        %v8007 = vsel %vm1516, %v8002, -inf
        %8008 = vmax.xlane.f32.xlu0 %v8007
        %v8009 = vpop.xlane.xlu0 %8008
        %v8010 = vsel %vm1516, %v8005, -inf
        %8011 = vmax.xlane.f32.xlu0 %v8010
        %v8012 = vpop.xlane.xlu0 %8011
        %v8013 = vsub.f32 %v8002, %v8009
        %v8014 = vsub.f32 %v8005, %v8012
        %v8015 = vmul.f32 %v8013, 1.442695
        %v8016 = vpow.pop %v8015
        %v8017 = vmul.f32 %v8014, 1.442695
        %v8018 = vpow.pop %v8017
        %v8019 = vsel %vm1516, %v8016, 0.0
        %8020 = vadd.xlane.f32.xlu0 %v8019
        %v8021 = vpop.xlane.xlu0 %8020
        %v8022 = vsel %vm1516, %v8018, 0.0
        %8023 = vadd.xlane.f32.xlu0 %v8022
        %v8024 = vpop.xlane.xlu0 %8023
        %v8025 = vrcp.pop %v8021
        %v8026 = vrcp.pop %v8024
        %v8027 = vmul.f32 %v8016, %v8025
        %v8028 = vmul.f32 %v8018, %v8026
        %8029 = vrot.lane.b32.xlu0 %v7581, 72
        %v8030 = vpop.permute.xlu0 %8029
        %8031 = vrot.lane.b32.xlu0 %v7583, 72
        %v8032 = vpop.permute.xlu0 %8031
        %8033 = vrot.lane.b32.xlu0 %v7586, 72
        %v8034 = vpop.permute.xlu0 %8033
        %v8039 = vsel %vm1516, %v8027, 0
        %v8042 = vsel %vm1516, %v8028, 0
        %8044 = vmatpush.msra.mxu0 0.0
        %8045 = vmatpush.msra.mxu0 0.0
        %8046 = vmatpush.msra.mxu0 0.0
        %8047 = vmatpush.msra.mxu0 0.0
        %8048 = vmatpush.msra.mxu0 0.0
        %8049 = vmatpush.msra.mxu0 0.0
        %8050 = vmatpush.msra.mxu0 0.0
        %8051 = vmatpush.msra.mxu0 0.0
        %8052 = vmatpush.msra.mxu0 0.0
        %8053 = vmatpush.msra.mxu0 0.0
        %8054 = vmatpush.msra.mxu0 0.0
        %8055 = vmatpush.msra.mxu0 0.0
        %8056 = vmatpush.msra.mxu0 0.0
        %8057 = vmatpush.msra.mxu0 %v8034
        %8058 = vmatpush.msra.mxu0 %v8032
        %8059 = vmatpush.msra.mxu0 %v8030
        %8060 = vmatmul.f32.gmra.mxu0 %v8039
        %v8061 = vpop.f32.mrf.mxu0
        %v8062 = vadd.f32 0.0, %v8061
        %8063 = vmatmul.f32.gmra.mxu0 %v8042
        %v8064 = vpop.f32.mrf.mxu0
        %v8065 = vadd.f32 0.0, %v8064
        %8066 = vdwg.mxu0
        %v8067 = vpack.c.bf16 %v8065, %v8062
        %v8068 = vld [vmem:[%s7690 + $0xc] sm:$0xf]
        %v8070 = vsel %vm857, %v8067, 0
        %v8073 = vsel %vm1054, %v8068, 0
        %8075 = vmatpush.bf16.msra.mxu0 0
        %8076 = vmatpush.bf16.msra.mxu0 0
        %8077 = vmatpush.bf16.msra.mxu0 0
        %8078 = vmatpush.bf16.msra.mxu0 0
        %8079 = vmatpush.bf16.msra.mxu0 0
        %8080 = vmatpush.bf16.msra.mxu0 0
        %8081 = vmatpush.bf16.msra.mxu0 0
        %8082 = vmatpush.bf16.msra.mxu0 %v8073
        %8083 = vmatmul.bf16.gmra.mxu0 %v8070
        %v8084 = vpop.f32.mrf.mxu0
        %v8085 = vadd.f32 0.0, %v8084
        %v8086 = vpop.f32.mrf.mxu0
        %v8087 = vadd.f32 0.0, %v8086
        %8088 = vdwg.mxu0
        %v8089 = vadd.f32 %v7962, %v8085
        %v8090 = vadd.f32 %v7963, %v8087
        %s8091 = scalar_lea.vmem %s10, 2
        %v8092 = vld [vmem:[%s8091] sm:$0x1]
        %v8094 = vperm.slane %v8092, 0
        %v8096 = vadd.f32 %v8089, %v8094
        %v8097 = vadd.f32 %v8090, %v8094
        %v8098 = vadd.f32 %v7520, %v8096
        %v8099 = vadd.f32 %v7521, %v8097
        %s8100 = scalar_lea.vmem %s17, 2
        %v8101 = vld [vmem:[%s8100] sm:$0x1]
        %s8102 = scalar_lea.vmem %s18, 2
        %v8103 = vld [vmem:[%s8102] sm:$0x1]
        %v8104 = vsel %vm814, %v8098, 0.0
        %8105 = vadd.xlane.f32.xlu0 %v8104
        %v8106 = vpop.xlane.xlu0 %8105
        %v8107 = vsel %vm814, %v8099, 0.0
        %8108 = vadd.xlane.f32.xlu0 %v8107
        %v8109 = vpop.xlane.xlu0 %8108
        %v8110 = vmul.f32 %v8106, %v1354
        %v8111 = vmul.f32 %v8109, %v1354
        %v8112 = vsub.f32 %v8098, %v8110
        %v8113 = vsub.f32 %v8099, %v8111
        %v8114 = vmul.f32 %v8112, %v8112
        %v8115 = vmul.f32 %v8113, %v8113
        %v8116 = vsel %vm814, %v8114, 0.0
        %8117 = vadd.xlane.f32.xlu0 %v8116
        %v8118 = vpop.xlane.xlu0 %8117
        %v8119 = vsel %vm814, %v8115, 0.0
        %8120 = vadd.xlane.f32.xlu0 %v8119
        %v8121 = vpop.xlane.xlu0 %8120
        %v8122 = vmul.f32 %v8118, %v1354
        %v8123 = vmul.f32 %v8121, %v1354
        %v8124 = vadd.f32 %v8122, 1e-05
        %v8125 = vadd.f32 %v8123, 1e-05
        %v8126 = vrsqrt.pop %v8124
        %v8127 = vmul.f32 %v8126, %v8124
        %v8128 = vmul.f32 %v8127, %v8126
        %v8129 = vmul.f32 0.5, %v8128
        %v8130 = vsub.f32 1.5, %v8129
        %v8131 = vmul.f32 %v8126, %v8130
        %vm8132 = vweird.f32 %v8124
        %vm8133 = vweird.f32 %v8126
        %vm8134 = vmor %vm8132, %vm8133
        %v8135 = vsel %vm8134, %v8126, %v8131
        %v8136 = vrsqrt.pop %v8125
        %v8137 = vmul.f32 %v8136, %v8125
        %v8138 = vmul.f32 %v8137, %v8136
        %v8139 = vmul.f32 0.5, %v8138
        %v8140 = vsub.f32 1.5, %v8139
        %v8141 = vmul.f32 %v8136, %v8140
        %vm8142 = vweird.f32 %v8125
        %vm8143 = vweird.f32 %v8136
        %vm8144 = vmor %vm8142, %vm8143
        %v8145 = vsel %vm8144, %v8136, %v8141
        %v8146 = vmul.f32 %v8112, %v8135
        %v8147 = vmul.f32 %v8113, %v8145
        %v8149 = vperm.slane %v8101, 0
        %v8151 = vmul.f32 %v8146, %v8149
        %v8152 = vmul.f32 %v8147, %v8149
        %v8154 = vperm.slane %v8103, 0
        %v8156 = vadd.f32 %v8151, %v8154
        %v8157 = vadd.f32 %v8152, %v8154
        %v8158 = vpack.c.bf16 %v8157, %v8156
        %s8159 = scalar_lea.vmem %s11, 512
        %v8160 = vld [vmem:[%s8159] sm:$0xff]
        %v8161 = vld [vmem:[%s8159 + $0x8] sm:$0xff]
        %v8162 = vld [vmem:[%s8159 + $0x10] sm:$0xff]
        %v8163 = vld [vmem:[%s8159 + $0x18] sm:$0xff]
        %v8164 = vld [vmem:[%s8159 + $0x20] sm:$0xff]
        %v8165 = vld [vmem:[%s8159 + $0x28] sm:$0xff]
        %v8166 = vld [vmem:[%s8159 + $0x30] sm:$0xff]
        %v8167 = vld [vmem:[%s8159 + $0x38] sm:$0xff]
        %v8168 = vld [vmem:[%s8159 + $0x40] sm:$0xff]
        %v8169 = vld [vmem:[%s8159 + $0x48] sm:$0xff]
        %v8170 = vld [vmem:[%s8159 + $0x50] sm:$0xff]
        %v8171 = vld [vmem:[%s8159 + $0x58] sm:$0xff]
        %v8172 = vld [vmem:[%s8159 + $0x60] sm:$0xff]
        %v8173 = vld [vmem:[%s8159 + $0x68] sm:$0xff]
        %v8174 = vld [vmem:[%s8159 + $0x70] sm:$0xff]
        %v8175 = vld [vmem:[%s8159 + $0x78] sm:$0xff]
        %v8176 = vld [vmem:[%s8159 + $0x80] sm:$0xff]
        %v8177 = vld [vmem:[%s8159 + $0x88] sm:$0xff]
        %v8178 = vld [vmem:[%s8159 + $0x90] sm:$0xff]
        %v8179 = vld [vmem:[%s8159 + $0x98] sm:$0xff]
        %v8180 = vld [vmem:[%s8159 + $0xa0] sm:$0xff]
        %v8181 = vld [vmem:[%s8159 + $0xa8] sm:$0xff]
        %v8182 = vld [vmem:[%s8159 + $0xb0] sm:$0xff]
        %v8183 = vld [vmem:[%s8159 + $0xb8] sm:$0xff]
        %v8184 = vld [vmem:[%s8159 + $0xc0] sm:$0xff]
        %v8185 = vld [vmem:[%s8159 + $0xc8] sm:$0xff]
        %v8186 = vld [vmem:[%s8159 + $0xd0] sm:$0xff]
        %v8187 = vld [vmem:[%s8159 + $0xd8] sm:$0xff]
        %v8188 = vld [vmem:[%s8159 + $0xe0] sm:$0xff]
        %v8189 = vld [vmem:[%s8159 + $0xe8] sm:$0xff]
        %v8190 = vld [vmem:[%s8159 + $0xf0] sm:$0xff]
        %v8191 = vld [vmem:[%s8159 + $0xf8] sm:$0xff]
        %s8192 = scalar_lea.vmem %s12, 32
        %v8193 = vld [vmem:[%s8192] sm:$0xff]
        %v8194 = vld [vmem:[%s8192 + $0x8] sm:$0xff]
        %v8197 = vperm.slane %v8193, 0
        %v8198 = vperm.slane %v8193, 1
        %v8199 = vperm.slane %v8193, 2
        %v8200 = vperm.slane %v8193, 3
        %v8201 = vperm.slane %v8193, 4
        %v8202 = vperm.slane %v8193, 5
        %v8203 = vperm.slane %v8193, 6
        %v8204 = vperm.slane %v8193, 7
        %v8205 = vperm.slane %v8194, 0
        %v8206 = vperm.slane %v8194, 1
        %v8207 = vperm.slane %v8194, 2
        %v8208 = vperm.slane %v8194, 3
        %v8209 = vperm.slane %v8194, 4
        %v8210 = vperm.slane %v8194, 5
        %v8211 = vperm.slane %v8194, 6
        %v8212 = vperm.slane %v8194, 7
        %v8261 = vunpack.c.l.b16 %v8160
        %v8262 = vunpack.c.h.b16 %v8160
        %v8263 = vunpack.c.l.b16 %v8161
        %v8264 = vunpack.c.h.b16 %v8161
        %v8265 = vunpack.c.l.b16 %v8162
        %v8266 = vunpack.c.h.b16 %v8162
        %v8267 = vunpack.c.l.b16 %v8163
        %v8268 = vunpack.c.h.b16 %v8163
        %v8269 = vunpack.c.l.b16 %v8164
        %v8270 = vunpack.c.h.b16 %v8164
        %v8271 = vunpack.c.l.b16 %v8165
        %v8272 = vunpack.c.h.b16 %v8165
        %v8273 = vunpack.c.l.b16 %v8166
        %v8274 = vunpack.c.h.b16 %v8166
        %v8275 = vunpack.c.l.b16 %v8167
        %v8276 = vunpack.c.h.b16 %v8167
        %v8277 = vunpack.c.l.b16 %v8168
        %v8278 = vunpack.c.h.b16 %v8168
        %v8279 = vunpack.c.l.b16 %v8169
        %v8280 = vunpack.c.h.b16 %v8169
        %v8281 = vunpack.c.l.b16 %v8170
        %v8282 = vunpack.c.h.b16 %v8170
        %v8283 = vunpack.c.l.b16 %v8171
        %v8284 = vunpack.c.h.b16 %v8171
        %v8285 = vunpack.c.l.b16 %v8172
        %v8286 = vunpack.c.h.b16 %v8172
        %v8287 = vunpack.c.l.b16 %v8173
        %v8288 = vunpack.c.h.b16 %v8173
        %v8289 = vunpack.c.l.b16 %v8174
        %v8290 = vunpack.c.h.b16 %v8174
        %v8291 = vunpack.c.l.b16 %v8175
        %v8292 = vunpack.c.h.b16 %v8175
        %v8293 = vunpack.c.l.b16 %v8176
        %v8294 = vunpack.c.h.b16 %v8176
        %v8295 = vunpack.c.l.b16 %v8177
        %v8296 = vunpack.c.h.b16 %v8177
        %v8297 = vunpack.c.l.b16 %v8178
        %v8298 = vunpack.c.h.b16 %v8178
        %v8299 = vunpack.c.l.b16 %v8179
        %v8300 = vunpack.c.h.b16 %v8179
        %v8301 = vunpack.c.l.b16 %v8180
        %v8302 = vunpack.c.h.b16 %v8180
        %v8303 = vunpack.c.l.b16 %v8181
        %v8304 = vunpack.c.h.b16 %v8181
        %v8305 = vunpack.c.l.b16 %v8182
        %v8306 = vunpack.c.h.b16 %v8182
        %v8307 = vunpack.c.l.b16 %v8183
        %v8308 = vunpack.c.h.b16 %v8183
        %v8309 = vunpack.c.l.b16 %v8184
        %v8310 = vunpack.c.h.b16 %v8184
        %v8311 = vunpack.c.l.b16 %v8185
        %v8312 = vunpack.c.h.b16 %v8185
        %v8313 = vunpack.c.l.b16 %v8186
        %v8314 = vunpack.c.h.b16 %v8186
        %v8315 = vunpack.c.l.b16 %v8187
        %v8316 = vunpack.c.h.b16 %v8187
        %v8317 = vunpack.c.l.b16 %v8188
        %v8318 = vunpack.c.h.b16 %v8188
        %v8319 = vunpack.c.l.b16 %v8189
        %v8320 = vunpack.c.h.b16 %v8189
        %v8321 = vunpack.c.l.b16 %v8190
        %v8322 = vunpack.c.h.b16 %v8190
        %v8323 = vunpack.c.l.b16 %v8191
        %v8324 = vunpack.c.h.b16 %v8191
        %v8325 = vpack.c.b16 %v8277, %v8261
        %v8326 = vpack.c.b16 %v8278, %v8262
        %v8327 = vpack.c.b16 %v8279, %v8263
        %v8328 = vpack.c.b16 %v8280, %v8264
        %v8329 = vpack.c.b16 %v8281, %v8265
        %v8330 = vpack.c.b16 %v8282, %v8266
        %v8331 = vpack.c.b16 %v8283, %v8267
        %v8332 = vpack.c.b16 %v8284, %v8268
        %v8333 = vpack.c.b16 %v8285, %v8269
        %v8334 = vpack.c.b16 %v8286, %v8270
        %v8335 = vpack.c.b16 %v8287, %v8271
        %v8336 = vpack.c.b16 %v8288, %v8272
        %v8337 = vpack.c.b16 %v8289, %v8273
        %v8338 = vpack.c.b16 %v8290, %v8274
        %v8339 = vpack.c.b16 %v8291, %v8275
        %v8340 = vpack.c.b16 %v8292, %v8276
        %v8341 = vpack.c.b16 %v8309, %v8293
        %v8342 = vpack.c.b16 %v8310, %v8294
        %v8343 = vpack.c.b16 %v8311, %v8295
        %v8344 = vpack.c.b16 %v8312, %v8296
        %v8345 = vpack.c.b16 %v8313, %v8297
        %v8346 = vpack.c.b16 %v8314, %v8298
        %v8347 = vpack.c.b16 %v8315, %v8299
        %v8348 = vpack.c.b16 %v8316, %v8300
        %v8349 = vpack.c.b16 %v8317, %v8301
        %v8350 = vpack.c.b16 %v8318, %v8302
        %v8351 = vpack.c.b16 %v8319, %v8303
        %v8352 = vpack.c.b16 %v8320, %v8304
        %v8353 = vpack.c.b16 %v8321, %v8305
        %v8354 = vpack.c.b16 %v8322, %v8306
        %v8355 = vpack.c.b16 %v8323, %v8307
        %v8356 = vpack.c.b16 %v8324, %v8308
        %v8390 = vsel %vm814, %v8158, 0
        %8392 = vmatpush.bf16.msra.mxu0 0
        %8393 = vmatpush.bf16.msra.mxu0 0
        %8394 = vmatpush.bf16.msra.mxu0 0
        %8395 = vmatpush.bf16.msra.mxu0 0
        %8396 = vmatpush.bf16.msra.mxu0 0
        %8397 = vmatpush.bf16.msra.mxu0 0
        %8398 = vmatpush.bf16.msra.mxu0 %v8341
        %8399 = vmatpush.bf16.msra.mxu0 %v8325
        %8400 = vmatmul.bf16.gmra.mxu0 %v8390
        %v8401 = vpop.f32.mrf.mxu0
        %v8402 = vadd.f32 %v8197, %v8401
        %v8403 = vpop.f32.mrf.mxu0
        %v8404 = vadd.f32 %v8197, %v8403
        %8405 = vdwg.mxu0
        %8406 = vmatpush.bf16.msra.mxu0 0
        %8407 = vmatpush.bf16.msra.mxu0 0
        %8408 = vmatpush.bf16.msra.mxu0 0
        %8409 = vmatpush.bf16.msra.mxu0 0
        %8410 = vmatpush.bf16.msra.mxu0 0
        %8411 = vmatpush.bf16.msra.mxu0 0
        %8412 = vmatpush.bf16.msra.mxu0 %v8342
        %8413 = vmatpush.bf16.msra.mxu0 %v8326
        %8414 = vmatmul.bf16.gmra.mxu0 %v8390
        %v8415 = vpop.f32.mrf.mxu0
        %v8416 = vadd.f32 %v8198, %v8415
        %v8417 = vpop.f32.mrf.mxu0
        %v8418 = vadd.f32 %v8198, %v8417
        %8419 = vdwg.mxu0
        %8420 = vmatpush.bf16.msra.mxu0 0
        %8421 = vmatpush.bf16.msra.mxu0 0
        %8422 = vmatpush.bf16.msra.mxu0 0
        %8423 = vmatpush.bf16.msra.mxu0 0
        %8424 = vmatpush.bf16.msra.mxu0 0
        %8425 = vmatpush.bf16.msra.mxu0 0
        %8426 = vmatpush.bf16.msra.mxu0 %v8343
        %8427 = vmatpush.bf16.msra.mxu0 %v8327
        %8428 = vmatmul.bf16.gmra.mxu0 %v8390
        %v8429 = vpop.f32.mrf.mxu0
        %v8430 = vadd.f32 %v8199, %v8429
        %v8431 = vpop.f32.mrf.mxu0
        %v8432 = vadd.f32 %v8199, %v8431
        %8433 = vdwg.mxu0
        %8434 = vmatpush.bf16.msra.mxu0 0
        %8435 = vmatpush.bf16.msra.mxu0 0
        %8436 = vmatpush.bf16.msra.mxu0 0
        %8437 = vmatpush.bf16.msra.mxu0 0
        %8438 = vmatpush.bf16.msra.mxu0 0
        %8439 = vmatpush.bf16.msra.mxu0 0
        %8440 = vmatpush.bf16.msra.mxu0 %v8344
        %8441 = vmatpush.bf16.msra.mxu0 %v8328
        %8442 = vmatmul.bf16.gmra.mxu0 %v8390
        %v8443 = vpop.f32.mrf.mxu0
        %v8444 = vadd.f32 %v8200, %v8443
        %v8445 = vpop.f32.mrf.mxu0
        %v8446 = vadd.f32 %v8200, %v8445
        %8447 = vdwg.mxu0
        %8448 = vmatpush.bf16.msra.mxu0 0
        %8449 = vmatpush.bf16.msra.mxu0 0
        %8450 = vmatpush.bf16.msra.mxu0 0
        %8451 = vmatpush.bf16.msra.mxu0 0
        %8452 = vmatpush.bf16.msra.mxu0 0
        %8453 = vmatpush.bf16.msra.mxu0 0
        %8454 = vmatpush.bf16.msra.mxu0 %v8345
        %8455 = vmatpush.bf16.msra.mxu0 %v8329
        %8456 = vmatmul.bf16.gmra.mxu0 %v8390
        %v8457 = vpop.f32.mrf.mxu0
        %v8458 = vadd.f32 %v8201, %v8457
        %v8459 = vpop.f32.mrf.mxu0
        %v8460 = vadd.f32 %v8201, %v8459
        %8461 = vdwg.mxu0
        %8462 = vmatpush.bf16.msra.mxu0 0
        %8463 = vmatpush.bf16.msra.mxu0 0
        %8464 = vmatpush.bf16.msra.mxu0 0
        %8465 = vmatpush.bf16.msra.mxu0 0
        %8466 = vmatpush.bf16.msra.mxu0 0
        %8467 = vmatpush.bf16.msra.mxu0 0
        %8468 = vmatpush.bf16.msra.mxu0 %v8346
        %8469 = vmatpush.bf16.msra.mxu0 %v8330
        %8470 = vmatmul.bf16.gmra.mxu0 %v8390
        %v8471 = vpop.f32.mrf.mxu0
        %v8472 = vadd.f32 %v8202, %v8471
        %v8473 = vpop.f32.mrf.mxu0
        %v8474 = vadd.f32 %v8202, %v8473
        %8475 = vdwg.mxu0
        %8476 = vmatpush.bf16.msra.mxu0 0
        %8477 = vmatpush.bf16.msra.mxu0 0
        %8478 = vmatpush.bf16.msra.mxu0 0
        %8479 = vmatpush.bf16.msra.mxu0 0
        %8480 = vmatpush.bf16.msra.mxu0 0
        %8481 = vmatpush.bf16.msra.mxu0 0
        %8482 = vmatpush.bf16.msra.mxu0 %v8347
        %8483 = vmatpush.bf16.msra.mxu0 %v8331
        %8484 = vmatmul.bf16.gmra.mxu0 %v8390
        %v8485 = vpop.f32.mrf.mxu0
        %v8486 = vadd.f32 %v8203, %v8485
        %v8487 = vpop.f32.mrf.mxu0
        %v8488 = vadd.f32 %v8203, %v8487
        %8489 = vdwg.mxu0
        %8490 = vmatpush.bf16.msra.mxu0 0
        %8491 = vmatpush.bf16.msra.mxu0 0
        %8492 = vmatpush.bf16.msra.mxu0 0
        %8493 = vmatpush.bf16.msra.mxu0 0
        %8494 = vmatpush.bf16.msra.mxu0 0
        %8495 = vmatpush.bf16.msra.mxu0 0
        %8496 = vmatpush.bf16.msra.mxu0 %v8348
        %8497 = vmatpush.bf16.msra.mxu0 %v8332
        %8498 = vmatmul.bf16.gmra.mxu0 %v8390
        %v8499 = vpop.f32.mrf.mxu0
        %v8500 = vadd.f32 %v8204, %v8499
        %v8501 = vpop.f32.mrf.mxu0
        %v8502 = vadd.f32 %v8204, %v8501
        %8503 = vdwg.mxu0
        %8504 = vmatpush.bf16.msra.mxu0 0
        %8505 = vmatpush.bf16.msra.mxu0 0
        %8506 = vmatpush.bf16.msra.mxu0 0
        %8507 = vmatpush.bf16.msra.mxu0 0
        %8508 = vmatpush.bf16.msra.mxu0 0
        %8509 = vmatpush.bf16.msra.mxu0 0
        %8510 = vmatpush.bf16.msra.mxu0 %v8349
        %8511 = vmatpush.bf16.msra.mxu0 %v8333
        %8512 = vmatmul.bf16.gmra.mxu0 %v8390
        %v8513 = vpop.f32.mrf.mxu0
        %v8514 = vadd.f32 %v8205, %v8513
        %v8515 = vpop.f32.mrf.mxu0
        %v8516 = vadd.f32 %v8205, %v8515
        %8517 = vdwg.mxu0
        %8518 = vmatpush.bf16.msra.mxu0 0
        %8519 = vmatpush.bf16.msra.mxu0 0
        %8520 = vmatpush.bf16.msra.mxu0 0
        %8521 = vmatpush.bf16.msra.mxu0 0
        %8522 = vmatpush.bf16.msra.mxu0 0
        %8523 = vmatpush.bf16.msra.mxu0 0
        %8524 = vmatpush.bf16.msra.mxu0 %v8350
        %8525 = vmatpush.bf16.msra.mxu0 %v8334
        %8526 = vmatmul.bf16.gmra.mxu0 %v8390
        %v8527 = vpop.f32.mrf.mxu0
        %v8528 = vadd.f32 %v8206, %v8527
        %v8529 = vpop.f32.mrf.mxu0
        %v8530 = vadd.f32 %v8206, %v8529
        %8531 = vdwg.mxu0
        %8532 = vmatpush.bf16.msra.mxu0 0
        %8533 = vmatpush.bf16.msra.mxu0 0
        %8534 = vmatpush.bf16.msra.mxu0 0
        %8535 = vmatpush.bf16.msra.mxu0 0
        %8536 = vmatpush.bf16.msra.mxu0 0
        %8537 = vmatpush.bf16.msra.mxu0 0
        %8538 = vmatpush.bf16.msra.mxu0 %v8351
        %8539 = vmatpush.bf16.msra.mxu0 %v8335
        %8540 = vmatmul.bf16.gmra.mxu0 %v8390
        %v8541 = vpop.f32.mrf.mxu0
        %v8542 = vadd.f32 %v8207, %v8541
        %v8543 = vpop.f32.mrf.mxu0
        %v8544 = vadd.f32 %v8207, %v8543
        %8545 = vdwg.mxu0
        %8546 = vmatpush.bf16.msra.mxu0 0
        %8547 = vmatpush.bf16.msra.mxu0 0
        %8548 = vmatpush.bf16.msra.mxu0 0
        %8549 = vmatpush.bf16.msra.mxu0 0
        %8550 = vmatpush.bf16.msra.mxu0 0
        %8551 = vmatpush.bf16.msra.mxu0 0
        %8552 = vmatpush.bf16.msra.mxu0 %v8352
        %8553 = vmatpush.bf16.msra.mxu0 %v8336
        %8554 = vmatmul.bf16.gmra.mxu0 %v8390
        %v8555 = vpop.f32.mrf.mxu0
        %v8556 = vadd.f32 %v8208, %v8555
        %v8557 = vpop.f32.mrf.mxu0
        %v8558 = vadd.f32 %v8208, %v8557
        %8559 = vdwg.mxu0
        %8560 = vmatpush.bf16.msra.mxu0 0
        %8561 = vmatpush.bf16.msra.mxu0 0
        %8562 = vmatpush.bf16.msra.mxu0 0
        %8563 = vmatpush.bf16.msra.mxu0 0
        %8564 = vmatpush.bf16.msra.mxu0 0
        %8565 = vmatpush.bf16.msra.mxu0 0
        %8566 = vmatpush.bf16.msra.mxu0 %v8353
        %8567 = vmatpush.bf16.msra.mxu0 %v8337
        %8568 = vmatmul.bf16.gmra.mxu0 %v8390
        %v8569 = vpop.f32.mrf.mxu0
        %v8570 = vadd.f32 %v8209, %v8569
        %v8571 = vpop.f32.mrf.mxu0
        %v8572 = vadd.f32 %v8209, %v8571
        %8573 = vdwg.mxu0
        %8574 = vmatpush.bf16.msra.mxu0 0
        %8575 = vmatpush.bf16.msra.mxu0 0
        %8576 = vmatpush.bf16.msra.mxu0 0
        %8577 = vmatpush.bf16.msra.mxu0 0
        %8578 = vmatpush.bf16.msra.mxu0 0
        %8579 = vmatpush.bf16.msra.mxu0 0
        %8580 = vmatpush.bf16.msra.mxu0 %v8354
        %8581 = vmatpush.bf16.msra.mxu0 %v8338
        %8582 = vmatmul.bf16.gmra.mxu0 %v8390
        %v8583 = vpop.f32.mrf.mxu0
        %v8584 = vadd.f32 %v8210, %v8583
        %v8585 = vpop.f32.mrf.mxu0
        %v8586 = vadd.f32 %v8210, %v8585
        %8587 = vdwg.mxu0
        %8588 = vmatpush.bf16.msra.mxu0 0
        %8589 = vmatpush.bf16.msra.mxu0 0
        %8590 = vmatpush.bf16.msra.mxu0 0
        %8591 = vmatpush.bf16.msra.mxu0 0
        %8592 = vmatpush.bf16.msra.mxu0 0
        %8593 = vmatpush.bf16.msra.mxu0 0
        %8594 = vmatpush.bf16.msra.mxu0 %v8355
        %8595 = vmatpush.bf16.msra.mxu0 %v8339
        %8596 = vmatmul.bf16.gmra.mxu0 %v8390
        %v8597 = vpop.f32.mrf.mxu0
        %v8598 = vadd.f32 %v8211, %v8597
        %v8599 = vpop.f32.mrf.mxu0
        %v8600 = vadd.f32 %v8211, %v8599
        %8601 = vdwg.mxu0
        %8602 = vmatpush.bf16.msra.mxu0 0
        %8603 = vmatpush.bf16.msra.mxu0 0
        %8604 = vmatpush.bf16.msra.mxu0 0
        %8605 = vmatpush.bf16.msra.mxu0 0
        %8606 = vmatpush.bf16.msra.mxu0 0
        %8607 = vmatpush.bf16.msra.mxu0 0
        %8608 = vmatpush.bf16.msra.mxu0 %v8356
        %8609 = vmatpush.bf16.msra.mxu0 %v8340
        %8610 = vmatmul.bf16.gmra.mxu0 %v8390
        %v8611 = vpop.f32.mrf.mxu0
        %v8612 = vadd.f32 %v8212, %v8611
        %v8613 = vpop.f32.mrf.mxu0
        %v8614 = vadd.f32 %v8212, %v8613
        %8615 = vdwg.mxu0
        %v8616 = vmax.f32 %v8402, 0.0
        %v8617 = vmax.f32 %v8416, 0.0
        %v8618 = vmax.f32 %v8430, 0.0
        %v8619 = vmax.f32 %v8444, 0.0
        %v8620 = vmax.f32 %v8458, 0.0
        %v8621 = vmax.f32 %v8472, 0.0
        %v8622 = vmax.f32 %v8486, 0.0
        %v8623 = vmax.f32 %v8500, 0.0
        %v8624 = vmax.f32 %v8514, 0.0
        %v8625 = vmax.f32 %v8528, 0.0
        %v8626 = vmax.f32 %v8542, 0.0
        %v8627 = vmax.f32 %v8556, 0.0
        %v8628 = vmax.f32 %v8570, 0.0
        %v8629 = vmax.f32 %v8584, 0.0
        %v8630 = vmax.f32 %v8598, 0.0
        %v8631 = vmax.f32 %v8612, 0.0
        %v8632 = vmax.f32 %v8404, 0.0
        %v8633 = vmax.f32 %v8418, 0.0
        %v8634 = vmax.f32 %v8432, 0.0
        %v8635 = vmax.f32 %v8446, 0.0
        %v8636 = vmax.f32 %v8460, 0.0
        %v8637 = vmax.f32 %v8474, 0.0
        %v8638 = vmax.f32 %v8488, 0.0
        %v8639 = vmax.f32 %v8502, 0.0
        %v8640 = vmax.f32 %v8516, 0.0
        %v8641 = vmax.f32 %v8530, 0.0
        %v8642 = vmax.f32 %v8544, 0.0
        %v8643 = vmax.f32 %v8558, 0.0
        %v8644 = vmax.f32 %v8572, 0.0
        %v8645 = vmax.f32 %v8586, 0.0
        %v8646 = vmax.f32 %v8600, 0.0
        %v8647 = vmax.f32 %v8614, 0.0
        %v8648 = vpack.c.bf16 %v8632, %v8616
        %v8649 = vpack.c.bf16 %v8633, %v8617
        %v8650 = vpack.c.bf16 %v8634, %v8618
        %v8651 = vpack.c.bf16 %v8635, %v8619
        %v8652 = vpack.c.bf16 %v8636, %v8620
        %v8653 = vpack.c.bf16 %v8637, %v8621
        %v8654 = vpack.c.bf16 %v8638, %v8622
        %v8655 = vpack.c.bf16 %v8639, %v8623
        %v8656 = vpack.c.bf16 %v8640, %v8624
        %v8657 = vpack.c.bf16 %v8641, %v8625
        %v8658 = vpack.c.bf16 %v8642, %v8626
        %v8659 = vpack.c.bf16 %v8643, %v8627
        %v8660 = vpack.c.bf16 %v8644, %v8628
        %v8661 = vpack.c.bf16 %v8645, %v8629
        %v8662 = vpack.c.bf16 %v8646, %v8630
        %v8663 = vpack.c.bf16 %v8647, %v8631
        %s8664 = scalar_lea.vmem %s13, 2048
        %v8665 = vld [vmem:[%s8664] sm:$0xf]
        %v8666 = vld [vmem:[%s8664 + $0x4] sm:$0xf]
        %v8667 = vld [vmem:[%s8664 + $0x8] sm:$0xf]
        %v8668 = vld [vmem:[%s8664 + $0xc] sm:$0xf]
        %v8669 = vld [vmem:[%s8664 + $0x10] sm:$0xf]
        %v8670 = vld [vmem:[%s8664 + $0x14] sm:$0xf]
        %v8671 = vld [vmem:[%s8664 + $0x18] sm:$0xf]
        %v8672 = vld [vmem:[%s8664 + $0x1c] sm:$0xf]
        %v8673 = vld [vmem:[%s8664 + $0x20] sm:$0xf]
        %v8674 = vld [vmem:[%s8664 + $0x24] sm:$0xf]
        %v8675 = vld [vmem:[%s8664 + $0x28] sm:$0xf]
        %v8676 = vld [vmem:[%s8664 + $0x2c] sm:$0xf]
        %v8677 = vld [vmem:[%s8664 + $0x30] sm:$0xf]
        %v8678 = vld [vmem:[%s8664 + $0x34] sm:$0xf]
        %v8679 = vld [vmem:[%s8664 + $0x38] sm:$0xf]
        %v8680 = vld [vmem:[%s8664 + $0x3c] sm:$0xf]
        %v8681 = vld [vmem:[%s8664 + $0x40] sm:$0xf]
        %v8682 = vld [vmem:[%s8664 + $0x44] sm:$0xf]
        %v8683 = vld [vmem:[%s8664 + $0x48] sm:$0xf]
        %v8684 = vld [vmem:[%s8664 + $0x4c] sm:$0xf]
        %v8685 = vld [vmem:[%s8664 + $0x50] sm:$0xf]
        %v8686 = vld [vmem:[%s8664 + $0x54] sm:$0xf]
        %v8687 = vld [vmem:[%s8664 + $0x58] sm:$0xf]
        %v8688 = vld [vmem:[%s8664 + $0x5c] sm:$0xf]
        %v8689 = vld [vmem:[%s8664 + $0x60] sm:$0xf]
        %v8690 = vld [vmem:[%s8664 + $0x64] sm:$0xf]
        %v8691 = vld [vmem:[%s8664 + $0x68] sm:$0xf]
        %v8692 = vld [vmem:[%s8664 + $0x6c] sm:$0xf]
        %v8693 = vld [vmem:[%s8664 + $0x70] sm:$0xf]
        %v8694 = vld [vmem:[%s8664 + $0x74] sm:$0xf]
        %v8695 = vld [vmem:[%s8664 + $0x78] sm:$0xf]
        %v8696 = vld [vmem:[%s8664 + $0x7c] sm:$0xf]
        %v8697 = vld [vmem:[%s8664 + $0x80] sm:$0xf]
        %v8698 = vld [vmem:[%s8664 + $0x84] sm:$0xf]
        %v8699 = vld [vmem:[%s8664 + $0x88] sm:$0xf]
        %v8700 = vld [vmem:[%s8664 + $0x8c] sm:$0xf]
        %v8701 = vld [vmem:[%s8664 + $0x90] sm:$0xf]
        %v8702 = vld [vmem:[%s8664 + $0x94] sm:$0xf]
        %v8703 = vld [vmem:[%s8664 + $0x98] sm:$0xf]
        %v8704 = vld [vmem:[%s8664 + $0x9c] sm:$0xf]
        %v8705 = vld [vmem:[%s8664 + $0xa0] sm:$0xf]
        %v8706 = vld [vmem:[%s8664 + $0xa4] sm:$0xf]
        %v8707 = vld [vmem:[%s8664 + $0xa8] sm:$0xf]
        %v8708 = vld [vmem:[%s8664 + $0xac] sm:$0xf]
        %v8709 = vld [vmem:[%s8664 + $0xb0] sm:$0xf]
        %v8710 = vld [vmem:[%s8664 + $0xb4] sm:$0xf]
        %v8711 = vld [vmem:[%s8664 + $0xb8] sm:$0xf]
        %v8712 = vld [vmem:[%s8664 + $0xbc] sm:$0xf]
        %v8713 = vld [vmem:[%s8664 + $0xc0] sm:$0xf]
        %v8714 = vld [vmem:[%s8664 + $0xc4] sm:$0xf]
        %v8715 = vld [vmem:[%s8664 + $0xc8] sm:$0xf]
        %v8716 = vld [vmem:[%s8664 + $0xcc] sm:$0xf]
        %v8717 = vld [vmem:[%s8664 + $0xd0] sm:$0xf]
        %v8718 = vld [vmem:[%s8664 + $0xd4] sm:$0xf]
        %v8719 = vld [vmem:[%s8664 + $0xd8] sm:$0xf]
        %v8720 = vld [vmem:[%s8664 + $0xdc] sm:$0xf]
        %v8721 = vld [vmem:[%s8664 + $0xe0] sm:$0xf]
        %v8722 = vld [vmem:[%s8664 + $0xe4] sm:$0xf]
        %v8723 = vld [vmem:[%s8664 + $0xe8] sm:$0xf]
        %v8724 = vld [vmem:[%s8664 + $0xec] sm:$0xf]
        %v8725 = vld [vmem:[%s8664 + $0xf0] sm:$0xf]
        %v8726 = vld [vmem:[%s8664 + $0xf4] sm:$0xf]
        %v8727 = vld [vmem:[%s8664 + $0xf8] sm:$0xf]
        %v8728 = vld [vmem:[%s8664 + $0xfc] sm:$0xf]
        %v8729 = vld [vmem:[%s8664 + $0x100] sm:$0xf]
        %v8730 = vld [vmem:[%s8664 + $0x104] sm:$0xf]
        %v8731 = vld [vmem:[%s8664 + $0x108] sm:$0xf]
        %v8732 = vld [vmem:[%s8664 + $0x10c] sm:$0xf]
        %v8733 = vld [vmem:[%s8664 + $0x110] sm:$0xf]
        %v8734 = vld [vmem:[%s8664 + $0x114] sm:$0xf]
        %v8735 = vld [vmem:[%s8664 + $0x118] sm:$0xf]
        %v8736 = vld [vmem:[%s8664 + $0x11c] sm:$0xf]
        %v8737 = vld [vmem:[%s8664 + $0x120] sm:$0xf]
        %v8738 = vld [vmem:[%s8664 + $0x124] sm:$0xf]
        %v8739 = vld [vmem:[%s8664 + $0x128] sm:$0xf]
        %v8740 = vld [vmem:[%s8664 + $0x12c] sm:$0xf]
        %v8741 = vld [vmem:[%s8664 + $0x130] sm:$0xf]
        %v8742 = vld [vmem:[%s8664 + $0x134] sm:$0xf]
        %v8743 = vld [vmem:[%s8664 + $0x138] sm:$0xf]
        %v8744 = vld [vmem:[%s8664 + $0x13c] sm:$0xf]
        %v8745 = vld [vmem:[%s8664 + $0x140] sm:$0xf]
        %v8746 = vld [vmem:[%s8664 + $0x144] sm:$0xf]
        %v8747 = vld [vmem:[%s8664 + $0x148] sm:$0xf]
        %v8748 = vld [vmem:[%s8664 + $0x14c] sm:$0xf]
        %v8749 = vld [vmem:[%s8664 + $0x150] sm:$0xf]
        %v8750 = vld [vmem:[%s8664 + $0x154] sm:$0xf]
        %v8751 = vld [vmem:[%s8664 + $0x158] sm:$0xf]
        %v8752 = vld [vmem:[%s8664 + $0x15c] sm:$0xf]
        %v8753 = vld [vmem:[%s8664 + $0x160] sm:$0xf]
        %v8754 = vld [vmem:[%s8664 + $0x164] sm:$0xf]
        %v8755 = vld [vmem:[%s8664 + $0x168] sm:$0xf]
        %v8756 = vld [vmem:[%s8664 + $0x16c] sm:$0xf]
        %v8757 = vld [vmem:[%s8664 + $0x170] sm:$0xf]
        %v8758 = vld [vmem:[%s8664 + $0x174] sm:$0xf]
        %v8759 = vld [vmem:[%s8664 + $0x178] sm:$0xf]
        %v8760 = vld [vmem:[%s8664 + $0x17c] sm:$0xf]
        %v8761 = vld [vmem:[%s8664 + $0x180] sm:$0xf]
        %v8762 = vld [vmem:[%s8664 + $0x184] sm:$0xf]
        %v8763 = vld [vmem:[%s8664 + $0x188] sm:$0xf]
        %v8764 = vld [vmem:[%s8664 + $0x18c] sm:$0xf]
        %v8765 = vld [vmem:[%s8664 + $0x190] sm:$0xf]
        %v8766 = vld [vmem:[%s8664 + $0x194] sm:$0xf]
        %v8767 = vld [vmem:[%s8664 + $0x198] sm:$0xf]
        %v8768 = vld [vmem:[%s8664 + $0x19c] sm:$0xf]
        %v8769 = vld [vmem:[%s8664 + $0x1a0] sm:$0xf]
        %v8770 = vld [vmem:[%s8664 + $0x1a4] sm:$0xf]
        %v8771 = vld [vmem:[%s8664 + $0x1a8] sm:$0xf]
        %v8772 = vld [vmem:[%s8664 + $0x1ac] sm:$0xf]
        %v8773 = vld [vmem:[%s8664 + $0x1b0] sm:$0xf]
        %v8774 = vld [vmem:[%s8664 + $0x1b4] sm:$0xf]
        %v8775 = vld [vmem:[%s8664 + $0x1b8] sm:$0xf]
        %v8776 = vld [vmem:[%s8664 + $0x1bc] sm:$0xf]
        %v8777 = vld [vmem:[%s8664 + $0x1c0] sm:$0xf]
        %v8778 = vld [vmem:[%s8664 + $0x1c4] sm:$0xf]
        %v8779 = vld [vmem:[%s8664 + $0x1c8] sm:$0xf]
        %v8780 = vld [vmem:[%s8664 + $0x1cc] sm:$0xf]
        %v8781 = vld [vmem:[%s8664 + $0x1d0] sm:$0xf]
        %v8782 = vld [vmem:[%s8664 + $0x1d4] sm:$0xf]
        %v8783 = vld [vmem:[%s8664 + $0x1d8] sm:$0xf]
        %v8784 = vld [vmem:[%s8664 + $0x1dc] sm:$0xf]
        %v8785 = vld [vmem:[%s8664 + $0x1e0] sm:$0xf]
        %v8786 = vld [vmem:[%s8664 + $0x1e4] sm:$0xf]
        %v8787 = vld [vmem:[%s8664 + $0x1e8] sm:$0xf]
        %v8788 = vld [vmem:[%s8664 + $0x1ec] sm:$0xf]
        %v8789 = vld [vmem:[%s8664 + $0x1f0] sm:$0xf]
        %v8790 = vld [vmem:[%s8664 + $0x1f4] sm:$0xf]
        %v8791 = vld [vmem:[%s8664 + $0x1f8] sm:$0xf]
        %v8792 = vld [vmem:[%s8664 + $0x1fc] sm:$0xf]
        %v8793 = vld [vmem:[%s8664 + $0x200] sm:$0xf]
        %v8794 = vld [vmem:[%s8664 + $0x204] sm:$0xf]
        %v8795 = vld [vmem:[%s8664 + $0x208] sm:$0xf]
        %v8796 = vld [vmem:[%s8664 + $0x20c] sm:$0xf]
        %v8797 = vld [vmem:[%s8664 + $0x210] sm:$0xf]
        %v8798 = vld [vmem:[%s8664 + $0x214] sm:$0xf]
        %v8799 = vld [vmem:[%s8664 + $0x218] sm:$0xf]
        %v8800 = vld [vmem:[%s8664 + $0x21c] sm:$0xf]
        %v8801 = vld [vmem:[%s8664 + $0x220] sm:$0xf]
        %v8802 = vld [vmem:[%s8664 + $0x224] sm:$0xf]
        %v8803 = vld [vmem:[%s8664 + $0x228] sm:$0xf]
        %v8804 = vld [vmem:[%s8664 + $0x22c] sm:$0xf]
        %v8805 = vld [vmem:[%s8664 + $0x230] sm:$0xf]
        %v8806 = vld [vmem:[%s8664 + $0x234] sm:$0xf]
        %v8807 = vld [vmem:[%s8664 + $0x238] sm:$0xf]
        %v8808 = vld [vmem:[%s8664 + $0x23c] sm:$0xf]
        %v8809 = vld [vmem:[%s8664 + $0x240] sm:$0xf]
        %v8810 = vld [vmem:[%s8664 + $0x244] sm:$0xf]
        %v8811 = vld [vmem:[%s8664 + $0x248] sm:$0xf]
        %v8812 = vld [vmem:[%s8664 + $0x24c] sm:$0xf]
        %v8813 = vld [vmem:[%s8664 + $0x250] sm:$0xf]
        %v8814 = vld [vmem:[%s8664 + $0x254] sm:$0xf]
        %v8815 = vld [vmem:[%s8664 + $0x258] sm:$0xf]
        %v8816 = vld [vmem:[%s8664 + $0x25c] sm:$0xf]
        %v8817 = vld [vmem:[%s8664 + $0x260] sm:$0xf]
        %v8818 = vld [vmem:[%s8664 + $0x264] sm:$0xf]
        %v8819 = vld [vmem:[%s8664 + $0x268] sm:$0xf]
        %v8820 = vld [vmem:[%s8664 + $0x26c] sm:$0xf]
        %v8821 = vld [vmem:[%s8664 + $0x270] sm:$0xf]
        %v8822 = vld [vmem:[%s8664 + $0x274] sm:$0xf]
        %v8823 = vld [vmem:[%s8664 + $0x278] sm:$0xf]
        %v8824 = vld [vmem:[%s8664 + $0x27c] sm:$0xf]
        %v8825 = vld [vmem:[%s8664 + $0x280] sm:$0xf]
        %v8826 = vld [vmem:[%s8664 + $0x284] sm:$0xf]
        %v8827 = vld [vmem:[%s8664 + $0x288] sm:$0xf]
        %v8828 = vld [vmem:[%s8664 + $0x28c] sm:$0xf]
        %v8829 = vld [vmem:[%s8664 + $0x290] sm:$0xf]
        %v8830 = vld [vmem:[%s8664 + $0x294] sm:$0xf]
        %v8831 = vld [vmem:[%s8664 + $0x298] sm:$0xf]
        %v8832 = vld [vmem:[%s8664 + $0x29c] sm:$0xf]
        %v8833 = vld [vmem:[%s8664 + $0x2a0] sm:$0xf]
        %v8834 = vld [vmem:[%s8664 + $0x2a4] sm:$0xf]
        %v8835 = vld [vmem:[%s8664 + $0x2a8] sm:$0xf]
        %v8836 = vld [vmem:[%s8664 + $0x2ac] sm:$0xf]
        %v8837 = vld [vmem:[%s8664 + $0x2b0] sm:$0xf]
        %v8838 = vld [vmem:[%s8664 + $0x2b4] sm:$0xf]
        %v8839 = vld [vmem:[%s8664 + $0x2b8] sm:$0xf]
        %v8840 = vld [vmem:[%s8664 + $0x2bc] sm:$0xf]
        %v8841 = vld [vmem:[%s8664 + $0x2c0] sm:$0xf]
        %v8842 = vld [vmem:[%s8664 + $0x2c4] sm:$0xf]
        %v8843 = vld [vmem:[%s8664 + $0x2c8] sm:$0xf]
        %v8844 = vld [vmem:[%s8664 + $0x2cc] sm:$0xf]
        %v8845 = vld [vmem:[%s8664 + $0x2d0] sm:$0xf]
        %v8846 = vld [vmem:[%s8664 + $0x2d4] sm:$0xf]
        %v8847 = vld [vmem:[%s8664 + $0x2d8] sm:$0xf]
        %v8848 = vld [vmem:[%s8664 + $0x2dc] sm:$0xf]
        %v8849 = vld [vmem:[%s8664 + $0x2e0] sm:$0xf]
        %v8850 = vld [vmem:[%s8664 + $0x2e4] sm:$0xf]
        %v8851 = vld [vmem:[%s8664 + $0x2e8] sm:$0xf]
        %v8852 = vld [vmem:[%s8664 + $0x2ec] sm:$0xf]
        %v8853 = vld [vmem:[%s8664 + $0x2f0] sm:$0xf]
        %v8854 = vld [vmem:[%s8664 + $0x2f4] sm:$0xf]
        %v8855 = vld [vmem:[%s8664 + $0x2f8] sm:$0xf]
        %v8856 = vld [vmem:[%s8664 + $0x2fc] sm:$0xf]
        %v8857 = vld [vmem:[%s8664 + $0x300] sm:$0xf]
        %v8858 = vld [vmem:[%s8664 + $0x304] sm:$0xf]
        %v8859 = vld [vmem:[%s8664 + $0x308] sm:$0xf]
        %v8860 = vld [vmem:[%s8664 + $0x30c] sm:$0xf]
        %v8861 = vld [vmem:[%s8664 + $0x310] sm:$0xf]
        %v8862 = vld [vmem:[%s8664 + $0x314] sm:$0xf]
        %v8863 = vld [vmem:[%s8664 + $0x318] sm:$0xf]
        %v8864 = vld [vmem:[%s8664 + $0x31c] sm:$0xf]
        %v8865 = vld [vmem:[%s8664 + $0x320] sm:$0xf]
        %v8866 = vld [vmem:[%s8664 + $0x324] sm:$0xf]
        %v8867 = vld [vmem:[%s8664 + $0x328] sm:$0xf]
        %v8868 = vld [vmem:[%s8664 + $0x32c] sm:$0xf]
        %v8869 = vld [vmem:[%s8664 + $0x330] sm:$0xf]
        %v8870 = vld [vmem:[%s8664 + $0x334] sm:$0xf]
        %v8871 = vld [vmem:[%s8664 + $0x338] sm:$0xf]
        %v8872 = vld [vmem:[%s8664 + $0x33c] sm:$0xf]
        %v8873 = vld [vmem:[%s8664 + $0x340] sm:$0xf]
        %v8874 = vld [vmem:[%s8664 + $0x344] sm:$0xf]
        %v8875 = vld [vmem:[%s8664 + $0x348] sm:$0xf]
        %v8876 = vld [vmem:[%s8664 + $0x34c] sm:$0xf]
        %v8877 = vld [vmem:[%s8664 + $0x350] sm:$0xf]
        %v8878 = vld [vmem:[%s8664 + $0x354] sm:$0xf]
        %v8879 = vld [vmem:[%s8664 + $0x358] sm:$0xf]
        %v8880 = vld [vmem:[%s8664 + $0x35c] sm:$0xf]
        %v8881 = vld [vmem:[%s8664 + $0x360] sm:$0xf]
        %v8882 = vld [vmem:[%s8664 + $0x364] sm:$0xf]
        %v8883 = vld [vmem:[%s8664 + $0x368] sm:$0xf]
        %v8884 = vld [vmem:[%s8664 + $0x36c] sm:$0xf]
        %v8885 = vld [vmem:[%s8664 + $0x370] sm:$0xf]
        %v8886 = vld [vmem:[%s8664 + $0x374] sm:$0xf]
        %v8887 = vld [vmem:[%s8664 + $0x378] sm:$0xf]
        %v8888 = vld [vmem:[%s8664 + $0x37c] sm:$0xf]
        %v8889 = vld [vmem:[%s8664 + $0x380] sm:$0xf]
        %v8890 = vld [vmem:[%s8664 + $0x384] sm:$0xf]
        %v8891 = vld [vmem:[%s8664 + $0x388] sm:$0xf]
        %v8892 = vld [vmem:[%s8664 + $0x38c] sm:$0xf]
        %v8893 = vld [vmem:[%s8664 + $0x390] sm:$0xf]
        %v8894 = vld [vmem:[%s8664 + $0x394] sm:$0xf]
        %v8895 = vld [vmem:[%s8664 + $0x398] sm:$0xf]
        %v8896 = vld [vmem:[%s8664 + $0x39c] sm:$0xf]
        %v8897 = vld [vmem:[%s8664 + $0x3a0] sm:$0xf]
        %v8898 = vld [vmem:[%s8664 + $0x3a4] sm:$0xf]
        %v8899 = vld [vmem:[%s8664 + $0x3a8] sm:$0xf]
        %v8900 = vld [vmem:[%s8664 + $0x3ac] sm:$0xf]
        %v8901 = vld [vmem:[%s8664 + $0x3b0] sm:$0xf]
        %v8902 = vld [vmem:[%s8664 + $0x3b4] sm:$0xf]
        %v8903 = vld [vmem:[%s8664 + $0x3b8] sm:$0xf]
        %v8904 = vld [vmem:[%s8664 + $0x3bc] sm:$0xf]
        %v8905 = vld [vmem:[%s8664 + $0x3c0] sm:$0xf]
        %v8906 = vld [vmem:[%s8664 + $0x3c4] sm:$0xf]
        %v8907 = vld [vmem:[%s8664 + $0x3c8] sm:$0xf]
        %v8908 = vld [vmem:[%s8664 + $0x3cc] sm:$0xf]
        %v8909 = vld [vmem:[%s8664 + $0x3d0] sm:$0xf]
        %v8910 = vld [vmem:[%s8664 + $0x3d4] sm:$0xf]
        %v8911 = vld [vmem:[%s8664 + $0x3d8] sm:$0xf]
        %v8912 = vld [vmem:[%s8664 + $0x3dc] sm:$0xf]
        %v8913 = vld [vmem:[%s8664 + $0x3e0] sm:$0xf]
        %v8914 = vld [vmem:[%s8664 + $0x3e4] sm:$0xf]
        %v8915 = vld [vmem:[%s8664 + $0x3e8] sm:$0xf]
        %v8916 = vld [vmem:[%s8664 + $0x3ec] sm:$0xf]
        %v8917 = vld [vmem:[%s8664 + $0x3f0] sm:$0xf]
        %v8918 = vld [vmem:[%s8664 + $0x3f4] sm:$0xf]
        %v8919 = vld [vmem:[%s8664 + $0x3f8] sm:$0xf]
        %v8920 = vld [vmem:[%s8664 + $0x3fc] sm:$0xf]
        %s8921 = scalar_lea.vmem %s14, 2
        %v8922 = vld [vmem:[%s8921] sm:$0x1]
        %v8924 = vperm.slane %v8922, 0
        %v9182 = vunpack.c.l.b16 %v8665
        %v9183 = vunpack.c.l.b16 %v8666
        %v9184 = vunpack.c.l.b16 %v8667
        %v9185 = vunpack.c.l.b16 %v8668
        %v9186 = vunpack.c.l.b16 %v8669
        %v9187 = vunpack.c.l.b16 %v8670
        %v9188 = vunpack.c.l.b16 %v8671
        %v9189 = vunpack.c.l.b16 %v8672
        %v9190 = vunpack.c.l.b16 %v8673
        %v9191 = vunpack.c.l.b16 %v8674
        %v9192 = vunpack.c.l.b16 %v8675
        %v9193 = vunpack.c.l.b16 %v8676
        %v9194 = vunpack.c.l.b16 %v8677
        %v9195 = vunpack.c.l.b16 %v8678
        %v9196 = vunpack.c.l.b16 %v8679
        %v9197 = vunpack.c.l.b16 %v8680
        %v9198 = vunpack.c.l.b16 %v8681
        %v9199 = vunpack.c.l.b16 %v8682
        %v9200 = vunpack.c.l.b16 %v8683
        %v9201 = vunpack.c.l.b16 %v8684
        %v9202 = vunpack.c.l.b16 %v8685
        %v9203 = vunpack.c.l.b16 %v8686
        %v9204 = vunpack.c.l.b16 %v8687
        %v9205 = vunpack.c.l.b16 %v8688
        %v9206 = vunpack.c.l.b16 %v8689
        %v9207 = vunpack.c.l.b16 %v8690
        %v9208 = vunpack.c.l.b16 %v8691
        %v9209 = vunpack.c.l.b16 %v8692
        %v9210 = vunpack.c.l.b16 %v8693
        %v9211 = vunpack.c.l.b16 %v8694
        %v9212 = vunpack.c.l.b16 %v8695
        %v9213 = vunpack.c.l.b16 %v8696
        %v9214 = vunpack.c.l.b16 %v8697
        %v9215 = vunpack.c.l.b16 %v8698
        %v9216 = vunpack.c.l.b16 %v8699
        %v9217 = vunpack.c.l.b16 %v8700
        %v9218 = vunpack.c.l.b16 %v8701
        %v9219 = vunpack.c.l.b16 %v8702
        %v9220 = vunpack.c.l.b16 %v8703
        %v9221 = vunpack.c.l.b16 %v8704
        %v9222 = vunpack.c.l.b16 %v8705
        %v9223 = vunpack.c.l.b16 %v8706
        %v9224 = vunpack.c.l.b16 %v8707
        %v9225 = vunpack.c.l.b16 %v8708
        %v9226 = vunpack.c.l.b16 %v8709
        %v9227 = vunpack.c.l.b16 %v8710
        %v9228 = vunpack.c.l.b16 %v8711
        %v9229 = vunpack.c.l.b16 %v8712
        %v9230 = vunpack.c.l.b16 %v8713
        %v9231 = vunpack.c.l.b16 %v8714
        %v9232 = vunpack.c.l.b16 %v8715
        %v9233 = vunpack.c.l.b16 %v8716
        %v9234 = vunpack.c.l.b16 %v8717
        %v9235 = vunpack.c.l.b16 %v8718
        %v9236 = vunpack.c.l.b16 %v8719
        %v9237 = vunpack.c.l.b16 %v8720
        %v9238 = vunpack.c.l.b16 %v8721
        %v9239 = vunpack.c.l.b16 %v8722
        %v9240 = vunpack.c.l.b16 %v8723
        %v9241 = vunpack.c.l.b16 %v8724
        %v9242 = vunpack.c.l.b16 %v8725
        %v9243 = vunpack.c.l.b16 %v8726
        %v9244 = vunpack.c.l.b16 %v8727
        %v9245 = vunpack.c.l.b16 %v8728
        %v9246 = vunpack.c.l.b16 %v8729
        %v9247 = vunpack.c.l.b16 %v8730
        %v9248 = vunpack.c.l.b16 %v8731
        %v9249 = vunpack.c.l.b16 %v8732
        %v9250 = vunpack.c.l.b16 %v8733
        %v9251 = vunpack.c.l.b16 %v8734
        %v9252 = vunpack.c.l.b16 %v8735
        %v9253 = vunpack.c.l.b16 %v8736
        %v9254 = vunpack.c.l.b16 %v8737
        %v9255 = vunpack.c.l.b16 %v8738
        %v9256 = vunpack.c.l.b16 %v8739
        %v9257 = vunpack.c.l.b16 %v8740
        %v9258 = vunpack.c.l.b16 %v8741
        %v9259 = vunpack.c.l.b16 %v8742
        %v9260 = vunpack.c.l.b16 %v8743
        %v9261 = vunpack.c.l.b16 %v8744
        %v9262 = vunpack.c.l.b16 %v8745
        %v9263 = vunpack.c.l.b16 %v8746
        %v9264 = vunpack.c.l.b16 %v8747
        %v9265 = vunpack.c.l.b16 %v8748
        %v9266 = vunpack.c.l.b16 %v8749
        %v9267 = vunpack.c.l.b16 %v8750
        %v9268 = vunpack.c.l.b16 %v8751
        %v9269 = vunpack.c.l.b16 %v8752
        %v9270 = vunpack.c.l.b16 %v8753
        %v9271 = vunpack.c.l.b16 %v8754
        %v9272 = vunpack.c.l.b16 %v8755
        %v9273 = vunpack.c.l.b16 %v8756
        %v9274 = vunpack.c.l.b16 %v8757
        %v9275 = vunpack.c.l.b16 %v8758
        %v9276 = vunpack.c.l.b16 %v8759
        %v9277 = vunpack.c.l.b16 %v8760
        %v9278 = vunpack.c.l.b16 %v8761
        %v9279 = vunpack.c.l.b16 %v8762
        %v9280 = vunpack.c.l.b16 %v8763
        %v9281 = vunpack.c.l.b16 %v8764
        %v9282 = vunpack.c.l.b16 %v8765
        %v9283 = vunpack.c.l.b16 %v8766
        %v9284 = vunpack.c.l.b16 %v8767
        %v9285 = vunpack.c.l.b16 %v8768
        %v9286 = vunpack.c.l.b16 %v8769
        %v9287 = vunpack.c.l.b16 %v8770
        %v9288 = vunpack.c.l.b16 %v8771
        %v9289 = vunpack.c.l.b16 %v8772
        %v9290 = vunpack.c.l.b16 %v8773
        %v9291 = vunpack.c.l.b16 %v8774
        %v9292 = vunpack.c.l.b16 %v8775
        %v9293 = vunpack.c.l.b16 %v8776
        %v9294 = vunpack.c.l.b16 %v8777
        %v9295 = vunpack.c.l.b16 %v8778
        %v9296 = vunpack.c.l.b16 %v8779
        %v9297 = vunpack.c.l.b16 %v8780
        %v9298 = vunpack.c.l.b16 %v8781
        %v9299 = vunpack.c.l.b16 %v8782
        %v9300 = vunpack.c.l.b16 %v8783
        %v9301 = vunpack.c.l.b16 %v8784
        %v9302 = vunpack.c.l.b16 %v8785
        %v9303 = vunpack.c.l.b16 %v8786
        %v9304 = vunpack.c.l.b16 %v8787
        %v9305 = vunpack.c.l.b16 %v8788
        %v9306 = vunpack.c.l.b16 %v8789
        %v9307 = vunpack.c.l.b16 %v8790
        %v9308 = vunpack.c.l.b16 %v8791
        %v9309 = vunpack.c.l.b16 %v8792
        %v9310 = vunpack.c.l.b16 %v8793
        %v9311 = vunpack.c.l.b16 %v8794
        %v9312 = vunpack.c.l.b16 %v8795
        %v9313 = vunpack.c.l.b16 %v8796
        %v9314 = vunpack.c.l.b16 %v8797
        %v9315 = vunpack.c.l.b16 %v8798
        %v9316 = vunpack.c.l.b16 %v8799
        %v9317 = vunpack.c.l.b16 %v8800
        %v9318 = vunpack.c.l.b16 %v8801
        %v9319 = vunpack.c.l.b16 %v8802
        %v9320 = vunpack.c.l.b16 %v8803
        %v9321 = vunpack.c.l.b16 %v8804
        %v9322 = vunpack.c.l.b16 %v8805
        %v9323 = vunpack.c.l.b16 %v8806
        %v9324 = vunpack.c.l.b16 %v8807
        %v9325 = vunpack.c.l.b16 %v8808
        %v9326 = vunpack.c.l.b16 %v8809
        %v9327 = vunpack.c.l.b16 %v8810
        %v9328 = vunpack.c.l.b16 %v8811
        %v9329 = vunpack.c.l.b16 %v8812
        %v9330 = vunpack.c.l.b16 %v8813
        %v9331 = vunpack.c.l.b16 %v8814
        %v9332 = vunpack.c.l.b16 %v8815
        %v9333 = vunpack.c.l.b16 %v8816
        %v9334 = vunpack.c.l.b16 %v8817
        %v9335 = vunpack.c.l.b16 %v8818
        %v9336 = vunpack.c.l.b16 %v8819
        %v9337 = vunpack.c.l.b16 %v8820
        %v9338 = vunpack.c.l.b16 %v8821
        %v9339 = vunpack.c.l.b16 %v8822
        %v9340 = vunpack.c.l.b16 %v8823
        %v9341 = vunpack.c.l.b16 %v8824
        %v9342 = vunpack.c.l.b16 %v8825
        %v9343 = vunpack.c.l.b16 %v8826
        %v9344 = vunpack.c.l.b16 %v8827
        %v9345 = vunpack.c.l.b16 %v8828
        %v9346 = vunpack.c.l.b16 %v8829
        %v9347 = vunpack.c.l.b16 %v8830
        %v9348 = vunpack.c.l.b16 %v8831
        %v9349 = vunpack.c.l.b16 %v8832
        %v9350 = vunpack.c.l.b16 %v8833
        %v9351 = vunpack.c.l.b16 %v8834
        %v9352 = vunpack.c.l.b16 %v8835
        %v9353 = vunpack.c.l.b16 %v8836
        %v9354 = vunpack.c.l.b16 %v8837
        %v9355 = vunpack.c.l.b16 %v8838
        %v9356 = vunpack.c.l.b16 %v8839
        %v9357 = vunpack.c.l.b16 %v8840
        %v9358 = vunpack.c.l.b16 %v8841
        %v9359 = vunpack.c.l.b16 %v8842
        %v9360 = vunpack.c.l.b16 %v8843
        %v9361 = vunpack.c.l.b16 %v8844
        %v9362 = vunpack.c.l.b16 %v8845
        %v9363 = vunpack.c.l.b16 %v8846
        %v9364 = vunpack.c.l.b16 %v8847
        %v9365 = vunpack.c.l.b16 %v8848
        %v9366 = vunpack.c.l.b16 %v8849
        %v9367 = vunpack.c.l.b16 %v8850
        %v9368 = vunpack.c.l.b16 %v8851
        %v9369 = vunpack.c.l.b16 %v8852
        %v9370 = vunpack.c.l.b16 %v8853
        %v9371 = vunpack.c.l.b16 %v8854
        %v9372 = vunpack.c.l.b16 %v8855
        %v9373 = vunpack.c.l.b16 %v8856
        %v9374 = vunpack.c.l.b16 %v8857
        %v9375 = vunpack.c.l.b16 %v8858
        %v9376 = vunpack.c.l.b16 %v8859
        %v9377 = vunpack.c.l.b16 %v8860
        %v9378 = vunpack.c.l.b16 %v8861
        %v9379 = vunpack.c.l.b16 %v8862
        %v9380 = vunpack.c.l.b16 %v8863
        %v9381 = vunpack.c.l.b16 %v8864
        %v9382 = vunpack.c.l.b16 %v8865
        %v9383 = vunpack.c.l.b16 %v8866
        %v9384 = vunpack.c.l.b16 %v8867
        %v9385 = vunpack.c.l.b16 %v8868
        %v9386 = vunpack.c.l.b16 %v8869
        %v9387 = vunpack.c.l.b16 %v8870
        %v9388 = vunpack.c.l.b16 %v8871
        %v9389 = vunpack.c.l.b16 %v8872
        %v9390 = vunpack.c.l.b16 %v8873
        %v9391 = vunpack.c.l.b16 %v8874
        %v9392 = vunpack.c.l.b16 %v8875
        %v9393 = vunpack.c.l.b16 %v8876
        %v9394 = vunpack.c.l.b16 %v8877
        %v9395 = vunpack.c.l.b16 %v8878
        %v9396 = vunpack.c.l.b16 %v8879
        %v9397 = vunpack.c.l.b16 %v8880
        %v9398 = vunpack.c.l.b16 %v8881
        %v9399 = vunpack.c.l.b16 %v8882
        %v9400 = vunpack.c.l.b16 %v8883
        %v9401 = vunpack.c.l.b16 %v8884
        %v9402 = vunpack.c.l.b16 %v8885
        %v9403 = vunpack.c.l.b16 %v8886
        %v9404 = vunpack.c.l.b16 %v8887
        %v9405 = vunpack.c.l.b16 %v8888
        %v9406 = vunpack.c.l.b16 %v8889
        %v9407 = vunpack.c.l.b16 %v8890
        %v9408 = vunpack.c.l.b16 %v8891
        %v9409 = vunpack.c.l.b16 %v8892
        %v9410 = vunpack.c.l.b16 %v8893
        %v9411 = vunpack.c.l.b16 %v8894
        %v9412 = vunpack.c.l.b16 %v8895
        %v9413 = vunpack.c.l.b16 %v8896
        %v9414 = vunpack.c.l.b16 %v8897
        %v9415 = vunpack.c.l.b16 %v8898
        %v9416 = vunpack.c.l.b16 %v8899
        %v9417 = vunpack.c.l.b16 %v8900
        %v9418 = vunpack.c.l.b16 %v8901
        %v9419 = vunpack.c.l.b16 %v8902
        %v9420 = vunpack.c.l.b16 %v8903
        %v9421 = vunpack.c.l.b16 %v8904
        %v9422 = vunpack.c.l.b16 %v8905
        %v9423 = vunpack.c.l.b16 %v8906
        %v9424 = vunpack.c.l.b16 %v8907
        %v9425 = vunpack.c.l.b16 %v8908
        %v9426 = vunpack.c.l.b16 %v8909
        %v9427 = vunpack.c.l.b16 %v8910
        %v9428 = vunpack.c.l.b16 %v8911
        %v9429 = vunpack.c.l.b16 %v8912
        %v9430 = vunpack.c.l.b16 %v8913
        %v9431 = vunpack.c.l.b16 %v8914
        %v9432 = vunpack.c.l.b16 %v8915
        %v9433 = vunpack.c.l.b16 %v8916
        %v9434 = vunpack.c.l.b16 %v8917
        %v9435 = vunpack.c.l.b16 %v8918
        %v9436 = vunpack.c.l.b16 %v8919
        %v9437 = vunpack.c.l.b16 %v8920
        %v9438 = vpack.c.b16 %v9183, %v9182
        %v9439 = vpack.c.b16 %v9185, %v9184
        %v9440 = vpack.c.b16 %v9187, %v9186
        %v9441 = vpack.c.b16 %v9189, %v9188
        %v9442 = vpack.c.b16 %v9191, %v9190
        %v9443 = vpack.c.b16 %v9193, %v9192
        %v9444 = vpack.c.b16 %v9195, %v9194
        %v9445 = vpack.c.b16 %v9197, %v9196
        %v9446 = vpack.c.b16 %v9199, %v9198
        %v9447 = vpack.c.b16 %v9201, %v9200
        %v9448 = vpack.c.b16 %v9203, %v9202
        %v9449 = vpack.c.b16 %v9205, %v9204
        %v9450 = vpack.c.b16 %v9207, %v9206
        %v9451 = vpack.c.b16 %v9209, %v9208
        %v9452 = vpack.c.b16 %v9211, %v9210
        %v9453 = vpack.c.b16 %v9213, %v9212
        %v9454 = vpack.c.b16 %v9215, %v9214
        %v9455 = vpack.c.b16 %v9217, %v9216
        %v9456 = vpack.c.b16 %v9219, %v9218
        %v9457 = vpack.c.b16 %v9221, %v9220
        %v9458 = vpack.c.b16 %v9223, %v9222
        %v9459 = vpack.c.b16 %v9225, %v9224
        %v9460 = vpack.c.b16 %v9227, %v9226
        %v9461 = vpack.c.b16 %v9229, %v9228
        %v9462 = vpack.c.b16 %v9231, %v9230
        %v9463 = vpack.c.b16 %v9233, %v9232
        %v9464 = vpack.c.b16 %v9235, %v9234
        %v9465 = vpack.c.b16 %v9237, %v9236
        %v9466 = vpack.c.b16 %v9239, %v9238
        %v9467 = vpack.c.b16 %v9241, %v9240
        %v9468 = vpack.c.b16 %v9243, %v9242
        %v9469 = vpack.c.b16 %v9245, %v9244
        %v9470 = vpack.c.b16 %v9247, %v9246
        %v9471 = vpack.c.b16 %v9249, %v9248
        %v9472 = vpack.c.b16 %v9251, %v9250
        %v9473 = vpack.c.b16 %v9253, %v9252
        %v9474 = vpack.c.b16 %v9255, %v9254
        %v9475 = vpack.c.b16 %v9257, %v9256
        %v9476 = vpack.c.b16 %v9259, %v9258
        %v9477 = vpack.c.b16 %v9261, %v9260
        %v9478 = vpack.c.b16 %v9263, %v9262
        %v9479 = vpack.c.b16 %v9265, %v9264
        %v9480 = vpack.c.b16 %v9267, %v9266
        %v9481 = vpack.c.b16 %v9269, %v9268
        %v9482 = vpack.c.b16 %v9271, %v9270
        %v9483 = vpack.c.b16 %v9273, %v9272
        %v9484 = vpack.c.b16 %v9275, %v9274
        %v9485 = vpack.c.b16 %v9277, %v9276
        %v9486 = vpack.c.b16 %v9279, %v9278
        %v9487 = vpack.c.b16 %v9281, %v9280
        %v9488 = vpack.c.b16 %v9283, %v9282
        %v9489 = vpack.c.b16 %v9285, %v9284
        %v9490 = vpack.c.b16 %v9287, %v9286
        %v9491 = vpack.c.b16 %v9289, %v9288
        %v9492 = vpack.c.b16 %v9291, %v9290
        %v9493 = vpack.c.b16 %v9293, %v9292
        %v9494 = vpack.c.b16 %v9295, %v9294
        %v9495 = vpack.c.b16 %v9297, %v9296
        %v9496 = vpack.c.b16 %v9299, %v9298
        %v9497 = vpack.c.b16 %v9301, %v9300
        %v9498 = vpack.c.b16 %v9303, %v9302
        %v9499 = vpack.c.b16 %v9305, %v9304
        %v9500 = vpack.c.b16 %v9307, %v9306
        %v9501 = vpack.c.b16 %v9309, %v9308
        %v9502 = vpack.c.b16 %v9311, %v9310
        %v9503 = vpack.c.b16 %v9313, %v9312
        %v9504 = vpack.c.b16 %v9315, %v9314
        %v9505 = vpack.c.b16 %v9317, %v9316
        %v9506 = vpack.c.b16 %v9319, %v9318
        %v9507 = vpack.c.b16 %v9321, %v9320
        %v9508 = vpack.c.b16 %v9323, %v9322
        %v9509 = vpack.c.b16 %v9325, %v9324
        %v9510 = vpack.c.b16 %v9327, %v9326
        %v9511 = vpack.c.b16 %v9329, %v9328
        %v9512 = vpack.c.b16 %v9331, %v9330
        %v9513 = vpack.c.b16 %v9333, %v9332
        %v9514 = vpack.c.b16 %v9335, %v9334
        %v9515 = vpack.c.b16 %v9337, %v9336
        %v9516 = vpack.c.b16 %v9339, %v9338
        %v9517 = vpack.c.b16 %v9341, %v9340
        %v9518 = vpack.c.b16 %v9343, %v9342
        %v9519 = vpack.c.b16 %v9345, %v9344
        %v9520 = vpack.c.b16 %v9347, %v9346
        %v9521 = vpack.c.b16 %v9349, %v9348
        %v9522 = vpack.c.b16 %v9351, %v9350
        %v9523 = vpack.c.b16 %v9353, %v9352
        %v9524 = vpack.c.b16 %v9355, %v9354
        %v9525 = vpack.c.b16 %v9357, %v9356
        %v9526 = vpack.c.b16 %v9359, %v9358
        %v9527 = vpack.c.b16 %v9361, %v9360
        %v9528 = vpack.c.b16 %v9363, %v9362
        %v9529 = vpack.c.b16 %v9365, %v9364
        %v9530 = vpack.c.b16 %v9367, %v9366
        %v9531 = vpack.c.b16 %v9369, %v9368
        %v9532 = vpack.c.b16 %v9371, %v9370
        %v9533 = vpack.c.b16 %v9373, %v9372
        %v9534 = vpack.c.b16 %v9375, %v9374
        %v9535 = vpack.c.b16 %v9377, %v9376
        %v9536 = vpack.c.b16 %v9379, %v9378
        %v9537 = vpack.c.b16 %v9381, %v9380
        %v9538 = vpack.c.b16 %v9383, %v9382
        %v9539 = vpack.c.b16 %v9385, %v9384
        %v9540 = vpack.c.b16 %v9387, %v9386
        %v9541 = vpack.c.b16 %v9389, %v9388
        %v9542 = vpack.c.b16 %v9391, %v9390
        %v9543 = vpack.c.b16 %v9393, %v9392
        %v9544 = vpack.c.b16 %v9395, %v9394
        %v9545 = vpack.c.b16 %v9397, %v9396
        %v9546 = vpack.c.b16 %v9399, %v9398
        %v9547 = vpack.c.b16 %v9401, %v9400
        %v9548 = vpack.c.b16 %v9403, %v9402
        %v9549 = vpack.c.b16 %v9405, %v9404
        %v9550 = vpack.c.b16 %v9407, %v9406
        %v9551 = vpack.c.b16 %v9409, %v9408
        %v9552 = vpack.c.b16 %v9411, %v9410
        %v9553 = vpack.c.b16 %v9413, %v9412
        %v9554 = vpack.c.b16 %v9415, %v9414
        %v9555 = vpack.c.b16 %v9417, %v9416
        %v9556 = vpack.c.b16 %v9419, %v9418
        %v9557 = vpack.c.b16 %v9421, %v9420
        %v9558 = vpack.c.b16 %v9423, %v9422
        %v9559 = vpack.c.b16 %v9425, %v9424
        %v9560 = vpack.c.b16 %v9427, %v9426
        %v9561 = vpack.c.b16 %v9429, %v9428
        %v9562 = vpack.c.b16 %v9431, %v9430
        %v9563 = vpack.c.b16 %v9433, %v9432
        %v9564 = vpack.c.b16 %v9435, %v9434
        %v9565 = vpack.c.b16 %v9437, %v9436
        %9694 = vmatpush.bf16.msra.mxu0 %v9445
        %9695 = vmatpush.bf16.msra.mxu0 %v9444
        %9696 = vmatpush.bf16.msra.mxu0 %v9443
        %9697 = vmatpush.bf16.msra.mxu0 %v9442
        %9698 = vmatpush.bf16.msra.mxu0 %v9441
        %9699 = vmatpush.bf16.msra.mxu0 %v9440
        %9700 = vmatpush.bf16.msra.mxu0 %v9439
        %9701 = vmatpush.bf16.msra.mxu0 %v9438
        %9702 = vmatmul.bf16.gmra.mxu0 %v8648
        %v9703 = vpop.f32.mrf.mxu0
        %v9704 = vadd.f32 %v8924, %v9703
        %v9705 = vpop.f32.mrf.mxu0
        %v9706 = vadd.f32 %v8924, %v9705
        %9707 = vdwg.mxu0
        %9708 = vmatpush.bf16.msra.mxu0 %v9453
        %9709 = vmatpush.bf16.msra.mxu0 %v9452
        %9710 = vmatpush.bf16.msra.mxu0 %v9451
        %9711 = vmatpush.bf16.msra.mxu0 %v9450
        %9712 = vmatpush.bf16.msra.mxu0 %v9449
        %9713 = vmatpush.bf16.msra.mxu0 %v9448
        %9714 = vmatpush.bf16.msra.mxu0 %v9447
        %9715 = vmatpush.bf16.msra.mxu0 %v9446
        %9716 = vmatmul.bf16.gmra.mxu0 %v8649
        %v9717 = vpop.f32.mrf.mxu0
        %v9718 = vadd.f32 %v9704, %v9717
        %v9719 = vpop.f32.mrf.mxu0
        %v9720 = vadd.f32 %v9706, %v9719
        %9721 = vdwg.mxu0
        %9722 = vmatpush.bf16.msra.mxu0 %v9461
        %9723 = vmatpush.bf16.msra.mxu0 %v9460
        %9724 = vmatpush.bf16.msra.mxu0 %v9459
        %9725 = vmatpush.bf16.msra.mxu0 %v9458
        %9726 = vmatpush.bf16.msra.mxu0 %v9457
        %9727 = vmatpush.bf16.msra.mxu0 %v9456
        %9728 = vmatpush.bf16.msra.mxu0 %v9455
        %9729 = vmatpush.bf16.msra.mxu0 %v9454
        %9730 = vmatmul.bf16.gmra.mxu0 %v8650
        %v9731 = vpop.f32.mrf.mxu0
        %v9732 = vadd.f32 %v9718, %v9731
        %v9733 = vpop.f32.mrf.mxu0
        %v9734 = vadd.f32 %v9720, %v9733
        %9735 = vdwg.mxu0
        %9736 = vmatpush.bf16.msra.mxu0 %v9469
        %9737 = vmatpush.bf16.msra.mxu0 %v9468
        %9738 = vmatpush.bf16.msra.mxu0 %v9467
        %9739 = vmatpush.bf16.msra.mxu0 %v9466
        %9740 = vmatpush.bf16.msra.mxu0 %v9465
        %9741 = vmatpush.bf16.msra.mxu0 %v9464
        %9742 = vmatpush.bf16.msra.mxu0 %v9463
        %9743 = vmatpush.bf16.msra.mxu0 %v9462
        %9744 = vmatmul.bf16.gmra.mxu0 %v8651
        %v9745 = vpop.f32.mrf.mxu0
        %v9746 = vadd.f32 %v9732, %v9745
        %v9747 = vpop.f32.mrf.mxu0
        %v9748 = vadd.f32 %v9734, %v9747
        %9749 = vdwg.mxu0
        %9750 = vmatpush.bf16.msra.mxu0 %v9477
        %9751 = vmatpush.bf16.msra.mxu0 %v9476
        %9752 = vmatpush.bf16.msra.mxu0 %v9475
        %9753 = vmatpush.bf16.msra.mxu0 %v9474
        %9754 = vmatpush.bf16.msra.mxu0 %v9473
        %9755 = vmatpush.bf16.msra.mxu0 %v9472
        %9756 = vmatpush.bf16.msra.mxu0 %v9471
        %9757 = vmatpush.bf16.msra.mxu0 %v9470
        %9758 = vmatmul.bf16.gmra.mxu0 %v8652
        %v9759 = vpop.f32.mrf.mxu0
        %v9760 = vadd.f32 %v9746, %v9759
        %v9761 = vpop.f32.mrf.mxu0
        %v9762 = vadd.f32 %v9748, %v9761
        %9763 = vdwg.mxu0
        %9764 = vmatpush.bf16.msra.mxu0 %v9485
        %9765 = vmatpush.bf16.msra.mxu0 %v9484
        %9766 = vmatpush.bf16.msra.mxu0 %v9483
        %9767 = vmatpush.bf16.msra.mxu0 %v9482
        %9768 = vmatpush.bf16.msra.mxu0 %v9481
        %9769 = vmatpush.bf16.msra.mxu0 %v9480
        %9770 = vmatpush.bf16.msra.mxu0 %v9479
        %9771 = vmatpush.bf16.msra.mxu0 %v9478
        %9772 = vmatmul.bf16.gmra.mxu0 %v8653
        %v9773 = vpop.f32.mrf.mxu0
        %v9774 = vadd.f32 %v9760, %v9773
        %v9775 = vpop.f32.mrf.mxu0
        %v9776 = vadd.f32 %v9762, %v9775
        %9777 = vdwg.mxu0
        %9778 = vmatpush.bf16.msra.mxu0 %v9493
        %9779 = vmatpush.bf16.msra.mxu0 %v9492
        %9780 = vmatpush.bf16.msra.mxu0 %v9491
        %9781 = vmatpush.bf16.msra.mxu0 %v9490
        %9782 = vmatpush.bf16.msra.mxu0 %v9489
        %9783 = vmatpush.bf16.msra.mxu0 %v9488
        %9784 = vmatpush.bf16.msra.mxu0 %v9487
        %9785 = vmatpush.bf16.msra.mxu0 %v9486
        %9786 = vmatmul.bf16.gmra.mxu0 %v8654
        %v9787 = vpop.f32.mrf.mxu0
        %v9788 = vadd.f32 %v9774, %v9787
        %v9789 = vpop.f32.mrf.mxu0
        %v9790 = vadd.f32 %v9776, %v9789
        %9791 = vdwg.mxu0
        %9792 = vmatpush.bf16.msra.mxu0 %v9501
        %9793 = vmatpush.bf16.msra.mxu0 %v9500
        %9794 = vmatpush.bf16.msra.mxu0 %v9499
        %9795 = vmatpush.bf16.msra.mxu0 %v9498
        %9796 = vmatpush.bf16.msra.mxu0 %v9497
        %9797 = vmatpush.bf16.msra.mxu0 %v9496
        %9798 = vmatpush.bf16.msra.mxu0 %v9495
        %9799 = vmatpush.bf16.msra.mxu0 %v9494
        %9800 = vmatmul.bf16.gmra.mxu0 %v8655
        %v9801 = vpop.f32.mrf.mxu0
        %v9802 = vadd.f32 %v9788, %v9801
        %v9803 = vpop.f32.mrf.mxu0
        %v9804 = vadd.f32 %v9790, %v9803
        %9805 = vdwg.mxu0
        %9806 = vmatpush.bf16.msra.mxu0 %v9509
        %9807 = vmatpush.bf16.msra.mxu0 %v9508
        %9808 = vmatpush.bf16.msra.mxu0 %v9507
        %9809 = vmatpush.bf16.msra.mxu0 %v9506
        %9810 = vmatpush.bf16.msra.mxu0 %v9505
        %9811 = vmatpush.bf16.msra.mxu0 %v9504
        %9812 = vmatpush.bf16.msra.mxu0 %v9503
        %9813 = vmatpush.bf16.msra.mxu0 %v9502
        %9814 = vmatmul.bf16.gmra.mxu0 %v8656
        %v9815 = vpop.f32.mrf.mxu0
        %v9816 = vadd.f32 %v9802, %v9815
        %v9817 = vpop.f32.mrf.mxu0
        %v9818 = vadd.f32 %v9804, %v9817
        %9819 = vdwg.mxu0
        %9820 = vmatpush.bf16.msra.mxu0 %v9517
        %9821 = vmatpush.bf16.msra.mxu0 %v9516
        %9822 = vmatpush.bf16.msra.mxu0 %v9515
        %9823 = vmatpush.bf16.msra.mxu0 %v9514
        %9824 = vmatpush.bf16.msra.mxu0 %v9513
        %9825 = vmatpush.bf16.msra.mxu0 %v9512
        %9826 = vmatpush.bf16.msra.mxu0 %v9511
        %9827 = vmatpush.bf16.msra.mxu0 %v9510
        %9828 = vmatmul.bf16.gmra.mxu0 %v8657
        %v9829 = vpop.f32.mrf.mxu0
        %v9830 = vadd.f32 %v9816, %v9829
        %v9831 = vpop.f32.mrf.mxu0
        %v9832 = vadd.f32 %v9818, %v9831
        %9833 = vdwg.mxu0
        %9834 = vmatpush.bf16.msra.mxu0 %v9525
        %9835 = vmatpush.bf16.msra.mxu0 %v9524
        %9836 = vmatpush.bf16.msra.mxu0 %v9523
        %9837 = vmatpush.bf16.msra.mxu0 %v9522
        %9838 = vmatpush.bf16.msra.mxu0 %v9521
        %9839 = vmatpush.bf16.msra.mxu0 %v9520
        %9840 = vmatpush.bf16.msra.mxu0 %v9519
        %9841 = vmatpush.bf16.msra.mxu0 %v9518
        %9842 = vmatmul.bf16.gmra.mxu0 %v8658
        %v9843 = vpop.f32.mrf.mxu0
        %v9844 = vadd.f32 %v9830, %v9843
        %v9845 = vpop.f32.mrf.mxu0
        %v9846 = vadd.f32 %v9832, %v9845
        %9847 = vdwg.mxu0
        %9848 = vmatpush.bf16.msra.mxu0 %v9533
        %9849 = vmatpush.bf16.msra.mxu0 %v9532
        %9850 = vmatpush.bf16.msra.mxu0 %v9531
        %9851 = vmatpush.bf16.msra.mxu0 %v9530
        %9852 = vmatpush.bf16.msra.mxu0 %v9529
        %9853 = vmatpush.bf16.msra.mxu0 %v9528
        %9854 = vmatpush.bf16.msra.mxu0 %v9527
        %9855 = vmatpush.bf16.msra.mxu0 %v9526
        %9856 = vmatmul.bf16.gmra.mxu0 %v8659
        %v9857 = vpop.f32.mrf.mxu0
        %v9858 = vadd.f32 %v9844, %v9857
        %v9859 = vpop.f32.mrf.mxu0
        %v9860 = vadd.f32 %v9846, %v9859
        %9861 = vdwg.mxu0
        %9862 = vmatpush.bf16.msra.mxu0 %v9541
        %9863 = vmatpush.bf16.msra.mxu0 %v9540
        %9864 = vmatpush.bf16.msra.mxu0 %v9539
        %9865 = vmatpush.bf16.msra.mxu0 %v9538
        %9866 = vmatpush.bf16.msra.mxu0 %v9537
        %9867 = vmatpush.bf16.msra.mxu0 %v9536
        %9868 = vmatpush.bf16.msra.mxu0 %v9535
        %9869 = vmatpush.bf16.msra.mxu0 %v9534
        %9870 = vmatmul.bf16.gmra.mxu0 %v8660
        %v9871 = vpop.f32.mrf.mxu0
        %v9872 = vadd.f32 %v9858, %v9871
        %v9873 = vpop.f32.mrf.mxu0
        %v9874 = vadd.f32 %v9860, %v9873
        %9875 = vdwg.mxu0
        %9876 = vmatpush.bf16.msra.mxu0 %v9549
        %9877 = vmatpush.bf16.msra.mxu0 %v9548
        %9878 = vmatpush.bf16.msra.mxu0 %v9547
        %9879 = vmatpush.bf16.msra.mxu0 %v9546
        %9880 = vmatpush.bf16.msra.mxu0 %v9545
        %9881 = vmatpush.bf16.msra.mxu0 %v9544
        %9882 = vmatpush.bf16.msra.mxu0 %v9543
        %9883 = vmatpush.bf16.msra.mxu0 %v9542
        %9884 = vmatmul.bf16.gmra.mxu0 %v8661
        %v9885 = vpop.f32.mrf.mxu0
        %v9886 = vadd.f32 %v9872, %v9885
        %v9887 = vpop.f32.mrf.mxu0
        %v9888 = vadd.f32 %v9874, %v9887
        %9889 = vdwg.mxu0
        %9890 = vmatpush.bf16.msra.mxu0 %v9557
        %9891 = vmatpush.bf16.msra.mxu0 %v9556
        %9892 = vmatpush.bf16.msra.mxu0 %v9555
        %9893 = vmatpush.bf16.msra.mxu0 %v9554
        %9894 = vmatpush.bf16.msra.mxu0 %v9553
        %9895 = vmatpush.bf16.msra.mxu0 %v9552
        %9896 = vmatpush.bf16.msra.mxu0 %v9551
        %9897 = vmatpush.bf16.msra.mxu0 %v9550
        %9898 = vmatmul.bf16.gmra.mxu0 %v8662
        %v9899 = vpop.f32.mrf.mxu0
        %v9900 = vadd.f32 %v9886, %v9899
        %v9901 = vpop.f32.mrf.mxu0
        %v9902 = vadd.f32 %v9888, %v9901
        %9903 = vdwg.mxu0
        %9904 = vmatpush.bf16.msra.mxu0 %v9565
        %9905 = vmatpush.bf16.msra.mxu0 %v9564
        %9906 = vmatpush.bf16.msra.mxu0 %v9563
        %9907 = vmatpush.bf16.msra.mxu0 %v9562
        %9908 = vmatpush.bf16.msra.mxu0 %v9561
        %9909 = vmatpush.bf16.msra.mxu0 %v9560
        %9910 = vmatpush.bf16.msra.mxu0 %v9559
        %9911 = vmatpush.bf16.msra.mxu0 %v9558
        %9912 = vmatmul.bf16.gmra.mxu0 %v8663
        %v9913 = vpop.f32.mrf.mxu0
        %v9914 = vadd.f32 %v9900, %v9913
        %v9915 = vpop.f32.mrf.mxu0
        %v9916 = vadd.f32 %v9902, %v9915
        %9917 = vdwg.mxu0
        %v9918 = vadd.f32 %v8156, %v9914
        %v9919 = vadd.f32 %v8157, %v9916
        %s9920 = scalar_lea.vmem %s19, 2
        %v9921 = vld [vmem:[%s9920] sm:$0x1]
        %s9922 = scalar_lea.vmem %s20, 2
        %v9923 = vld [vmem:[%s9922] sm:$0x1]
        %v9924 = vsel %vm814, %v9918, 0.0
        %9925 = vadd.xlane.f32.xlu0 %v9924
        %v9926 = vpop.xlane.xlu0 %9925
        %v9927 = vsel %vm814, %v9919, 0.0
        %9928 = vadd.xlane.f32.xlu0 %v9927
        %v9929 = vpop.xlane.xlu0 %9928
        %v9930 = vmul.f32 %v9926, %v1354
        %v9931 = vmul.f32 %v9929, %v1354
        %v9932 = vsub.f32 %v9918, %v9930
        %v9933 = vsub.f32 %v9919, %v9931
        %v9934 = vmul.f32 %v9932, %v9932
        %v9935 = vmul.f32 %v9933, %v9933
        %v9936 = vsel %vm814, %v9934, 0.0
        %9937 = vadd.xlane.f32.xlu0 %v9936
        %v9938 = vpop.xlane.xlu0 %9937
        %v9939 = vsel %vm814, %v9935, 0.0
        %9940 = vadd.xlane.f32.xlu0 %v9939
        %v9941 = vpop.xlane.xlu0 %9940
        %v9942 = vmul.f32 %v9938, %v1354
        %v9943 = vmul.f32 %v9941, %v1354
        %v9944 = vadd.f32 %v9942, 1e-05
        %v9945 = vadd.f32 %v9943, 1e-05
        %v9946 = vrsqrt.pop %v9944
        %v9947 = vmul.f32 %v9946, %v9944
        %v9948 = vmul.f32 %v9947, %v9946
        %v9949 = vmul.f32 0.5, %v9948
        %v9950 = vsub.f32 1.5, %v9949
        %v9951 = vmul.f32 %v9946, %v9950
        %vm9952 = vweird.f32 %v9944
        %vm9953 = vweird.f32 %v9946
        %vm9954 = vmor %vm9952, %vm9953
        %v9955 = vsel %vm9954, %v9946, %v9951
        %v9956 = vrsqrt.pop %v9945
        %v9957 = vmul.f32 %v9956, %v9945
        %v9958 = vmul.f32 %v9957, %v9956
        %v9959 = vmul.f32 0.5, %v9958
        %v9960 = vsub.f32 1.5, %v9959
        %v9961 = vmul.f32 %v9956, %v9960
        %vm9962 = vweird.f32 %v9945
        %vm9963 = vweird.f32 %v9956
        %vm9964 = vmor %vm9962, %vm9963
        %v9965 = vsel %vm9964, %v9956, %v9961
        %v9966 = vmul.f32 %v9932, %v9955
        %v9967 = vmul.f32 %v9933, %v9965
        %v9969 = vperm.slane %v9921, 0
        %v9971 = vmul.f32 %v9966, %v9969
        %v9972 = vmul.f32 %v9967, %v9969
        %v9974 = vperm.slane %v9923, 0
        %v9976 = vadd.f32 %v9971, %v9974
        %v9977 = vadd.f32 %v9972, %v9974
        %v9978 = vld [vmem:[%s21] sm:$0x1]
        %v9979 = vld [vmem:[%s22] sm:$0x1]
        %v9980 = vsel %vm814, %v9976, 0.0
        %9981 = vadd.xlane.f32.xlu0 %v9980
        %v9982 = vpop.xlane.xlu0 %9981
        %v9983 = vsel %vm814, %v9977, 0.0
        %9984 = vadd.xlane.f32.xlu0 %v9983
        %v9985 = vpop.xlane.xlu0 %9984
        %v9986 = vmul.f32 %v9982, %v1354
        %v9987 = vmul.f32 %v9985, %v1354
        %v9988 = vsub.f32 %v9976, %v9986
        %v9989 = vsub.f32 %v9977, %v9987
        %v9990 = vmul.f32 %v9988, %v9988
        %v9991 = vmul.f32 %v9989, %v9989
        %v9992 = vsel %vm814, %v9990, 0.0
        %9993 = vadd.xlane.f32.xlu0 %v9992
        %v9994 = vpop.xlane.xlu0 %9993
        %v9995 = vsel %vm814, %v9991, 0.0
        %9996 = vadd.xlane.f32.xlu0 %v9995
        %v9997 = vpop.xlane.xlu0 %9996
        %v9998 = vmul.f32 %v9994, %v1354
        %v9999 = vmul.f32 %v9997, %v1354
        %v10000 = vadd.f32 %v9998, 1e-05
        %v10001 = vadd.f32 %v9999, 1e-05
        %v10002 = vrsqrt.pop %v10000
        %v10003 = vmul.f32 %v10002, %v10000
        %v10004 = vmul.f32 %v10003, %v10002
        %v10005 = vmul.f32 0.5, %v10004
        %v10006 = vsub.f32 1.5, %v10005
        %v10007 = vmul.f32 %v10002, %v10006
        %vm10008 = vweird.f32 %v10000
        %vm10009 = vweird.f32 %v10002
        %vm10010 = vmor %vm10008, %vm10009
        %v10011 = vsel %vm10010, %v10002, %v10007
        %v10012 = vrsqrt.pop %v10001
        %v10013 = vmul.f32 %v10012, %v10001
        %v10014 = vmul.f32 %v10013, %v10012
        %v10015 = vmul.f32 0.5, %v10014
        %v10016 = vsub.f32 1.5, %v10015
        %v10017 = vmul.f32 %v10012, %v10016
        %vm10018 = vweird.f32 %v10001
        %vm10019 = vweird.f32 %v10012
        %vm10020 = vmor %vm10018, %vm10019
        %v10021 = vsel %vm10020, %v10012, %v10017
        %v10022 = vmul.f32 %v9988, %v10011
        %v10023 = vmul.f32 %v9989, %v10021
        %v10025 = vperm.slane %v9978, 0
        %v10027 = vmul.f32 %v10022, %v10025
        %v10028 = vmul.f32 %v10023, %v10025
        %v10030 = vperm.slane %v9979, 0
        %v10032 = vadd.f32 %v10027, %v10030
        %v10033 = vadd.f32 %v10028, %v10030
        %v10034 = vpack.c.bf16 %v10033, %v10032
        %v10035 = vld [vmem:[%s23] sm:$0xf]
        %v10036 = vld [vmem:[%s23 + $0x4] sm:$0xf]
        %v10037 = vld [vmem:[%s23 + $0x8] sm:$0xf]
        %v10038 = vld [vmem:[%s23 + $0xc] sm:$0xf]
        %v10039 = vld [vmem:[%s24] sm:$0x1]
        %v10041 = vperm.slane %v10039, 0
        %v10047 = vunpack.c.l.b16 %v10035
        %v10048 = vunpack.c.l.b16 %v10036
        %v10049 = vunpack.c.l.b16 %v10037
        %v10050 = vunpack.c.l.b16 %v10038
        %v10051 = vpack.c.b16 %v10048, %v10047
        %v10052 = vpack.c.b16 %v10050, %v10049
        %v10056 = vsel %vm814, %v10034, 0
        %10058 = vmatpush.bf16.msra.mxu0 0
        %10059 = vmatpush.bf16.msra.mxu0 0
        %10060 = vmatpush.bf16.msra.mxu0 0
        %10061 = vmatpush.bf16.msra.mxu0 0
        %10062 = vmatpush.bf16.msra.mxu0 0
        %10063 = vmatpush.bf16.msra.mxu0 0
        %10064 = vmatpush.bf16.msra.mxu0 %v10052
        %10065 = vmatpush.bf16.msra.mxu0 %v10051
        %10066 = vmatmul.bf16.gmra.mxu0 %v10056
        %v10067 = vpop.f32.mrf.mxu0
        %v10068 = vadd.f32 %v10041, %v10067
        %v10069 = vpop.f32.mrf.mxu0
        %v10070 = vadd.f32 %v10041, %v10069
        %10071 = vdwg.mxu0
        %vm10072 = vcmask 408576
        %10073 = vst.msk [vmem:[%s772] sm:$0xff] %vm10072, %v10068
        %10074 = vst.msk [vmem:[%s772 + $0x8] sm:$0xff] %vm10072, %v10070
        %s10075 = sand.u32 %s582, 1
        %s10076 = scalar_lea.sflag [#allocation3], %s10075
        %s10077 = sand.u32 %s582, 1
        %s10078 = smul.addr %s10077, 16
        %s10079 = scalar_lea.vmem [#allocation2], %s10078
        // Predicated region
        $region121: #{tpu_custom_call.1} parent=119 // pred_check
          %p10080 = pneg %p592
        $region122: #{tpu_custom_call.1} parent=119 // pred_check_branch
          %10082 = sbr.rel (%p10080) target = $region124
        $region123: #{tpu_custom_call.1} parent=119 // pred_region
          %10084 = vsyncadd %s10076, 0
          %s10085 = smul.addr %s39, 2
          %s10086 = smul.addr %s10085, 8
          %s10087 = scalar_lea.hbm %s25, %s10086
          %s10088 = sshll.u32 %s10079, 4
          %s10089 = int_to_ptr.vmem [resolvable:$true] %s10088
          %s10090 = sshll.u32 %s10087, 4
          %s10091 = int_to_ptr.hbm [resolvable:$true] %s10090
          %10096 = dma.vmem_to_hbm [thread:$0]  %s10089, 256, %s10091, %s10076, 128, 128, 8
        $region124: #{tpu_custom_call.1} parent=119 // pred_fallthru
          _
      $region120: #{tpu_custom_call.1} parent=5 // pred_fallthru
        _
      %p10097 = scmp.le.s32.totalorder 2, %s34
      // Predicated region
      $region125: #{tpu_custom_call.1} parent=5 // pred_check
        %p10098 = pneg %p10097
      $region126: #{tpu_custom_call.1} parent=5 // pred_check_branch
        %10100 = sbr.rel (%p10098) target = $region128
      $region127: #{tpu_custom_call.1} parent=5 // pred_region
        %s10101 = ssub.s32 %s34, 2
        // Predicated region
        $region129: #{tpu_custom_call.1} parent=127 // pred_check
          %p10102 = pneg %p598
        $region130: #{tpu_custom_call.1} parent=127 // pred_check_branch
          %10104 = sbr.rel (%p10102) target = $region132
        $region131: #{tpu_custom_call.1} parent=127 // pred_region
          %s10105 = sand.u32 %s583, 1
          %s10106 = scalar_lea.sflag [#allocation3], %s10105
          %s10107 = sand.u32 %s583, 1
          %s10108 = smul.addr %s10107, 16
          %s10109 = scalar_lea.vmem [#allocation2], %s10108
          %10111 = dma.done %s10106, 256
        $region132: #{tpu_custom_call.1} parent=127 // pred_fallthru
          _
      $region128: #{tpu_custom_call.1} parent=5 // pred_fallthru
        _
    $region6: #{tpu_custom_call.1} parent=1 // loop_footer
      %s38 = sadd.s32 1, %s34
    $region7: #{tpu_custom_call.1} parent=1 // loop_footer_branch
      %33 = sbr.rel target = $region3
    $region8: #{tpu_custom_call.1} parent=1 // loop_exit
      _
    %10112 = vsyncpa [#allocation3], 1
    %s10113 = scalar_lea.sflag [#allocation3], 1
    %10114 = vsyncpa %s10113, 1

</llo_original>
